<compile_context>
chip_gen: v5e
topology: v5e:2x2
jax: 0.10.0
libtpu: 0.0.40
codegen_flags: <defaults>
</compile_context>

<pallas_src>
import jax
import jax.numpy as jnp
from jax import lax
from jax.experimental import pallas as pl
from jax.experimental.pallas import tpu as pltpu

Z_DIM = 32          # latent dim (z_dim in the torch module)
H1 = 512
H2 = 64

_INV_SQRT2 = 0.7071067811865476


def _round_up(x, m):
    return ((x + m - 1) // m) * m


def _gelu_prescaled(u):
    # u = y / sqrt(2)  (the 1/sqrt(2) is folded into the preceding weights/bias)
    # GELU(y) = 0.5 * y * (1 + erf(y/sqrt(2))) = (1/sqrt(2)) * u * (1 + erf(u))
    return _INV_SQRT2 * u * (1.0 + lax.erf(u))


def _make_kernel(use_bf16):
    mm_dtype = jnp.bfloat16 if use_bf16 else jnp.float32
    prec = None if use_bf16 else lax.Precision.HIGHEST

    def kernel(zt_ref, w1t_ref, b1_ref, w2t_ref, b2_ref, w3t_ref, b3_ref, o_ref):
        # Everything is in (features, batch) layout: batch lives in the lane dim.
        x = zt_ref[...].astype(mm_dtype)                                  # (Z_DIM, bt)

        u1 = jnp.dot(w1t_ref[...], x,                                     # (H1, bt)
                     preferred_element_type=jnp.float32, precision=prec)
        u1 = u1 + b1_ref[...]
        g1 = _gelu_prescaled(u1)                                          # f32 GELU

        u2 = jnp.dot(w2t_ref[...], g1.astype(mm_dtype),                   # (H2, bt)
                     preferred_element_type=jnp.float32, precision=prec)
        u2 = u2 + b2_ref[...]
        g2 = _gelu_prescaled(u2)

        e = jnp.dot(w3t_ref[...], g2,                                     # (1, bt)
                    preferred_element_type=jnp.float32,
                    precision=lax.Precision.HIGHEST)
        o_ref[...] = (e + b3_ref[0]).astype(o_ref.dtype)                  # lane-dense row

    return kernel


def _pick_batch_tile(batch):
    if batch <= 128:
        return 128
    if batch <= 2048:
        # >= 2 grid steps so v7x's two TensorCores both get work; tiles stay in the
        # 128..1024 range (multiples of 128) to amortize per-step grid overhead.
        return _round_up((batch + 1) // 2, 128)
    return 1024


def prepare_params(params):
    """One-time param prep: transpose to (out, in), fold 1/sqrt(2) of the GELU."""
    w1, b1, w2, b2, w3, b3 = params
    w1t = (jnp.transpose(w1) * _INV_SQRT2).astype(jnp.float32)    # (H1, Z_DIM)
    b1c = (jnp.reshape(b1, (H1, 1)) * _INV_SQRT2).astype(jnp.float32)
    w2t = (jnp.transpose(w2) * _INV_SQRT2).astype(jnp.float32)    # (H2, H1)
    b2c = (jnp.reshape(b2, (H2, 1)) * _INV_SQRT2).astype(jnp.float32)
    w3t = jnp.transpose(w3).astype(jnp.float32)                    # (1, H2)
    b3s = jnp.reshape(b3, (1,)).astype(jnp.float32)                # scalar -> SMEM
    return (w1t, b1c, w2t, b2c, w3t, b3s)


def nete_forward(z, prepped_params, *, batch_tile=None, use_bf16=False):
    """z: (B, z_dim, 1, 1) or (B, z_dim). Returns (B, 1) energies (float32)."""
    B = z.shape[0]
    # Robust equivalent of torch's z.squeeze() for latent codes: collapse all
    # trailing dims (never squeezes the batch dim away when B == 1).
    z2d = jnp.reshape(z, (B, -1)).astype(jnp.float32)
    assert z2d.shape[1] == Z_DIM, f"expected z_dim={Z_DIM}, got {z2d.shape[1]}"

    w1t, b1c, w2t, b2c, w3t, b3s = prepped_params
    if use_bf16:
        # bf16 operands, f32 accumulation — native MXU rate on v6e/v7x.
        # TODO(synk): violates the strict 1e-4 tolerance (~1e-3 abs error); use only
        # when that is acceptable, or restrict to the K=512 second matmul.
        w1t = w1t.astype(jnp.bfloat16)
        w2t = w2t.astype(jnp.bfloat16)

    if batch_tile is None:
        batch_tile = _pick_batch_tile(B)
    batch_tile = _round_up(max(int(batch_tile), 128), 128)   # always a 128 multiple

    B_pad = _round_up(B, batch_tile)
    zt = jnp.transpose(z2d)                                   # (Z_DIM, B), batch in lanes
    if B_pad != B:
        zt = jnp.pad(zt, ((0, 0), (0, B_pad - B)))
    num_tiles = B_pad // batch_tile

    const = lambda i: (0, 0)

    out = pl.pallas_call(
        _make_kernel(use_bf16),
        out_shape=jax.ShapeDtypeStruct((1, B_pad), jnp.float32),
        grid_spec=pltpu.PrefetchScalarGridSpec(
            num_scalar_prefetch=0,
            grid=(num_tiles,),
            in_specs=[
                pl.BlockSpec((Z_DIM, batch_tile), lambda i: (0, i)),   # z tile (batch in lanes)
                pl.BlockSpec((H1, Z_DIM), const),                      # W1^T (resident)
                pl.BlockSpec((H1, 1), const),                          # b1 (column)
                pl.BlockSpec((H2, H1), const),                         # W2^T (resident)
                pl.BlockSpec((H2, 1), const),                          # b2 (column)
                pl.BlockSpec((1, H2), const),                          # W3^T (resident)
                pl.BlockSpec(memory_space=pltpu.MemorySpace.SMEM),     # b3 scalar
            ],
            out_specs=pl.BlockSpec((1, batch_tile), lambda i: (0, i)),  # single lane-dense row
        ),
        compiler_params=pltpu.CompilerParams(
            dimension_semantics=("parallel",)),
    )(zt, w1t, b1c, w2t, b2c, w3t, b3s)

    return out[0, :B].reshape(B, 1)


def init_params(key):
    """Deterministic synthetic init (uniform like torch's default Linear init)."""
    ks = jax.random.split(key, 6)

    def lin(kw, kb, fan_in, fan_out):
        bound = 1.0 / jnp.sqrt(fan_in)
        w = jax.random.uniform(kw, (fan_in, fan_out), jnp.float32, -bound, bound)
        b = jax.random.uniform(kb, (1, fan_out), jnp.float32, -bound, bound)
        return w, b

    w1, b1 = lin(ks[0], ks[1], Z_DIM, H1)
    w2, b2 = lin(ks[2], ks[3], H1, H2)
    w3, b3 = lin(ks[4], ks[5], H2, 1)
    return (w1, b1, w2, b2, w3, b3)


def nete_reference(z, params):
    """Plain-JAX reference (exact erf-GELU, matching nn.GELU() default)."""
    B = z.shape[0]
    z2d = jnp.reshape(z, (B, -1))
    w1, b1, w2, b2, w3, b3 = params
    h = jax.nn.gelu(z2d @ w1 + b1, approximate=False)
    h = jax.nn.gelu(h @ w2 + b2, approximate=False)
    return h @ w3 + b3


if __name__ == "__main__":
    key = jax.random.PRNGKey(0)
    k_param, k_z1, k_z2 = jax.random.split(key, 3)
    params = init_params(k_param)
    prepped = prepare_params(params)

    # Case 1: small (B, z_dim, 1, 1) latents -> single 128-row tile (padding path).
    B1 = 2
    z1 = jax.random.normal(k_z1, (B1, Z_DIM, 1, 1), jnp.float32)
    out1 = jax.block_until_ready(nete_forward(z1, prepped))
    ref1 = nete_reference(z1, params)
    assert out1.shape == (B1, 1)
    assert jnp.allclose(out1, ref1, atol=1e-4, rtol=1e-4), "mismatch (single tile)"

    # Case 2: B=300 (already 2-D latents) -> two 256-row tiles, parallel batch grid.
    B2 = 300
    z2 = jax.random.normal(k_z2, (B2, Z_DIM), jnp.float32)
    out2 = jax.block_until_ready(nete_forward(z2, prepped))
    ref2 = nete_reference(z2, params)
    assert out2.shape == (B2, 1)
    assert jnp.allclose(out2, ref2, atol=1e-4, rtol=1e-4), "mismatch (multi tile)"

    # Case 3: optional bf16-operand MXU path (v6e/v7x rate); loose tolerance since
    # bf16 operand rounding intentionally trades the strict 1e-4 accuracy for speed.
    out3 = jax.block_until_ready(nete_forward(z2, prepped, use_bf16=True))
    assert out3.shape == (B2, 1)
    assert jnp.allclose(out3, ref2, atol=5e-2, rtol=5e-2), "mismatch (bf16 path)"

    print("KERNEL_OK")
</pallas_src>

<mosaic_0001>
module attributes {stable_mosaic.version = 11 : i64} {
  func.func @kernel(%arg0: i32, %arg1: memref<32x128xf32, #tpu.memory_space<vmem>>, %arg2: memref<512x32xf32, #tpu.memory_space<vmem>>, %arg3: memref<512x1xf32, #tpu.memory_space<vmem>>, %arg4: memref<64x512xf32, #tpu.memory_space<vmem>>, %arg5: memref<64x1xf32, #tpu.memory_space<vmem>>, %arg6: memref<1x64xf32, #tpu.memory_space<vmem>>, %arg7: memref<1xf32, #tpu.memory_space<smem>>, %arg8: memref<1x128xf32, #tpu.memory_space<vmem>>) attributes {dimension_semantics = [#tpu.dimension_semantics<parallel>], iteration_bounds = array<i64: 1>, scalar_prefetch = 0 : i64, scratch_operands = 0 : i64, tpu.core_type = #tpu.core_type<tc>, window_params = [{transform_indices = @transform_0, window_bounds = array<i64: 32, 128>}, {pipeline_mode = #tpu.pipeline_mode<synchronous>, transform_indices = @transform_1, window_bounds = array<i64: 512, 32>}, {pipeline_mode = #tpu.pipeline_mode<synchronous>, transform_indices = @transform_2, window_bounds = array<i64: 512, 1>}, {pipeline_mode = #tpu.pipeline_mode<synchronous>, transform_indices = @transform_3, window_bounds = array<i64: 64, 512>}, {pipeline_mode = #tpu.pipeline_mode<synchronous>, transform_indices = @transform_4, window_bounds = array<i64: 64, 1>}, {pipeline_mode = #tpu.pipeline_mode<synchronous>, transform_indices = @transform_5, window_bounds = array<i64: 1, 64>}, {transform_indices = @transform_6, window_bounds = array<i64: 1>}, {transform_indices = @transform_7, window_bounds = array<i64: 1, 128>}]} {
    %c0 = arith.constant 0 : index
    %c0_0 = arith.constant 0 : index
    %0 = vector.load %arg1[%c0, %c0_0] : memref<32x128xf32, #tpu.memory_space<vmem>>, vector<32x128xf32>
    %c0_1 = arith.constant 0 : index
    %c0_2 = arith.constant 0 : index
    %1 = vector.load %arg2[%c0_1, %c0_2] : memref<512x32xf32, #tpu.memory_space<vmem>>, vector<512x32xf32>
    %cst = arith.constant dense<0.000000e+00> : vector<512x128xf32>
    %2 = tpu.matmul %1, %0, %cst {dimension_numbers = #tpu.dot_dimension_numbers<[1], [0], [0], [1], [0, 0, 1, 1], [], []>, precision = #tpu.contract_precision<fp32>} : vector<512x32xf32>, vector<32x128xf32>, vector<512x128xf32> -> vector<512x128xf32>
    %c0_3 = arith.constant 0 : index
    %c0_4 = arith.constant 0 : index
    %3 = vector.load %arg3[%c0_3, %c0_4] : memref<512x1xf32, #tpu.memory_space<vmem>>, vector<512x1xf32>
    %4 = vector.broadcast %3 : vector<512x1xf32> to vector<512x128xf32>
    %5 = arith.addf %2, %4 : vector<512x128xf32>
    %cst_5 = arith.constant 0.707106769 : f32
    %6 = vector.broadcast %cst_5 : f32 to vector<512x128xf32>
    %7 = arith.mulf %6, %5 : vector<512x128xf32>
    %8 = math.erf %5 : vector<512x128xf32>
    %cst_6 = arith.constant 1.000000e+00 : f32
    %9 = vector.broadcast %cst_6 : f32 to vector<512x128xf32>
    %10 = arith.addf %9, %8 : vector<512x128xf32>
    %11 = arith.mulf %7, %10 : vector<512x128xf32>
    %c0_7 = arith.constant 0 : index
    %c0_8 = arith.constant 0 : index
    %12 = vector.load %arg4[%c0_7, %c0_8] : memref<64x512xf32, #tpu.memory_space<vmem>>, vector<64x512xf32>
    %cst_9 = arith.constant dense<0.000000e+00> : vector<64x128xf32>
    %13 = tpu.matmul %12, %11, %cst_9 {dimension_numbers = #tpu.dot_dimension_numbers<[1], [0], [0], [1], [0, 0, 1, 1], [], []>, precision = #tpu.contract_precision<fp32>} : vector<64x512xf32>, vector<512x128xf32>, vector<64x128xf32> -> vector<64x128xf32>
    %c0_10 = arith.constant 0 : index
    %c0_11 = arith.constant 0 : index
    %14 = vector.load %arg5[%c0_10, %c0_11] : memref<64x1xf32, #tpu.memory_space<vmem>>, vector<64x1xf32>
    %15 = vector.broadcast %14 : vector<64x1xf32> to vector<64x128xf32>
    %16 = arith.addf %13, %15 : vector<64x128xf32>
    %cst_12 = arith.constant 0.707106769 : f32
    %17 = vector.broadcast %cst_12 : f32 to vector<64x128xf32>
    %18 = arith.mulf %17, %16 : vector<64x128xf32>
    %19 = math.erf %16 : vector<64x128xf32>
    %cst_13 = arith.constant 1.000000e+00 : f32
    %20 = vector.broadcast %cst_13 : f32 to vector<64x128xf32>
    %21 = arith.addf %20, %19 : vector<64x128xf32>
    %22 = arith.mulf %18, %21 : vector<64x128xf32>
    %c0_14 = arith.constant 0 : index
    %c0_15 = arith.constant 0 : index
    %23 = vector.load %arg6[%c0_14, %c0_15] : memref<1x64xf32, #tpu.memory_space<vmem>>, vector<1x64xf32>
    %cst_16 = arith.constant dense<0.000000e+00> : vector<1x128xf32>
    %24 = tpu.matmul %23, %22, %cst_16 {dimension_numbers = #tpu.dot_dimension_numbers<[1], [0], [0], [1], [0, 0, 1, 1], [], []>, precision = #tpu.contract_precision<fp32>} : vector<1x64xf32>, vector<64x128xf32>, vector<1x128xf32> -> vector<1x128xf32>
    %c0_17 = arith.constant 0 : index
    %25 = memref.load %arg7[%c0_17] : memref<1xf32, #tpu.memory_space<smem>>
    %26 = vector.broadcast %25 : f32 to vector<1x128xf32>
    %27 = arith.addf %24, %26 : vector<1x128xf32>
    %c0_18 = arith.constant 0 : index
    %c0_19 = arith.constant 0 : index
    %28 = vector.load %arg8[%c0_18, %c0_19] : memref<1x128xf32, #tpu.memory_space<vmem>>, vector<1x128xf32>
    tpu.vector_store %arg8[%c0_18, %c0_19], %27 {strides = array<i32>} : memref<1x128xf32, #tpu.memory_space<vmem>>, vector<1x128xf32>,
    return
  }
  func.func @transform_0(%arg0: i32) -> (i32, i32) {
    %c0_i32 = arith.constant 0 : i32
    %c0_i32_0 = arith.constant 0 : i32
    return %c0_i32, %arg0 : i32, i32
  }
  func.func @transform_1(%arg0: i32) -> (i32, i32) {
    %c0_i32 = arith.constant 0 : i32
    %c0_i32_0 = arith.constant 0 : i32
    %c0_i32_1 = arith.constant 0 : i32
    return %c0_i32, %c0_i32_0 : i32, i32
  }
  func.func @transform_2(%arg0: i32) -> (i32, i32) {
    %c0_i32 = arith.constant 0 : i32
    %c0_i32_0 = arith.constant 0 : i32
    %c0_i32_1 = arith.constant 0 : i32
    return %c0_i32, %c0_i32_0 : i32, i32
  }
  func.func @transform_3(%arg0: i32) -> (i32, i32) {
    %c0_i32 = arith.constant 0 : i32
    %c0_i32_0 = arith.constant 0 : i32
    %c0_i32_1 = arith.constant 0 : i32
    return %c0_i32, %c0_i32_0 : i32, i32
  }
  func.func @transform_4(%arg0: i32) -> (i32, i32) {
    %c0_i32 = arith.constant 0 : i32
    %c0_i32_0 = arith.constant 0 : i32
    %c0_i32_1 = arith.constant 0 : i32
    return %c0_i32, %c0_i32_0 : i32, i32
  }
  func.func @transform_5(%arg0: i32) -> (i32, i32) {
    %c0_i32 = arith.constant 0 : i32
    %c0_i32_0 = arith.constant 0 : i32
    %c0_i32_1 = arith.constant 0 : i32
    return %c0_i32, %c0_i32_0 : i32, i32
  }
  func.func @transform_6(%arg0: i32) -> i32 {
    %c0_i32 = arith.constant 0 : i32
    %c0_i32_0 = arith.constant 0 : i32
    return %c0_i32 : i32
  }
  func.func @transform_7(%arg0: i32) -> (i32, i32) {
    %c0_i32 = arith.constant 0 : i32
    %c0_i32_0 = arith.constant 0 : i32
    return %c0_i32, %arg0 : i32, i32
  }
}

</mosaic_0001>

<llo_original>
// kernel: tpu_custom_call.1
$region0: #{tpu_custom_call.1}
  #allocation0 [shape = 'u32[]', space=smem, size = 0x4, offset = 0x4, fixed_abs, tag = 'smem constant byte address 0x4 - core index']
  #allocation1 [shape = 'u32[72,128]{1,0:T(1,128)}', space=vmem, size = 0x9000, scoped, tag = 'internal scratch']
  #allocation2 [shape = 'f32[1]{0:T(128)S(6)}', space=smem, size = 0x200, scoped, tag = 'scoped memory for tpu_custom_call.1']
  %s0 = inlined_call_operand.vmem [shape: f32[32,128], index: 0, kind: input, shape index: {}]
  %s1 = inlined_call_operand.vmem [shape: f32[512,32], index: 1, kind: input, shape index: {}]
  %s2 = inlined_call_operand.vmem [shape: f32[512,1], index: 2, kind: input, shape index: {}]
  %s3 = inlined_call_operand.vmem [shape: f32[64,512], index: 3, kind: input, shape index: {}]
  %s4 = inlined_call_operand.vmem [shape: f32[64,1], index: 4, kind: input, shape index: {}]
  %s5 = inlined_call_operand.vmem [shape: f32[1,64], index: 5, kind: input, shape index: {}]
  %s6 = inlined_call_operand.<no memory space> [shape: f32[1], index: 6, kind: input, shape index: {}]
  %s7 = inlined_call_operand.hbm [shape: f32[1,128], index: 7, kind: output, shape index: {}]
  %s8 = sld [smem:[#allocation0]]
  $region38: #{tpu_custom_call.1} parent=0
    _
  %s10 = ssub.s32 1, %s8
  %s11 = scalar_select 0, %s10, %s8
  %12 = sst [smem:[#allocation2]] %s6
  $region1: #{tpu_custom_call.1} parent=0
    #allocation3 [shape = 'u8[512]{0}', space=vmem, size = 0x400, scoped, tag = 'output window, operand 0, single buffered']
    #allocation4 [shape = 's32[1]{0}', space=sflag, size = 0x4, scoped, tag = 'scoped memory for tpu_custom_call.1']
    %13 = vsyncpa [#allocation4], 0
    // Predicated region
    $region2: #{tpu_custom_call.1} parent=1 // pred_check
      _
    $region3: #{tpu_custom_call.1} parent=1 // pred_check_branch
      %15 = sbr.rel (0) target = $region5
    $region4: #{tpu_custom_call.1} parent=1 // pred_region
      _
    $region5: #{tpu_custom_call.1} parent=1 // pred_fallthru
      _
    // Predicated region
    $region6: #{tpu_custom_call.1} parent=1 // pred_check
      _
    $region7: #{tpu_custom_call.1} parent=1 // pred_check_branch
      %17 = sbr.rel (0) target = $region9
    $region8: #{tpu_custom_call.1} parent=1 // pred_region
      _
    $region9: #{tpu_custom_call.1} parent=1 // pred_fallthru
      _
    // Predicated region
    $region10: #{tpu_custom_call.1} parent=1 // pred_check
      _
    $region11: #{tpu_custom_call.1} parent=1 // pred_check_branch
      %19 = sbr.rel (0) target = $region13
    $region12: #{tpu_custom_call.1} parent=1 // pred_region
      _
    $region13: #{tpu_custom_call.1} parent=1 // pred_fallthru
      _
    // Predicated region
    $region14: #{tpu_custom_call.1} parent=1 // pred_check
      _
    $region15: #{tpu_custom_call.1} parent=1 // pred_check_branch
      %21 = sbr.rel (0) target = $region17
    $region16: #{tpu_custom_call.1} parent=1 // pred_region
      _
    $region17: #{tpu_custom_call.1} parent=1 // pred_fallthru
      _
    // Predicated region
    $region18: #{tpu_custom_call.1} parent=1 // pred_check
      _
    $region19: #{tpu_custom_call.1} parent=1 // pred_check_branch
      %23 = sbr.rel (0) target = $region21
    $region20: #{tpu_custom_call.1} parent=1 // pred_region
      _
    $region21: #{tpu_custom_call.1} parent=1 // pred_fallthru
      _
    // Predicated region
    $region22: #{tpu_custom_call.1} parent=1 // pred_check
      _
    $region23: #{tpu_custom_call.1} parent=1 // pred_check_branch
      %25 = sbr.rel (0) target = $region25
    $region24: #{tpu_custom_call.1} parent=1 // pred_region
      _
    $region25: #{tpu_custom_call.1} parent=1 // pred_fallthru
      _
    // Predicated region
    $region26: #{tpu_custom_call.1} parent=1 // pred_check
      _
    $region27: #{tpu_custom_call.1} parent=1 // pred_check_branch
      %27 = sbr.rel (0) target = $region29
    $region28: #{tpu_custom_call.1} parent=1 // pred_region
      _
    $region29: #{tpu_custom_call.1} parent=1 // pred_fallthru
      _
    %v28 = vld [vmem:[%s0] sm:$0xff]
    %v29 = vld [vmem:[%s0 + $0x8] sm:$0xff]
    %v30 = vld [vmem:[%s0 + $0x10] sm:$0xff]
    %v31 = vld [vmem:[%s0 + $0x18] sm:$0xff]
    %v32 = vld [vmem:[%s1] sm:$0xff]
    %v33 = vld [vmem:[%s1 + $0x8] sm:$0xff]
    %v34 = vld [vmem:[%s1 + $0x10] sm:$0xff]
    %v35 = vld [vmem:[%s1 + $0x18] sm:$0xff]
    %v36 = vld [vmem:[%s1 + $0x20] sm:$0xff]
    %v37 = vld [vmem:[%s1 + $0x28] sm:$0xff]
    %v38 = vld [vmem:[%s1 + $0x30] sm:$0xff]
    %v39 = vld [vmem:[%s1 + $0x38] sm:$0xff]
    %v40 = vld [vmem:[%s1 + $0x40] sm:$0xff]
    %v41 = vld [vmem:[%s1 + $0x48] sm:$0xff]
    %v42 = vld [vmem:[%s1 + $0x50] sm:$0xff]
    %v43 = vld [vmem:[%s1 + $0x58] sm:$0xff]
    %v44 = vld [vmem:[%s1 + $0x60] sm:$0xff]
    %v45 = vld [vmem:[%s1 + $0x68] sm:$0xff]
    %v46 = vld [vmem:[%s1 + $0x70] sm:$0xff]
    %v47 = vld [vmem:[%s1 + $0x78] sm:$0xff]
    %v48 = vld [vmem:[%s1 + $0x80] sm:$0xff]
    %v49 = vld [vmem:[%s1 + $0x88] sm:$0xff]
    %v50 = vld [vmem:[%s1 + $0x90] sm:$0xff]
    %v51 = vld [vmem:[%s1 + $0x98] sm:$0xff]
    %v52 = vld [vmem:[%s1 + $0xa0] sm:$0xff]
    %v53 = vld [vmem:[%s1 + $0xa8] sm:$0xff]
    %v54 = vld [vmem:[%s1 + $0xb0] sm:$0xff]
    %v55 = vld [vmem:[%s1 + $0xb8] sm:$0xff]
    %v56 = vld [vmem:[%s1 + $0xc0] sm:$0xff]
    %v57 = vld [vmem:[%s1 + $0xc8] sm:$0xff]
    %v58 = vld [vmem:[%s1 + $0xd0] sm:$0xff]
    %v59 = vld [vmem:[%s1 + $0xd8] sm:$0xff]
    %v60 = vld [vmem:[%s1 + $0xe0] sm:$0xff]
    %v61 = vld [vmem:[%s1 + $0xe8] sm:$0xff]
    %v62 = vld [vmem:[%s1 + $0xf0] sm:$0xff]
    %v63 = vld [vmem:[%s1 + $0xf8] sm:$0xff]
    %v64 = vld [vmem:[%s1 + $0x100] sm:$0xff]
    %v65 = vld [vmem:[%s1 + $0x108] sm:$0xff]
    %v66 = vld [vmem:[%s1 + $0x110] sm:$0xff]
    %v67 = vld [vmem:[%s1 + $0x118] sm:$0xff]
    %v68 = vld [vmem:[%s1 + $0x120] sm:$0xff]
    %v69 = vld [vmem:[%s1 + $0x128] sm:$0xff]
    %v70 = vld [vmem:[%s1 + $0x130] sm:$0xff]
    %v71 = vld [vmem:[%s1 + $0x138] sm:$0xff]
    %v72 = vld [vmem:[%s1 + $0x140] sm:$0xff]
    %v73 = vld [vmem:[%s1 + $0x148] sm:$0xff]
    %v74 = vld [vmem:[%s1 + $0x150] sm:$0xff]
    %v75 = vld [vmem:[%s1 + $0x158] sm:$0xff]
    %v76 = vld [vmem:[%s1 + $0x160] sm:$0xff]
    %v77 = vld [vmem:[%s1 + $0x168] sm:$0xff]
    %v78 = vld [vmem:[%s1 + $0x170] sm:$0xff]
    %v79 = vld [vmem:[%s1 + $0x178] sm:$0xff]
    %v80 = vld [vmem:[%s1 + $0x180] sm:$0xff]
    %v81 = vld [vmem:[%s1 + $0x188] sm:$0xff]
    %v82 = vld [vmem:[%s1 + $0x190] sm:$0xff]
    %v83 = vld [vmem:[%s1 + $0x198] sm:$0xff]
    %v84 = vld [vmem:[%s1 + $0x1a0] sm:$0xff]
    %v85 = vld [vmem:[%s1 + $0x1a8] sm:$0xff]
    %v86 = vld [vmem:[%s1 + $0x1b0] sm:$0xff]
    %v87 = vld [vmem:[%s1 + $0x1b8] sm:$0xff]
    %v88 = vld [vmem:[%s1 + $0x1c0] sm:$0xff]
    %v89 = vld [vmem:[%s1 + $0x1c8] sm:$0xff]
    %v90 = vld [vmem:[%s1 + $0x1d0] sm:$0xff]
    %v91 = vld [vmem:[%s1 + $0x1d8] sm:$0xff]
    %v92 = vld [vmem:[%s1 + $0x1e0] sm:$0xff]
    %v93 = vld [vmem:[%s1 + $0x1e8] sm:$0xff]
    %v94 = vld [vmem:[%s1 + $0x1f0] sm:$0xff]
    %v95 = vld [vmem:[%s1 + $0x1f8] sm:$0xff]
    %v96 = vld [vmem:[%s2] sm:$0xff]
    %v97 = vld [vmem:[%s2 + $0x8] sm:$0xff]
    %v98 = vld [vmem:[%s2 + $0x10] sm:$0xff]
    %v99 = vld [vmem:[%s2 + $0x18] sm:$0xff]
    %v100 = vld [vmem:[%s2 + $0x20] sm:$0xff]
    %v101 = vld [vmem:[%s2 + $0x28] sm:$0xff]
    %v102 = vld [vmem:[%s2 + $0x30] sm:$0xff]
    %v103 = vld [vmem:[%s2 + $0x38] sm:$0xff]
    %v104 = vld [vmem:[%s2 + $0x40] sm:$0xff]
    %v105 = vld [vmem:[%s2 + $0x48] sm:$0xff]
    %v106 = vld [vmem:[%s2 + $0x50] sm:$0xff]
    %v107 = vld [vmem:[%s2 + $0x58] sm:$0xff]
    %v108 = vld [vmem:[%s2 + $0x60] sm:$0xff]
    %v109 = vld [vmem:[%s2 + $0x68] sm:$0xff]
    %v110 = vld [vmem:[%s2 + $0x70] sm:$0xff]
    %v111 = vld [vmem:[%s2 + $0x78] sm:$0xff]
    %v112 = vld [vmem:[%s2 + $0x80] sm:$0xff]
    %v113 = vld [vmem:[%s2 + $0x88] sm:$0xff]
    %v114 = vld [vmem:[%s2 + $0x90] sm:$0xff]
    %v115 = vld [vmem:[%s2 + $0x98] sm:$0xff]
    %v116 = vld [vmem:[%s2 + $0xa0] sm:$0xff]
    %v117 = vld [vmem:[%s2 + $0xa8] sm:$0xff]
    %v118 = vld [vmem:[%s2 + $0xb0] sm:$0xff]
    %v119 = vld [vmem:[%s2 + $0xb8] sm:$0xff]
    %v120 = vld [vmem:[%s2 + $0xc0] sm:$0xff]
    %v121 = vld [vmem:[%s2 + $0xc8] sm:$0xff]
    %v122 = vld [vmem:[%s2 + $0xd0] sm:$0xff]
    %v123 = vld [vmem:[%s2 + $0xd8] sm:$0xff]
    %v124 = vld [vmem:[%s2 + $0xe0] sm:$0xff]
    %v125 = vld [vmem:[%s2 + $0xe8] sm:$0xff]
    %v126 = vld [vmem:[%s2 + $0xf0] sm:$0xff]
    %v127 = vld [vmem:[%s2 + $0xf8] sm:$0xff]
    %v128 = vld [vmem:[%s2 + $0x100] sm:$0xff]
    %v129 = vld [vmem:[%s2 + $0x108] sm:$0xff]
    %v130 = vld [vmem:[%s2 + $0x110] sm:$0xff]
    %v131 = vld [vmem:[%s2 + $0x118] sm:$0xff]
    %v132 = vld [vmem:[%s2 + $0x120] sm:$0xff]
    %v133 = vld [vmem:[%s2 + $0x128] sm:$0xff]
    %v134 = vld [vmem:[%s2 + $0x130] sm:$0xff]
    %v135 = vld [vmem:[%s2 + $0x138] sm:$0xff]
    %v136 = vld [vmem:[%s2 + $0x140] sm:$0xff]
    %v137 = vld [vmem:[%s2 + $0x148] sm:$0xff]
    %v138 = vld [vmem:[%s2 + $0x150] sm:$0xff]
    %v139 = vld [vmem:[%s2 + $0x158] sm:$0xff]
    %v140 = vld [vmem:[%s2 + $0x160] sm:$0xff]
    %v141 = vld [vmem:[%s2 + $0x168] sm:$0xff]
    %v142 = vld [vmem:[%s2 + $0x170] sm:$0xff]
    %v143 = vld [vmem:[%s2 + $0x178] sm:$0xff]
    %v144 = vld [vmem:[%s2 + $0x180] sm:$0xff]
    %v145 = vld [vmem:[%s2 + $0x188] sm:$0xff]
    %v146 = vld [vmem:[%s2 + $0x190] sm:$0xff]
    %v147 = vld [vmem:[%s2 + $0x198] sm:$0xff]
    %v148 = vld [vmem:[%s2 + $0x1a0] sm:$0xff]
    %v149 = vld [vmem:[%s2 + $0x1a8] sm:$0xff]
    %v150 = vld [vmem:[%s2 + $0x1b0] sm:$0xff]
    %v151 = vld [vmem:[%s2 + $0x1b8] sm:$0xff]
    %v152 = vld [vmem:[%s2 + $0x1c0] sm:$0xff]
    %v153 = vld [vmem:[%s2 + $0x1c8] sm:$0xff]
    %v154 = vld [vmem:[%s2 + $0x1d0] sm:$0xff]
    %v155 = vld [vmem:[%s2 + $0x1d8] sm:$0xff]
    %v156 = vld [vmem:[%s2 + $0x1e0] sm:$0xff]
    %v157 = vld [vmem:[%s2 + $0x1e8] sm:$0xff]
    %v158 = vld [vmem:[%s2 + $0x1f0] sm:$0xff]
    %v159 = vld [vmem:[%s2 + $0x1f8] sm:$0xff]
    %161 = vset.pattern.permute.xlu0 0
    %162 = vperm.xlu0 %161, %v96
    %v163 = vpop.permute.xlu0 %162
    %166 = vset.pattern.permute.xlu0 0
    %167 = vperm.xlu0 %166, %v97
    %v168 = vpop.permute.xlu0 %167
    %171 = vset.pattern.permute.xlu0 0
    %172 = vperm.xlu0 %171, %v98
    %v173 = vpop.permute.xlu0 %172
    %176 = vset.pattern.permute.xlu0 0
    %177 = vperm.xlu0 %176, %v99
    %v178 = vpop.permute.xlu0 %177
    %181 = vset.pattern.permute.xlu0 0
    %182 = vperm.xlu0 %181, %v100
    %v183 = vpop.permute.xlu0 %182
    %186 = vset.pattern.permute.xlu0 0
    %187 = vperm.xlu0 %186, %v101
    %v188 = vpop.permute.xlu0 %187
    %191 = vset.pattern.permute.xlu0 0
    %192 = vperm.xlu0 %191, %v102
    %v193 = vpop.permute.xlu0 %192
    %196 = vset.pattern.permute.xlu0 0
    %197 = vperm.xlu0 %196, %v103
    %v198 = vpop.permute.xlu0 %197
    %201 = vset.pattern.permute.xlu0 0
    %202 = vperm.xlu0 %201, %v104
    %v203 = vpop.permute.xlu0 %202
    %206 = vset.pattern.permute.xlu0 0
    %207 = vperm.xlu0 %206, %v105
    %v208 = vpop.permute.xlu0 %207
    %211 = vset.pattern.permute.xlu0 0
    %212 = vperm.xlu0 %211, %v106
    %v213 = vpop.permute.xlu0 %212
    %216 = vset.pattern.permute.xlu0 0
    %217 = vperm.xlu0 %216, %v107
    %v218 = vpop.permute.xlu0 %217
    %221 = vset.pattern.permute.xlu0 0
    %222 = vperm.xlu0 %221, %v108
    %v223 = vpop.permute.xlu0 %222
    %226 = vset.pattern.permute.xlu0 0
    %227 = vperm.xlu0 %226, %v109
    %v228 = vpop.permute.xlu0 %227
    %231 = vset.pattern.permute.xlu0 0
    %232 = vperm.xlu0 %231, %v110
    %v233 = vpop.permute.xlu0 %232
    %236 = vset.pattern.permute.xlu0 0
    %237 = vperm.xlu0 %236, %v111
    %v238 = vpop.permute.xlu0 %237
    %241 = vset.pattern.permute.xlu0 0
    %242 = vperm.xlu0 %241, %v112
    %v243 = vpop.permute.xlu0 %242
    %246 = vset.pattern.permute.xlu0 0
    %247 = vperm.xlu0 %246, %v113
    %v248 = vpop.permute.xlu0 %247
    %251 = vset.pattern.permute.xlu0 0
    %252 = vperm.xlu0 %251, %v114
    %v253 = vpop.permute.xlu0 %252
    %256 = vset.pattern.permute.xlu0 0
    %257 = vperm.xlu0 %256, %v115
    %v258 = vpop.permute.xlu0 %257
    %261 = vset.pattern.permute.xlu0 0
    %262 = vperm.xlu0 %261, %v116
    %v263 = vpop.permute.xlu0 %262
    %266 = vset.pattern.permute.xlu0 0
    %267 = vperm.xlu0 %266, %v117
    %v268 = vpop.permute.xlu0 %267
    %271 = vset.pattern.permute.xlu0 0
    %272 = vperm.xlu0 %271, %v118
    %v273 = vpop.permute.xlu0 %272
    %276 = vset.pattern.permute.xlu0 0
    %277 = vperm.xlu0 %276, %v119
    %v278 = vpop.permute.xlu0 %277
    %281 = vset.pattern.permute.xlu0 0
    %282 = vperm.xlu0 %281, %v120
    %v283 = vpop.permute.xlu0 %282
    %286 = vset.pattern.permute.xlu0 0
    %287 = vperm.xlu0 %286, %v121
    %v288 = vpop.permute.xlu0 %287
    %291 = vset.pattern.permute.xlu0 0
    %292 = vperm.xlu0 %291, %v122
    %v293 = vpop.permute.xlu0 %292
    %296 = vset.pattern.permute.xlu0 0
    %297 = vperm.xlu0 %296, %v123
    %v298 = vpop.permute.xlu0 %297
    %301 = vset.pattern.permute.xlu0 0
    %302 = vperm.xlu0 %301, %v124
    %v303 = vpop.permute.xlu0 %302
    %306 = vset.pattern.permute.xlu0 0
    %307 = vperm.xlu0 %306, %v125
    %v308 = vpop.permute.xlu0 %307
    %311 = vset.pattern.permute.xlu0 0
    %312 = vperm.xlu0 %311, %v126
    %v313 = vpop.permute.xlu0 %312
    %316 = vset.pattern.permute.xlu0 0
    %317 = vperm.xlu0 %316, %v127
    %v318 = vpop.permute.xlu0 %317
    %321 = vset.pattern.permute.xlu0 0
    %322 = vperm.xlu0 %321, %v128
    %v323 = vpop.permute.xlu0 %322
    %326 = vset.pattern.permute.xlu0 0
    %327 = vperm.xlu0 %326, %v129
    %v328 = vpop.permute.xlu0 %327
    %331 = vset.pattern.permute.xlu0 0
    %332 = vperm.xlu0 %331, %v130
    %v333 = vpop.permute.xlu0 %332
    %336 = vset.pattern.permute.xlu0 0
    %337 = vperm.xlu0 %336, %v131
    %v338 = vpop.permute.xlu0 %337
    %341 = vset.pattern.permute.xlu0 0
    %342 = vperm.xlu0 %341, %v132
    %v343 = vpop.permute.xlu0 %342
    %346 = vset.pattern.permute.xlu0 0
    %347 = vperm.xlu0 %346, %v133
    %v348 = vpop.permute.xlu0 %347
    %351 = vset.pattern.permute.xlu0 0
    %352 = vperm.xlu0 %351, %v134
    %v353 = vpop.permute.xlu0 %352
    %356 = vset.pattern.permute.xlu0 0
    %357 = vperm.xlu0 %356, %v135
    %v358 = vpop.permute.xlu0 %357
    %361 = vset.pattern.permute.xlu0 0
    %362 = vperm.xlu0 %361, %v136
    %v363 = vpop.permute.xlu0 %362
    %366 = vset.pattern.permute.xlu0 0
    %367 = vperm.xlu0 %366, %v137
    %v368 = vpop.permute.xlu0 %367
    %371 = vset.pattern.permute.xlu0 0
    %372 = vperm.xlu0 %371, %v138
    %v373 = vpop.permute.xlu0 %372
    %376 = vset.pattern.permute.xlu0 0
    %377 = vperm.xlu0 %376, %v139
    %v378 = vpop.permute.xlu0 %377
    %381 = vset.pattern.permute.xlu0 0
    %382 = vperm.xlu0 %381, %v140
    %v383 = vpop.permute.xlu0 %382
    %386 = vset.pattern.permute.xlu0 0
    %387 = vperm.xlu0 %386, %v141
    %v388 = vpop.permute.xlu0 %387
    %391 = vset.pattern.permute.xlu0 0
    %392 = vperm.xlu0 %391, %v142
    %v393 = vpop.permute.xlu0 %392
    %396 = vset.pattern.permute.xlu0 0
    %397 = vperm.xlu0 %396, %v143
    %v398 = vpop.permute.xlu0 %397
    %401 = vset.pattern.permute.xlu0 0
    %402 = vperm.xlu0 %401, %v144
    %v403 = vpop.permute.xlu0 %402
    %406 = vset.pattern.permute.xlu0 0
    %407 = vperm.xlu0 %406, %v145
    %v408 = vpop.permute.xlu0 %407
    %411 = vset.pattern.permute.xlu0 0
    %412 = vperm.xlu0 %411, %v146
    %v413 = vpop.permute.xlu0 %412
    %416 = vset.pattern.permute.xlu0 0
    %417 = vperm.xlu0 %416, %v147
    %v418 = vpop.permute.xlu0 %417
    %421 = vset.pattern.permute.xlu0 0
    %422 = vperm.xlu0 %421, %v148
    %v423 = vpop.permute.xlu0 %422
    %426 = vset.pattern.permute.xlu0 0
    %427 = vperm.xlu0 %426, %v149
    %v428 = vpop.permute.xlu0 %427
    %431 = vset.pattern.permute.xlu0 0
    %432 = vperm.xlu0 %431, %v150
    %v433 = vpop.permute.xlu0 %432
    %436 = vset.pattern.permute.xlu0 0
    %437 = vperm.xlu0 %436, %v151
    %v438 = vpop.permute.xlu0 %437
    %441 = vset.pattern.permute.xlu0 0
    %442 = vperm.xlu0 %441, %v152
    %v443 = vpop.permute.xlu0 %442
    %446 = vset.pattern.permute.xlu0 0
    %447 = vperm.xlu0 %446, %v153
    %v448 = vpop.permute.xlu0 %447
    %451 = vset.pattern.permute.xlu0 0
    %452 = vperm.xlu0 %451, %v154
    %v453 = vpop.permute.xlu0 %452
    %456 = vset.pattern.permute.xlu0 0
    %457 = vperm.xlu0 %456, %v155
    %v458 = vpop.permute.xlu0 %457
    %461 = vset.pattern.permute.xlu0 0
    %462 = vperm.xlu0 %461, %v156
    %v463 = vpop.permute.xlu0 %462
    %466 = vset.pattern.permute.xlu0 0
    %467 = vperm.xlu0 %466, %v157
    %v468 = vpop.permute.xlu0 %467
    %471 = vset.pattern.permute.xlu0 0
    %472 = vperm.xlu0 %471, %v158
    %v473 = vpop.permute.xlu0 %472
    %476 = vset.pattern.permute.xlu0 0
    %477 = vperm.xlu0 %476, %v159
    %v478 = vpop.permute.xlu0 %477
    %vm480 = vcmask 261120
    %v482 = vsel %vm480, %v32, 0
    %v485 = vsel %vm480, %v33, 0
    %v488 = vsel %vm480, %v34, 0
    %v491 = vsel %vm480, %v35, 0
    %v494 = vsel %vm480, %v36, 0
    %v497 = vsel %vm480, %v37, 0
    %v500 = vsel %vm480, %v38, 0
    %v503 = vsel %vm480, %v39, 0
    %v506 = vsel %vm480, %v40, 0
    %v509 = vsel %vm480, %v41, 0
    %v512 = vsel %vm480, %v42, 0
    %v515 = vsel %vm480, %v43, 0
    %v518 = vsel %vm480, %v44, 0
    %v521 = vsel %vm480, %v45, 0
    %v524 = vsel %vm480, %v46, 0
    %v527 = vsel %vm480, %v47, 0
    %v530 = vsel %vm480, %v48, 0
    %v533 = vsel %vm480, %v49, 0
    %v536 = vsel %vm480, %v50, 0
    %v539 = vsel %vm480, %v51, 0
    %v542 = vsel %vm480, %v52, 0
    %v545 = vsel %vm480, %v53, 0
    %v548 = vsel %vm480, %v54, 0
    %v551 = vsel %vm480, %v55, 0
    %v554 = vsel %vm480, %v56, 0
    %v557 = vsel %vm480, %v57, 0
    %v560 = vsel %vm480, %v58, 0
    %v563 = vsel %vm480, %v59, 0
    %v566 = vsel %vm480, %v60, 0
    %v569 = vsel %vm480, %v61, 0
    %v572 = vsel %vm480, %v62, 0
    %v575 = vsel %vm480, %v63, 0
    %v578 = vsel %vm480, %v64, 0
    %v581 = vsel %vm480, %v65, 0
    %v584 = vsel %vm480, %v66, 0
    %v587 = vsel %vm480, %v67, 0
    %v590 = vsel %vm480, %v68, 0
    %v593 = vsel %vm480, %v69, 0
    %v596 = vsel %vm480, %v70, 0
    %v599 = vsel %vm480, %v71, 0
    %v602 = vsel %vm480, %v72, 0
    %v605 = vsel %vm480, %v73, 0
    %v608 = vsel %vm480, %v74, 0
    %v611 = vsel %vm480, %v75, 0
    %v614 = vsel %vm480, %v76, 0
    %v617 = vsel %vm480, %v77, 0
    %v620 = vsel %vm480, %v78, 0
    %v623 = vsel %vm480, %v79, 0
    %v626 = vsel %vm480, %v80, 0
    %v629 = vsel %vm480, %v81, 0
    %v632 = vsel %vm480, %v82, 0
    %v635 = vsel %vm480, %v83, 0
    %v638 = vsel %vm480, %v84, 0
    %v641 = vsel %vm480, %v85, 0
    %v644 = vsel %vm480, %v86, 0
    %v647 = vsel %vm480, %v87, 0
    %v650 = vsel %vm480, %v88, 0
    %v653 = vsel %vm480, %v89, 0
    %v656 = vsel %vm480, %v90, 0
    %v659 = vsel %vm480, %v91, 0
    %v662 = vsel %vm480, %v92, 0
    %v665 = vsel %vm480, %v93, 0
    %v668 = vsel %vm480, %v94, 0
    %v671 = vsel %vm480, %v95, 0
    %673 = vmatpush.msra.mxu0 0.0
    %674 = vmatpush.msra.mxu0 0.0
    %675 = vmatpush.msra.mxu0 0.0
    %676 = vmatpush.msra.mxu0 0.0
    %677 = vmatpush.msra.mxu0 0.0
    %678 = vmatpush.msra.mxu0 0.0
    %679 = vmatpush.msra.mxu0 0.0
    %680 = vmatpush.msra.mxu0 0.0
    %681 = vmatpush.msra.mxu0 0.0
    %682 = vmatpush.msra.mxu0 0.0
    %683 = vmatpush.msra.mxu0 0.0
    %684 = vmatpush.msra.mxu0 0.0
    %v685 = vand.u32 %v31, 4294901760
    %686 = vmatpush.msra.mxu0 %v685
    %v687 = vand.u32 %v30, 4294901760
    %688 = vmatpush.msra.mxu0 %v687
    %v689 = vand.u32 %v29, 4294901760
    %690 = vmatpush.msra.mxu0 %v689
    %v691 = vand.u32 %v28, 4294901760
    %692 = vmatpush.msra.mxu0 %v691
    %v693 = vand.u32 %v482, 4294901760
    %v694 = vsub.f32 %v482, %v693
    %v695 = vand.u32 %v694, 4294901760
    %v696 = vsub.f32 %v694, %v695
    %v697 = vand.u32 %v696, 4294901760
    %698 = vmatmul.f32.gmra.mxu0 %v697
    %v699 = vpop.f32.mrf.mxu0
    %v700 = vadd.f32 %v163, %v699
    %v701 = vand.u32 %v485, 4294901760
    %v702 = vsub.f32 %v485, %v701
    %v703 = vand.u32 %v702, 4294901760
    %v704 = vsub.f32 %v702, %v703
    %v705 = vand.u32 %v704, 4294901760
    %706 = vmatmul.f32.gmra.mxu0 %v705
    %v707 = vpop.f32.mrf.mxu0
    %v708 = vadd.f32 %v168, %v707
    %v709 = vand.u32 %v488, 4294901760
    %v710 = vsub.f32 %v488, %v709
    %v711 = vand.u32 %v710, 4294901760
    %v712 = vsub.f32 %v710, %v711
    %v713 = vand.u32 %v712, 4294901760
    %714 = vmatmul.f32.gmra.mxu0 %v713
    %v715 = vpop.f32.mrf.mxu0
    %v716 = vadd.f32 %v173, %v715
    %v717 = vand.u32 %v491, 4294901760
    %v718 = vsub.f32 %v491, %v717
    %v719 = vand.u32 %v718, 4294901760
    %v720 = vsub.f32 %v718, %v719
    %v721 = vand.u32 %v720, 4294901760
    %722 = vmatmul.f32.gmra.mxu0 %v721
    %v723 = vpop.f32.mrf.mxu0
    %v724 = vadd.f32 %v178, %v723
    %v725 = vand.u32 %v494, 4294901760
    %v726 = vsub.f32 %v494, %v725
    %v727 = vand.u32 %v726, 4294901760
    %v728 = vsub.f32 %v726, %v727
    %v729 = vand.u32 %v728, 4294901760
    %730 = vmatmul.f32.gmra.mxu0 %v729
    %v731 = vpop.f32.mrf.mxu0
    %v732 = vadd.f32 %v183, %v731
    %v733 = vand.u32 %v497, 4294901760
    %v734 = vsub.f32 %v497, %v733
    %v735 = vand.u32 %v734, 4294901760
    %v736 = vsub.f32 %v734, %v735
    %v737 = vand.u32 %v736, 4294901760
    %738 = vmatmul.f32.gmra.mxu0 %v737
    %v739 = vpop.f32.mrf.mxu0
    %v740 = vadd.f32 %v188, %v739
    %v741 = vand.u32 %v500, 4294901760
    %v742 = vsub.f32 %v500, %v741
    %v743 = vand.u32 %v742, 4294901760
    %v744 = vsub.f32 %v742, %v743
    %v745 = vand.u32 %v744, 4294901760
    %746 = vmatmul.f32.gmra.mxu0 %v745
    %v747 = vpop.f32.mrf.mxu0
    %v748 = vadd.f32 %v193, %v747
    %v749 = vand.u32 %v503, 4294901760
    %v750 = vsub.f32 %v503, %v749
    %v751 = vand.u32 %v750, 4294901760
    %v752 = vsub.f32 %v750, %v751
    %v753 = vand.u32 %v752, 4294901760
    %754 = vmatmul.f32.gmra.mxu0 %v753
    %v755 = vpop.f32.mrf.mxu0
    %v756 = vadd.f32 %v198, %v755
    %v757 = vand.u32 %v506, 4294901760
    %v758 = vsub.f32 %v506, %v757
    %v759 = vand.u32 %v758, 4294901760
    %v760 = vsub.f32 %v758, %v759
    %v761 = vand.u32 %v760, 4294901760
    %762 = vmatmul.f32.gmra.mxu0 %v761
    %v763 = vpop.f32.mrf.mxu0
    %v764 = vadd.f32 %v203, %v763
    %v765 = vand.u32 %v509, 4294901760
    %v766 = vsub.f32 %v509, %v765
    %v767 = vand.u32 %v766, 4294901760
    %v768 = vsub.f32 %v766, %v767
    %v769 = vand.u32 %v768, 4294901760
    %770 = vmatmul.f32.gmra.mxu0 %v769
    %v771 = vpop.f32.mrf.mxu0
    %v772 = vadd.f32 %v208, %v771
    %v773 = vand.u32 %v512, 4294901760
    %v774 = vsub.f32 %v512, %v773
    %v775 = vand.u32 %v774, 4294901760
    %v776 = vsub.f32 %v774, %v775
    %v777 = vand.u32 %v776, 4294901760
    %778 = vmatmul.f32.gmra.mxu0 %v777
    %v779 = vpop.f32.mrf.mxu0
    %v780 = vadd.f32 %v213, %v779
    %v781 = vand.u32 %v515, 4294901760
    %v782 = vsub.f32 %v515, %v781
    %v783 = vand.u32 %v782, 4294901760
    %v784 = vsub.f32 %v782, %v783
    %v785 = vand.u32 %v784, 4294901760
    %786 = vmatmul.f32.gmra.mxu0 %v785
    %v787 = vpop.f32.mrf.mxu0
    %v788 = vadd.f32 %v218, %v787
    %v789 = vand.u32 %v518, 4294901760
    %v790 = vsub.f32 %v518, %v789
    %v791 = vand.u32 %v790, 4294901760
    %v792 = vsub.f32 %v790, %v791
    %v793 = vand.u32 %v792, 4294901760
    %794 = vmatmul.f32.gmra.mxu0 %v793
    %v795 = vpop.f32.mrf.mxu0
    %v796 = vadd.f32 %v223, %v795
    %v797 = vand.u32 %v521, 4294901760
    %v798 = vsub.f32 %v521, %v797
    %v799 = vand.u32 %v798, 4294901760
    %v800 = vsub.f32 %v798, %v799
    %v801 = vand.u32 %v800, 4294901760
    %802 = vmatmul.f32.gmra.mxu0 %v801
    %v803 = vpop.f32.mrf.mxu0
    %v804 = vadd.f32 %v228, %v803
    %v805 = vand.u32 %v524, 4294901760
    %v806 = vsub.f32 %v524, %v805
    %v807 = vand.u32 %v806, 4294901760
    %v808 = vsub.f32 %v806, %v807
    %v809 = vand.u32 %v808, 4294901760
    %810 = vmatmul.f32.gmra.mxu0 %v809
    %v811 = vpop.f32.mrf.mxu0
    %v812 = vadd.f32 %v233, %v811
    %v813 = vand.u32 %v527, 4294901760
    %v814 = vsub.f32 %v527, %v813
    %v815 = vand.u32 %v814, 4294901760
    %v816 = vsub.f32 %v814, %v815
    %v817 = vand.u32 %v816, 4294901760
    %818 = vmatmul.f32.gmra.mxu0 %v817
    %v819 = vpop.f32.mrf.mxu0
    %v820 = vadd.f32 %v238, %v819
    %v821 = vand.u32 %v530, 4294901760
    %v822 = vsub.f32 %v530, %v821
    %v823 = vand.u32 %v822, 4294901760
    %v824 = vsub.f32 %v822, %v823
    %v825 = vand.u32 %v824, 4294901760
    %826 = vmatmul.f32.gmra.mxu0 %v825
    %v827 = vpop.f32.mrf.mxu0
    %v828 = vadd.f32 %v243, %v827
    %v829 = vand.u32 %v533, 4294901760
    %v830 = vsub.f32 %v533, %v829
    %v831 = vand.u32 %v830, 4294901760
    %v832 = vsub.f32 %v830, %v831
    %v833 = vand.u32 %v832, 4294901760
    %834 = vmatmul.f32.gmra.mxu0 %v833
    %v835 = vpop.f32.mrf.mxu0
    %v836 = vadd.f32 %v248, %v835
    %v837 = vand.u32 %v536, 4294901760
    %v838 = vsub.f32 %v536, %v837
    %v839 = vand.u32 %v838, 4294901760
    %v840 = vsub.f32 %v838, %v839
    %v841 = vand.u32 %v840, 4294901760
    %842 = vmatmul.f32.gmra.mxu0 %v841
    %v843 = vpop.f32.mrf.mxu0
    %v844 = vadd.f32 %v253, %v843
    %v845 = vand.u32 %v539, 4294901760
    %v846 = vsub.f32 %v539, %v845
    %v847 = vand.u32 %v846, 4294901760
    %v848 = vsub.f32 %v846, %v847
    %v849 = vand.u32 %v848, 4294901760
    %850 = vmatmul.f32.gmra.mxu0 %v849
    %v851 = vpop.f32.mrf.mxu0
    %v852 = vadd.f32 %v258, %v851
    %v853 = vand.u32 %v542, 4294901760
    %v854 = vsub.f32 %v542, %v853
    %v855 = vand.u32 %v854, 4294901760
    %v856 = vsub.f32 %v854, %v855
    %v857 = vand.u32 %v856, 4294901760
    %858 = vmatmul.f32.gmra.mxu0 %v857
    %v859 = vpop.f32.mrf.mxu0
    %v860 = vadd.f32 %v263, %v859
    %v861 = vand.u32 %v545, 4294901760
    %v862 = vsub.f32 %v545, %v861
    %v863 = vand.u32 %v862, 4294901760
    %v864 = vsub.f32 %v862, %v863
    %v865 = vand.u32 %v864, 4294901760
    %866 = vmatmul.f32.gmra.mxu0 %v865
    %v867 = vpop.f32.mrf.mxu0
    %v868 = vadd.f32 %v268, %v867
    %v869 = vand.u32 %v548, 4294901760
    %v870 = vsub.f32 %v548, %v869
    %v871 = vand.u32 %v870, 4294901760
    %v872 = vsub.f32 %v870, %v871
    %v873 = vand.u32 %v872, 4294901760
    %874 = vmatmul.f32.gmra.mxu0 %v873
    %v875 = vpop.f32.mrf.mxu0
    %v876 = vadd.f32 %v273, %v875
    %v877 = vand.u32 %v551, 4294901760
    %v878 = vsub.f32 %v551, %v877
    %v879 = vand.u32 %v878, 4294901760
    %v880 = vsub.f32 %v878, %v879
    %v881 = vand.u32 %v880, 4294901760
    %882 = vmatmul.f32.gmra.mxu0 %v881
    %v883 = vpop.f32.mrf.mxu0
    %v884 = vadd.f32 %v278, %v883
    %v885 = vand.u32 %v554, 4294901760
    %v886 = vsub.f32 %v554, %v885
    %v887 = vand.u32 %v886, 4294901760
    %v888 = vsub.f32 %v886, %v887
    %v889 = vand.u32 %v888, 4294901760
    %890 = vmatmul.f32.gmra.mxu0 %v889
    %v891 = vpop.f32.mrf.mxu0
    %v892 = vadd.f32 %v283, %v891
    %v893 = vand.u32 %v557, 4294901760
    %v894 = vsub.f32 %v557, %v893
    %v895 = vand.u32 %v894, 4294901760
    %v896 = vsub.f32 %v894, %v895
    %v897 = vand.u32 %v896, 4294901760
    %898 = vmatmul.f32.gmra.mxu0 %v897
    %v899 = vpop.f32.mrf.mxu0
    %v900 = vadd.f32 %v288, %v899
    %v901 = vand.u32 %v560, 4294901760
    %v902 = vsub.f32 %v560, %v901
    %v903 = vand.u32 %v902, 4294901760
    %v904 = vsub.f32 %v902, %v903
    %v905 = vand.u32 %v904, 4294901760
    %906 = vmatmul.f32.gmra.mxu0 %v905
    %v907 = vpop.f32.mrf.mxu0
    %v908 = vadd.f32 %v293, %v907
    %v909 = vand.u32 %v563, 4294901760
    %v910 = vsub.f32 %v563, %v909
    %v911 = vand.u32 %v910, 4294901760
    %v912 = vsub.f32 %v910, %v911
    %v913 = vand.u32 %v912, 4294901760
    %914 = vmatmul.f32.gmra.mxu0 %v913
    %v915 = vpop.f32.mrf.mxu0
    %v916 = vadd.f32 %v298, %v915
    %v917 = vand.u32 %v566, 4294901760
    %v918 = vsub.f32 %v566, %v917
    %v919 = vand.u32 %v918, 4294901760
    %v920 = vsub.f32 %v918, %v919
    %v921 = vand.u32 %v920, 4294901760
    %922 = vmatmul.f32.gmra.mxu0 %v921
    %v923 = vpop.f32.mrf.mxu0
    %v924 = vadd.f32 %v303, %v923
    %v925 = vand.u32 %v569, 4294901760
    %v926 = vsub.f32 %v569, %v925
    %v927 = vand.u32 %v926, 4294901760
    %v928 = vsub.f32 %v926, %v927
    %v929 = vand.u32 %v928, 4294901760
    %930 = vmatmul.f32.gmra.mxu0 %v929
    %v931 = vpop.f32.mrf.mxu0
    %v932 = vadd.f32 %v308, %v931
    %v933 = vand.u32 %v572, 4294901760
    %v934 = vsub.f32 %v572, %v933
    %v935 = vand.u32 %v934, 4294901760
    %v936 = vsub.f32 %v934, %v935
    %v937 = vand.u32 %v936, 4294901760
    %938 = vmatmul.f32.gmra.mxu0 %v937
    %v939 = vpop.f32.mrf.mxu0
    %v940 = vadd.f32 %v313, %v939
    %v941 = vand.u32 %v575, 4294901760
    %v942 = vsub.f32 %v575, %v941
    %v943 = vand.u32 %v942, 4294901760
    %v944 = vsub.f32 %v942, %v943
    %v945 = vand.u32 %v944, 4294901760
    %946 = vmatmul.f32.gmra.mxu0 %v945
    %v947 = vpop.f32.mrf.mxu0
    %v948 = vadd.f32 %v318, %v947
    %v949 = vand.u32 %v578, 4294901760
    %v950 = vsub.f32 %v578, %v949
    %v951 = vand.u32 %v950, 4294901760
    %v952 = vsub.f32 %v950, %v951
    %v953 = vand.u32 %v952, 4294901760
    %954 = vmatmul.f32.gmra.mxu0 %v953
    %v955 = vpop.f32.mrf.mxu0
    %v956 = vadd.f32 %v323, %v955
    %v957 = vand.u32 %v581, 4294901760
    %v958 = vsub.f32 %v581, %v957
    %v959 = vand.u32 %v958, 4294901760
    %v960 = vsub.f32 %v958, %v959
    %v961 = vand.u32 %v960, 4294901760
    %962 = vmatmul.f32.gmra.mxu0 %v961
    %v963 = vpop.f32.mrf.mxu0
    %v964 = vadd.f32 %v328, %v963
    %v965 = vand.u32 %v584, 4294901760
    %v966 = vsub.f32 %v584, %v965
    %v967 = vand.u32 %v966, 4294901760
    %v968 = vsub.f32 %v966, %v967
    %v969 = vand.u32 %v968, 4294901760
    %970 = vmatmul.f32.gmra.mxu0 %v969
    %v971 = vpop.f32.mrf.mxu0
    %v972 = vadd.f32 %v333, %v971
    %v973 = vand.u32 %v587, 4294901760
    %v974 = vsub.f32 %v587, %v973
    %v975 = vand.u32 %v974, 4294901760
    %v976 = vsub.f32 %v974, %v975
    %v977 = vand.u32 %v976, 4294901760
    %978 = vmatmul.f32.gmra.mxu0 %v977
    %v979 = vpop.f32.mrf.mxu0
    %v980 = vadd.f32 %v338, %v979
    %v981 = vand.u32 %v590, 4294901760
    %v982 = vsub.f32 %v590, %v981
    %v983 = vand.u32 %v982, 4294901760
    %v984 = vsub.f32 %v982, %v983
    %v985 = vand.u32 %v984, 4294901760
    %986 = vmatmul.f32.gmra.mxu0 %v985
    %v987 = vpop.f32.mrf.mxu0
    %v988 = vadd.f32 %v343, %v987
    %v989 = vand.u32 %v593, 4294901760
    %v990 = vsub.f32 %v593, %v989
    %v991 = vand.u32 %v990, 4294901760
    %v992 = vsub.f32 %v990, %v991
    %v993 = vand.u32 %v992, 4294901760
    %994 = vmatmul.f32.gmra.mxu0 %v993
    %v995 = vpop.f32.mrf.mxu0
    %v996 = vadd.f32 %v348, %v995
    %v997 = vand.u32 %v596, 4294901760
    %v998 = vsub.f32 %v596, %v997
    %v999 = vand.u32 %v998, 4294901760
    %v1000 = vsub.f32 %v998, %v999
    %v1001 = vand.u32 %v1000, 4294901760
    %1002 = vmatmul.f32.gmra.mxu0 %v1001
    %v1003 = vpop.f32.mrf.mxu0
    %v1004 = vadd.f32 %v353, %v1003
    %v1005 = vand.u32 %v599, 4294901760
    %v1006 = vsub.f32 %v599, %v1005
    %v1007 = vand.u32 %v1006, 4294901760
    %v1008 = vsub.f32 %v1006, %v1007
    %v1009 = vand.u32 %v1008, 4294901760
    %1010 = vmatmul.f32.gmra.mxu0 %v1009
    %v1011 = vpop.f32.mrf.mxu0
    %v1012 = vadd.f32 %v358, %v1011
    %v1013 = vand.u32 %v602, 4294901760
    %v1014 = vsub.f32 %v602, %v1013
    %v1015 = vand.u32 %v1014, 4294901760
    %v1016 = vsub.f32 %v1014, %v1015
    %v1017 = vand.u32 %v1016, 4294901760
    %1018 = vmatmul.f32.gmra.mxu0 %v1017
    %v1019 = vpop.f32.mrf.mxu0
    %v1020 = vadd.f32 %v363, %v1019
    %v1021 = vand.u32 %v605, 4294901760
    %v1022 = vsub.f32 %v605, %v1021
    %v1023 = vand.u32 %v1022, 4294901760
    %v1024 = vsub.f32 %v1022, %v1023
    %v1025 = vand.u32 %v1024, 4294901760
    %1026 = vmatmul.f32.gmra.mxu0 %v1025
    %v1027 = vpop.f32.mrf.mxu0
    %v1028 = vadd.f32 %v368, %v1027
    %v1029 = vand.u32 %v608, 4294901760
    %v1030 = vsub.f32 %v608, %v1029
    %v1031 = vand.u32 %v1030, 4294901760
    %v1032 = vsub.f32 %v1030, %v1031
    %v1033 = vand.u32 %v1032, 4294901760
    %1034 = vmatmul.f32.gmra.mxu0 %v1033
    %v1035 = vpop.f32.mrf.mxu0
    %v1036 = vadd.f32 %v373, %v1035
    %v1037 = vand.u32 %v611, 4294901760
    %v1038 = vsub.f32 %v611, %v1037
    %v1039 = vand.u32 %v1038, 4294901760
    %v1040 = vsub.f32 %v1038, %v1039
    %v1041 = vand.u32 %v1040, 4294901760
    %1042 = vmatmul.f32.gmra.mxu0 %v1041
    %v1043 = vpop.f32.mrf.mxu0
    %v1044 = vadd.f32 %v378, %v1043
    %v1045 = vand.u32 %v614, 4294901760
    %v1046 = vsub.f32 %v614, %v1045
    %v1047 = vand.u32 %v1046, 4294901760
    %v1048 = vsub.f32 %v1046, %v1047
    %v1049 = vand.u32 %v1048, 4294901760
    %1050 = vmatmul.f32.gmra.mxu0 %v1049
    %v1051 = vpop.f32.mrf.mxu0
    %v1052 = vadd.f32 %v383, %v1051
    %v1053 = vand.u32 %v617, 4294901760
    %v1054 = vsub.f32 %v617, %v1053
    %v1055 = vand.u32 %v1054, 4294901760
    %v1056 = vsub.f32 %v1054, %v1055
    %v1057 = vand.u32 %v1056, 4294901760
    %1058 = vmatmul.f32.gmra.mxu0 %v1057
    %v1059 = vpop.f32.mrf.mxu0
    %v1060 = vadd.f32 %v388, %v1059
    %v1061 = vand.u32 %v620, 4294901760
    %v1062 = vsub.f32 %v620, %v1061
    %v1063 = vand.u32 %v1062, 4294901760
    %v1064 = vsub.f32 %v1062, %v1063
    %v1065 = vand.u32 %v1064, 4294901760
    %1066 = vmatmul.f32.gmra.mxu0 %v1065
    %v1067 = vpop.f32.mrf.mxu0
    %v1068 = vadd.f32 %v393, %v1067
    %v1069 = vand.u32 %v623, 4294901760
    %v1070 = vsub.f32 %v623, %v1069
    %v1071 = vand.u32 %v1070, 4294901760
    %v1072 = vsub.f32 %v1070, %v1071
    %v1073 = vand.u32 %v1072, 4294901760
    %1074 = vmatmul.f32.gmra.mxu0 %v1073
    %v1075 = vpop.f32.mrf.mxu0
    %v1076 = vadd.f32 %v398, %v1075
    %v1077 = vand.u32 %v626, 4294901760
    %v1078 = vsub.f32 %v626, %v1077
    %v1079 = vand.u32 %v1078, 4294901760
    %v1080 = vsub.f32 %v1078, %v1079
    %v1081 = vand.u32 %v1080, 4294901760
    %1082 = vmatmul.f32.gmra.mxu0 %v1081
    %v1083 = vpop.f32.mrf.mxu0
    %v1084 = vadd.f32 %v403, %v1083
    %v1085 = vand.u32 %v629, 4294901760
    %v1086 = vsub.f32 %v629, %v1085
    %v1087 = vand.u32 %v1086, 4294901760
    %v1088 = vsub.f32 %v1086, %v1087
    %v1089 = vand.u32 %v1088, 4294901760
    %1090 = vmatmul.f32.gmra.mxu0 %v1089
    %v1091 = vpop.f32.mrf.mxu0
    %v1092 = vadd.f32 %v408, %v1091
    %v1093 = vand.u32 %v632, 4294901760
    %v1094 = vsub.f32 %v632, %v1093
    %v1095 = vand.u32 %v1094, 4294901760
    %v1096 = vsub.f32 %v1094, %v1095
    %v1097 = vand.u32 %v1096, 4294901760
    %1098 = vmatmul.f32.gmra.mxu0 %v1097
    %v1099 = vpop.f32.mrf.mxu0
    %v1100 = vadd.f32 %v413, %v1099
    %v1101 = vand.u32 %v635, 4294901760
    %v1102 = vsub.f32 %v635, %v1101
    %v1103 = vand.u32 %v1102, 4294901760
    %v1104 = vsub.f32 %v1102, %v1103
    %v1105 = vand.u32 %v1104, 4294901760
    %1106 = vmatmul.f32.gmra.mxu0 %v1105
    %v1107 = vpop.f32.mrf.mxu0
    %v1108 = vadd.f32 %v418, %v1107
    %v1109 = vand.u32 %v638, 4294901760
    %v1110 = vsub.f32 %v638, %v1109
    %v1111 = vand.u32 %v1110, 4294901760
    %v1112 = vsub.f32 %v1110, %v1111
    %v1113 = vand.u32 %v1112, 4294901760
    %1114 = vmatmul.f32.gmra.mxu0 %v1113
    %v1115 = vpop.f32.mrf.mxu0
    %v1116 = vadd.f32 %v423, %v1115
    %v1117 = vand.u32 %v641, 4294901760
    %v1118 = vsub.f32 %v641, %v1117
    %v1119 = vand.u32 %v1118, 4294901760
    %v1120 = vsub.f32 %v1118, %v1119
    %v1121 = vand.u32 %v1120, 4294901760
    %1122 = vmatmul.f32.gmra.mxu0 %v1121
    %v1123 = vpop.f32.mrf.mxu0
    %v1124 = vadd.f32 %v428, %v1123
    %v1125 = vand.u32 %v644, 4294901760
    %v1126 = vsub.f32 %v644, %v1125
    %v1127 = vand.u32 %v1126, 4294901760
    %v1128 = vsub.f32 %v1126, %v1127
    %v1129 = vand.u32 %v1128, 4294901760
    %1130 = vmatmul.f32.gmra.mxu0 %v1129
    %v1131 = vpop.f32.mrf.mxu0
    %v1132 = vadd.f32 %v433, %v1131
    %v1133 = vand.u32 %v647, 4294901760
    %v1134 = vsub.f32 %v647, %v1133
    %v1135 = vand.u32 %v1134, 4294901760
    %v1136 = vsub.f32 %v1134, %v1135
    %v1137 = vand.u32 %v1136, 4294901760
    %1138 = vmatmul.f32.gmra.mxu0 %v1137
    %v1139 = vpop.f32.mrf.mxu0
    %v1140 = vadd.f32 %v438, %v1139
    %v1141 = vand.u32 %v650, 4294901760
    %v1142 = vsub.f32 %v650, %v1141
    %v1143 = vand.u32 %v1142, 4294901760
    %v1144 = vsub.f32 %v1142, %v1143
    %v1145 = vand.u32 %v1144, 4294901760
    %1146 = vmatmul.f32.gmra.mxu0 %v1145
    %v1147 = vpop.f32.mrf.mxu0
    %v1148 = vadd.f32 %v443, %v1147
    %v1149 = vand.u32 %v653, 4294901760
    %v1150 = vsub.f32 %v653, %v1149
    %v1151 = vand.u32 %v1150, 4294901760
    %v1152 = vsub.f32 %v1150, %v1151
    %v1153 = vand.u32 %v1152, 4294901760
    %1154 = vmatmul.f32.gmra.mxu0 %v1153
    %v1155 = vpop.f32.mrf.mxu0
    %v1156 = vadd.f32 %v448, %v1155
    %v1157 = vand.u32 %v656, 4294901760
    %v1158 = vsub.f32 %v656, %v1157
    %v1159 = vand.u32 %v1158, 4294901760
    %v1160 = vsub.f32 %v1158, %v1159
    %v1161 = vand.u32 %v1160, 4294901760
    %1162 = vmatmul.f32.gmra.mxu0 %v1161
    %v1163 = vpop.f32.mrf.mxu0
    %v1164 = vadd.f32 %v453, %v1163
    %v1165 = vand.u32 %v659, 4294901760
    %v1166 = vsub.f32 %v659, %v1165
    %v1167 = vand.u32 %v1166, 4294901760
    %v1168 = vsub.f32 %v1166, %v1167
    %v1169 = vand.u32 %v1168, 4294901760
    %1170 = vmatmul.f32.gmra.mxu0 %v1169
    %v1171 = vpop.f32.mrf.mxu0
    %v1172 = vadd.f32 %v458, %v1171
    %v1173 = vand.u32 %v662, 4294901760
    %v1174 = vsub.f32 %v662, %v1173
    %v1175 = vand.u32 %v1174, 4294901760
    %v1176 = vsub.f32 %v1174, %v1175
    %v1177 = vand.u32 %v1176, 4294901760
    %1178 = vmatmul.f32.gmra.mxu0 %v1177
    %v1179 = vpop.f32.mrf.mxu0
    %v1180 = vadd.f32 %v463, %v1179
    %v1181 = vand.u32 %v665, 4294901760
    %v1182 = vsub.f32 %v665, %v1181
    %v1183 = vand.u32 %v1182, 4294901760
    %v1184 = vsub.f32 %v1182, %v1183
    %v1185 = vand.u32 %v1184, 4294901760
    %1186 = vmatmul.f32.gmra.mxu0 %v1185
    %v1187 = vpop.f32.mrf.mxu0
    %v1188 = vadd.f32 %v468, %v1187
    %v1189 = vand.u32 %v668, 4294901760
    %v1190 = vsub.f32 %v668, %v1189
    %v1191 = vand.u32 %v1190, 4294901760
    %v1192 = vsub.f32 %v1190, %v1191
    %v1193 = vand.u32 %v1192, 4294901760
    %1194 = vmatmul.f32.gmra.mxu0 %v1193
    %v1195 = vpop.f32.mrf.mxu0
    %v1196 = vadd.f32 %v473, %v1195
    %v1197 = vand.u32 %v671, 4294901760
    %v1198 = vsub.f32 %v671, %v1197
    %v1199 = vand.u32 %v1198, 4294901760
    %v1200 = vsub.f32 %v1198, %v1199
    %v1201 = vand.u32 %v1200, 4294901760
    %1202 = vmatmul.f32.gmra.mxu0 %v1201
    %v1203 = vpop.f32.mrf.mxu0
    %v1204 = vadd.f32 %v478, %v1203
    %1205 = vdwg.mxu0
    %1206 = vmatpush.msra.mxu0 0.0
    %1207 = vmatpush.msra.mxu0 0.0
    %1208 = vmatpush.msra.mxu0 0.0
    %1209 = vmatpush.msra.mxu0 0.0
    %1210 = vmatpush.msra.mxu0 0.0
    %1211 = vmatpush.msra.mxu0 0.0
    %1212 = vmatpush.msra.mxu0 0.0
    %1213 = vmatpush.msra.mxu0 0.0
    %1214 = vmatpush.msra.mxu0 0.0
    %1215 = vmatpush.msra.mxu0 0.0
    %1216 = vmatpush.msra.mxu0 0.0
    %1217 = vmatpush.msra.mxu0 0.0
    %v1218 = vand.u32 %v31, 4294901760
    %v1219 = vsub.f32 %v31, %v1218
    %v1220 = vand.u32 %v1219, 4294901760
    %v1221 = vsub.f32 %v1219, %v1220
    %v1222 = vand.u32 %v1221, 4294901760
    %1223 = vmatpush.msra.mxu0 %v1222
    %v1224 = vand.u32 %v30, 4294901760
    %v1225 = vsub.f32 %v30, %v1224
    %v1226 = vand.u32 %v1225, 4294901760
    %v1227 = vsub.f32 %v1225, %v1226
    %v1228 = vand.u32 %v1227, 4294901760
    %1229 = vmatpush.msra.mxu0 %v1228
    %v1230 = vand.u32 %v29, 4294901760
    %v1231 = vsub.f32 %v29, %v1230
    %v1232 = vand.u32 %v1231, 4294901760
    %v1233 = vsub.f32 %v1231, %v1232
    %v1234 = vand.u32 %v1233, 4294901760
    %1235 = vmatpush.msra.mxu0 %v1234
    %v1236 = vand.u32 %v28, 4294901760
    %v1237 = vsub.f32 %v28, %v1236
    %v1238 = vand.u32 %v1237, 4294901760
    %v1239 = vsub.f32 %v1237, %v1238
    %v1240 = vand.u32 %v1239, 4294901760
    %1241 = vmatpush.msra.mxu0 %v1240
    %v1242 = vand.u32 %v482, 4294901760
    %1243 = vmatmul.f32.gmra.mxu0 %v1242
    %v1244 = vpop.f32.mrf.mxu0
    %v1245 = vadd.f32 %v700, %v1244
    %v1246 = vand.u32 %v485, 4294901760
    %1247 = vmatmul.f32.gmra.mxu0 %v1246
    %v1248 = vpop.f32.mrf.mxu0
    %v1249 = vadd.f32 %v708, %v1248
    %v1250 = vand.u32 %v488, 4294901760
    %1251 = vmatmul.f32.gmra.mxu0 %v1250
    %v1252 = vpop.f32.mrf.mxu0
    %v1253 = vadd.f32 %v716, %v1252
    %v1254 = vand.u32 %v491, 4294901760
    %1255 = vmatmul.f32.gmra.mxu0 %v1254
    %v1256 = vpop.f32.mrf.mxu0
    %v1257 = vadd.f32 %v724, %v1256
    %v1258 = vand.u32 %v494, 4294901760
    %1259 = vmatmul.f32.gmra.mxu0 %v1258
    %v1260 = vpop.f32.mrf.mxu0
    %v1261 = vadd.f32 %v732, %v1260
    %v1262 = vand.u32 %v497, 4294901760
    %1263 = vmatmul.f32.gmra.mxu0 %v1262
    %v1264 = vpop.f32.mrf.mxu0
    %v1265 = vadd.f32 %v740, %v1264
    %v1266 = vand.u32 %v500, 4294901760
    %1267 = vmatmul.f32.gmra.mxu0 %v1266
    %v1268 = vpop.f32.mrf.mxu0
    %v1269 = vadd.f32 %v748, %v1268
    %v1270 = vand.u32 %v503, 4294901760
    %1271 = vmatmul.f32.gmra.mxu0 %v1270
    %v1272 = vpop.f32.mrf.mxu0
    %v1273 = vadd.f32 %v756, %v1272
    %v1274 = vand.u32 %v506, 4294901760
    %1275 = vmatmul.f32.gmra.mxu0 %v1274
    %v1276 = vpop.f32.mrf.mxu0
    %v1277 = vadd.f32 %v764, %v1276
    %v1278 = vand.u32 %v509, 4294901760
    %1279 = vmatmul.f32.gmra.mxu0 %v1278
    %v1280 = vpop.f32.mrf.mxu0
    %v1281 = vadd.f32 %v772, %v1280
    %v1282 = vand.u32 %v512, 4294901760
    %1283 = vmatmul.f32.gmra.mxu0 %v1282
    %v1284 = vpop.f32.mrf.mxu0
    %v1285 = vadd.f32 %v780, %v1284
    %v1286 = vand.u32 %v515, 4294901760
    %1287 = vmatmul.f32.gmra.mxu0 %v1286
    %v1288 = vpop.f32.mrf.mxu0
    %v1289 = vadd.f32 %v788, %v1288
    %v1290 = vand.u32 %v518, 4294901760
    %1291 = vmatmul.f32.gmra.mxu0 %v1290
    %v1292 = vpop.f32.mrf.mxu0
    %v1293 = vadd.f32 %v796, %v1292
    %v1294 = vand.u32 %v521, 4294901760
    %1295 = vmatmul.f32.gmra.mxu0 %v1294
    %v1296 = vpop.f32.mrf.mxu0
    %v1297 = vadd.f32 %v804, %v1296
    %v1298 = vand.u32 %v524, 4294901760
    %1299 = vmatmul.f32.gmra.mxu0 %v1298
    %v1300 = vpop.f32.mrf.mxu0
    %v1301 = vadd.f32 %v812, %v1300
    %v1302 = vand.u32 %v527, 4294901760
    %1303 = vmatmul.f32.gmra.mxu0 %v1302
    %v1304 = vpop.f32.mrf.mxu0
    %v1305 = vadd.f32 %v820, %v1304
    %v1306 = vand.u32 %v530, 4294901760
    %1307 = vmatmul.f32.gmra.mxu0 %v1306
    %v1308 = vpop.f32.mrf.mxu0
    %v1309 = vadd.f32 %v828, %v1308
    %v1310 = vand.u32 %v533, 4294901760
    %1311 = vmatmul.f32.gmra.mxu0 %v1310
    %v1312 = vpop.f32.mrf.mxu0
    %v1313 = vadd.f32 %v836, %v1312
    %v1314 = vand.u32 %v536, 4294901760
    %1315 = vmatmul.f32.gmra.mxu0 %v1314
    %v1316 = vpop.f32.mrf.mxu0
    %v1317 = vadd.f32 %v844, %v1316
    %v1318 = vand.u32 %v539, 4294901760
    %1319 = vmatmul.f32.gmra.mxu0 %v1318
    %v1320 = vpop.f32.mrf.mxu0
    %v1321 = vadd.f32 %v852, %v1320
    %v1322 = vand.u32 %v542, 4294901760
    %1323 = vmatmul.f32.gmra.mxu0 %v1322
    %v1324 = vpop.f32.mrf.mxu0
    %v1325 = vadd.f32 %v860, %v1324
    %v1326 = vand.u32 %v545, 4294901760
    %1327 = vmatmul.f32.gmra.mxu0 %v1326
    %v1328 = vpop.f32.mrf.mxu0
    %v1329 = vadd.f32 %v868, %v1328
    %v1330 = vand.u32 %v548, 4294901760
    %1331 = vmatmul.f32.gmra.mxu0 %v1330
    %v1332 = vpop.f32.mrf.mxu0
    %v1333 = vadd.f32 %v876, %v1332
    %v1334 = vand.u32 %v551, 4294901760
    %1335 = vmatmul.f32.gmra.mxu0 %v1334
    %v1336 = vpop.f32.mrf.mxu0
    %v1337 = vadd.f32 %v884, %v1336
    %v1338 = vand.u32 %v554, 4294901760
    %1339 = vmatmul.f32.gmra.mxu0 %v1338
    %v1340 = vpop.f32.mrf.mxu0
    %v1341 = vadd.f32 %v892, %v1340
    %v1342 = vand.u32 %v557, 4294901760
    %1343 = vmatmul.f32.gmra.mxu0 %v1342
    %v1344 = vpop.f32.mrf.mxu0
    %v1345 = vadd.f32 %v900, %v1344
    %v1346 = vand.u32 %v560, 4294901760
    %1347 = vmatmul.f32.gmra.mxu0 %v1346
    %v1348 = vpop.f32.mrf.mxu0
    %v1349 = vadd.f32 %v908, %v1348
    %v1350 = vand.u32 %v563, 4294901760
    %1351 = vmatmul.f32.gmra.mxu0 %v1350
    %v1352 = vpop.f32.mrf.mxu0
    %v1353 = vadd.f32 %v916, %v1352
    %v1354 = vand.u32 %v566, 4294901760
    %1355 = vmatmul.f32.gmra.mxu0 %v1354
    %v1356 = vpop.f32.mrf.mxu0
    %v1357 = vadd.f32 %v924, %v1356
    %v1358 = vand.u32 %v569, 4294901760
    %1359 = vmatmul.f32.gmra.mxu0 %v1358
    %v1360 = vpop.f32.mrf.mxu0
    %v1361 = vadd.f32 %v932, %v1360
    %v1362 = vand.u32 %v572, 4294901760
    %1363 = vmatmul.f32.gmra.mxu0 %v1362
    %v1364 = vpop.f32.mrf.mxu0
    %v1365 = vadd.f32 %v940, %v1364
    %v1366 = vand.u32 %v575, 4294901760
    %1367 = vmatmul.f32.gmra.mxu0 %v1366
    %v1368 = vpop.f32.mrf.mxu0
    %v1369 = vadd.f32 %v948, %v1368
    %v1370 = vand.u32 %v578, 4294901760
    %1371 = vmatmul.f32.gmra.mxu0 %v1370
    %v1372 = vpop.f32.mrf.mxu0
    %v1373 = vadd.f32 %v956, %v1372
    %v1374 = vand.u32 %v581, 4294901760
    %1375 = vmatmul.f32.gmra.mxu0 %v1374
    %v1376 = vpop.f32.mrf.mxu0
    %v1377 = vadd.f32 %v964, %v1376
    %v1378 = vand.u32 %v584, 4294901760
    %1379 = vmatmul.f32.gmra.mxu0 %v1378
    %v1380 = vpop.f32.mrf.mxu0
    %v1381 = vadd.f32 %v972, %v1380
    %v1382 = vand.u32 %v587, 4294901760
    %1383 = vmatmul.f32.gmra.mxu0 %v1382
    %v1384 = vpop.f32.mrf.mxu0
    %v1385 = vadd.f32 %v980, %v1384
    %v1386 = vand.u32 %v590, 4294901760
    %1387 = vmatmul.f32.gmra.mxu0 %v1386
    %v1388 = vpop.f32.mrf.mxu0
    %v1389 = vadd.f32 %v988, %v1388
    %v1390 = vand.u32 %v593, 4294901760
    %1391 = vmatmul.f32.gmra.mxu0 %v1390
    %v1392 = vpop.f32.mrf.mxu0
    %v1393 = vadd.f32 %v996, %v1392
    %v1394 = vand.u32 %v596, 4294901760
    %1395 = vmatmul.f32.gmra.mxu0 %v1394
    %v1396 = vpop.f32.mrf.mxu0
    %v1397 = vadd.f32 %v1004, %v1396
    %v1398 = vand.u32 %v599, 4294901760
    %1399 = vmatmul.f32.gmra.mxu0 %v1398
    %v1400 = vpop.f32.mrf.mxu0
    %v1401 = vadd.f32 %v1012, %v1400
    %v1402 = vand.u32 %v602, 4294901760
    %1403 = vmatmul.f32.gmra.mxu0 %v1402
    %v1404 = vpop.f32.mrf.mxu0
    %v1405 = vadd.f32 %v1020, %v1404
    %v1406 = vand.u32 %v605, 4294901760
    %1407 = vmatmul.f32.gmra.mxu0 %v1406
    %v1408 = vpop.f32.mrf.mxu0
    %v1409 = vadd.f32 %v1028, %v1408
    %v1410 = vand.u32 %v608, 4294901760
    %1411 = vmatmul.f32.gmra.mxu0 %v1410
    %v1412 = vpop.f32.mrf.mxu0
    %v1413 = vadd.f32 %v1036, %v1412
    %v1414 = vand.u32 %v611, 4294901760
    %1415 = vmatmul.f32.gmra.mxu0 %v1414
    %v1416 = vpop.f32.mrf.mxu0
    %v1417 = vadd.f32 %v1044, %v1416
    %v1418 = vand.u32 %v614, 4294901760
    %1419 = vmatmul.f32.gmra.mxu0 %v1418
    %v1420 = vpop.f32.mrf.mxu0
    %v1421 = vadd.f32 %v1052, %v1420
    %v1422 = vand.u32 %v617, 4294901760
    %1423 = vmatmul.f32.gmra.mxu0 %v1422
    %v1424 = vpop.f32.mrf.mxu0
    %v1425 = vadd.f32 %v1060, %v1424
    %v1426 = vand.u32 %v620, 4294901760
    %1427 = vmatmul.f32.gmra.mxu0 %v1426
    %v1428 = vpop.f32.mrf.mxu0
    %v1429 = vadd.f32 %v1068, %v1428
    %v1430 = vand.u32 %v623, 4294901760
    %1431 = vmatmul.f32.gmra.mxu0 %v1430
    %v1432 = vpop.f32.mrf.mxu0
    %v1433 = vadd.f32 %v1076, %v1432
    %v1434 = vand.u32 %v626, 4294901760
    %1435 = vmatmul.f32.gmra.mxu0 %v1434
    %v1436 = vpop.f32.mrf.mxu0
    %v1437 = vadd.f32 %v1084, %v1436
    %v1438 = vand.u32 %v629, 4294901760
    %1439 = vmatmul.f32.gmra.mxu0 %v1438
    %v1440 = vpop.f32.mrf.mxu0
    %v1441 = vadd.f32 %v1092, %v1440
    %v1442 = vand.u32 %v632, 4294901760
    %1443 = vmatmul.f32.gmra.mxu0 %v1442
    %v1444 = vpop.f32.mrf.mxu0
    %v1445 = vadd.f32 %v1100, %v1444
    %v1446 = vand.u32 %v635, 4294901760
    %1447 = vmatmul.f32.gmra.mxu0 %v1446
    %v1448 = vpop.f32.mrf.mxu0
    %v1449 = vadd.f32 %v1108, %v1448
    %v1450 = vand.u32 %v638, 4294901760
    %1451 = vmatmul.f32.gmra.mxu0 %v1450
    %v1452 = vpop.f32.mrf.mxu0
    %v1453 = vadd.f32 %v1116, %v1452
    %v1454 = vand.u32 %v641, 4294901760
    %1455 = vmatmul.f32.gmra.mxu0 %v1454
    %v1456 = vpop.f32.mrf.mxu0
    %v1457 = vadd.f32 %v1124, %v1456
    %v1458 = vand.u32 %v644, 4294901760
    %1459 = vmatmul.f32.gmra.mxu0 %v1458
    %v1460 = vpop.f32.mrf.mxu0
    %v1461 = vadd.f32 %v1132, %v1460
    %v1462 = vand.u32 %v647, 4294901760
    %1463 = vmatmul.f32.gmra.mxu0 %v1462
    %v1464 = vpop.f32.mrf.mxu0
    %v1465 = vadd.f32 %v1140, %v1464
    %v1466 = vand.u32 %v650, 4294901760
    %1467 = vmatmul.f32.gmra.mxu0 %v1466
    %v1468 = vpop.f32.mrf.mxu0
    %v1469 = vadd.f32 %v1148, %v1468
    %v1470 = vand.u32 %v653, 4294901760
    %1471 = vmatmul.f32.gmra.mxu0 %v1470
    %v1472 = vpop.f32.mrf.mxu0
    %v1473 = vadd.f32 %v1156, %v1472
    %v1474 = vand.u32 %v656, 4294901760
    %1475 = vmatmul.f32.gmra.mxu0 %v1474
    %v1476 = vpop.f32.mrf.mxu0
    %v1477 = vadd.f32 %v1164, %v1476
    %v1478 = vand.u32 %v659, 4294901760
    %1479 = vmatmul.f32.gmra.mxu0 %v1478
    %v1480 = vpop.f32.mrf.mxu0
    %v1481 = vadd.f32 %v1172, %v1480
    %v1482 = vand.u32 %v662, 4294901760
    %1483 = vmatmul.f32.gmra.mxu0 %v1482
    %v1484 = vpop.f32.mrf.mxu0
    %v1485 = vadd.f32 %v1180, %v1484
    %v1486 = vand.u32 %v665, 4294901760
    %1487 = vmatmul.f32.gmra.mxu0 %v1486
    %v1488 = vpop.f32.mrf.mxu0
    %v1489 = vadd.f32 %v1188, %v1488
    %v1490 = vand.u32 %v668, 4294901760
    %1491 = vmatmul.f32.gmra.mxu0 %v1490
    %v1492 = vpop.f32.mrf.mxu0
    %v1493 = vadd.f32 %v1196, %v1492
    %v1494 = vand.u32 %v671, 4294901760
    %1495 = vmatmul.f32.gmra.mxu0 %v1494
    %v1496 = vpop.f32.mrf.mxu0
    %v1497 = vadd.f32 %v1204, %v1496
    %1498 = vdwg.mxu0
    %1499 = vmatpush.msra.mxu0 0.0
    %1500 = vmatpush.msra.mxu0 0.0
    %1501 = vmatpush.msra.mxu0 0.0
    %1502 = vmatpush.msra.mxu0 0.0
    %1503 = vmatpush.msra.mxu0 0.0
    %1504 = vmatpush.msra.mxu0 0.0
    %1505 = vmatpush.msra.mxu0 0.0
    %1506 = vmatpush.msra.mxu0 0.0
    %1507 = vmatpush.msra.mxu0 0.0
    %1508 = vmatpush.msra.mxu0 0.0
    %1509 = vmatpush.msra.mxu0 0.0
    %1510 = vmatpush.msra.mxu0 0.0
    %v1511 = vand.u32 %v31, 4294901760
    %v1512 = vsub.f32 %v31, %v1511
    %1513 = vmatpush.msra.mxu0 %v1512
    %v1514 = vand.u32 %v30, 4294901760
    %v1515 = vsub.f32 %v30, %v1514
    %1516 = vmatpush.msra.mxu0 %v1515
    %v1517 = vand.u32 %v29, 4294901760
    %v1518 = vsub.f32 %v29, %v1517
    %1519 = vmatpush.msra.mxu0 %v1518
    %v1520 = vand.u32 %v28, 4294901760
    %v1521 = vsub.f32 %v28, %v1520
    %1522 = vmatpush.msra.mxu0 %v1521
    %v1523 = vand.u32 %v482, 4294901760
    %v1524 = vsub.f32 %v482, %v1523
    %1525 = vmatmul.f32.gmra.mxu0 %v1524
    %v1526 = vpop.f32.mrf.mxu0
    %v1527 = vadd.f32 %v1245, %v1526
    %v1528 = vand.u32 %v485, 4294901760
    %v1529 = vsub.f32 %v485, %v1528
    %1530 = vmatmul.f32.gmra.mxu0 %v1529
    %v1531 = vpop.f32.mrf.mxu0
    %v1532 = vadd.f32 %v1249, %v1531
    %v1533 = vand.u32 %v488, 4294901760
    %v1534 = vsub.f32 %v488, %v1533
    %1535 = vmatmul.f32.gmra.mxu0 %v1534
    %v1536 = vpop.f32.mrf.mxu0
    %v1537 = vadd.f32 %v1253, %v1536
    %v1538 = vand.u32 %v491, 4294901760
    %v1539 = vsub.f32 %v491, %v1538
    %1540 = vmatmul.f32.gmra.mxu0 %v1539
    %v1541 = vpop.f32.mrf.mxu0
    %v1542 = vadd.f32 %v1257, %v1541
    %v1543 = vand.u32 %v494, 4294901760
    %v1544 = vsub.f32 %v494, %v1543
    %1545 = vmatmul.f32.gmra.mxu0 %v1544
    %v1546 = vpop.f32.mrf.mxu0
    %v1547 = vadd.f32 %v1261, %v1546
    %v1548 = vand.u32 %v497, 4294901760
    %v1549 = vsub.f32 %v497, %v1548
    %1550 = vmatmul.f32.gmra.mxu0 %v1549
    %v1551 = vpop.f32.mrf.mxu0
    %v1552 = vadd.f32 %v1265, %v1551
    %v1553 = vand.u32 %v500, 4294901760
    %v1554 = vsub.f32 %v500, %v1553
    %1555 = vmatmul.f32.gmra.mxu0 %v1554
    %v1556 = vpop.f32.mrf.mxu0
    %v1557 = vadd.f32 %v1269, %v1556
    %v1558 = vand.u32 %v503, 4294901760
    %v1559 = vsub.f32 %v503, %v1558
    %1560 = vmatmul.f32.gmra.mxu0 %v1559
    %v1561 = vpop.f32.mrf.mxu0
    %v1562 = vadd.f32 %v1273, %v1561
    %v1563 = vand.u32 %v506, 4294901760
    %v1564 = vsub.f32 %v506, %v1563
    %1565 = vmatmul.f32.gmra.mxu0 %v1564
    %v1566 = vpop.f32.mrf.mxu0
    %v1567 = vadd.f32 %v1277, %v1566
    %v1568 = vand.u32 %v509, 4294901760
    %v1569 = vsub.f32 %v509, %v1568
    %1570 = vmatmul.f32.gmra.mxu0 %v1569
    %v1571 = vpop.f32.mrf.mxu0
    %v1572 = vadd.f32 %v1281, %v1571
    %v1573 = vand.u32 %v512, 4294901760
    %v1574 = vsub.f32 %v512, %v1573
    %1575 = vmatmul.f32.gmra.mxu0 %v1574
    %v1576 = vpop.f32.mrf.mxu0
    %v1577 = vadd.f32 %v1285, %v1576
    %v1578 = vand.u32 %v515, 4294901760
    %v1579 = vsub.f32 %v515, %v1578
    %1580 = vmatmul.f32.gmra.mxu0 %v1579
    %v1581 = vpop.f32.mrf.mxu0
    %v1582 = vadd.f32 %v1289, %v1581
    %v1583 = vand.u32 %v518, 4294901760
    %v1584 = vsub.f32 %v518, %v1583
    %1585 = vmatmul.f32.gmra.mxu0 %v1584
    %v1586 = vpop.f32.mrf.mxu0
    %v1587 = vadd.f32 %v1293, %v1586
    %v1588 = vand.u32 %v521, 4294901760
    %v1589 = vsub.f32 %v521, %v1588
    %1590 = vmatmul.f32.gmra.mxu0 %v1589
    %v1591 = vpop.f32.mrf.mxu0
    %v1592 = vadd.f32 %v1297, %v1591
    %v1593 = vand.u32 %v524, 4294901760
    %v1594 = vsub.f32 %v524, %v1593
    %1595 = vmatmul.f32.gmra.mxu0 %v1594
    %v1596 = vpop.f32.mrf.mxu0
    %v1597 = vadd.f32 %v1301, %v1596
    %v1598 = vand.u32 %v527, 4294901760
    %v1599 = vsub.f32 %v527, %v1598
    %1600 = vmatmul.f32.gmra.mxu0 %v1599
    %v1601 = vpop.f32.mrf.mxu0
    %v1602 = vadd.f32 %v1305, %v1601
    %v1603 = vand.u32 %v530, 4294901760
    %v1604 = vsub.f32 %v530, %v1603
    %1605 = vmatmul.f32.gmra.mxu0 %v1604
    %v1606 = vpop.f32.mrf.mxu0
    %v1607 = vadd.f32 %v1309, %v1606
    %v1608 = vand.u32 %v533, 4294901760
    %v1609 = vsub.f32 %v533, %v1608
    %1610 = vmatmul.f32.gmra.mxu0 %v1609
    %v1611 = vpop.f32.mrf.mxu0
    %v1612 = vadd.f32 %v1313, %v1611
    %v1613 = vand.u32 %v536, 4294901760
    %v1614 = vsub.f32 %v536, %v1613
    %1615 = vmatmul.f32.gmra.mxu0 %v1614
    %v1616 = vpop.f32.mrf.mxu0
    %v1617 = vadd.f32 %v1317, %v1616
    %v1618 = vand.u32 %v539, 4294901760
    %v1619 = vsub.f32 %v539, %v1618
    %1620 = vmatmul.f32.gmra.mxu0 %v1619
    %v1621 = vpop.f32.mrf.mxu0
    %v1622 = vadd.f32 %v1321, %v1621
    %v1623 = vand.u32 %v542, 4294901760
    %v1624 = vsub.f32 %v542, %v1623
    %1625 = vmatmul.f32.gmra.mxu0 %v1624
    %v1626 = vpop.f32.mrf.mxu0
    %v1627 = vadd.f32 %v1325, %v1626
    %v1628 = vand.u32 %v545, 4294901760
    %v1629 = vsub.f32 %v545, %v1628
    %1630 = vmatmul.f32.gmra.mxu0 %v1629
    %v1631 = vpop.f32.mrf.mxu0
    %v1632 = vadd.f32 %v1329, %v1631
    %v1633 = vand.u32 %v548, 4294901760
    %v1634 = vsub.f32 %v548, %v1633
    %1635 = vmatmul.f32.gmra.mxu0 %v1634
    %v1636 = vpop.f32.mrf.mxu0
    %v1637 = vadd.f32 %v1333, %v1636
    %v1638 = vand.u32 %v551, 4294901760
    %v1639 = vsub.f32 %v551, %v1638
    %1640 = vmatmul.f32.gmra.mxu0 %v1639
    %v1641 = vpop.f32.mrf.mxu0
    %v1642 = vadd.f32 %v1337, %v1641
    %v1643 = vand.u32 %v554, 4294901760
    %v1644 = vsub.f32 %v554, %v1643
    %1645 = vmatmul.f32.gmra.mxu0 %v1644
    %v1646 = vpop.f32.mrf.mxu0
    %v1647 = vadd.f32 %v1341, %v1646
    %v1648 = vand.u32 %v557, 4294901760
    %v1649 = vsub.f32 %v557, %v1648
    %1650 = vmatmul.f32.gmra.mxu0 %v1649
    %v1651 = vpop.f32.mrf.mxu0
    %v1652 = vadd.f32 %v1345, %v1651
    %v1653 = vand.u32 %v560, 4294901760
    %v1654 = vsub.f32 %v560, %v1653
    %1655 = vmatmul.f32.gmra.mxu0 %v1654
    %v1656 = vpop.f32.mrf.mxu0
    %v1657 = vadd.f32 %v1349, %v1656
    %v1658 = vand.u32 %v563, 4294901760
    %v1659 = vsub.f32 %v563, %v1658
    %1660 = vmatmul.f32.gmra.mxu0 %v1659
    %v1661 = vpop.f32.mrf.mxu0
    %v1662 = vadd.f32 %v1353, %v1661
    %v1663 = vand.u32 %v566, 4294901760
    %v1664 = vsub.f32 %v566, %v1663
    %1665 = vmatmul.f32.gmra.mxu0 %v1664
    %v1666 = vpop.f32.mrf.mxu0
    %v1667 = vadd.f32 %v1357, %v1666
    %v1668 = vand.u32 %v569, 4294901760
    %v1669 = vsub.f32 %v569, %v1668
    %1670 = vmatmul.f32.gmra.mxu0 %v1669
    %v1671 = vpop.f32.mrf.mxu0
    %v1672 = vadd.f32 %v1361, %v1671
    %v1673 = vand.u32 %v572, 4294901760
    %v1674 = vsub.f32 %v572, %v1673
    %1675 = vmatmul.f32.gmra.mxu0 %v1674
    %v1676 = vpop.f32.mrf.mxu0
    %v1677 = vadd.f32 %v1365, %v1676
    %v1678 = vand.u32 %v575, 4294901760
    %v1679 = vsub.f32 %v575, %v1678
    %1680 = vmatmul.f32.gmra.mxu0 %v1679
    %v1681 = vpop.f32.mrf.mxu0
    %v1682 = vadd.f32 %v1369, %v1681
    %v1683 = vand.u32 %v578, 4294901760
    %v1684 = vsub.f32 %v578, %v1683
    %1685 = vmatmul.f32.gmra.mxu0 %v1684
    %v1686 = vpop.f32.mrf.mxu0
    %v1687 = vadd.f32 %v1373, %v1686
    %v1688 = vand.u32 %v581, 4294901760
    %v1689 = vsub.f32 %v581, %v1688
    %1690 = vmatmul.f32.gmra.mxu0 %v1689
    %v1691 = vpop.f32.mrf.mxu0
    %v1692 = vadd.f32 %v1377, %v1691
    %v1693 = vand.u32 %v584, 4294901760
    %v1694 = vsub.f32 %v584, %v1693
    %1695 = vmatmul.f32.gmra.mxu0 %v1694
    %v1696 = vpop.f32.mrf.mxu0
    %v1697 = vadd.f32 %v1381, %v1696
    %v1698 = vand.u32 %v587, 4294901760
    %v1699 = vsub.f32 %v587, %v1698
    %1700 = vmatmul.f32.gmra.mxu0 %v1699
    %v1701 = vpop.f32.mrf.mxu0
    %v1702 = vadd.f32 %v1385, %v1701
    %v1703 = vand.u32 %v590, 4294901760
    %v1704 = vsub.f32 %v590, %v1703
    %1705 = vmatmul.f32.gmra.mxu0 %v1704
    %v1706 = vpop.f32.mrf.mxu0
    %v1707 = vadd.f32 %v1389, %v1706
    %v1708 = vand.u32 %v593, 4294901760
    %v1709 = vsub.f32 %v593, %v1708
    %1710 = vmatmul.f32.gmra.mxu0 %v1709
    %v1711 = vpop.f32.mrf.mxu0
    %v1712 = vadd.f32 %v1393, %v1711
    %v1713 = vand.u32 %v596, 4294901760
    %v1714 = vsub.f32 %v596, %v1713
    %1715 = vmatmul.f32.gmra.mxu0 %v1714
    %v1716 = vpop.f32.mrf.mxu0
    %v1717 = vadd.f32 %v1397, %v1716
    %v1718 = vand.u32 %v599, 4294901760
    %v1719 = vsub.f32 %v599, %v1718
    %1720 = vmatmul.f32.gmra.mxu0 %v1719
    %v1721 = vpop.f32.mrf.mxu0
    %v1722 = vadd.f32 %v1401, %v1721
    %v1723 = vand.u32 %v602, 4294901760
    %v1724 = vsub.f32 %v602, %v1723
    %1725 = vmatmul.f32.gmra.mxu0 %v1724
    %v1726 = vpop.f32.mrf.mxu0
    %v1727 = vadd.f32 %v1405, %v1726
    %v1728 = vand.u32 %v605, 4294901760
    %v1729 = vsub.f32 %v605, %v1728
    %1730 = vmatmul.f32.gmra.mxu0 %v1729
    %v1731 = vpop.f32.mrf.mxu0
    %v1732 = vadd.f32 %v1409, %v1731
    %v1733 = vand.u32 %v608, 4294901760
    %v1734 = vsub.f32 %v608, %v1733
    %1735 = vmatmul.f32.gmra.mxu0 %v1734
    %v1736 = vpop.f32.mrf.mxu0
    %v1737 = vadd.f32 %v1413, %v1736
    %v1738 = vand.u32 %v611, 4294901760
    %v1739 = vsub.f32 %v611, %v1738
    %1740 = vmatmul.f32.gmra.mxu0 %v1739
    %v1741 = vpop.f32.mrf.mxu0
    %v1742 = vadd.f32 %v1417, %v1741
    %v1743 = vand.u32 %v614, 4294901760
    %v1744 = vsub.f32 %v614, %v1743
    %1745 = vmatmul.f32.gmra.mxu0 %v1744
    %v1746 = vpop.f32.mrf.mxu0
    %v1747 = vadd.f32 %v1421, %v1746
    %v1748 = vand.u32 %v617, 4294901760
    %v1749 = vsub.f32 %v617, %v1748
    %1750 = vmatmul.f32.gmra.mxu0 %v1749
    %v1751 = vpop.f32.mrf.mxu0
    %v1752 = vadd.f32 %v1425, %v1751
    %v1753 = vand.u32 %v620, 4294901760
    %v1754 = vsub.f32 %v620, %v1753
    %1755 = vmatmul.f32.gmra.mxu0 %v1754
    %v1756 = vpop.f32.mrf.mxu0
    %v1757 = vadd.f32 %v1429, %v1756
    %v1758 = vand.u32 %v623, 4294901760
    %v1759 = vsub.f32 %v623, %v1758
    %1760 = vmatmul.f32.gmra.mxu0 %v1759
    %v1761 = vpop.f32.mrf.mxu0
    %v1762 = vadd.f32 %v1433, %v1761
    %v1763 = vand.u32 %v626, 4294901760
    %v1764 = vsub.f32 %v626, %v1763
    %1765 = vmatmul.f32.gmra.mxu0 %v1764
    %v1766 = vpop.f32.mrf.mxu0
    %v1767 = vadd.f32 %v1437, %v1766
    %v1768 = vand.u32 %v629, 4294901760
    %v1769 = vsub.f32 %v629, %v1768
    %1770 = vmatmul.f32.gmra.mxu0 %v1769
    %v1771 = vpop.f32.mrf.mxu0
    %v1772 = vadd.f32 %v1441, %v1771
    %v1773 = vand.u32 %v632, 4294901760
    %v1774 = vsub.f32 %v632, %v1773
    %1775 = vmatmul.f32.gmra.mxu0 %v1774
    %v1776 = vpop.f32.mrf.mxu0
    %v1777 = vadd.f32 %v1445, %v1776
    %v1778 = vand.u32 %v635, 4294901760
    %v1779 = vsub.f32 %v635, %v1778
    %1780 = vmatmul.f32.gmra.mxu0 %v1779
    %v1781 = vpop.f32.mrf.mxu0
    %v1782 = vadd.f32 %v1449, %v1781
    %v1783 = vand.u32 %v638, 4294901760
    %v1784 = vsub.f32 %v638, %v1783
    %1785 = vmatmul.f32.gmra.mxu0 %v1784
    %v1786 = vpop.f32.mrf.mxu0
    %v1787 = vadd.f32 %v1453, %v1786
    %v1788 = vand.u32 %v641, 4294901760
    %v1789 = vsub.f32 %v641, %v1788
    %1790 = vmatmul.f32.gmra.mxu0 %v1789
    %v1791 = vpop.f32.mrf.mxu0
    %v1792 = vadd.f32 %v1457, %v1791
    %v1793 = vand.u32 %v644, 4294901760
    %v1794 = vsub.f32 %v644, %v1793
    %1795 = vmatmul.f32.gmra.mxu0 %v1794
    %v1796 = vpop.f32.mrf.mxu0
    %v1797 = vadd.f32 %v1461, %v1796
    %v1798 = vand.u32 %v647, 4294901760
    %v1799 = vsub.f32 %v647, %v1798
    %1800 = vmatmul.f32.gmra.mxu0 %v1799
    %v1801 = vpop.f32.mrf.mxu0
    %v1802 = vadd.f32 %v1465, %v1801
    %v1803 = vand.u32 %v650, 4294901760
    %v1804 = vsub.f32 %v650, %v1803
    %1805 = vmatmul.f32.gmra.mxu0 %v1804
    %v1806 = vpop.f32.mrf.mxu0
    %v1807 = vadd.f32 %v1469, %v1806
    %v1808 = vand.u32 %v653, 4294901760
    %v1809 = vsub.f32 %v653, %v1808
    %1810 = vmatmul.f32.gmra.mxu0 %v1809
    %v1811 = vpop.f32.mrf.mxu0
    %v1812 = vadd.f32 %v1473, %v1811
    %v1813 = vand.u32 %v656, 4294901760
    %v1814 = vsub.f32 %v656, %v1813
    %1815 = vmatmul.f32.gmra.mxu0 %v1814
    %v1816 = vpop.f32.mrf.mxu0
    %v1817 = vadd.f32 %v1477, %v1816
    %v1818 = vand.u32 %v659, 4294901760
    %v1819 = vsub.f32 %v659, %v1818
    %1820 = vmatmul.f32.gmra.mxu0 %v1819
    %v1821 = vpop.f32.mrf.mxu0
    %v1822 = vadd.f32 %v1481, %v1821
    %v1823 = vand.u32 %v662, 4294901760
    %v1824 = vsub.f32 %v662, %v1823
    %1825 = vmatmul.f32.gmra.mxu0 %v1824
    %v1826 = vpop.f32.mrf.mxu0
    %v1827 = vadd.f32 %v1485, %v1826
    %v1828 = vand.u32 %v665, 4294901760
    %v1829 = vsub.f32 %v665, %v1828
    %1830 = vmatmul.f32.gmra.mxu0 %v1829
    %v1831 = vpop.f32.mrf.mxu0
    %v1832 = vadd.f32 %v1489, %v1831
    %v1833 = vand.u32 %v668, 4294901760
    %v1834 = vsub.f32 %v668, %v1833
    %1835 = vmatmul.f32.gmra.mxu0 %v1834
    %v1836 = vpop.f32.mrf.mxu0
    %v1837 = vadd.f32 %v1493, %v1836
    %v1838 = vand.u32 %v671, 4294901760
    %v1839 = vsub.f32 %v671, %v1838
    %1840 = vmatmul.f32.gmra.mxu0 %v1839
    %v1841 = vpop.f32.mrf.mxu0
    %v1842 = vadd.f32 %v1497, %v1841
    %1843 = vdwg.mxu0
    %1844 = vmatpush.msra.mxu0 0.0
    %1845 = vmatpush.msra.mxu0 0.0
    %1846 = vmatpush.msra.mxu0 0.0
    %1847 = vmatpush.msra.mxu0 0.0
    %1848 = vmatpush.msra.mxu0 0.0
    %1849 = vmatpush.msra.mxu0 0.0
    %1850 = vmatpush.msra.mxu0 0.0
    %1851 = vmatpush.msra.mxu0 0.0
    %1852 = vmatpush.msra.mxu0 0.0
    %1853 = vmatpush.msra.mxu0 0.0
    %1854 = vmatpush.msra.mxu0 0.0
    %1855 = vmatpush.msra.mxu0 0.0
    %v1856 = vand.u32 %v31, 4294901760
    %1857 = vmatpush.msra.mxu0 %v1856
    %v1858 = vand.u32 %v30, 4294901760
    %1859 = vmatpush.msra.mxu0 %v1858
    %v1860 = vand.u32 %v29, 4294901760
    %1861 = vmatpush.msra.mxu0 %v1860
    %v1862 = vand.u32 %v28, 4294901760
    %1863 = vmatpush.msra.mxu0 %v1862
    %v1864 = vand.u32 %v482, 4294901760
    %v1865 = vsub.f32 %v482, %v1864
    %v1866 = vand.u32 %v1865, 4294901760
    %1867 = vmatmul.f32.gmra.mxu0 %v1866
    %v1868 = vpop.f32.mrf.mxu0
    %v1869 = vadd.f32 %v1527, %v1868
    %v1870 = vand.u32 %v485, 4294901760
    %v1871 = vsub.f32 %v485, %v1870
    %v1872 = vand.u32 %v1871, 4294901760
    %1873 = vmatmul.f32.gmra.mxu0 %v1872
    %v1874 = vpop.f32.mrf.mxu0
    %v1875 = vadd.f32 %v1532, %v1874
    %v1876 = vand.u32 %v488, 4294901760
    %v1877 = vsub.f32 %v488, %v1876
    %v1878 = vand.u32 %v1877, 4294901760
    %1879 = vmatmul.f32.gmra.mxu0 %v1878
    %v1880 = vpop.f32.mrf.mxu0
    %v1881 = vadd.f32 %v1537, %v1880
    %v1882 = vand.u32 %v491, 4294901760
    %v1883 = vsub.f32 %v491, %v1882
    %v1884 = vand.u32 %v1883, 4294901760
    %1885 = vmatmul.f32.gmra.mxu0 %v1884
    %v1886 = vpop.f32.mrf.mxu0
    %v1887 = vadd.f32 %v1542, %v1886
    %v1888 = vand.u32 %v494, 4294901760
    %v1889 = vsub.f32 %v494, %v1888
    %v1890 = vand.u32 %v1889, 4294901760
    %1891 = vmatmul.f32.gmra.mxu0 %v1890
    %v1892 = vpop.f32.mrf.mxu0
    %v1893 = vadd.f32 %v1547, %v1892
    %v1894 = vand.u32 %v497, 4294901760
    %v1895 = vsub.f32 %v497, %v1894
    %v1896 = vand.u32 %v1895, 4294901760
    %1897 = vmatmul.f32.gmra.mxu0 %v1896
    %v1898 = vpop.f32.mrf.mxu0
    %v1899 = vadd.f32 %v1552, %v1898
    %v1900 = vand.u32 %v500, 4294901760
    %v1901 = vsub.f32 %v500, %v1900
    %v1902 = vand.u32 %v1901, 4294901760
    %1903 = vmatmul.f32.gmra.mxu0 %v1902
    %v1904 = vpop.f32.mrf.mxu0
    %v1905 = vadd.f32 %v1557, %v1904
    %v1906 = vand.u32 %v503, 4294901760
    %v1907 = vsub.f32 %v503, %v1906
    %v1908 = vand.u32 %v1907, 4294901760
    %1909 = vmatmul.f32.gmra.mxu0 %v1908
    %v1910 = vpop.f32.mrf.mxu0
    %v1911 = vadd.f32 %v1562, %v1910
    %v1912 = vand.u32 %v506, 4294901760
    %v1913 = vsub.f32 %v506, %v1912
    %v1914 = vand.u32 %v1913, 4294901760
    %1915 = vmatmul.f32.gmra.mxu0 %v1914
    %v1916 = vpop.f32.mrf.mxu0
    %v1917 = vadd.f32 %v1567, %v1916
    %v1918 = vand.u32 %v509, 4294901760
    %v1919 = vsub.f32 %v509, %v1918
    %v1920 = vand.u32 %v1919, 4294901760
    %1921 = vmatmul.f32.gmra.mxu0 %v1920
    %v1922 = vpop.f32.mrf.mxu0
    %v1923 = vadd.f32 %v1572, %v1922
    %v1924 = vand.u32 %v512, 4294901760
    %v1925 = vsub.f32 %v512, %v1924
    %v1926 = vand.u32 %v1925, 4294901760
    %1927 = vmatmul.f32.gmra.mxu0 %v1926
    %v1928 = vpop.f32.mrf.mxu0
    %v1929 = vadd.f32 %v1577, %v1928
    %v1930 = vand.u32 %v515, 4294901760
    %v1931 = vsub.f32 %v515, %v1930
    %v1932 = vand.u32 %v1931, 4294901760
    %1933 = vmatmul.f32.gmra.mxu0 %v1932
    %v1934 = vpop.f32.mrf.mxu0
    %v1935 = vadd.f32 %v1582, %v1934
    %v1936 = vand.u32 %v518, 4294901760
    %v1937 = vsub.f32 %v518, %v1936
    %v1938 = vand.u32 %v1937, 4294901760
    %1939 = vmatmul.f32.gmra.mxu0 %v1938
    %v1940 = vpop.f32.mrf.mxu0
    %v1941 = vadd.f32 %v1587, %v1940
    %v1942 = vand.u32 %v521, 4294901760
    %v1943 = vsub.f32 %v521, %v1942
    %v1944 = vand.u32 %v1943, 4294901760
    %1945 = vmatmul.f32.gmra.mxu0 %v1944
    %v1946 = vpop.f32.mrf.mxu0
    %v1947 = vadd.f32 %v1592, %v1946
    %v1948 = vand.u32 %v524, 4294901760
    %v1949 = vsub.f32 %v524, %v1948
    %v1950 = vand.u32 %v1949, 4294901760
    %1951 = vmatmul.f32.gmra.mxu0 %v1950
    %v1952 = vpop.f32.mrf.mxu0
    %v1953 = vadd.f32 %v1597, %v1952
    %v1954 = vand.u32 %v527, 4294901760
    %v1955 = vsub.f32 %v527, %v1954
    %v1956 = vand.u32 %v1955, 4294901760
    %1957 = vmatmul.f32.gmra.mxu0 %v1956
    %v1958 = vpop.f32.mrf.mxu0
    %v1959 = vadd.f32 %v1602, %v1958
    %v1960 = vand.u32 %v530, 4294901760
    %v1961 = vsub.f32 %v530, %v1960
    %v1962 = vand.u32 %v1961, 4294901760
    %1963 = vmatmul.f32.gmra.mxu0 %v1962
    %v1964 = vpop.f32.mrf.mxu0
    %v1965 = vadd.f32 %v1607, %v1964
    %v1966 = vand.u32 %v533, 4294901760
    %v1967 = vsub.f32 %v533, %v1966
    %v1968 = vand.u32 %v1967, 4294901760
    %1969 = vmatmul.f32.gmra.mxu0 %v1968
    %v1970 = vpop.f32.mrf.mxu0
    %v1971 = vadd.f32 %v1612, %v1970
    %v1972 = vand.u32 %v536, 4294901760
    %v1973 = vsub.f32 %v536, %v1972
    %v1974 = vand.u32 %v1973, 4294901760
    %1975 = vmatmul.f32.gmra.mxu0 %v1974
    %v1976 = vpop.f32.mrf.mxu0
    %v1977 = vadd.f32 %v1617, %v1976
    %v1978 = vand.u32 %v539, 4294901760
    %v1979 = vsub.f32 %v539, %v1978
    %v1980 = vand.u32 %v1979, 4294901760
    %1981 = vmatmul.f32.gmra.mxu0 %v1980
    %v1982 = vpop.f32.mrf.mxu0
    %v1983 = vadd.f32 %v1622, %v1982
    %v1984 = vand.u32 %v542, 4294901760
    %v1985 = vsub.f32 %v542, %v1984
    %v1986 = vand.u32 %v1985, 4294901760
    %1987 = vmatmul.f32.gmra.mxu0 %v1986
    %v1988 = vpop.f32.mrf.mxu0
    %v1989 = vadd.f32 %v1627, %v1988
    %v1990 = vand.u32 %v545, 4294901760
    %v1991 = vsub.f32 %v545, %v1990
    %v1992 = vand.u32 %v1991, 4294901760
    %1993 = vmatmul.f32.gmra.mxu0 %v1992
    %v1994 = vpop.f32.mrf.mxu0
    %v1995 = vadd.f32 %v1632, %v1994
    %v1996 = vand.u32 %v548, 4294901760
    %v1997 = vsub.f32 %v548, %v1996
    %v1998 = vand.u32 %v1997, 4294901760
    %1999 = vmatmul.f32.gmra.mxu0 %v1998
    %v2000 = vpop.f32.mrf.mxu0
    %v2001 = vadd.f32 %v1637, %v2000
    %v2002 = vand.u32 %v551, 4294901760
    %v2003 = vsub.f32 %v551, %v2002
    %v2004 = vand.u32 %v2003, 4294901760
    %2005 = vmatmul.f32.gmra.mxu0 %v2004
    %v2006 = vpop.f32.mrf.mxu0
    %v2007 = vadd.f32 %v1642, %v2006
    %v2008 = vand.u32 %v554, 4294901760
    %v2009 = vsub.f32 %v554, %v2008
    %v2010 = vand.u32 %v2009, 4294901760
    %2011 = vmatmul.f32.gmra.mxu0 %v2010
    %v2012 = vpop.f32.mrf.mxu0
    %v2013 = vadd.f32 %v1647, %v2012
    %v2014 = vand.u32 %v557, 4294901760
    %v2015 = vsub.f32 %v557, %v2014
    %v2016 = vand.u32 %v2015, 4294901760
    %2017 = vmatmul.f32.gmra.mxu0 %v2016
    %v2018 = vpop.f32.mrf.mxu0
    %v2019 = vadd.f32 %v1652, %v2018
    %v2020 = vand.u32 %v560, 4294901760
    %v2021 = vsub.f32 %v560, %v2020
    %v2022 = vand.u32 %v2021, 4294901760
    %2023 = vmatmul.f32.gmra.mxu0 %v2022
    %v2024 = vpop.f32.mrf.mxu0
    %v2025 = vadd.f32 %v1657, %v2024
    %v2026 = vand.u32 %v563, 4294901760
    %v2027 = vsub.f32 %v563, %v2026
    %v2028 = vand.u32 %v2027, 4294901760
    %2029 = vmatmul.f32.gmra.mxu0 %v2028
    %v2030 = vpop.f32.mrf.mxu0
    %v2031 = vadd.f32 %v1662, %v2030
    %v2032 = vand.u32 %v566, 4294901760
    %v2033 = vsub.f32 %v566, %v2032
    %v2034 = vand.u32 %v2033, 4294901760
    %2035 = vmatmul.f32.gmra.mxu0 %v2034
    %v2036 = vpop.f32.mrf.mxu0
    %v2037 = vadd.f32 %v1667, %v2036
    %v2038 = vand.u32 %v569, 4294901760
    %v2039 = vsub.f32 %v569, %v2038
    %v2040 = vand.u32 %v2039, 4294901760
    %2041 = vmatmul.f32.gmra.mxu0 %v2040
    %v2042 = vpop.f32.mrf.mxu0
    %v2043 = vadd.f32 %v1672, %v2042
    %v2044 = vand.u32 %v572, 4294901760
    %v2045 = vsub.f32 %v572, %v2044
    %v2046 = vand.u32 %v2045, 4294901760
    %2047 = vmatmul.f32.gmra.mxu0 %v2046
    %v2048 = vpop.f32.mrf.mxu0
    %v2049 = vadd.f32 %v1677, %v2048
    %v2050 = vand.u32 %v575, 4294901760
    %v2051 = vsub.f32 %v575, %v2050
    %v2052 = vand.u32 %v2051, 4294901760
    %2053 = vmatmul.f32.gmra.mxu0 %v2052
    %v2054 = vpop.f32.mrf.mxu0
    %v2055 = vadd.f32 %v1682, %v2054
    %v2056 = vand.u32 %v578, 4294901760
    %v2057 = vsub.f32 %v578, %v2056
    %v2058 = vand.u32 %v2057, 4294901760
    %2059 = vmatmul.f32.gmra.mxu0 %v2058
    %v2060 = vpop.f32.mrf.mxu0
    %v2061 = vadd.f32 %v1687, %v2060
    %v2062 = vand.u32 %v581, 4294901760
    %v2063 = vsub.f32 %v581, %v2062
    %v2064 = vand.u32 %v2063, 4294901760
    %2065 = vmatmul.f32.gmra.mxu0 %v2064
    %v2066 = vpop.f32.mrf.mxu0
    %v2067 = vadd.f32 %v1692, %v2066
    %v2068 = vand.u32 %v584, 4294901760
    %v2069 = vsub.f32 %v584, %v2068
    %v2070 = vand.u32 %v2069, 4294901760
    %2071 = vmatmul.f32.gmra.mxu0 %v2070
    %v2072 = vpop.f32.mrf.mxu0
    %v2073 = vadd.f32 %v1697, %v2072
    %v2074 = vand.u32 %v587, 4294901760
    %v2075 = vsub.f32 %v587, %v2074
    %v2076 = vand.u32 %v2075, 4294901760
    %2077 = vmatmul.f32.gmra.mxu0 %v2076
    %v2078 = vpop.f32.mrf.mxu0
    %v2079 = vadd.f32 %v1702, %v2078
    %v2080 = vand.u32 %v590, 4294901760
    %v2081 = vsub.f32 %v590, %v2080
    %v2082 = vand.u32 %v2081, 4294901760
    %2083 = vmatmul.f32.gmra.mxu0 %v2082
    %v2084 = vpop.f32.mrf.mxu0
    %v2085 = vadd.f32 %v1707, %v2084
    %v2086 = vand.u32 %v593, 4294901760
    %v2087 = vsub.f32 %v593, %v2086
    %v2088 = vand.u32 %v2087, 4294901760
    %2089 = vmatmul.f32.gmra.mxu0 %v2088
    %v2090 = vpop.f32.mrf.mxu0
    %v2091 = vadd.f32 %v1712, %v2090
    %v2092 = vand.u32 %v596, 4294901760
    %v2093 = vsub.f32 %v596, %v2092
    %v2094 = vand.u32 %v2093, 4294901760
    %2095 = vmatmul.f32.gmra.mxu0 %v2094
    %v2096 = vpop.f32.mrf.mxu0
    %v2097 = vadd.f32 %v1717, %v2096
    %v2098 = vand.u32 %v599, 4294901760
    %v2099 = vsub.f32 %v599, %v2098
    %v2100 = vand.u32 %v2099, 4294901760
    %2101 = vmatmul.f32.gmra.mxu0 %v2100
    %v2102 = vpop.f32.mrf.mxu0
    %v2103 = vadd.f32 %v1722, %v2102
    %v2104 = vand.u32 %v602, 4294901760
    %v2105 = vsub.f32 %v602, %v2104
    %v2106 = vand.u32 %v2105, 4294901760
    %2107 = vmatmul.f32.gmra.mxu0 %v2106
    %v2108 = vpop.f32.mrf.mxu0
    %v2109 = vadd.f32 %v1727, %v2108
    %v2110 = vand.u32 %v605, 4294901760
    %v2111 = vsub.f32 %v605, %v2110
    %v2112 = vand.u32 %v2111, 4294901760
    %2113 = vmatmul.f32.gmra.mxu0 %v2112
    %v2114 = vpop.f32.mrf.mxu0
    %v2115 = vadd.f32 %v1732, %v2114
    %v2116 = vand.u32 %v608, 4294901760
    %v2117 = vsub.f32 %v608, %v2116
    %v2118 = vand.u32 %v2117, 4294901760
    %2119 = vmatmul.f32.gmra.mxu0 %v2118
    %v2120 = vpop.f32.mrf.mxu0
    %v2121 = vadd.f32 %v1737, %v2120
    %v2122 = vand.u32 %v611, 4294901760
    %v2123 = vsub.f32 %v611, %v2122
    %v2124 = vand.u32 %v2123, 4294901760
    %2125 = vmatmul.f32.gmra.mxu0 %v2124
    %v2126 = vpop.f32.mrf.mxu0
    %v2127 = vadd.f32 %v1742, %v2126
    %v2128 = vand.u32 %v614, 4294901760
    %v2129 = vsub.f32 %v614, %v2128
    %v2130 = vand.u32 %v2129, 4294901760
    %2131 = vmatmul.f32.gmra.mxu0 %v2130
    %v2132 = vpop.f32.mrf.mxu0
    %v2133 = vadd.f32 %v1747, %v2132
    %v2134 = vand.u32 %v617, 4294901760
    %v2135 = vsub.f32 %v617, %v2134
    %v2136 = vand.u32 %v2135, 4294901760
    %2137 = vmatmul.f32.gmra.mxu0 %v2136
    %v2138 = vpop.f32.mrf.mxu0
    %v2139 = vadd.f32 %v1752, %v2138
    %v2140 = vand.u32 %v620, 4294901760
    %v2141 = vsub.f32 %v620, %v2140
    %v2142 = vand.u32 %v2141, 4294901760
    %2143 = vmatmul.f32.gmra.mxu0 %v2142
    %v2144 = vpop.f32.mrf.mxu0
    %v2145 = vadd.f32 %v1757, %v2144
    %v2146 = vand.u32 %v623, 4294901760
    %v2147 = vsub.f32 %v623, %v2146
    %v2148 = vand.u32 %v2147, 4294901760
    %2149 = vmatmul.f32.gmra.mxu0 %v2148
    %v2150 = vpop.f32.mrf.mxu0
    %v2151 = vadd.f32 %v1762, %v2150
    %v2152 = vand.u32 %v626, 4294901760
    %v2153 = vsub.f32 %v626, %v2152
    %v2154 = vand.u32 %v2153, 4294901760
    %2155 = vmatmul.f32.gmra.mxu0 %v2154
    %v2156 = vpop.f32.mrf.mxu0
    %v2157 = vadd.f32 %v1767, %v2156
    %v2158 = vand.u32 %v629, 4294901760
    %v2159 = vsub.f32 %v629, %v2158
    %v2160 = vand.u32 %v2159, 4294901760
    %2161 = vmatmul.f32.gmra.mxu0 %v2160
    %v2162 = vpop.f32.mrf.mxu0
    %v2163 = vadd.f32 %v1772, %v2162
    %v2164 = vand.u32 %v632, 4294901760
    %v2165 = vsub.f32 %v632, %v2164
    %v2166 = vand.u32 %v2165, 4294901760
    %2167 = vmatmul.f32.gmra.mxu0 %v2166
    %v2168 = vpop.f32.mrf.mxu0
    %v2169 = vadd.f32 %v1777, %v2168
    %v2170 = vand.u32 %v635, 4294901760
    %v2171 = vsub.f32 %v635, %v2170
    %v2172 = vand.u32 %v2171, 4294901760
    %2173 = vmatmul.f32.gmra.mxu0 %v2172
    %v2174 = vpop.f32.mrf.mxu0
    %v2175 = vadd.f32 %v1782, %v2174
    %v2176 = vand.u32 %v638, 4294901760
    %v2177 = vsub.f32 %v638, %v2176
    %v2178 = vand.u32 %v2177, 4294901760
    %2179 = vmatmul.f32.gmra.mxu0 %v2178
    %v2180 = vpop.f32.mrf.mxu0
    %v2181 = vadd.f32 %v1787, %v2180
    %v2182 = vand.u32 %v641, 4294901760
    %v2183 = vsub.f32 %v641, %v2182
    %v2184 = vand.u32 %v2183, 4294901760
    %2185 = vmatmul.f32.gmra.mxu0 %v2184
    %v2186 = vpop.f32.mrf.mxu0
    %v2187 = vadd.f32 %v1792, %v2186
    %v2188 = vand.u32 %v644, 4294901760
    %v2189 = vsub.f32 %v644, %v2188
    %v2190 = vand.u32 %v2189, 4294901760
    %2191 = vmatmul.f32.gmra.mxu0 %v2190
    %v2192 = vpop.f32.mrf.mxu0
    %v2193 = vadd.f32 %v1797, %v2192
    %v2194 = vand.u32 %v647, 4294901760
    %v2195 = vsub.f32 %v647, %v2194
    %v2196 = vand.u32 %v2195, 4294901760
    %2197 = vmatmul.f32.gmra.mxu0 %v2196
    %v2198 = vpop.f32.mrf.mxu0
    %v2199 = vadd.f32 %v1802, %v2198
    %v2200 = vand.u32 %v650, 4294901760
    %v2201 = vsub.f32 %v650, %v2200
    %v2202 = vand.u32 %v2201, 4294901760
    %2203 = vmatmul.f32.gmra.mxu0 %v2202
    %v2204 = vpop.f32.mrf.mxu0
    %v2205 = vadd.f32 %v1807, %v2204
    %v2206 = vand.u32 %v653, 4294901760
    %v2207 = vsub.f32 %v653, %v2206
    %v2208 = vand.u32 %v2207, 4294901760
    %2209 = vmatmul.f32.gmra.mxu0 %v2208
    %v2210 = vpop.f32.mrf.mxu0
    %v2211 = vadd.f32 %v1812, %v2210
    %v2212 = vand.u32 %v656, 4294901760
    %v2213 = vsub.f32 %v656, %v2212
    %v2214 = vand.u32 %v2213, 4294901760
    %2215 = vmatmul.f32.gmra.mxu0 %v2214
    %v2216 = vpop.f32.mrf.mxu0
    %v2217 = vadd.f32 %v1817, %v2216
    %v2218 = vand.u32 %v659, 4294901760
    %v2219 = vsub.f32 %v659, %v2218
    %v2220 = vand.u32 %v2219, 4294901760
    %2221 = vmatmul.f32.gmra.mxu0 %v2220
    %v2222 = vpop.f32.mrf.mxu0
    %v2223 = vadd.f32 %v1822, %v2222
    %v2224 = vand.u32 %v662, 4294901760
    %v2225 = vsub.f32 %v662, %v2224
    %v2226 = vand.u32 %v2225, 4294901760
    %2227 = vmatmul.f32.gmra.mxu0 %v2226
    %v2228 = vpop.f32.mrf.mxu0
    %v2229 = vadd.f32 %v1827, %v2228
    %v2230 = vand.u32 %v665, 4294901760
    %v2231 = vsub.f32 %v665, %v2230
    %v2232 = vand.u32 %v2231, 4294901760
    %2233 = vmatmul.f32.gmra.mxu0 %v2232
    %v2234 = vpop.f32.mrf.mxu0
    %v2235 = vadd.f32 %v1832, %v2234
    %v2236 = vand.u32 %v668, 4294901760
    %v2237 = vsub.f32 %v668, %v2236
    %v2238 = vand.u32 %v2237, 4294901760
    %2239 = vmatmul.f32.gmra.mxu0 %v2238
    %v2240 = vpop.f32.mrf.mxu0
    %v2241 = vadd.f32 %v1837, %v2240
    %v2242 = vand.u32 %v671, 4294901760
    %v2243 = vsub.f32 %v671, %v2242
    %v2244 = vand.u32 %v2243, 4294901760
    %2245 = vmatmul.f32.gmra.mxu0 %v2244
    %v2246 = vpop.f32.mrf.mxu0
    %v2247 = vadd.f32 %v1842, %v2246
    %2248 = vdwg.mxu0
    %2249 = vmatpush.msra.mxu0 0.0
    %2250 = vmatpush.msra.mxu0 0.0
    %2251 = vmatpush.msra.mxu0 0.0
    %2252 = vmatpush.msra.mxu0 0.0
    %2253 = vmatpush.msra.mxu0 0.0
    %2254 = vmatpush.msra.mxu0 0.0
    %2255 = vmatpush.msra.mxu0 0.0
    %2256 = vmatpush.msra.mxu0 0.0
    %2257 = vmatpush.msra.mxu0 0.0
    %2258 = vmatpush.msra.mxu0 0.0
    %2259 = vmatpush.msra.mxu0 0.0
    %2260 = vmatpush.msra.mxu0 0.0
    %v2261 = vand.u32 %v31, 4294901760
    %v2262 = vsub.f32 %v31, %v2261
    %v2263 = vand.u32 %v2262, 4294901760
    %2264 = vmatpush.msra.mxu0 %v2263
    %v2265 = vand.u32 %v30, 4294901760
    %v2266 = vsub.f32 %v30, %v2265
    %v2267 = vand.u32 %v2266, 4294901760
    %2268 = vmatpush.msra.mxu0 %v2267
    %v2269 = vand.u32 %v29, 4294901760
    %v2270 = vsub.f32 %v29, %v2269
    %v2271 = vand.u32 %v2270, 4294901760
    %2272 = vmatpush.msra.mxu0 %v2271
    %v2273 = vand.u32 %v28, 4294901760
    %v2274 = vsub.f32 %v28, %v2273
    %v2275 = vand.u32 %v2274, 4294901760
    %2276 = vmatpush.msra.mxu0 %v2275
    %v2277 = vand.u32 %v482, 4294901760
    %2278 = vmatmul.f32.gmra.mxu0 %v2277
    %v2279 = vpop.f32.mrf.mxu0
    %v2280 = vadd.f32 %v1869, %v2279
    %v2281 = vand.u32 %v485, 4294901760
    %2282 = vmatmul.f32.gmra.mxu0 %v2281
    %v2283 = vpop.f32.mrf.mxu0
    %v2284 = vadd.f32 %v1875, %v2283
    %v2285 = vand.u32 %v488, 4294901760
    %2286 = vmatmul.f32.gmra.mxu0 %v2285
    %v2287 = vpop.f32.mrf.mxu0
    %v2288 = vadd.f32 %v1881, %v2287
    %v2289 = vand.u32 %v491, 4294901760
    %2290 = vmatmul.f32.gmra.mxu0 %v2289
    %v2291 = vpop.f32.mrf.mxu0
    %v2292 = vadd.f32 %v1887, %v2291
    %v2293 = vand.u32 %v494, 4294901760
    %2294 = vmatmul.f32.gmra.mxu0 %v2293
    %v2295 = vpop.f32.mrf.mxu0
    %v2296 = vadd.f32 %v1893, %v2295
    %v2297 = vand.u32 %v497, 4294901760
    %2298 = vmatmul.f32.gmra.mxu0 %v2297
    %v2299 = vpop.f32.mrf.mxu0
    %v2300 = vadd.f32 %v1899, %v2299
    %v2301 = vand.u32 %v500, 4294901760
    %2302 = vmatmul.f32.gmra.mxu0 %v2301
    %v2303 = vpop.f32.mrf.mxu0
    %v2304 = vadd.f32 %v1905, %v2303
    %v2305 = vand.u32 %v503, 4294901760
    %2306 = vmatmul.f32.gmra.mxu0 %v2305
    %v2307 = vpop.f32.mrf.mxu0
    %v2308 = vadd.f32 %v1911, %v2307
    %v2309 = vand.u32 %v506, 4294901760
    %2310 = vmatmul.f32.gmra.mxu0 %v2309
    %v2311 = vpop.f32.mrf.mxu0
    %v2312 = vadd.f32 %v1917, %v2311
    %v2313 = vand.u32 %v509, 4294901760
    %2314 = vmatmul.f32.gmra.mxu0 %v2313
    %v2315 = vpop.f32.mrf.mxu0
    %v2316 = vadd.f32 %v1923, %v2315
    %v2317 = vand.u32 %v512, 4294901760
    %2318 = vmatmul.f32.gmra.mxu0 %v2317
    %v2319 = vpop.f32.mrf.mxu0
    %v2320 = vadd.f32 %v1929, %v2319
    %v2321 = vand.u32 %v515, 4294901760
    %2322 = vmatmul.f32.gmra.mxu0 %v2321
    %v2323 = vpop.f32.mrf.mxu0
    %v2324 = vadd.f32 %v1935, %v2323
    %v2325 = vand.u32 %v518, 4294901760
    %2326 = vmatmul.f32.gmra.mxu0 %v2325
    %v2327 = vpop.f32.mrf.mxu0
    %v2328 = vadd.f32 %v1941, %v2327
    %v2329 = vand.u32 %v521, 4294901760
    %2330 = vmatmul.f32.gmra.mxu0 %v2329
    %v2331 = vpop.f32.mrf.mxu0
    %v2332 = vadd.f32 %v1947, %v2331
    %v2333 = vand.u32 %v524, 4294901760
    %2334 = vmatmul.f32.gmra.mxu0 %v2333
    %v2335 = vpop.f32.mrf.mxu0
    %v2336 = vadd.f32 %v1953, %v2335
    %v2337 = vand.u32 %v527, 4294901760
    %2338 = vmatmul.f32.gmra.mxu0 %v2337
    %v2339 = vpop.f32.mrf.mxu0
    %v2340 = vadd.f32 %v1959, %v2339
    %v2341 = vand.u32 %v530, 4294901760
    %2342 = vmatmul.f32.gmra.mxu0 %v2341
    %v2343 = vpop.f32.mrf.mxu0
    %v2344 = vadd.f32 %v1965, %v2343
    %v2345 = vand.u32 %v533, 4294901760
    %2346 = vmatmul.f32.gmra.mxu0 %v2345
    %v2347 = vpop.f32.mrf.mxu0
    %v2348 = vadd.f32 %v1971, %v2347
    %v2349 = vand.u32 %v536, 4294901760
    %2350 = vmatmul.f32.gmra.mxu0 %v2349
    %v2351 = vpop.f32.mrf.mxu0
    %v2352 = vadd.f32 %v1977, %v2351
    %v2353 = vand.u32 %v539, 4294901760
    %2354 = vmatmul.f32.gmra.mxu0 %v2353
    %v2355 = vpop.f32.mrf.mxu0
    %v2356 = vadd.f32 %v1983, %v2355
    %v2357 = vand.u32 %v542, 4294901760
    %2358 = vmatmul.f32.gmra.mxu0 %v2357
    %v2359 = vpop.f32.mrf.mxu0
    %v2360 = vadd.f32 %v1989, %v2359
    %v2361 = vand.u32 %v545, 4294901760
    %2362 = vmatmul.f32.gmra.mxu0 %v2361
    %v2363 = vpop.f32.mrf.mxu0
    %v2364 = vadd.f32 %v1995, %v2363
    %v2365 = vand.u32 %v548, 4294901760
    %2366 = vmatmul.f32.gmra.mxu0 %v2365
    %v2367 = vpop.f32.mrf.mxu0
    %v2368 = vadd.f32 %v2001, %v2367
    %v2369 = vand.u32 %v551, 4294901760
    %2370 = vmatmul.f32.gmra.mxu0 %v2369
    %v2371 = vpop.f32.mrf.mxu0
    %v2372 = vadd.f32 %v2007, %v2371
    %v2373 = vand.u32 %v554, 4294901760
    %2374 = vmatmul.f32.gmra.mxu0 %v2373
    %v2375 = vpop.f32.mrf.mxu0
    %v2376 = vadd.f32 %v2013, %v2375
    %v2377 = vand.u32 %v557, 4294901760
    %2378 = vmatmul.f32.gmra.mxu0 %v2377
    %v2379 = vpop.f32.mrf.mxu0
    %v2380 = vadd.f32 %v2019, %v2379
    %v2381 = vand.u32 %v560, 4294901760
    %2382 = vmatmul.f32.gmra.mxu0 %v2381
    %v2383 = vpop.f32.mrf.mxu0
    %v2384 = vadd.f32 %v2025, %v2383
    %v2385 = vand.u32 %v563, 4294901760
    %2386 = vmatmul.f32.gmra.mxu0 %v2385
    %v2387 = vpop.f32.mrf.mxu0
    %v2388 = vadd.f32 %v2031, %v2387
    %v2389 = vand.u32 %v566, 4294901760
    %2390 = vmatmul.f32.gmra.mxu0 %v2389
    %v2391 = vpop.f32.mrf.mxu0
    %v2392 = vadd.f32 %v2037, %v2391
    %v2393 = vand.u32 %v569, 4294901760
    %2394 = vmatmul.f32.gmra.mxu0 %v2393
    %v2395 = vpop.f32.mrf.mxu0
    %v2396 = vadd.f32 %v2043, %v2395
    %v2397 = vand.u32 %v572, 4294901760
    %2398 = vmatmul.f32.gmra.mxu0 %v2397
    %v2399 = vpop.f32.mrf.mxu0
    %v2400 = vadd.f32 %v2049, %v2399
    %v2401 = vand.u32 %v575, 4294901760
    %2402 = vmatmul.f32.gmra.mxu0 %v2401
    %v2403 = vpop.f32.mrf.mxu0
    %v2404 = vadd.f32 %v2055, %v2403
    %v2405 = vand.u32 %v578, 4294901760
    %2406 = vmatmul.f32.gmra.mxu0 %v2405
    %v2407 = vpop.f32.mrf.mxu0
    %v2408 = vadd.f32 %v2061, %v2407
    %v2409 = vand.u32 %v581, 4294901760
    %2410 = vmatmul.f32.gmra.mxu0 %v2409
    %v2411 = vpop.f32.mrf.mxu0
    %v2412 = vadd.f32 %v2067, %v2411
    %v2413 = vand.u32 %v584, 4294901760
    %2414 = vmatmul.f32.gmra.mxu0 %v2413
    %v2415 = vpop.f32.mrf.mxu0
    %v2416 = vadd.f32 %v2073, %v2415
    %v2417 = vand.u32 %v587, 4294901760
    %2418 = vmatmul.f32.gmra.mxu0 %v2417
    %v2419 = vpop.f32.mrf.mxu0
    %v2420 = vadd.f32 %v2079, %v2419
    %v2421 = vand.u32 %v590, 4294901760
    %2422 = vmatmul.f32.gmra.mxu0 %v2421
    %v2423 = vpop.f32.mrf.mxu0
    %v2424 = vadd.f32 %v2085, %v2423
    %v2425 = vand.u32 %v593, 4294901760
    %2426 = vmatmul.f32.gmra.mxu0 %v2425
    %v2427 = vpop.f32.mrf.mxu0
    %v2428 = vadd.f32 %v2091, %v2427
    %v2429 = vand.u32 %v596, 4294901760
    %2430 = vmatmul.f32.gmra.mxu0 %v2429
    %v2431 = vpop.f32.mrf.mxu0
    %v2432 = vadd.f32 %v2097, %v2431
    %v2433 = vand.u32 %v599, 4294901760
    %2434 = vmatmul.f32.gmra.mxu0 %v2433
    %v2435 = vpop.f32.mrf.mxu0
    %v2436 = vadd.f32 %v2103, %v2435
    %v2437 = vand.u32 %v602, 4294901760
    %2438 = vmatmul.f32.gmra.mxu0 %v2437
    %v2439 = vpop.f32.mrf.mxu0
    %v2440 = vadd.f32 %v2109, %v2439
    %v2441 = vand.u32 %v605, 4294901760
    %2442 = vmatmul.f32.gmra.mxu0 %v2441
    %v2443 = vpop.f32.mrf.mxu0
    %v2444 = vadd.f32 %v2115, %v2443
    %v2445 = vand.u32 %v608, 4294901760
    %2446 = vmatmul.f32.gmra.mxu0 %v2445
    %v2447 = vpop.f32.mrf.mxu0
    %v2448 = vadd.f32 %v2121, %v2447
    %v2449 = vand.u32 %v611, 4294901760
    %2450 = vmatmul.f32.gmra.mxu0 %v2449
    %v2451 = vpop.f32.mrf.mxu0
    %v2452 = vadd.f32 %v2127, %v2451
    %v2453 = vand.u32 %v614, 4294901760
    %2454 = vmatmul.f32.gmra.mxu0 %v2453
    %v2455 = vpop.f32.mrf.mxu0
    %v2456 = vadd.f32 %v2133, %v2455
    %v2457 = vand.u32 %v617, 4294901760
    %2458 = vmatmul.f32.gmra.mxu0 %v2457
    %v2459 = vpop.f32.mrf.mxu0
    %v2460 = vadd.f32 %v2139, %v2459
    %v2461 = vand.u32 %v620, 4294901760
    %2462 = vmatmul.f32.gmra.mxu0 %v2461
    %v2463 = vpop.f32.mrf.mxu0
    %v2464 = vadd.f32 %v2145, %v2463
    %v2465 = vand.u32 %v623, 4294901760
    %2466 = vmatmul.f32.gmra.mxu0 %v2465
    %v2467 = vpop.f32.mrf.mxu0
    %v2468 = vadd.f32 %v2151, %v2467
    %v2469 = vand.u32 %v626, 4294901760
    %2470 = vmatmul.f32.gmra.mxu0 %v2469
    %v2471 = vpop.f32.mrf.mxu0
    %v2472 = vadd.f32 %v2157, %v2471
    %v2473 = vand.u32 %v629, 4294901760
    %2474 = vmatmul.f32.gmra.mxu0 %v2473
    %v2475 = vpop.f32.mrf.mxu0
    %v2476 = vadd.f32 %v2163, %v2475
    %v2477 = vand.u32 %v632, 4294901760
    %2478 = vmatmul.f32.gmra.mxu0 %v2477
    %v2479 = vpop.f32.mrf.mxu0
    %v2480 = vadd.f32 %v2169, %v2479
    %v2481 = vand.u32 %v635, 4294901760
    %2482 = vmatmul.f32.gmra.mxu0 %v2481
    %v2483 = vpop.f32.mrf.mxu0
    %v2484 = vadd.f32 %v2175, %v2483
    %v2485 = vand.u32 %v638, 4294901760
    %2486 = vmatmul.f32.gmra.mxu0 %v2485
    %v2487 = vpop.f32.mrf.mxu0
    %v2488 = vadd.f32 %v2181, %v2487
    %v2489 = vand.u32 %v641, 4294901760
    %2490 = vmatmul.f32.gmra.mxu0 %v2489
    %v2491 = vpop.f32.mrf.mxu0
    %v2492 = vadd.f32 %v2187, %v2491
    %v2493 = vand.u32 %v644, 4294901760
    %2494 = vmatmul.f32.gmra.mxu0 %v2493
    %v2495 = vpop.f32.mrf.mxu0
    %v2496 = vadd.f32 %v2193, %v2495
    %v2497 = vand.u32 %v647, 4294901760
    %2498 = vmatmul.f32.gmra.mxu0 %v2497
    %v2499 = vpop.f32.mrf.mxu0
    %v2500 = vadd.f32 %v2199, %v2499
    %v2501 = vand.u32 %v650, 4294901760
    %2502 = vmatmul.f32.gmra.mxu0 %v2501
    %v2503 = vpop.f32.mrf.mxu0
    %v2504 = vadd.f32 %v2205, %v2503
    %v2505 = vand.u32 %v653, 4294901760
    %2506 = vmatmul.f32.gmra.mxu0 %v2505
    %v2507 = vpop.f32.mrf.mxu0
    %v2508 = vadd.f32 %v2211, %v2507
    %v2509 = vand.u32 %v656, 4294901760
    %2510 = vmatmul.f32.gmra.mxu0 %v2509
    %v2511 = vpop.f32.mrf.mxu0
    %v2512 = vadd.f32 %v2217, %v2511
    %v2513 = vand.u32 %v659, 4294901760
    %2514 = vmatmul.f32.gmra.mxu0 %v2513
    %v2515 = vpop.f32.mrf.mxu0
    %v2516 = vadd.f32 %v2223, %v2515
    %v2517 = vand.u32 %v662, 4294901760
    %2518 = vmatmul.f32.gmra.mxu0 %v2517
    %v2519 = vpop.f32.mrf.mxu0
    %v2520 = vadd.f32 %v2229, %v2519
    %v2521 = vand.u32 %v665, 4294901760
    %2522 = vmatmul.f32.gmra.mxu0 %v2521
    %v2523 = vpop.f32.mrf.mxu0
    %v2524 = vadd.f32 %v2235, %v2523
    %v2525 = vand.u32 %v668, 4294901760
    %2526 = vmatmul.f32.gmra.mxu0 %v2525
    %v2527 = vpop.f32.mrf.mxu0
    %v2528 = vadd.f32 %v2241, %v2527
    %v2529 = vand.u32 %v671, 4294901760
    %2530 = vmatmul.f32.gmra.mxu0 %v2529
    %v2531 = vpop.f32.mrf.mxu0
    %v2532 = vadd.f32 %v2247, %v2531
    %2533 = vdwg.mxu0
    %2534 = vmatpush.msra.mxu0 0.0
    %2535 = vmatpush.msra.mxu0 0.0
    %2536 = vmatpush.msra.mxu0 0.0
    %2537 = vmatpush.msra.mxu0 0.0
    %2538 = vmatpush.msra.mxu0 0.0
    %2539 = vmatpush.msra.mxu0 0.0
    %2540 = vmatpush.msra.mxu0 0.0
    %2541 = vmatpush.msra.mxu0 0.0
    %2542 = vmatpush.msra.mxu0 0.0
    %2543 = vmatpush.msra.mxu0 0.0
    %2544 = vmatpush.msra.mxu0 0.0
    %2545 = vmatpush.msra.mxu0 0.0
    %v2546 = vand.u32 %v31, 4294901760
    %2547 = vmatpush.msra.mxu0 %v2546
    %v2548 = vand.u32 %v30, 4294901760
    %2549 = vmatpush.msra.mxu0 %v2548
    %v2550 = vand.u32 %v29, 4294901760
    %2551 = vmatpush.msra.mxu0 %v2550
    %v2552 = vand.u32 %v28, 4294901760
    %2553 = vmatpush.msra.mxu0 %v2552
    %v2554 = vand.u32 %v482, 4294901760
    %2555 = vmatmul.f32.gmra.mxu0 %v2554
    %v2556 = vpop.f32.mrf.mxu0
    %v2557 = vadd.f32 %v2280, %v2556
    %v2558 = vand.u32 %v485, 4294901760
    %2559 = vmatmul.f32.gmra.mxu0 %v2558
    %v2560 = vpop.f32.mrf.mxu0
    %v2561 = vadd.f32 %v2284, %v2560
    %v2562 = vand.u32 %v488, 4294901760
    %2563 = vmatmul.f32.gmra.mxu0 %v2562
    %v2564 = vpop.f32.mrf.mxu0
    %v2565 = vadd.f32 %v2288, %v2564
    %v2566 = vand.u32 %v491, 4294901760
    %2567 = vmatmul.f32.gmra.mxu0 %v2566
    %v2568 = vpop.f32.mrf.mxu0
    %v2569 = vadd.f32 %v2292, %v2568
    %v2570 = vand.u32 %v494, 4294901760
    %2571 = vmatmul.f32.gmra.mxu0 %v2570
    %v2572 = vpop.f32.mrf.mxu0
    %v2573 = vadd.f32 %v2296, %v2572
    %v2574 = vand.u32 %v497, 4294901760
    %2575 = vmatmul.f32.gmra.mxu0 %v2574
    %v2576 = vpop.f32.mrf.mxu0
    %v2577 = vadd.f32 %v2300, %v2576
    %v2578 = vand.u32 %v500, 4294901760
    %2579 = vmatmul.f32.gmra.mxu0 %v2578
    %v2580 = vpop.f32.mrf.mxu0
    %v2581 = vadd.f32 %v2304, %v2580
    %v2582 = vand.u32 %v503, 4294901760
    %2583 = vmatmul.f32.gmra.mxu0 %v2582
    %v2584 = vpop.f32.mrf.mxu0
    %v2585 = vadd.f32 %v2308, %v2584
    %v2586 = vand.u32 %v506, 4294901760
    %2587 = vmatmul.f32.gmra.mxu0 %v2586
    %v2588 = vpop.f32.mrf.mxu0
    %v2589 = vadd.f32 %v2312, %v2588
    %v2590 = vand.u32 %v509, 4294901760
    %2591 = vmatmul.f32.gmra.mxu0 %v2590
    %v2592 = vpop.f32.mrf.mxu0
    %v2593 = vadd.f32 %v2316, %v2592
    %v2594 = vand.u32 %v512, 4294901760
    %2595 = vmatmul.f32.gmra.mxu0 %v2594
    %v2596 = vpop.f32.mrf.mxu0
    %v2597 = vadd.f32 %v2320, %v2596
    %v2598 = vand.u32 %v515, 4294901760
    %2599 = vmatmul.f32.gmra.mxu0 %v2598
    %v2600 = vpop.f32.mrf.mxu0
    %v2601 = vadd.f32 %v2324, %v2600
    %v2602 = vand.u32 %v518, 4294901760
    %2603 = vmatmul.f32.gmra.mxu0 %v2602
    %v2604 = vpop.f32.mrf.mxu0
    %v2605 = vadd.f32 %v2328, %v2604
    %v2606 = vand.u32 %v521, 4294901760
    %2607 = vmatmul.f32.gmra.mxu0 %v2606
    %v2608 = vpop.f32.mrf.mxu0
    %v2609 = vadd.f32 %v2332, %v2608
    %v2610 = vand.u32 %v524, 4294901760
    %2611 = vmatmul.f32.gmra.mxu0 %v2610
    %v2612 = vpop.f32.mrf.mxu0
    %v2613 = vadd.f32 %v2336, %v2612
    %v2614 = vand.u32 %v527, 4294901760
    %2615 = vmatmul.f32.gmra.mxu0 %v2614
    %v2616 = vpop.f32.mrf.mxu0
    %v2617 = vadd.f32 %v2340, %v2616
    %v2618 = vand.u32 %v530, 4294901760
    %2619 = vmatmul.f32.gmra.mxu0 %v2618
    %v2620 = vpop.f32.mrf.mxu0
    %v2621 = vadd.f32 %v2344, %v2620
    %v2622 = vand.u32 %v533, 4294901760
    %2623 = vmatmul.f32.gmra.mxu0 %v2622
    %v2624 = vpop.f32.mrf.mxu0
    %v2625 = vadd.f32 %v2348, %v2624
    %v2626 = vand.u32 %v536, 4294901760
    %2627 = vmatmul.f32.gmra.mxu0 %v2626
    %v2628 = vpop.f32.mrf.mxu0
    %v2629 = vadd.f32 %v2352, %v2628
    %v2630 = vand.u32 %v539, 4294901760
    %2631 = vmatmul.f32.gmra.mxu0 %v2630
    %v2632 = vpop.f32.mrf.mxu0
    %v2633 = vadd.f32 %v2356, %v2632
    %v2634 = vand.u32 %v542, 4294901760
    %2635 = vmatmul.f32.gmra.mxu0 %v2634
    %v2636 = vpop.f32.mrf.mxu0
    %v2637 = vadd.f32 %v2360, %v2636
    %v2638 = vand.u32 %v545, 4294901760
    %2639 = vmatmul.f32.gmra.mxu0 %v2638
    %v2640 = vpop.f32.mrf.mxu0
    %v2641 = vadd.f32 %v2364, %v2640
    %v2642 = vand.u32 %v548, 4294901760
    %2643 = vmatmul.f32.gmra.mxu0 %v2642
    %v2644 = vpop.f32.mrf.mxu0
    %v2645 = vadd.f32 %v2368, %v2644
    %v2646 = vand.u32 %v551, 4294901760
    %2647 = vmatmul.f32.gmra.mxu0 %v2646
    %v2648 = vpop.f32.mrf.mxu0
    %v2649 = vadd.f32 %v2372, %v2648
    %v2650 = vand.u32 %v554, 4294901760
    %2651 = vmatmul.f32.gmra.mxu0 %v2650
    %v2652 = vpop.f32.mrf.mxu0
    %v2653 = vadd.f32 %v2376, %v2652
    %v2654 = vand.u32 %v557, 4294901760
    %2655 = vmatmul.f32.gmra.mxu0 %v2654
    %v2656 = vpop.f32.mrf.mxu0
    %v2657 = vadd.f32 %v2380, %v2656
    %v2658 = vand.u32 %v560, 4294901760
    %2659 = vmatmul.f32.gmra.mxu0 %v2658
    %v2660 = vpop.f32.mrf.mxu0
    %v2661 = vadd.f32 %v2384, %v2660
    %v2662 = vand.u32 %v563, 4294901760
    %2663 = vmatmul.f32.gmra.mxu0 %v2662
    %v2664 = vpop.f32.mrf.mxu0
    %v2665 = vadd.f32 %v2388, %v2664
    %v2666 = vand.u32 %v566, 4294901760
    %2667 = vmatmul.f32.gmra.mxu0 %v2666
    %v2668 = vpop.f32.mrf.mxu0
    %v2669 = vadd.f32 %v2392, %v2668
    %v2670 = vand.u32 %v569, 4294901760
    %2671 = vmatmul.f32.gmra.mxu0 %v2670
    %v2672 = vpop.f32.mrf.mxu0
    %v2673 = vadd.f32 %v2396, %v2672
    %v2674 = vand.u32 %v572, 4294901760
    %2675 = vmatmul.f32.gmra.mxu0 %v2674
    %v2676 = vpop.f32.mrf.mxu0
    %v2677 = vadd.f32 %v2400, %v2676
    %v2678 = vand.u32 %v575, 4294901760
    %2679 = vmatmul.f32.gmra.mxu0 %v2678
    %v2680 = vpop.f32.mrf.mxu0
    %v2681 = vadd.f32 %v2404, %v2680
    %v2682 = vand.u32 %v578, 4294901760
    %2683 = vmatmul.f32.gmra.mxu0 %v2682
    %v2684 = vpop.f32.mrf.mxu0
    %v2685 = vadd.f32 %v2408, %v2684
    %v2686 = vand.u32 %v581, 4294901760
    %2687 = vmatmul.f32.gmra.mxu0 %v2686
    %v2688 = vpop.f32.mrf.mxu0
    %v2689 = vadd.f32 %v2412, %v2688
    %v2690 = vand.u32 %v584, 4294901760
    %2691 = vmatmul.f32.gmra.mxu0 %v2690
    %v2692 = vpop.f32.mrf.mxu0
    %v2693 = vadd.f32 %v2416, %v2692
    %v2694 = vand.u32 %v587, 4294901760
    %2695 = vmatmul.f32.gmra.mxu0 %v2694
    %v2696 = vpop.f32.mrf.mxu0
    %v2697 = vadd.f32 %v2420, %v2696
    %v2698 = vand.u32 %v590, 4294901760
    %2699 = vmatmul.f32.gmra.mxu0 %v2698
    %v2700 = vpop.f32.mrf.mxu0
    %v2701 = vadd.f32 %v2424, %v2700
    %v2702 = vand.u32 %v593, 4294901760
    %2703 = vmatmul.f32.gmra.mxu0 %v2702
    %v2704 = vpop.f32.mrf.mxu0
    %v2705 = vadd.f32 %v2428, %v2704
    %v2706 = vand.u32 %v596, 4294901760
    %2707 = vmatmul.f32.gmra.mxu0 %v2706
    %v2708 = vpop.f32.mrf.mxu0
    %v2709 = vadd.f32 %v2432, %v2708
    %v2710 = vand.u32 %v599, 4294901760
    %2711 = vmatmul.f32.gmra.mxu0 %v2710
    %v2712 = vpop.f32.mrf.mxu0
    %v2713 = vadd.f32 %v2436, %v2712
    %v2714 = vand.u32 %v602, 4294901760
    %2715 = vmatmul.f32.gmra.mxu0 %v2714
    %v2716 = vpop.f32.mrf.mxu0
    %v2717 = vadd.f32 %v2440, %v2716
    %v2718 = vand.u32 %v605, 4294901760
    %2719 = vmatmul.f32.gmra.mxu0 %v2718
    %v2720 = vpop.f32.mrf.mxu0
    %v2721 = vadd.f32 %v2444, %v2720
    %v2722 = vand.u32 %v608, 4294901760
    %2723 = vmatmul.f32.gmra.mxu0 %v2722
    %v2724 = vpop.f32.mrf.mxu0
    %v2725 = vadd.f32 %v2448, %v2724
    %v2726 = vand.u32 %v611, 4294901760
    %2727 = vmatmul.f32.gmra.mxu0 %v2726
    %v2728 = vpop.f32.mrf.mxu0
    %v2729 = vadd.f32 %v2452, %v2728
    %v2730 = vand.u32 %v614, 4294901760
    %2731 = vmatmul.f32.gmra.mxu0 %v2730
    %v2732 = vpop.f32.mrf.mxu0
    %v2733 = vadd.f32 %v2456, %v2732
    %v2734 = vand.u32 %v617, 4294901760
    %2735 = vmatmul.f32.gmra.mxu0 %v2734
    %v2736 = vpop.f32.mrf.mxu0
    %v2737 = vadd.f32 %v2460, %v2736
    %v2738 = vand.u32 %v620, 4294901760
    %2739 = vmatmul.f32.gmra.mxu0 %v2738
    %v2740 = vpop.f32.mrf.mxu0
    %v2741 = vadd.f32 %v2464, %v2740
    %v2742 = vand.u32 %v623, 4294901760
    %2743 = vmatmul.f32.gmra.mxu0 %v2742
    %v2744 = vpop.f32.mrf.mxu0
    %v2745 = vadd.f32 %v2468, %v2744
    %v2746 = vand.u32 %v626, 4294901760
    %2747 = vmatmul.f32.gmra.mxu0 %v2746
    %v2748 = vpop.f32.mrf.mxu0
    %v2749 = vadd.f32 %v2472, %v2748
    %v2750 = vand.u32 %v629, 4294901760
    %2751 = vmatmul.f32.gmra.mxu0 %v2750
    %v2752 = vpop.f32.mrf.mxu0
    %v2753 = vadd.f32 %v2476, %v2752
    %v2754 = vand.u32 %v632, 4294901760
    %2755 = vmatmul.f32.gmra.mxu0 %v2754
    %v2756 = vpop.f32.mrf.mxu0
    %v2757 = vadd.f32 %v2480, %v2756
    %v2758 = vand.u32 %v635, 4294901760
    %2759 = vmatmul.f32.gmra.mxu0 %v2758
    %v2760 = vpop.f32.mrf.mxu0
    %v2761 = vadd.f32 %v2484, %v2760
    %v2762 = vand.u32 %v638, 4294901760
    %2763 = vmatmul.f32.gmra.mxu0 %v2762
    %v2764 = vpop.f32.mrf.mxu0
    %v2765 = vadd.f32 %v2488, %v2764
    %v2766 = vand.u32 %v641, 4294901760
    %2767 = vmatmul.f32.gmra.mxu0 %v2766
    %v2768 = vpop.f32.mrf.mxu0
    %v2769 = vadd.f32 %v2492, %v2768
    %v2770 = vand.u32 %v644, 4294901760
    %2771 = vmatmul.f32.gmra.mxu0 %v2770
    %v2772 = vpop.f32.mrf.mxu0
    %v2773 = vadd.f32 %v2496, %v2772
    %v2774 = vand.u32 %v647, 4294901760
    %2775 = vmatmul.f32.gmra.mxu0 %v2774
    %v2776 = vpop.f32.mrf.mxu0
    %v2777 = vadd.f32 %v2500, %v2776
    %v2778 = vand.u32 %v650, 4294901760
    %2779 = vmatmul.f32.gmra.mxu0 %v2778
    %v2780 = vpop.f32.mrf.mxu0
    %v2781 = vadd.f32 %v2504, %v2780
    %v2782 = vand.u32 %v653, 4294901760
    %2783 = vmatmul.f32.gmra.mxu0 %v2782
    %v2784 = vpop.f32.mrf.mxu0
    %v2785 = vadd.f32 %v2508, %v2784
    %v2786 = vand.u32 %v656, 4294901760
    %2787 = vmatmul.f32.gmra.mxu0 %v2786
    %v2788 = vpop.f32.mrf.mxu0
    %v2789 = vadd.f32 %v2512, %v2788
    %v2790 = vand.u32 %v659, 4294901760
    %2791 = vmatmul.f32.gmra.mxu0 %v2790
    %v2792 = vpop.f32.mrf.mxu0
    %v2793 = vadd.f32 %v2516, %v2792
    %v2794 = vand.u32 %v662, 4294901760
    %2795 = vmatmul.f32.gmra.mxu0 %v2794
    %v2796 = vpop.f32.mrf.mxu0
    %v2797 = vadd.f32 %v2520, %v2796
    %v2798 = vand.u32 %v665, 4294901760
    %2799 = vmatmul.f32.gmra.mxu0 %v2798
    %v2800 = vpop.f32.mrf.mxu0
    %v2801 = vadd.f32 %v2524, %v2800
    %v2802 = vand.u32 %v668, 4294901760
    %2803 = vmatmul.f32.gmra.mxu0 %v2802
    %v2804 = vpop.f32.mrf.mxu0
    %v2805 = vadd.f32 %v2528, %v2804
    %v2806 = vand.u32 %v671, 4294901760
    %2807 = vmatmul.f32.gmra.mxu0 %v2806
    %v2808 = vpop.f32.mrf.mxu0
    %v2809 = vadd.f32 %v2532, %v2808
    %2810 = vdwg.mxu0
    %v2811 = vmul.f32 %v2557, 0.70710677
    %v2812 = vmul.f32 %v2561, 0.70710677
    %v2813 = vmul.f32 %v2565, 0.70710677
    %v2814 = vmul.f32 %v2569, 0.70710677
    %v2815 = vmul.f32 %v2573, 0.70710677
    %v2816 = vmul.f32 %v2577, 0.70710677
    %v2817 = vmul.f32 %v2581, 0.70710677
    %v2818 = vmul.f32 %v2585, 0.70710677
    %v2819 = vmul.f32 %v2589, 0.70710677
    %v2820 = vmul.f32 %v2593, 0.70710677
    %v2821 = vmul.f32 %v2597, 0.70710677
    %v2822 = vmul.f32 %v2601, 0.70710677
    %v2823 = vmul.f32 %v2605, 0.70710677
    %v2824 = vmul.f32 %v2609, 0.70710677
    %v2825 = vmul.f32 %v2613, 0.70710677
    %v2826 = vmul.f32 %v2617, 0.70710677
    %v2827 = vmul.f32 %v2621, 0.70710677
    %v2828 = vmul.f32 %v2625, 0.70710677
    %v2829 = vmul.f32 %v2629, 0.70710677
    %v2830 = vmul.f32 %v2633, 0.70710677
    %v2831 = vmul.f32 %v2637, 0.70710677
    %v2832 = vmul.f32 %v2641, 0.70710677
    %v2833 = vmul.f32 %v2645, 0.70710677
    %v2834 = vmul.f32 %v2649, 0.70710677
    %v2835 = vmul.f32 %v2653, 0.70710677
    %v2836 = vmul.f32 %v2657, 0.70710677
    %v2837 = vmul.f32 %v2661, 0.70710677
    %v2838 = vmul.f32 %v2665, 0.70710677
    %v2839 = vmul.f32 %v2669, 0.70710677
    %v2840 = vmul.f32 %v2673, 0.70710677
    %v2841 = vmul.f32 %v2677, 0.70710677
    %v2842 = vmul.f32 %v2681, 0.70710677
    %v2843 = vmul.f32 %v2685, 0.70710677
    %v2844 = vmul.f32 %v2689, 0.70710677
    %v2845 = vmul.f32 %v2693, 0.70710677
    %v2846 = vmul.f32 %v2697, 0.70710677
    %v2847 = vmul.f32 %v2701, 0.70710677
    %v2848 = vmul.f32 %v2705, 0.70710677
    %v2849 = vmul.f32 %v2709, 0.70710677
    %v2850 = vmul.f32 %v2713, 0.70710677
    %v2851 = vmul.f32 %v2717, 0.70710677
    %v2852 = vmul.f32 %v2721, 0.70710677
    %v2853 = vmul.f32 %v2725, 0.70710677
    %v2854 = vmul.f32 %v2729, 0.70710677
    %v2855 = vmul.f32 %v2733, 0.70710677
    %v2856 = vmul.f32 %v2737, 0.70710677
    %v2857 = vmul.f32 %v2741, 0.70710677
    %v2858 = vmul.f32 %v2745, 0.70710677
    %v2859 = vmul.f32 %v2749, 0.70710677
    %v2860 = vmul.f32 %v2753, 0.70710677
    %v2861 = vmul.f32 %v2757, 0.70710677
    %v2862 = vmul.f32 %v2761, 0.70710677
    %v2863 = vmul.f32 %v2765, 0.70710677
    %v2864 = vmul.f32 %v2769, 0.70710677
    %v2865 = vmul.f32 %v2773, 0.70710677
    %v2866 = vmul.f32 %v2777, 0.70710677
    %v2867 = vmul.f32 %v2781, 0.70710677
    %v2868 = vmul.f32 %v2785, 0.70710677
    %v2869 = vmul.f32 %v2789, 0.70710677
    %v2870 = vmul.f32 %v2793, 0.70710677
    %v2871 = vmul.f32 %v2797, 0.70710677
    %v2872 = vmul.f32 %v2801, 0.70710677
    %v2873 = vmul.f32 %v2805, 0.70710677
    %v2874 = vmul.f32 %v2809, 0.70710677
    %v2875 = vmul.f32 %v2557, %v2557
    %v2876 = vmin.f32 16.0, %v2875
    %v2877 = vmul.f32 %v2876, 2.1237322e-06
    %v2878 = vadd.f32 %v2877, 0.00028619796
    %v2879 = vmul.f32 %v2876, %v2878
    %v2880 = vadd.f32 %v2879, 0.0036580483
    %v2881 = vmul.f32 %v2876, %v2880
    %v2882 = vadd.f32 %v2881, 0.05243302
    %v2883 = vmul.f32 %v2876, %v2882
    %v2884 = vadd.f32 %v2883, 0.18741608
    %v2885 = vmul.f32 %v2876, %v2884
    %v2886 = vadd.f32 %v2885, 1.1283791
    %v2887 = vmul.f32 %v2557, %v2886
    %v2888 = vmul.f32 %v2876, 3.8918573e-05
    %v2889 = vadd.f32 %v2888, 0.001143296
    %v2890 = vmul.f32 %v2876, %v2889
    %v2891 = vadd.f32 %v2890, 0.014752088
    %v2892 = vmul.f32 %v2876, %v2891
    %v2893 = vadd.f32 %v2892, 0.112945676
    %v2894 = vmul.f32 %v2876, %v2893
    %v2895 = vadd.f32 %v2894, 0.4994258
    %v2896 = vmul.f32 %v2876, %v2895
    %v2897 = vadd.f32 %v2896, 1.0
    %v2898 = vrcp.pop %v2897
    %v2899 = vmul.f32 %v2897, %v2898
    %v2900 = vsub.f32 1.0, %v2899
    %v2901 = vmul.f32 %v2898, %v2900
    %v2902 = vadd.f32 %v2898, %v2901
    %vm2903 = vweird.f32 %v2897
    %vm2904 = vweird.f32 %v2898
    %vm2905 = vmor %vm2903, %vm2904
    %v2906 = vsel %vm2905, %v2898, %v2902
    %v2907 = vand.u32 2147483647, %v2897
    %vm2908 = vcmp.eq.f32.partialorder %v2907, 8.507059e+37
    %v2909 = vand.u32 %v2897, 2147483648
    %v2910 = vor.u32 1.1754944e-38, %v2909
    %v2911 = vsel %vm2908, %v2910, %v2906
    %v2912 = vmul.f32 %v2887, %v2911
    %v2913 = vmin.f32 %v2912, 1.0
    %v2914 = vmax.f32 %v2913, -1.0
    %v2915 = vmul.f32 %v2561, %v2561
    %v2916 = vmin.f32 16.0, %v2915
    %v2917 = vmul.f32 %v2916, 2.1237322e-06
    %v2918 = vadd.f32 %v2917, 0.00028619796
    %v2919 = vmul.f32 %v2916, %v2918
    %v2920 = vadd.f32 %v2919, 0.0036580483
    %v2921 = vmul.f32 %v2916, %v2920
    %v2922 = vadd.f32 %v2921, 0.05243302
    %v2923 = vmul.f32 %v2916, %v2922
    %v2924 = vadd.f32 %v2923, 0.18741608
    %v2925 = vmul.f32 %v2916, %v2924
    %v2926 = vadd.f32 %v2925, 1.1283791
    %v2927 = vmul.f32 %v2561, %v2926
    %v2928 = vmul.f32 %v2916, 3.8918573e-05
    %v2929 = vadd.f32 %v2928, 0.001143296
    %v2930 = vmul.f32 %v2916, %v2929
    %v2931 = vadd.f32 %v2930, 0.014752088
    %v2932 = vmul.f32 %v2916, %v2931
    %v2933 = vadd.f32 %v2932, 0.112945676
    %v2934 = vmul.f32 %v2916, %v2933
    %v2935 = vadd.f32 %v2934, 0.4994258
    %v2936 = vmul.f32 %v2916, %v2935
    %v2937 = vadd.f32 %v2936, 1.0
    %v2938 = vrcp.pop %v2937
    %v2939 = vmul.f32 %v2937, %v2938
    %v2940 = vsub.f32 1.0, %v2939
    %v2941 = vmul.f32 %v2938, %v2940
    %v2942 = vadd.f32 %v2938, %v2941
    %vm2943 = vweird.f32 %v2937
    %vm2944 = vweird.f32 %v2938
    %vm2945 = vmor %vm2943, %vm2944
    %v2946 = vsel %vm2945, %v2938, %v2942
    %v2947 = vand.u32 2147483647, %v2937
    %vm2948 = vcmp.eq.f32.partialorder %v2947, 8.507059e+37
    %v2949 = vand.u32 %v2937, 2147483648
    %v2950 = vor.u32 1.1754944e-38, %v2949
    %v2951 = vsel %vm2948, %v2950, %v2946
    %v2952 = vmul.f32 %v2927, %v2951
    %v2953 = vmin.f32 %v2952, 1.0
    %v2954 = vmax.f32 %v2953, -1.0
    %v2955 = vmul.f32 %v2565, %v2565
    %v2956 = vmin.f32 16.0, %v2955
    %v2957 = vmul.f32 %v2956, 2.1237322e-06
    %v2958 = vadd.f32 %v2957, 0.00028619796
    %v2959 = vmul.f32 %v2956, %v2958
    %v2960 = vadd.f32 %v2959, 0.0036580483
    %v2961 = vmul.f32 %v2956, %v2960
    %v2962 = vadd.f32 %v2961, 0.05243302
    %v2963 = vmul.f32 %v2956, %v2962
    %v2964 = vadd.f32 %v2963, 0.18741608
    %v2965 = vmul.f32 %v2956, %v2964
    %v2966 = vadd.f32 %v2965, 1.1283791
    %v2967 = vmul.f32 %v2565, %v2966
    %v2968 = vmul.f32 %v2956, 3.8918573e-05
    %v2969 = vadd.f32 %v2968, 0.001143296
    %v2970 = vmul.f32 %v2956, %v2969
    %v2971 = vadd.f32 %v2970, 0.014752088
    %v2972 = vmul.f32 %v2956, %v2971
    %v2973 = vadd.f32 %v2972, 0.112945676
    %v2974 = vmul.f32 %v2956, %v2973
    %v2975 = vadd.f32 %v2974, 0.4994258
    %v2976 = vmul.f32 %v2956, %v2975
    %v2977 = vadd.f32 %v2976, 1.0
    %v2978 = vrcp.pop %v2977
    %v2979 = vmul.f32 %v2977, %v2978
    %v2980 = vsub.f32 1.0, %v2979
    %v2981 = vmul.f32 %v2978, %v2980
    %v2982 = vadd.f32 %v2978, %v2981
    %vm2983 = vweird.f32 %v2977
    %vm2984 = vweird.f32 %v2978
    %vm2985 = vmor %vm2983, %vm2984
    %v2986 = vsel %vm2985, %v2978, %v2982
    %v2987 = vand.u32 2147483647, %v2977
    %vm2988 = vcmp.eq.f32.partialorder %v2987, 8.507059e+37
    %v2989 = vand.u32 %v2977, 2147483648
    %v2990 = vor.u32 1.1754944e-38, %v2989
    %v2991 = vsel %vm2988, %v2990, %v2986
    %v2992 = vmul.f32 %v2967, %v2991
    %v2993 = vmin.f32 %v2992, 1.0
    %v2994 = vmax.f32 %v2993, -1.0
    %v2995 = vmul.f32 %v2569, %v2569
    %v2996 = vmin.f32 16.0, %v2995
    %v2997 = vmul.f32 %v2996, 2.1237322e-06
    %v2998 = vadd.f32 %v2997, 0.00028619796
    %v2999 = vmul.f32 %v2996, %v2998
    %v3000 = vadd.f32 %v2999, 0.0036580483
    %v3001 = vmul.f32 %v2996, %v3000
    %v3002 = vadd.f32 %v3001, 0.05243302
    %v3003 = vmul.f32 %v2996, %v3002
    %v3004 = vadd.f32 %v3003, 0.18741608
    %v3005 = vmul.f32 %v2996, %v3004
    %v3006 = vadd.f32 %v3005, 1.1283791
    %v3007 = vmul.f32 %v2569, %v3006
    %v3008 = vmul.f32 %v2996, 3.8918573e-05
    %v3009 = vadd.f32 %v3008, 0.001143296
    %v3010 = vmul.f32 %v2996, %v3009
    %v3011 = vadd.f32 %v3010, 0.014752088
    %v3012 = vmul.f32 %v2996, %v3011
    %v3013 = vadd.f32 %v3012, 0.112945676
    %v3014 = vmul.f32 %v2996, %v3013
    %v3015 = vadd.f32 %v3014, 0.4994258
    %v3016 = vmul.f32 %v2996, %v3015
    %v3017 = vadd.f32 %v3016, 1.0
    %v3018 = vrcp.pop %v3017
    %v3019 = vmul.f32 %v3017, %v3018
    %v3020 = vsub.f32 1.0, %v3019
    %v3021 = vmul.f32 %v3018, %v3020
    %v3022 = vadd.f32 %v3018, %v3021
    %vm3023 = vweird.f32 %v3017
    %vm3024 = vweird.f32 %v3018
    %vm3025 = vmor %vm3023, %vm3024
    %v3026 = vsel %vm3025, %v3018, %v3022
    %v3027 = vand.u32 2147483647, %v3017
    %vm3028 = vcmp.eq.f32.partialorder %v3027, 8.507059e+37
    %v3029 = vand.u32 %v3017, 2147483648
    %v3030 = vor.u32 1.1754944e-38, %v3029
    %v3031 = vsel %vm3028, %v3030, %v3026
    %v3032 = vmul.f32 %v3007, %v3031
    %v3033 = vmin.f32 %v3032, 1.0
    %v3034 = vmax.f32 %v3033, -1.0
    %v3035 = vmul.f32 %v2573, %v2573
    %v3036 = vmin.f32 16.0, %v3035
    %v3037 = vmul.f32 %v3036, 2.1237322e-06
    %v3038 = vadd.f32 %v3037, 0.00028619796
    %v3039 = vmul.f32 %v3036, %v3038
    %v3040 = vadd.f32 %v3039, 0.0036580483
    %v3041 = vmul.f32 %v3036, %v3040
    %v3042 = vadd.f32 %v3041, 0.05243302
    %v3043 = vmul.f32 %v3036, %v3042
    %v3044 = vadd.f32 %v3043, 0.18741608
    %v3045 = vmul.f32 %v3036, %v3044
    %v3046 = vadd.f32 %v3045, 1.1283791
    %v3047 = vmul.f32 %v2573, %v3046
    %v3048 = vmul.f32 %v3036, 3.8918573e-05
    %v3049 = vadd.f32 %v3048, 0.001143296
    %v3050 = vmul.f32 %v3036, %v3049
    %v3051 = vadd.f32 %v3050, 0.014752088
    %v3052 = vmul.f32 %v3036, %v3051
    %v3053 = vadd.f32 %v3052, 0.112945676
    %v3054 = vmul.f32 %v3036, %v3053
    %v3055 = vadd.f32 %v3054, 0.4994258
    %v3056 = vmul.f32 %v3036, %v3055
    %v3057 = vadd.f32 %v3056, 1.0
    %v3058 = vrcp.pop %v3057
    %v3059 = vmul.f32 %v3057, %v3058
    %v3060 = vsub.f32 1.0, %v3059
    %v3061 = vmul.f32 %v3058, %v3060
    %v3062 = vadd.f32 %v3058, %v3061
    %vm3063 = vweird.f32 %v3057
    %vm3064 = vweird.f32 %v3058
    %vm3065 = vmor %vm3063, %vm3064
    %v3066 = vsel %vm3065, %v3058, %v3062
    %v3067 = vand.u32 2147483647, %v3057
    %vm3068 = vcmp.eq.f32.partialorder %v3067, 8.507059e+37
    %v3069 = vand.u32 %v3057, 2147483648
    %v3070 = vor.u32 1.1754944e-38, %v3069
    %v3071 = vsel %vm3068, %v3070, %v3066
    %v3072 = vmul.f32 %v3047, %v3071
    %v3073 = vmin.f32 %v3072, 1.0
    %v3074 = vmax.f32 %v3073, -1.0
    %v3075 = vmul.f32 %v2577, %v2577
    %v3076 = vmin.f32 16.0, %v3075
    %v3077 = vmul.f32 %v3076, 2.1237322e-06
    %v3078 = vadd.f32 %v3077, 0.00028619796
    %v3079 = vmul.f32 %v3076, %v3078
    %v3080 = vadd.f32 %v3079, 0.0036580483
    %v3081 = vmul.f32 %v3076, %v3080
    %v3082 = vadd.f32 %v3081, 0.05243302
    %v3083 = vmul.f32 %v3076, %v3082
    %v3084 = vadd.f32 %v3083, 0.18741608
    %v3085 = vmul.f32 %v3076, %v3084
    %v3086 = vadd.f32 %v3085, 1.1283791
    %v3087 = vmul.f32 %v2577, %v3086
    %v3088 = vmul.f32 %v3076, 3.8918573e-05
    %v3089 = vadd.f32 %v3088, 0.001143296
    %v3090 = vmul.f32 %v3076, %v3089
    %v3091 = vadd.f32 %v3090, 0.014752088
    %v3092 = vmul.f32 %v3076, %v3091
    %v3093 = vadd.f32 %v3092, 0.112945676
    %v3094 = vmul.f32 %v3076, %v3093
    %v3095 = vadd.f32 %v3094, 0.4994258
    %v3096 = vmul.f32 %v3076, %v3095
    %v3097 = vadd.f32 %v3096, 1.0
    %v3098 = vrcp.pop %v3097
    %v3099 = vmul.f32 %v3097, %v3098
    %v3100 = vsub.f32 1.0, %v3099
    %v3101 = vmul.f32 %v3098, %v3100
    %v3102 = vadd.f32 %v3098, %v3101
    %vm3103 = vweird.f32 %v3097
    %vm3104 = vweird.f32 %v3098
    %vm3105 = vmor %vm3103, %vm3104
    %v3106 = vsel %vm3105, %v3098, %v3102
    %v3107 = vand.u32 2147483647, %v3097
    %vm3108 = vcmp.eq.f32.partialorder %v3107, 8.507059e+37
    %v3109 = vand.u32 %v3097, 2147483648
    %v3110 = vor.u32 1.1754944e-38, %v3109
    %v3111 = vsel %vm3108, %v3110, %v3106
    %v3112 = vmul.f32 %v3087, %v3111
    %v3113 = vmin.f32 %v3112, 1.0
    %v3114 = vmax.f32 %v3113, -1.0
    %v3115 = vmul.f32 %v2581, %v2581
    %v3116 = vmin.f32 16.0, %v3115
    %v3117 = vmul.f32 %v3116, 2.1237322e-06
    %v3118 = vadd.f32 %v3117, 0.00028619796
    %v3119 = vmul.f32 %v3116, %v3118
    %v3120 = vadd.f32 %v3119, 0.0036580483
    %v3121 = vmul.f32 %v3116, %v3120
    %v3122 = vadd.f32 %v3121, 0.05243302
    %v3123 = vmul.f32 %v3116, %v3122
    %v3124 = vadd.f32 %v3123, 0.18741608
    %v3125 = vmul.f32 %v3116, %v3124
    %v3126 = vadd.f32 %v3125, 1.1283791
    %v3127 = vmul.f32 %v2581, %v3126
    %v3128 = vmul.f32 %v3116, 3.8918573e-05
    %v3129 = vadd.f32 %v3128, 0.001143296
    %v3130 = vmul.f32 %v3116, %v3129
    %v3131 = vadd.f32 %v3130, 0.014752088
    %v3132 = vmul.f32 %v3116, %v3131
    %v3133 = vadd.f32 %v3132, 0.112945676
    %v3134 = vmul.f32 %v3116, %v3133
    %v3135 = vadd.f32 %v3134, 0.4994258
    %v3136 = vmul.f32 %v3116, %v3135
    %v3137 = vadd.f32 %v3136, 1.0
    %v3138 = vrcp.pop %v3137
    %v3139 = vmul.f32 %v3137, %v3138
    %v3140 = vsub.f32 1.0, %v3139
    %v3141 = vmul.f32 %v3138, %v3140
    %v3142 = vadd.f32 %v3138, %v3141
    %vm3143 = vweird.f32 %v3137
    %vm3144 = vweird.f32 %v3138
    %vm3145 = vmor %vm3143, %vm3144
    %v3146 = vsel %vm3145, %v3138, %v3142
    %v3147 = vand.u32 2147483647, %v3137
    %vm3148 = vcmp.eq.f32.partialorder %v3147, 8.507059e+37
    %v3149 = vand.u32 %v3137, 2147483648
    %v3150 = vor.u32 1.1754944e-38, %v3149
    %v3151 = vsel %vm3148, %v3150, %v3146
    %v3152 = vmul.f32 %v3127, %v3151
    %v3153 = vmin.f32 %v3152, 1.0
    %v3154 = vmax.f32 %v3153, -1.0
    %v3155 = vmul.f32 %v2585, %v2585
    %v3156 = vmin.f32 16.0, %v3155
    %v3157 = vmul.f32 %v3156, 2.1237322e-06
    %v3158 = vadd.f32 %v3157, 0.00028619796
    %v3159 = vmul.f32 %v3156, %v3158
    %v3160 = vadd.f32 %v3159, 0.0036580483
    %v3161 = vmul.f32 %v3156, %v3160
    %v3162 = vadd.f32 %v3161, 0.05243302
    %v3163 = vmul.f32 %v3156, %v3162
    %v3164 = vadd.f32 %v3163, 0.18741608
    %v3165 = vmul.f32 %v3156, %v3164
    %v3166 = vadd.f32 %v3165, 1.1283791
    %v3167 = vmul.f32 %v2585, %v3166
    %v3168 = vmul.f32 %v3156, 3.8918573e-05
    %v3169 = vadd.f32 %v3168, 0.001143296
    %v3170 = vmul.f32 %v3156, %v3169
    %v3171 = vadd.f32 %v3170, 0.014752088
    %v3172 = vmul.f32 %v3156, %v3171
    %v3173 = vadd.f32 %v3172, 0.112945676
    %v3174 = vmul.f32 %v3156, %v3173
    %v3175 = vadd.f32 %v3174, 0.4994258
    %v3176 = vmul.f32 %v3156, %v3175
    %v3177 = vadd.f32 %v3176, 1.0
    %v3178 = vrcp.pop %v3177
    %v3179 = vmul.f32 %v3177, %v3178
    %v3180 = vsub.f32 1.0, %v3179
    %v3181 = vmul.f32 %v3178, %v3180
    %v3182 = vadd.f32 %v3178, %v3181
    %vm3183 = vweird.f32 %v3177
    %vm3184 = vweird.f32 %v3178
    %vm3185 = vmor %vm3183, %vm3184
    %v3186 = vsel %vm3185, %v3178, %v3182
    %v3187 = vand.u32 2147483647, %v3177
    %vm3188 = vcmp.eq.f32.partialorder %v3187, 8.507059e+37
    %v3189 = vand.u32 %v3177, 2147483648
    %v3190 = vor.u32 1.1754944e-38, %v3189
    %v3191 = vsel %vm3188, %v3190, %v3186
    %v3192 = vmul.f32 %v3167, %v3191
    %v3193 = vmin.f32 %v3192, 1.0
    %v3194 = vmax.f32 %v3193, -1.0
    %v3195 = vmul.f32 %v2589, %v2589
    %v3196 = vmin.f32 16.0, %v3195
    %v3197 = vmul.f32 %v3196, 2.1237322e-06
    %v3198 = vadd.f32 %v3197, 0.00028619796
    %v3199 = vmul.f32 %v3196, %v3198
    %v3200 = vadd.f32 %v3199, 0.0036580483
    %v3201 = vmul.f32 %v3196, %v3200
    %v3202 = vadd.f32 %v3201, 0.05243302
    %v3203 = vmul.f32 %v3196, %v3202
    %v3204 = vadd.f32 %v3203, 0.18741608
    %v3205 = vmul.f32 %v3196, %v3204
    %v3206 = vadd.f32 %v3205, 1.1283791
    %v3207 = vmul.f32 %v2589, %v3206
    %v3208 = vmul.f32 %v3196, 3.8918573e-05
    %v3209 = vadd.f32 %v3208, 0.001143296
    %v3210 = vmul.f32 %v3196, %v3209
    %v3211 = vadd.f32 %v3210, 0.014752088
    %v3212 = vmul.f32 %v3196, %v3211
    %v3213 = vadd.f32 %v3212, 0.112945676
    %v3214 = vmul.f32 %v3196, %v3213
    %v3215 = vadd.f32 %v3214, 0.4994258
    %v3216 = vmul.f32 %v3196, %v3215
    %v3217 = vadd.f32 %v3216, 1.0
    %v3218 = vrcp.pop %v3217
    %v3219 = vmul.f32 %v3217, %v3218
    %v3220 = vsub.f32 1.0, %v3219
    %v3221 = vmul.f32 %v3218, %v3220
    %v3222 = vadd.f32 %v3218, %v3221
    %vm3223 = vweird.f32 %v3217
    %vm3224 = vweird.f32 %v3218
    %vm3225 = vmor %vm3223, %vm3224
    %v3226 = vsel %vm3225, %v3218, %v3222
    %v3227 = vand.u32 2147483647, %v3217
    %vm3228 = vcmp.eq.f32.partialorder %v3227, 8.507059e+37
    %v3229 = vand.u32 %v3217, 2147483648
    %v3230 = vor.u32 1.1754944e-38, %v3229
    %v3231 = vsel %vm3228, %v3230, %v3226
    %v3232 = vmul.f32 %v3207, %v3231
    %v3233 = vmin.f32 %v3232, 1.0
    %v3234 = vmax.f32 %v3233, -1.0
    %v3235 = vmul.f32 %v2593, %v2593
    %v3236 = vmin.f32 16.0, %v3235
    %v3237 = vmul.f32 %v3236, 2.1237322e-06
    %v3238 = vadd.f32 %v3237, 0.00028619796
    %v3239 = vmul.f32 %v3236, %v3238
    %v3240 = vadd.f32 %v3239, 0.0036580483
    %v3241 = vmul.f32 %v3236, %v3240
    %v3242 = vadd.f32 %v3241, 0.05243302
    %v3243 = vmul.f32 %v3236, %v3242
    %v3244 = vadd.f32 %v3243, 0.18741608
    %v3245 = vmul.f32 %v3236, %v3244
    %v3246 = vadd.f32 %v3245, 1.1283791
    %v3247 = vmul.f32 %v2593, %v3246
    %v3248 = vmul.f32 %v3236, 3.8918573e-05
    %v3249 = vadd.f32 %v3248, 0.001143296
    %v3250 = vmul.f32 %v3236, %v3249
    %v3251 = vadd.f32 %v3250, 0.014752088
    %v3252 = vmul.f32 %v3236, %v3251
    %v3253 = vadd.f32 %v3252, 0.112945676
    %v3254 = vmul.f32 %v3236, %v3253
    %v3255 = vadd.f32 %v3254, 0.4994258
    %v3256 = vmul.f32 %v3236, %v3255
    %v3257 = vadd.f32 %v3256, 1.0
    %v3258 = vrcp.pop %v3257
    %v3259 = vmul.f32 %v3257, %v3258
    %v3260 = vsub.f32 1.0, %v3259
    %v3261 = vmul.f32 %v3258, %v3260
    %v3262 = vadd.f32 %v3258, %v3261
    %vm3263 = vweird.f32 %v3257
    %vm3264 = vweird.f32 %v3258
    %vm3265 = vmor %vm3263, %vm3264
    %v3266 = vsel %vm3265, %v3258, %v3262
    %v3267 = vand.u32 2147483647, %v3257
    %vm3268 = vcmp.eq.f32.partialorder %v3267, 8.507059e+37
    %v3269 = vand.u32 %v3257, 2147483648
    %v3270 = vor.u32 1.1754944e-38, %v3269
    %v3271 = vsel %vm3268, %v3270, %v3266
    %v3272 = vmul.f32 %v3247, %v3271
    %v3273 = vmin.f32 %v3272, 1.0
    %v3274 = vmax.f32 %v3273, -1.0
    %v3275 = vmul.f32 %v2597, %v2597
    %v3276 = vmin.f32 16.0, %v3275
    %v3277 = vmul.f32 %v3276, 2.1237322e-06
    %v3278 = vadd.f32 %v3277, 0.00028619796
    %v3279 = vmul.f32 %v3276, %v3278
    %v3280 = vadd.f32 %v3279, 0.0036580483
    %v3281 = vmul.f32 %v3276, %v3280
    %v3282 = vadd.f32 %v3281, 0.05243302
    %v3283 = vmul.f32 %v3276, %v3282
    %v3284 = vadd.f32 %v3283, 0.18741608
    %v3285 = vmul.f32 %v3276, %v3284
    %v3286 = vadd.f32 %v3285, 1.1283791
    %v3287 = vmul.f32 %v2597, %v3286
    %v3288 = vmul.f32 %v3276, 3.8918573e-05
    %v3289 = vadd.f32 %v3288, 0.001143296
    %v3290 = vmul.f32 %v3276, %v3289
    %v3291 = vadd.f32 %v3290, 0.014752088
    %v3292 = vmul.f32 %v3276, %v3291
    %v3293 = vadd.f32 %v3292, 0.112945676
    %v3294 = vmul.f32 %v3276, %v3293
    %v3295 = vadd.f32 %v3294, 0.4994258
    %v3296 = vmul.f32 %v3276, %v3295
    %v3297 = vadd.f32 %v3296, 1.0
    %v3298 = vrcp.pop %v3297
    %v3299 = vmul.f32 %v3297, %v3298
    %v3300 = vsub.f32 1.0, %v3299
    %v3301 = vmul.f32 %v3298, %v3300
    %v3302 = vadd.f32 %v3298, %v3301
    %vm3303 = vweird.f32 %v3297
    %vm3304 = vweird.f32 %v3298
    %vm3305 = vmor %vm3303, %vm3304
    %v3306 = vsel %vm3305, %v3298, %v3302
    %v3307 = vand.u32 2147483647, %v3297
    %vm3308 = vcmp.eq.f32.partialorder %v3307, 8.507059e+37
    %v3309 = vand.u32 %v3297, 2147483648
    %v3310 = vor.u32 1.1754944e-38, %v3309
    %v3311 = vsel %vm3308, %v3310, %v3306
    %v3312 = vmul.f32 %v3287, %v3311
    %v3313 = vmin.f32 %v3312, 1.0
    %v3314 = vmax.f32 %v3313, -1.0
    %v3315 = vmul.f32 %v2601, %v2601
    %v3316 = vmin.f32 16.0, %v3315
    %v3317 = vmul.f32 %v3316, 2.1237322e-06
    %v3318 = vadd.f32 %v3317, 0.00028619796
    %v3319 = vmul.f32 %v3316, %v3318
    %v3320 = vadd.f32 %v3319, 0.0036580483
    %v3321 = vmul.f32 %v3316, %v3320
    %v3322 = vadd.f32 %v3321, 0.05243302
    %v3323 = vmul.f32 %v3316, %v3322
    %v3324 = vadd.f32 %v3323, 0.18741608
    %v3325 = vmul.f32 %v3316, %v3324
    %v3326 = vadd.f32 %v3325, 1.1283791
    %v3327 = vmul.f32 %v2601, %v3326
    %v3328 = vmul.f32 %v3316, 3.8918573e-05
    %v3329 = vadd.f32 %v3328, 0.001143296
    %v3330 = vmul.f32 %v3316, %v3329
    %v3331 = vadd.f32 %v3330, 0.014752088
    %v3332 = vmul.f32 %v3316, %v3331
    %v3333 = vadd.f32 %v3332, 0.112945676
    %v3334 = vmul.f32 %v3316, %v3333
    %v3335 = vadd.f32 %v3334, 0.4994258
    %v3336 = vmul.f32 %v3316, %v3335
    %v3337 = vadd.f32 %v3336, 1.0
    %v3338 = vrcp.pop %v3337
    %v3339 = vmul.f32 %v3337, %v3338
    %v3340 = vsub.f32 1.0, %v3339
    %v3341 = vmul.f32 %v3338, %v3340
    %v3342 = vadd.f32 %v3338, %v3341
    %vm3343 = vweird.f32 %v3337
    %vm3344 = vweird.f32 %v3338
    %vm3345 = vmor %vm3343, %vm3344
    %v3346 = vsel %vm3345, %v3338, %v3342
    %v3347 = vand.u32 2147483647, %v3337
    %vm3348 = vcmp.eq.f32.partialorder %v3347, 8.507059e+37
    %v3349 = vand.u32 %v3337, 2147483648
    %v3350 = vor.u32 1.1754944e-38, %v3349
    %v3351 = vsel %vm3348, %v3350, %v3346
    %v3352 = vmul.f32 %v3327, %v3351
    %v3353 = vmin.f32 %v3352, 1.0
    %v3354 = vmax.f32 %v3353, -1.0
    %v3355 = vmul.f32 %v2605, %v2605
    %v3356 = vmin.f32 16.0, %v3355
    %v3357 = vmul.f32 %v3356, 2.1237322e-06
    %v3358 = vadd.f32 %v3357, 0.00028619796
    %v3359 = vmul.f32 %v3356, %v3358
    %v3360 = vadd.f32 %v3359, 0.0036580483
    %v3361 = vmul.f32 %v3356, %v3360
    %v3362 = vadd.f32 %v3361, 0.05243302
    %v3363 = vmul.f32 %v3356, %v3362
    %v3364 = vadd.f32 %v3363, 0.18741608
    %v3365 = vmul.f32 %v3356, %v3364
    %v3366 = vadd.f32 %v3365, 1.1283791
    %v3367 = vmul.f32 %v2605, %v3366
    %v3368 = vmul.f32 %v3356, 3.8918573e-05
    %v3369 = vadd.f32 %v3368, 0.001143296
    %v3370 = vmul.f32 %v3356, %v3369
    %v3371 = vadd.f32 %v3370, 0.014752088
    %v3372 = vmul.f32 %v3356, %v3371
    %v3373 = vadd.f32 %v3372, 0.112945676
    %v3374 = vmul.f32 %v3356, %v3373
    %v3375 = vadd.f32 %v3374, 0.4994258
    %v3376 = vmul.f32 %v3356, %v3375
    %v3377 = vadd.f32 %v3376, 1.0
    %v3378 = vrcp.pop %v3377
    %v3379 = vmul.f32 %v3377, %v3378
    %v3380 = vsub.f32 1.0, %v3379
    %v3381 = vmul.f32 %v3378, %v3380
    %v3382 = vadd.f32 %v3378, %v3381
    %vm3383 = vweird.f32 %v3377
    %vm3384 = vweird.f32 %v3378
    %vm3385 = vmor %vm3383, %vm3384
    %v3386 = vsel %vm3385, %v3378, %v3382
    %v3387 = vand.u32 2147483647, %v3377
    %vm3388 = vcmp.eq.f32.partialorder %v3387, 8.507059e+37
    %v3389 = vand.u32 %v3377, 2147483648
    %v3390 = vor.u32 1.1754944e-38, %v3389
    %v3391 = vsel %vm3388, %v3390, %v3386
    %v3392 = vmul.f32 %v3367, %v3391
    %v3393 = vmin.f32 %v3392, 1.0
    %v3394 = vmax.f32 %v3393, -1.0
    %v3395 = vmul.f32 %v2609, %v2609
    %v3396 = vmin.f32 16.0, %v3395
    %v3397 = vmul.f32 %v3396, 2.1237322e-06
    %v3398 = vadd.f32 %v3397, 0.00028619796
    %v3399 = vmul.f32 %v3396, %v3398
    %v3400 = vadd.f32 %v3399, 0.0036580483
    %v3401 = vmul.f32 %v3396, %v3400
    %v3402 = vadd.f32 %v3401, 0.05243302
    %v3403 = vmul.f32 %v3396, %v3402
    %v3404 = vadd.f32 %v3403, 0.18741608
    %v3405 = vmul.f32 %v3396, %v3404
    %v3406 = vadd.f32 %v3405, 1.1283791
    %v3407 = vmul.f32 %v2609, %v3406
    %v3408 = vmul.f32 %v3396, 3.8918573e-05
    %v3409 = vadd.f32 %v3408, 0.001143296
    %v3410 = vmul.f32 %v3396, %v3409
    %v3411 = vadd.f32 %v3410, 0.014752088
    %v3412 = vmul.f32 %v3396, %v3411
    %v3413 = vadd.f32 %v3412, 0.112945676
    %v3414 = vmul.f32 %v3396, %v3413
    %v3415 = vadd.f32 %v3414, 0.4994258
    %v3416 = vmul.f32 %v3396, %v3415
    %v3417 = vadd.f32 %v3416, 1.0
    %v3418 = vrcp.pop %v3417
    %v3419 = vmul.f32 %v3417, %v3418
    %v3420 = vsub.f32 1.0, %v3419
    %v3421 = vmul.f32 %v3418, %v3420
    %v3422 = vadd.f32 %v3418, %v3421
    %vm3423 = vweird.f32 %v3417
    %vm3424 = vweird.f32 %v3418
    %vm3425 = vmor %vm3423, %vm3424
    %v3426 = vsel %vm3425, %v3418, %v3422
    %v3427 = vand.u32 2147483647, %v3417
    %vm3428 = vcmp.eq.f32.partialorder %v3427, 8.507059e+37
    %v3429 = vand.u32 %v3417, 2147483648
    %v3430 = vor.u32 1.1754944e-38, %v3429
    %v3431 = vsel %vm3428, %v3430, %v3426
    %v3432 = vmul.f32 %v3407, %v3431
    %v3433 = vmin.f32 %v3432, 1.0
    %v3434 = vmax.f32 %v3433, -1.0
    %v3435 = vmul.f32 %v2613, %v2613
    %v3436 = vmin.f32 16.0, %v3435
    %v3437 = vmul.f32 %v3436, 2.1237322e-06
    %v3438 = vadd.f32 %v3437, 0.00028619796
    %v3439 = vmul.f32 %v3436, %v3438
    %v3440 = vadd.f32 %v3439, 0.0036580483
    %v3441 = vmul.f32 %v3436, %v3440
    %v3442 = vadd.f32 %v3441, 0.05243302
    %v3443 = vmul.f32 %v3436, %v3442
    %v3444 = vadd.f32 %v3443, 0.18741608
    %v3445 = vmul.f32 %v3436, %v3444
    %v3446 = vadd.f32 %v3445, 1.1283791
    %v3447 = vmul.f32 %v2613, %v3446
    %v3448 = vmul.f32 %v3436, 3.8918573e-05
    %v3449 = vadd.f32 %v3448, 0.001143296
    %v3450 = vmul.f32 %v3436, %v3449
    %v3451 = vadd.f32 %v3450, 0.014752088
    %v3452 = vmul.f32 %v3436, %v3451
    %v3453 = vadd.f32 %v3452, 0.112945676
    %v3454 = vmul.f32 %v3436, %v3453
    %v3455 = vadd.f32 %v3454, 0.4994258
    %v3456 = vmul.f32 %v3436, %v3455
    %v3457 = vadd.f32 %v3456, 1.0
    %v3458 = vrcp.pop %v3457
    %v3459 = vmul.f32 %v3457, %v3458
    %v3460 = vsub.f32 1.0, %v3459
    %v3461 = vmul.f32 %v3458, %v3460
    %v3462 = vadd.f32 %v3458, %v3461
    %vm3463 = vweird.f32 %v3457
    %vm3464 = vweird.f32 %v3458
    %vm3465 = vmor %vm3463, %vm3464
    %v3466 = vsel %vm3465, %v3458, %v3462
    %v3467 = vand.u32 2147483647, %v3457
    %vm3468 = vcmp.eq.f32.partialorder %v3467, 8.507059e+37
    %v3469 = vand.u32 %v3457, 2147483648
    %v3470 = vor.u32 1.1754944e-38, %v3469
    %v3471 = vsel %vm3468, %v3470, %v3466
    %v3472 = vmul.f32 %v3447, %v3471
    %v3473 = vmin.f32 %v3472, 1.0
    %v3474 = vmax.f32 %v3473, -1.0
    %v3475 = vmul.f32 %v2617, %v2617
    %v3476 = vmin.f32 16.0, %v3475
    %v3477 = vmul.f32 %v3476, 2.1237322e-06
    %v3478 = vadd.f32 %v3477, 0.00028619796
    %v3479 = vmul.f32 %v3476, %v3478
    %v3480 = vadd.f32 %v3479, 0.0036580483
    %v3481 = vmul.f32 %v3476, %v3480
    %v3482 = vadd.f32 %v3481, 0.05243302
    %v3483 = vmul.f32 %v3476, %v3482
    %v3484 = vadd.f32 %v3483, 0.18741608
    %v3485 = vmul.f32 %v3476, %v3484
    %v3486 = vadd.f32 %v3485, 1.1283791
    %v3487 = vmul.f32 %v2617, %v3486
    %v3488 = vmul.f32 %v3476, 3.8918573e-05
    %v3489 = vadd.f32 %v3488, 0.001143296
    %v3490 = vmul.f32 %v3476, %v3489
    %v3491 = vadd.f32 %v3490, 0.014752088
    %v3492 = vmul.f32 %v3476, %v3491
    %v3493 = vadd.f32 %v3492, 0.112945676
    %v3494 = vmul.f32 %v3476, %v3493
    %v3495 = vadd.f32 %v3494, 0.4994258
    %v3496 = vmul.f32 %v3476, %v3495
    %v3497 = vadd.f32 %v3496, 1.0
    %v3498 = vrcp.pop %v3497
    %v3499 = vmul.f32 %v3497, %v3498
    %v3500 = vsub.f32 1.0, %v3499
    %v3501 = vmul.f32 %v3498, %v3500
    %v3502 = vadd.f32 %v3498, %v3501
    %vm3503 = vweird.f32 %v3497
    %vm3504 = vweird.f32 %v3498
    %vm3505 = vmor %vm3503, %vm3504
    %v3506 = vsel %vm3505, %v3498, %v3502
    %v3507 = vand.u32 2147483647, %v3497
    %vm3508 = vcmp.eq.f32.partialorder %v3507, 8.507059e+37
    %v3509 = vand.u32 %v3497, 2147483648
    %v3510 = vor.u32 1.1754944e-38, %v3509
    %v3511 = vsel %vm3508, %v3510, %v3506
    %v3512 = vmul.f32 %v3487, %v3511
    %v3513 = vmin.f32 %v3512, 1.0
    %v3514 = vmax.f32 %v3513, -1.0
    %v3515 = vmul.f32 %v2621, %v2621
    %v3516 = vmin.f32 16.0, %v3515
    %v3517 = vmul.f32 %v3516, 2.1237322e-06
    %v3518 = vadd.f32 %v3517, 0.00028619796
    %v3519 = vmul.f32 %v3516, %v3518
    %v3520 = vadd.f32 %v3519, 0.0036580483
    %v3521 = vmul.f32 %v3516, %v3520
    %v3522 = vadd.f32 %v3521, 0.05243302
    %v3523 = vmul.f32 %v3516, %v3522
    %v3524 = vadd.f32 %v3523, 0.18741608
    %v3525 = vmul.f32 %v3516, %v3524
    %v3526 = vadd.f32 %v3525, 1.1283791
    %v3527 = vmul.f32 %v2621, %v3526
    %v3528 = vmul.f32 %v3516, 3.8918573e-05
    %v3529 = vadd.f32 %v3528, 0.001143296
    %v3530 = vmul.f32 %v3516, %v3529
    %v3531 = vadd.f32 %v3530, 0.014752088
    %v3532 = vmul.f32 %v3516, %v3531
    %v3533 = vadd.f32 %v3532, 0.112945676
    %v3534 = vmul.f32 %v3516, %v3533
    %v3535 = vadd.f32 %v3534, 0.4994258
    %v3536 = vmul.f32 %v3516, %v3535
    %v3537 = vadd.f32 %v3536, 1.0
    %v3538 = vrcp.pop %v3537
    %v3539 = vmul.f32 %v3537, %v3538
    %v3540 = vsub.f32 1.0, %v3539
    %v3541 = vmul.f32 %v3538, %v3540
    %v3542 = vadd.f32 %v3538, %v3541
    %vm3543 = vweird.f32 %v3537
    %vm3544 = vweird.f32 %v3538
    %vm3545 = vmor %vm3543, %vm3544
    %v3546 = vsel %vm3545, %v3538, %v3542
    %v3547 = vand.u32 2147483647, %v3537
    %vm3548 = vcmp.eq.f32.partialorder %v3547, 8.507059e+37
    %v3549 = vand.u32 %v3537, 2147483648
    %v3550 = vor.u32 1.1754944e-38, %v3549
    %v3551 = vsel %vm3548, %v3550, %v3546
    %v3552 = vmul.f32 %v3527, %v3551
    %v3553 = vmin.f32 %v3552, 1.0
    %v3554 = vmax.f32 %v3553, -1.0
    %v3555 = vmul.f32 %v2625, %v2625
    %v3556 = vmin.f32 16.0, %v3555
    %v3557 = vmul.f32 %v3556, 2.1237322e-06
    %v3558 = vadd.f32 %v3557, 0.00028619796
    %v3559 = vmul.f32 %v3556, %v3558
    %v3560 = vadd.f32 %v3559, 0.0036580483
    %v3561 = vmul.f32 %v3556, %v3560
    %v3562 = vadd.f32 %v3561, 0.05243302
    %v3563 = vmul.f32 %v3556, %v3562
    %v3564 = vadd.f32 %v3563, 0.18741608
    %v3565 = vmul.f32 %v3556, %v3564
    %v3566 = vadd.f32 %v3565, 1.1283791
    %v3567 = vmul.f32 %v2625, %v3566
    %v3568 = vmul.f32 %v3556, 3.8918573e-05
    %v3569 = vadd.f32 %v3568, 0.001143296
    %v3570 = vmul.f32 %v3556, %v3569
    %v3571 = vadd.f32 %v3570, 0.014752088
    %v3572 = vmul.f32 %v3556, %v3571
    %v3573 = vadd.f32 %v3572, 0.112945676
    %v3574 = vmul.f32 %v3556, %v3573
    %v3575 = vadd.f32 %v3574, 0.4994258
    %v3576 = vmul.f32 %v3556, %v3575
    %v3577 = vadd.f32 %v3576, 1.0
    %v3578 = vrcp.pop %v3577
    %v3579 = vmul.f32 %v3577, %v3578
    %v3580 = vsub.f32 1.0, %v3579
    %v3581 = vmul.f32 %v3578, %v3580
    %v3582 = vadd.f32 %v3578, %v3581
    %vm3583 = vweird.f32 %v3577
    %vm3584 = vweird.f32 %v3578
    %vm3585 = vmor %vm3583, %vm3584
    %v3586 = vsel %vm3585, %v3578, %v3582
    %v3587 = vand.u32 2147483647, %v3577
    %vm3588 = vcmp.eq.f32.partialorder %v3587, 8.507059e+37
    %v3589 = vand.u32 %v3577, 2147483648
    %v3590 = vor.u32 1.1754944e-38, %v3589
    %v3591 = vsel %vm3588, %v3590, %v3586
    %v3592 = vmul.f32 %v3567, %v3591
    %v3593 = vmin.f32 %v3592, 1.0
    %v3594 = vmax.f32 %v3593, -1.0
    %v3595 = vmul.f32 %v2629, %v2629
    %v3596 = vmin.f32 16.0, %v3595
    %v3597 = vmul.f32 %v3596, 2.1237322e-06
    %v3598 = vadd.f32 %v3597, 0.00028619796
    %v3599 = vmul.f32 %v3596, %v3598
    %v3600 = vadd.f32 %v3599, 0.0036580483
    %v3601 = vmul.f32 %v3596, %v3600
    %v3602 = vadd.f32 %v3601, 0.05243302
    %v3603 = vmul.f32 %v3596, %v3602
    %v3604 = vadd.f32 %v3603, 0.18741608
    %v3605 = vmul.f32 %v3596, %v3604
    %v3606 = vadd.f32 %v3605, 1.1283791
    %v3607 = vmul.f32 %v2629, %v3606
    %v3608 = vmul.f32 %v3596, 3.8918573e-05
    %v3609 = vadd.f32 %v3608, 0.001143296
    %v3610 = vmul.f32 %v3596, %v3609
    %v3611 = vadd.f32 %v3610, 0.014752088
    %v3612 = vmul.f32 %v3596, %v3611
    %v3613 = vadd.f32 %v3612, 0.112945676
    %v3614 = vmul.f32 %v3596, %v3613
    %v3615 = vadd.f32 %v3614, 0.4994258
    %v3616 = vmul.f32 %v3596, %v3615
    %v3617 = vadd.f32 %v3616, 1.0
    %v3618 = vrcp.pop %v3617
    %v3619 = vmul.f32 %v3617, %v3618
    %v3620 = vsub.f32 1.0, %v3619
    %v3621 = vmul.f32 %v3618, %v3620
    %v3622 = vadd.f32 %v3618, %v3621
    %vm3623 = vweird.f32 %v3617
    %vm3624 = vweird.f32 %v3618
    %vm3625 = vmor %vm3623, %vm3624
    %v3626 = vsel %vm3625, %v3618, %v3622
    %v3627 = vand.u32 2147483647, %v3617
    %vm3628 = vcmp.eq.f32.partialorder %v3627, 8.507059e+37
    %v3629 = vand.u32 %v3617, 2147483648
    %v3630 = vor.u32 1.1754944e-38, %v3629
    %v3631 = vsel %vm3628, %v3630, %v3626
    %v3632 = vmul.f32 %v3607, %v3631
    %v3633 = vmin.f32 %v3632, 1.0
    %v3634 = vmax.f32 %v3633, -1.0
    %v3635 = vmul.f32 %v2633, %v2633
    %v3636 = vmin.f32 16.0, %v3635
    %v3637 = vmul.f32 %v3636, 2.1237322e-06
    %v3638 = vadd.f32 %v3637, 0.00028619796
    %v3639 = vmul.f32 %v3636, %v3638
    %v3640 = vadd.f32 %v3639, 0.0036580483
    %v3641 = vmul.f32 %v3636, %v3640
    %v3642 = vadd.f32 %v3641, 0.05243302
    %v3643 = vmul.f32 %v3636, %v3642
    %v3644 = vadd.f32 %v3643, 0.18741608
    %v3645 = vmul.f32 %v3636, %v3644
    %v3646 = vadd.f32 %v3645, 1.1283791
    %v3647 = vmul.f32 %v2633, %v3646
    %v3648 = vmul.f32 %v3636, 3.8918573e-05
    %v3649 = vadd.f32 %v3648, 0.001143296
    %v3650 = vmul.f32 %v3636, %v3649
    %v3651 = vadd.f32 %v3650, 0.014752088
    %v3652 = vmul.f32 %v3636, %v3651
    %v3653 = vadd.f32 %v3652, 0.112945676
    %v3654 = vmul.f32 %v3636, %v3653
    %v3655 = vadd.f32 %v3654, 0.4994258
    %v3656 = vmul.f32 %v3636, %v3655
    %v3657 = vadd.f32 %v3656, 1.0
    %v3658 = vrcp.pop %v3657
    %v3659 = vmul.f32 %v3657, %v3658
    %v3660 = vsub.f32 1.0, %v3659
    %v3661 = vmul.f32 %v3658, %v3660
    %v3662 = vadd.f32 %v3658, %v3661
    %vm3663 = vweird.f32 %v3657
    %vm3664 = vweird.f32 %v3658
    %vm3665 = vmor %vm3663, %vm3664
    %v3666 = vsel %vm3665, %v3658, %v3662
    %v3667 = vand.u32 2147483647, %v3657
    %vm3668 = vcmp.eq.f32.partialorder %v3667, 8.507059e+37
    %v3669 = vand.u32 %v3657, 2147483648
    %v3670 = vor.u32 1.1754944e-38, %v3669
    %v3671 = vsel %vm3668, %v3670, %v3666
    %v3672 = vmul.f32 %v3647, %v3671
    %v3673 = vmin.f32 %v3672, 1.0
    %v3674 = vmax.f32 %v3673, -1.0
    %v3675 = vmul.f32 %v2637, %v2637
    %v3676 = vmin.f32 16.0, %v3675
    %v3677 = vmul.f32 %v3676, 2.1237322e-06
    %v3678 = vadd.f32 %v3677, 0.00028619796
    %v3679 = vmul.f32 %v3676, %v3678
    %v3680 = vadd.f32 %v3679, 0.0036580483
    %v3681 = vmul.f32 %v3676, %v3680
    %v3682 = vadd.f32 %v3681, 0.05243302
    %v3683 = vmul.f32 %v3676, %v3682
    %v3684 = vadd.f32 %v3683, 0.18741608
    %v3685 = vmul.f32 %v3676, %v3684
    %v3686 = vadd.f32 %v3685, 1.1283791
    %v3687 = vmul.f32 %v2637, %v3686
    %v3688 = vmul.f32 %v3676, 3.8918573e-05
    %v3689 = vadd.f32 %v3688, 0.001143296
    %v3690 = vmul.f32 %v3676, %v3689
    %v3691 = vadd.f32 %v3690, 0.014752088
    %v3692 = vmul.f32 %v3676, %v3691
    %v3693 = vadd.f32 %v3692, 0.112945676
    %v3694 = vmul.f32 %v3676, %v3693
    %v3695 = vadd.f32 %v3694, 0.4994258
    %v3696 = vmul.f32 %v3676, %v3695
    %v3697 = vadd.f32 %v3696, 1.0
    %v3698 = vrcp.pop %v3697
    %v3699 = vmul.f32 %v3697, %v3698
    %v3700 = vsub.f32 1.0, %v3699
    %v3701 = vmul.f32 %v3698, %v3700
    %v3702 = vadd.f32 %v3698, %v3701
    %vm3703 = vweird.f32 %v3697
    %vm3704 = vweird.f32 %v3698
    %vm3705 = vmor %vm3703, %vm3704
    %v3706 = vsel %vm3705, %v3698, %v3702
    %v3707 = vand.u32 2147483647, %v3697
    %vm3708 = vcmp.eq.f32.partialorder %v3707, 8.507059e+37
    %v3709 = vand.u32 %v3697, 2147483648
    %v3710 = vor.u32 1.1754944e-38, %v3709
    %v3711 = vsel %vm3708, %v3710, %v3706
    %v3712 = vmul.f32 %v3687, %v3711
    %v3713 = vmin.f32 %v3712, 1.0
    %v3714 = vmax.f32 %v3713, -1.0
    %v3715 = vmul.f32 %v2641, %v2641
    %v3716 = vmin.f32 16.0, %v3715
    %v3717 = vmul.f32 %v3716, 2.1237322e-06
    %v3718 = vadd.f32 %v3717, 0.00028619796
    %v3719 = vmul.f32 %v3716, %v3718
    %v3720 = vadd.f32 %v3719, 0.0036580483
    %v3721 = vmul.f32 %v3716, %v3720
    %v3722 = vadd.f32 %v3721, 0.05243302
    %v3723 = vmul.f32 %v3716, %v3722
    %v3724 = vadd.f32 %v3723, 0.18741608
    %v3725 = vmul.f32 %v3716, %v3724
    %v3726 = vadd.f32 %v3725, 1.1283791
    %v3727 = vmul.f32 %v2641, %v3726
    %v3728 = vmul.f32 %v3716, 3.8918573e-05
    %v3729 = vadd.f32 %v3728, 0.001143296
    %v3730 = vmul.f32 %v3716, %v3729
    %v3731 = vadd.f32 %v3730, 0.014752088
    %v3732 = vmul.f32 %v3716, %v3731
    %v3733 = vadd.f32 %v3732, 0.112945676
    %v3734 = vmul.f32 %v3716, %v3733
    %v3735 = vadd.f32 %v3734, 0.4994258
    %v3736 = vmul.f32 %v3716, %v3735
    %v3737 = vadd.f32 %v3736, 1.0
    %v3738 = vrcp.pop %v3737
    %v3739 = vmul.f32 %v3737, %v3738
    %v3740 = vsub.f32 1.0, %v3739
    %v3741 = vmul.f32 %v3738, %v3740
    %v3742 = vadd.f32 %v3738, %v3741
    %vm3743 = vweird.f32 %v3737
    %vm3744 = vweird.f32 %v3738
    %vm3745 = vmor %vm3743, %vm3744
    %v3746 = vsel %vm3745, %v3738, %v3742
    %v3747 = vand.u32 2147483647, %v3737
    %vm3748 = vcmp.eq.f32.partialorder %v3747, 8.507059e+37
    %v3749 = vand.u32 %v3737, 2147483648
    %v3750 = vor.u32 1.1754944e-38, %v3749
    %v3751 = vsel %vm3748, %v3750, %v3746
    %v3752 = vmul.f32 %v3727, %v3751
    %v3753 = vmin.f32 %v3752, 1.0
    %v3754 = vmax.f32 %v3753, -1.0
    %v3755 = vmul.f32 %v2645, %v2645
    %v3756 = vmin.f32 16.0, %v3755
    %v3757 = vmul.f32 %v3756, 2.1237322e-06
    %v3758 = vadd.f32 %v3757, 0.00028619796
    %v3759 = vmul.f32 %v3756, %v3758
    %v3760 = vadd.f32 %v3759, 0.0036580483
    %v3761 = vmul.f32 %v3756, %v3760
    %v3762 = vadd.f32 %v3761, 0.05243302
    %v3763 = vmul.f32 %v3756, %v3762
    %v3764 = vadd.f32 %v3763, 0.18741608
    %v3765 = vmul.f32 %v3756, %v3764
    %v3766 = vadd.f32 %v3765, 1.1283791
    %v3767 = vmul.f32 %v2645, %v3766
    %v3768 = vmul.f32 %v3756, 3.8918573e-05
    %v3769 = vadd.f32 %v3768, 0.001143296
    %v3770 = vmul.f32 %v3756, %v3769
    %v3771 = vadd.f32 %v3770, 0.014752088
    %v3772 = vmul.f32 %v3756, %v3771
    %v3773 = vadd.f32 %v3772, 0.112945676
    %v3774 = vmul.f32 %v3756, %v3773
    %v3775 = vadd.f32 %v3774, 0.4994258
    %v3776 = vmul.f32 %v3756, %v3775
    %v3777 = vadd.f32 %v3776, 1.0
    %v3778 = vrcp.pop %v3777
    %v3779 = vmul.f32 %v3777, %v3778
    %v3780 = vsub.f32 1.0, %v3779
    %v3781 = vmul.f32 %v3778, %v3780
    %v3782 = vadd.f32 %v3778, %v3781
    %vm3783 = vweird.f32 %v3777
    %vm3784 = vweird.f32 %v3778
    %vm3785 = vmor %vm3783, %vm3784
    %v3786 = vsel %vm3785, %v3778, %v3782
    %v3787 = vand.u32 2147483647, %v3777
    %vm3788 = vcmp.eq.f32.partialorder %v3787, 8.507059e+37
    %v3789 = vand.u32 %v3777, 2147483648
    %v3790 = vor.u32 1.1754944e-38, %v3789
    %v3791 = vsel %vm3788, %v3790, %v3786
    %v3792 = vmul.f32 %v3767, %v3791
    %v3793 = vmin.f32 %v3792, 1.0
    %v3794 = vmax.f32 %v3793, -1.0
    %v3795 = vmul.f32 %v2649, %v2649
    %v3796 = vmin.f32 16.0, %v3795
    %v3797 = vmul.f32 %v3796, 2.1237322e-06
    %v3798 = vadd.f32 %v3797, 0.00028619796
    %v3799 = vmul.f32 %v3796, %v3798
    %v3800 = vadd.f32 %v3799, 0.0036580483
    %v3801 = vmul.f32 %v3796, %v3800
    %v3802 = vadd.f32 %v3801, 0.05243302
    %v3803 = vmul.f32 %v3796, %v3802
    %v3804 = vadd.f32 %v3803, 0.18741608
    %v3805 = vmul.f32 %v3796, %v3804
    %v3806 = vadd.f32 %v3805, 1.1283791
    %v3807 = vmul.f32 %v2649, %v3806
    %v3808 = vmul.f32 %v3796, 3.8918573e-05
    %v3809 = vadd.f32 %v3808, 0.001143296
    %v3810 = vmul.f32 %v3796, %v3809
    %v3811 = vadd.f32 %v3810, 0.014752088
    %v3812 = vmul.f32 %v3796, %v3811
    %v3813 = vadd.f32 %v3812, 0.112945676
    %v3814 = vmul.f32 %v3796, %v3813
    %v3815 = vadd.f32 %v3814, 0.4994258
    %v3816 = vmul.f32 %v3796, %v3815
    %v3817 = vadd.f32 %v3816, 1.0
    %v3818 = vrcp.pop %v3817
    %v3819 = vmul.f32 %v3817, %v3818
    %v3820 = vsub.f32 1.0, %v3819
    %v3821 = vmul.f32 %v3818, %v3820
    %v3822 = vadd.f32 %v3818, %v3821
    %vm3823 = vweird.f32 %v3817
    %vm3824 = vweird.f32 %v3818
    %vm3825 = vmor %vm3823, %vm3824
    %v3826 = vsel %vm3825, %v3818, %v3822
    %v3827 = vand.u32 2147483647, %v3817
    %vm3828 = vcmp.eq.f32.partialorder %v3827, 8.507059e+37
    %v3829 = vand.u32 %v3817, 2147483648
    %v3830 = vor.u32 1.1754944e-38, %v3829
    %v3831 = vsel %vm3828, %v3830, %v3826
    %v3832 = vmul.f32 %v3807, %v3831
    %v3833 = vmin.f32 %v3832, 1.0
    %v3834 = vmax.f32 %v3833, -1.0
    %v3835 = vmul.f32 %v2653, %v2653
    %v3836 = vmin.f32 16.0, %v3835
    %v3837 = vmul.f32 %v3836, 2.1237322e-06
    %v3838 = vadd.f32 %v3837, 0.00028619796
    %v3839 = vmul.f32 %v3836, %v3838
    %v3840 = vadd.f32 %v3839, 0.0036580483
    %v3841 = vmul.f32 %v3836, %v3840
    %v3842 = vadd.f32 %v3841, 0.05243302
    %v3843 = vmul.f32 %v3836, %v3842
    %v3844 = vadd.f32 %v3843, 0.18741608
    %v3845 = vmul.f32 %v3836, %v3844
    %v3846 = vadd.f32 %v3845, 1.1283791
    %v3847 = vmul.f32 %v2653, %v3846
    %v3848 = vmul.f32 %v3836, 3.8918573e-05
    %v3849 = vadd.f32 %v3848, 0.001143296
    %v3850 = vmul.f32 %v3836, %v3849
    %v3851 = vadd.f32 %v3850, 0.014752088
    %v3852 = vmul.f32 %v3836, %v3851
    %v3853 = vadd.f32 %v3852, 0.112945676
    %v3854 = vmul.f32 %v3836, %v3853
    %v3855 = vadd.f32 %v3854, 0.4994258
    %v3856 = vmul.f32 %v3836, %v3855
    %v3857 = vadd.f32 %v3856, 1.0
    %v3858 = vrcp.pop %v3857
    %v3859 = vmul.f32 %v3857, %v3858
    %v3860 = vsub.f32 1.0, %v3859
    %v3861 = vmul.f32 %v3858, %v3860
    %v3862 = vadd.f32 %v3858, %v3861
    %vm3863 = vweird.f32 %v3857
    %vm3864 = vweird.f32 %v3858
    %vm3865 = vmor %vm3863, %vm3864
    %v3866 = vsel %vm3865, %v3858, %v3862
    %v3867 = vand.u32 2147483647, %v3857
    %vm3868 = vcmp.eq.f32.partialorder %v3867, 8.507059e+37
    %v3869 = vand.u32 %v3857, 2147483648
    %v3870 = vor.u32 1.1754944e-38, %v3869
    %v3871 = vsel %vm3868, %v3870, %v3866
    %v3872 = vmul.f32 %v3847, %v3871
    %v3873 = vmin.f32 %v3872, 1.0
    %v3874 = vmax.f32 %v3873, -1.0
    %v3875 = vmul.f32 %v2657, %v2657
    %v3876 = vmin.f32 16.0, %v3875
    %v3877 = vmul.f32 %v3876, 2.1237322e-06
    %v3878 = vadd.f32 %v3877, 0.00028619796
    %v3879 = vmul.f32 %v3876, %v3878
    %v3880 = vadd.f32 %v3879, 0.0036580483
    %v3881 = vmul.f32 %v3876, %v3880
    %v3882 = vadd.f32 %v3881, 0.05243302
    %v3883 = vmul.f32 %v3876, %v3882
    %v3884 = vadd.f32 %v3883, 0.18741608
    %v3885 = vmul.f32 %v3876, %v3884
    %v3886 = vadd.f32 %v3885, 1.1283791
    %v3887 = vmul.f32 %v2657, %v3886
    %v3888 = vmul.f32 %v3876, 3.8918573e-05
    %v3889 = vadd.f32 %v3888, 0.001143296
    %v3890 = vmul.f32 %v3876, %v3889
    %v3891 = vadd.f32 %v3890, 0.014752088
    %v3892 = vmul.f32 %v3876, %v3891
    %v3893 = vadd.f32 %v3892, 0.112945676
    %v3894 = vmul.f32 %v3876, %v3893
    %v3895 = vadd.f32 %v3894, 0.4994258
    %v3896 = vmul.f32 %v3876, %v3895
    %v3897 = vadd.f32 %v3896, 1.0
    %v3898 = vrcp.pop %v3897
    %v3899 = vmul.f32 %v3897, %v3898
    %v3900 = vsub.f32 1.0, %v3899
    %v3901 = vmul.f32 %v3898, %v3900
    %v3902 = vadd.f32 %v3898, %v3901
    %vm3903 = vweird.f32 %v3897
    %vm3904 = vweird.f32 %v3898
    %vm3905 = vmor %vm3903, %vm3904
    %v3906 = vsel %vm3905, %v3898, %v3902
    %v3907 = vand.u32 2147483647, %v3897
    %vm3908 = vcmp.eq.f32.partialorder %v3907, 8.507059e+37
    %v3909 = vand.u32 %v3897, 2147483648
    %v3910 = vor.u32 1.1754944e-38, %v3909
    %v3911 = vsel %vm3908, %v3910, %v3906
    %v3912 = vmul.f32 %v3887, %v3911
    %v3913 = vmin.f32 %v3912, 1.0
    %v3914 = vmax.f32 %v3913, -1.0
    %v3915 = vmul.f32 %v2661, %v2661
    %v3916 = vmin.f32 16.0, %v3915
    %v3917 = vmul.f32 %v3916, 2.1237322e-06
    %v3918 = vadd.f32 %v3917, 0.00028619796
    %v3919 = vmul.f32 %v3916, %v3918
    %v3920 = vadd.f32 %v3919, 0.0036580483
    %v3921 = vmul.f32 %v3916, %v3920
    %v3922 = vadd.f32 %v3921, 0.05243302
    %v3923 = vmul.f32 %v3916, %v3922
    %v3924 = vadd.f32 %v3923, 0.18741608
    %v3925 = vmul.f32 %v3916, %v3924
    %v3926 = vadd.f32 %v3925, 1.1283791
    %v3927 = vmul.f32 %v2661, %v3926
    %v3928 = vmul.f32 %v3916, 3.8918573e-05
    %v3929 = vadd.f32 %v3928, 0.001143296
    %v3930 = vmul.f32 %v3916, %v3929
    %v3931 = vadd.f32 %v3930, 0.014752088
    %v3932 = vmul.f32 %v3916, %v3931
    %v3933 = vadd.f32 %v3932, 0.112945676
    %v3934 = vmul.f32 %v3916, %v3933
    %v3935 = vadd.f32 %v3934, 0.4994258
    %v3936 = vmul.f32 %v3916, %v3935
    %v3937 = vadd.f32 %v3936, 1.0
    %v3938 = vrcp.pop %v3937
    %v3939 = vmul.f32 %v3937, %v3938
    %v3940 = vsub.f32 1.0, %v3939
    %v3941 = vmul.f32 %v3938, %v3940
    %v3942 = vadd.f32 %v3938, %v3941
    %vm3943 = vweird.f32 %v3937
    %vm3944 = vweird.f32 %v3938
    %vm3945 = vmor %vm3943, %vm3944
    %v3946 = vsel %vm3945, %v3938, %v3942
    %v3947 = vand.u32 2147483647, %v3937
    %vm3948 = vcmp.eq.f32.partialorder %v3947, 8.507059e+37
    %v3949 = vand.u32 %v3937, 2147483648
    %v3950 = vor.u32 1.1754944e-38, %v3949
    %v3951 = vsel %vm3948, %v3950, %v3946
    %v3952 = vmul.f32 %v3927, %v3951
    %v3953 = vmin.f32 %v3952, 1.0
    %v3954 = vmax.f32 %v3953, -1.0
    %v3955 = vmul.f32 %v2665, %v2665
    %v3956 = vmin.f32 16.0, %v3955
    %v3957 = vmul.f32 %v3956, 2.1237322e-06
    %v3958 = vadd.f32 %v3957, 0.00028619796
    %v3959 = vmul.f32 %v3956, %v3958
    %v3960 = vadd.f32 %v3959, 0.0036580483
    %v3961 = vmul.f32 %v3956, %v3960
    %v3962 = vadd.f32 %v3961, 0.05243302
    %v3963 = vmul.f32 %v3956, %v3962
    %v3964 = vadd.f32 %v3963, 0.18741608
    %v3965 = vmul.f32 %v3956, %v3964
    %v3966 = vadd.f32 %v3965, 1.1283791
    %v3967 = vmul.f32 %v2665, %v3966
    %v3968 = vmul.f32 %v3956, 3.8918573e-05
    %v3969 = vadd.f32 %v3968, 0.001143296
    %v3970 = vmul.f32 %v3956, %v3969
    %v3971 = vadd.f32 %v3970, 0.014752088
    %v3972 = vmul.f32 %v3956, %v3971
    %v3973 = vadd.f32 %v3972, 0.112945676
    %v3974 = vmul.f32 %v3956, %v3973
    %v3975 = vadd.f32 %v3974, 0.4994258
    %v3976 = vmul.f32 %v3956, %v3975
    %v3977 = vadd.f32 %v3976, 1.0
    %v3978 = vrcp.pop %v3977
    %v3979 = vmul.f32 %v3977, %v3978
    %v3980 = vsub.f32 1.0, %v3979
    %v3981 = vmul.f32 %v3978, %v3980
    %v3982 = vadd.f32 %v3978, %v3981
    %vm3983 = vweird.f32 %v3977
    %vm3984 = vweird.f32 %v3978
    %vm3985 = vmor %vm3983, %vm3984
    %v3986 = vsel %vm3985, %v3978, %v3982
    %v3987 = vand.u32 2147483647, %v3977
    %vm3988 = vcmp.eq.f32.partialorder %v3987, 8.507059e+37
    %v3989 = vand.u32 %v3977, 2147483648
    %v3990 = vor.u32 1.1754944e-38, %v3989
    %v3991 = vsel %vm3988, %v3990, %v3986
    %v3992 = vmul.f32 %v3967, %v3991
    %v3993 = vmin.f32 %v3992, 1.0
    %v3994 = vmax.f32 %v3993, -1.0
    %v3995 = vmul.f32 %v2669, %v2669
    %v3996 = vmin.f32 16.0, %v3995
    %v3997 = vmul.f32 %v3996, 2.1237322e-06
    %v3998 = vadd.f32 %v3997, 0.00028619796
    %v3999 = vmul.f32 %v3996, %v3998
    %v4000 = vadd.f32 %v3999, 0.0036580483
    %v4001 = vmul.f32 %v3996, %v4000
    %v4002 = vadd.f32 %v4001, 0.05243302
    %v4003 = vmul.f32 %v3996, %v4002
    %v4004 = vadd.f32 %v4003, 0.18741608
    %v4005 = vmul.f32 %v3996, %v4004
    %v4006 = vadd.f32 %v4005, 1.1283791
    %v4007 = vmul.f32 %v2669, %v4006
    %v4008 = vmul.f32 %v3996, 3.8918573e-05
    %v4009 = vadd.f32 %v4008, 0.001143296
    %v4010 = vmul.f32 %v3996, %v4009
    %v4011 = vadd.f32 %v4010, 0.014752088
    %v4012 = vmul.f32 %v3996, %v4011
    %v4013 = vadd.f32 %v4012, 0.112945676
    %v4014 = vmul.f32 %v3996, %v4013
    %v4015 = vadd.f32 %v4014, 0.4994258
    %v4016 = vmul.f32 %v3996, %v4015
    %v4017 = vadd.f32 %v4016, 1.0
    %v4018 = vrcp.pop %v4017
    %v4019 = vmul.f32 %v4017, %v4018
    %v4020 = vsub.f32 1.0, %v4019
    %v4021 = vmul.f32 %v4018, %v4020
    %v4022 = vadd.f32 %v4018, %v4021
    %vm4023 = vweird.f32 %v4017
    %vm4024 = vweird.f32 %v4018
    %vm4025 = vmor %vm4023, %vm4024
    %v4026 = vsel %vm4025, %v4018, %v4022
    %v4027 = vand.u32 2147483647, %v4017
    %vm4028 = vcmp.eq.f32.partialorder %v4027, 8.507059e+37
    %v4029 = vand.u32 %v4017, 2147483648
    %v4030 = vor.u32 1.1754944e-38, %v4029
    %v4031 = vsel %vm4028, %v4030, %v4026
    %v4032 = vmul.f32 %v4007, %v4031
    %v4033 = vmin.f32 %v4032, 1.0
    %v4034 = vmax.f32 %v4033, -1.0
    %v4035 = vmul.f32 %v2673, %v2673
    %v4036 = vmin.f32 16.0, %v4035
    %v4037 = vmul.f32 %v4036, 2.1237322e-06
    %v4038 = vadd.f32 %v4037, 0.00028619796
    %v4039 = vmul.f32 %v4036, %v4038
    %v4040 = vadd.f32 %v4039, 0.0036580483
    %v4041 = vmul.f32 %v4036, %v4040
    %v4042 = vadd.f32 %v4041, 0.05243302
    %v4043 = vmul.f32 %v4036, %v4042
    %v4044 = vadd.f32 %v4043, 0.18741608
    %v4045 = vmul.f32 %v4036, %v4044
    %v4046 = vadd.f32 %v4045, 1.1283791
    %v4047 = vmul.f32 %v2673, %v4046
    %v4048 = vmul.f32 %v4036, 3.8918573e-05
    %v4049 = vadd.f32 %v4048, 0.001143296
    %v4050 = vmul.f32 %v4036, %v4049
    %v4051 = vadd.f32 %v4050, 0.014752088
    %v4052 = vmul.f32 %v4036, %v4051
    %v4053 = vadd.f32 %v4052, 0.112945676
    %v4054 = vmul.f32 %v4036, %v4053
    %v4055 = vadd.f32 %v4054, 0.4994258
    %v4056 = vmul.f32 %v4036, %v4055
    %v4057 = vadd.f32 %v4056, 1.0
    %v4058 = vrcp.pop %v4057
    %v4059 = vmul.f32 %v4057, %v4058
    %v4060 = vsub.f32 1.0, %v4059
    %v4061 = vmul.f32 %v4058, %v4060
    %v4062 = vadd.f32 %v4058, %v4061
    %vm4063 = vweird.f32 %v4057
    %vm4064 = vweird.f32 %v4058
    %vm4065 = vmor %vm4063, %vm4064
    %v4066 = vsel %vm4065, %v4058, %v4062
    %v4067 = vand.u32 2147483647, %v4057
    %vm4068 = vcmp.eq.f32.partialorder %v4067, 8.507059e+37
    %v4069 = vand.u32 %v4057, 2147483648
    %v4070 = vor.u32 1.1754944e-38, %v4069
    %v4071 = vsel %vm4068, %v4070, %v4066
    %v4072 = vmul.f32 %v4047, %v4071
    %v4073 = vmin.f32 %v4072, 1.0
    %v4074 = vmax.f32 %v4073, -1.0
    %v4075 = vmul.f32 %v2677, %v2677
    %v4076 = vmin.f32 16.0, %v4075
    %v4077 = vmul.f32 %v4076, 2.1237322e-06
    %v4078 = vadd.f32 %v4077, 0.00028619796
    %v4079 = vmul.f32 %v4076, %v4078
    %v4080 = vadd.f32 %v4079, 0.0036580483
    %v4081 = vmul.f32 %v4076, %v4080
    %v4082 = vadd.f32 %v4081, 0.05243302
    %v4083 = vmul.f32 %v4076, %v4082
    %v4084 = vadd.f32 %v4083, 0.18741608
    %v4085 = vmul.f32 %v4076, %v4084
    %v4086 = vadd.f32 %v4085, 1.1283791
    %v4087 = vmul.f32 %v2677, %v4086
    %v4088 = vmul.f32 %v4076, 3.8918573e-05
    %v4089 = vadd.f32 %v4088, 0.001143296
    %v4090 = vmul.f32 %v4076, %v4089
    %v4091 = vadd.f32 %v4090, 0.014752088
    %v4092 = vmul.f32 %v4076, %v4091
    %v4093 = vadd.f32 %v4092, 0.112945676
    %v4094 = vmul.f32 %v4076, %v4093
    %v4095 = vadd.f32 %v4094, 0.4994258
    %v4096 = vmul.f32 %v4076, %v4095
    %v4097 = vadd.f32 %v4096, 1.0
    %v4098 = vrcp.pop %v4097
    %v4099 = vmul.f32 %v4097, %v4098
    %v4100 = vsub.f32 1.0, %v4099
    %v4101 = vmul.f32 %v4098, %v4100
    %v4102 = vadd.f32 %v4098, %v4101
    %vm4103 = vweird.f32 %v4097
    %vm4104 = vweird.f32 %v4098
    %vm4105 = vmor %vm4103, %vm4104
    %v4106 = vsel %vm4105, %v4098, %v4102
    %v4107 = vand.u32 2147483647, %v4097
    %vm4108 = vcmp.eq.f32.partialorder %v4107, 8.507059e+37
    %v4109 = vand.u32 %v4097, 2147483648
    %v4110 = vor.u32 1.1754944e-38, %v4109
    %v4111 = vsel %vm4108, %v4110, %v4106
    %v4112 = vmul.f32 %v4087, %v4111
    %v4113 = vmin.f32 %v4112, 1.0
    %v4114 = vmax.f32 %v4113, -1.0
    %v4115 = vmul.f32 %v2681, %v2681
    %v4116 = vmin.f32 16.0, %v4115
    %v4117 = vmul.f32 %v4116, 2.1237322e-06
    %v4118 = vadd.f32 %v4117, 0.00028619796
    %v4119 = vmul.f32 %v4116, %v4118
    %v4120 = vadd.f32 %v4119, 0.0036580483
    %v4121 = vmul.f32 %v4116, %v4120
    %v4122 = vadd.f32 %v4121, 0.05243302
    %v4123 = vmul.f32 %v4116, %v4122
    %v4124 = vadd.f32 %v4123, 0.18741608
    %v4125 = vmul.f32 %v4116, %v4124
    %v4126 = vadd.f32 %v4125, 1.1283791
    %v4127 = vmul.f32 %v2681, %v4126
    %v4128 = vmul.f32 %v4116, 3.8918573e-05
    %v4129 = vadd.f32 %v4128, 0.001143296
    %v4130 = vmul.f32 %v4116, %v4129
    %v4131 = vadd.f32 %v4130, 0.014752088
    %v4132 = vmul.f32 %v4116, %v4131
    %v4133 = vadd.f32 %v4132, 0.112945676
    %v4134 = vmul.f32 %v4116, %v4133
    %v4135 = vadd.f32 %v4134, 0.4994258
    %v4136 = vmul.f32 %v4116, %v4135
    %v4137 = vadd.f32 %v4136, 1.0
    %v4138 = vrcp.pop %v4137
    %v4139 = vmul.f32 %v4137, %v4138
    %v4140 = vsub.f32 1.0, %v4139
    %v4141 = vmul.f32 %v4138, %v4140
    %v4142 = vadd.f32 %v4138, %v4141
    %vm4143 = vweird.f32 %v4137
    %vm4144 = vweird.f32 %v4138
    %vm4145 = vmor %vm4143, %vm4144
    %v4146 = vsel %vm4145, %v4138, %v4142
    %v4147 = vand.u32 2147483647, %v4137
    %vm4148 = vcmp.eq.f32.partialorder %v4147, 8.507059e+37
    %v4149 = vand.u32 %v4137, 2147483648
    %v4150 = vor.u32 1.1754944e-38, %v4149
    %v4151 = vsel %vm4148, %v4150, %v4146
    %v4152 = vmul.f32 %v4127, %v4151
    %v4153 = vmin.f32 %v4152, 1.0
    %v4154 = vmax.f32 %v4153, -1.0
    %v4155 = vmul.f32 %v2685, %v2685
    %v4156 = vmin.f32 16.0, %v4155
    %v4157 = vmul.f32 %v4156, 2.1237322e-06
    %v4158 = vadd.f32 %v4157, 0.00028619796
    %v4159 = vmul.f32 %v4156, %v4158
    %v4160 = vadd.f32 %v4159, 0.0036580483
    %v4161 = vmul.f32 %v4156, %v4160
    %v4162 = vadd.f32 %v4161, 0.05243302
    %v4163 = vmul.f32 %v4156, %v4162
    %v4164 = vadd.f32 %v4163, 0.18741608
    %v4165 = vmul.f32 %v4156, %v4164
    %v4166 = vadd.f32 %v4165, 1.1283791
    %v4167 = vmul.f32 %v2685, %v4166
    %v4168 = vmul.f32 %v4156, 3.8918573e-05
    %v4169 = vadd.f32 %v4168, 0.001143296
    %v4170 = vmul.f32 %v4156, %v4169
    %v4171 = vadd.f32 %v4170, 0.014752088
    %v4172 = vmul.f32 %v4156, %v4171
    %v4173 = vadd.f32 %v4172, 0.112945676
    %v4174 = vmul.f32 %v4156, %v4173
    %v4175 = vadd.f32 %v4174, 0.4994258
    %v4176 = vmul.f32 %v4156, %v4175
    %v4177 = vadd.f32 %v4176, 1.0
    %v4178 = vrcp.pop %v4177
    %v4179 = vmul.f32 %v4177, %v4178
    %v4180 = vsub.f32 1.0, %v4179
    %v4181 = vmul.f32 %v4178, %v4180
    %v4182 = vadd.f32 %v4178, %v4181
    %vm4183 = vweird.f32 %v4177
    %vm4184 = vweird.f32 %v4178
    %vm4185 = vmor %vm4183, %vm4184
    %v4186 = vsel %vm4185, %v4178, %v4182
    %v4187 = vand.u32 2147483647, %v4177
    %vm4188 = vcmp.eq.f32.partialorder %v4187, 8.507059e+37
    %v4189 = vand.u32 %v4177, 2147483648
    %v4190 = vor.u32 1.1754944e-38, %v4189
    %v4191 = vsel %vm4188, %v4190, %v4186
    %v4192 = vmul.f32 %v4167, %v4191
    %v4193 = vmin.f32 %v4192, 1.0
    %v4194 = vmax.f32 %v4193, -1.0
    %v4195 = vmul.f32 %v2689, %v2689
    %v4196 = vmin.f32 16.0, %v4195
    %v4197 = vmul.f32 %v4196, 2.1237322e-06
    %v4198 = vadd.f32 %v4197, 0.00028619796
    %v4199 = vmul.f32 %v4196, %v4198
    %v4200 = vadd.f32 %v4199, 0.0036580483
    %v4201 = vmul.f32 %v4196, %v4200
    %v4202 = vadd.f32 %v4201, 0.05243302
    %v4203 = vmul.f32 %v4196, %v4202
    %v4204 = vadd.f32 %v4203, 0.18741608
    %v4205 = vmul.f32 %v4196, %v4204
    %v4206 = vadd.f32 %v4205, 1.1283791
    %v4207 = vmul.f32 %v2689, %v4206
    %v4208 = vmul.f32 %v4196, 3.8918573e-05
    %v4209 = vadd.f32 %v4208, 0.001143296
    %v4210 = vmul.f32 %v4196, %v4209
    %v4211 = vadd.f32 %v4210, 0.014752088
    %v4212 = vmul.f32 %v4196, %v4211
    %v4213 = vadd.f32 %v4212, 0.112945676
    %v4214 = vmul.f32 %v4196, %v4213
    %v4215 = vadd.f32 %v4214, 0.4994258
    %v4216 = vmul.f32 %v4196, %v4215
    %v4217 = vadd.f32 %v4216, 1.0
    %v4218 = vrcp.pop %v4217
    %v4219 = vmul.f32 %v4217, %v4218
    %v4220 = vsub.f32 1.0, %v4219
    %v4221 = vmul.f32 %v4218, %v4220
    %v4222 = vadd.f32 %v4218, %v4221
    %vm4223 = vweird.f32 %v4217
    %vm4224 = vweird.f32 %v4218
    %vm4225 = vmor %vm4223, %vm4224
    %v4226 = vsel %vm4225, %v4218, %v4222
    %v4227 = vand.u32 2147483647, %v4217
    %vm4228 = vcmp.eq.f32.partialorder %v4227, 8.507059e+37
    %v4229 = vand.u32 %v4217, 2147483648
    %v4230 = vor.u32 1.1754944e-38, %v4229
    %v4231 = vsel %vm4228, %v4230, %v4226
    %v4232 = vmul.f32 %v4207, %v4231
    %v4233 = vmin.f32 %v4232, 1.0
    %v4234 = vmax.f32 %v4233, -1.0
    %v4235 = vmul.f32 %v2693, %v2693
    %v4236 = vmin.f32 16.0, %v4235
    %v4237 = vmul.f32 %v4236, 2.1237322e-06
    %v4238 = vadd.f32 %v4237, 0.00028619796
    %v4239 = vmul.f32 %v4236, %v4238
    %v4240 = vadd.f32 %v4239, 0.0036580483
    %v4241 = vmul.f32 %v4236, %v4240
    %v4242 = vadd.f32 %v4241, 0.05243302
    %v4243 = vmul.f32 %v4236, %v4242
    %v4244 = vadd.f32 %v4243, 0.18741608
    %v4245 = vmul.f32 %v4236, %v4244
    %v4246 = vadd.f32 %v4245, 1.1283791
    %v4247 = vmul.f32 %v2693, %v4246
    %v4248 = vmul.f32 %v4236, 3.8918573e-05
    %v4249 = vadd.f32 %v4248, 0.001143296
    %v4250 = vmul.f32 %v4236, %v4249
    %v4251 = vadd.f32 %v4250, 0.014752088
    %v4252 = vmul.f32 %v4236, %v4251
    %v4253 = vadd.f32 %v4252, 0.112945676
    %v4254 = vmul.f32 %v4236, %v4253
    %v4255 = vadd.f32 %v4254, 0.4994258
    %v4256 = vmul.f32 %v4236, %v4255
    %v4257 = vadd.f32 %v4256, 1.0
    %v4258 = vrcp.pop %v4257
    %v4259 = vmul.f32 %v4257, %v4258
    %v4260 = vsub.f32 1.0, %v4259
    %v4261 = vmul.f32 %v4258, %v4260
    %v4262 = vadd.f32 %v4258, %v4261
    %vm4263 = vweird.f32 %v4257
    %vm4264 = vweird.f32 %v4258
    %vm4265 = vmor %vm4263, %vm4264
    %v4266 = vsel %vm4265, %v4258, %v4262
    %v4267 = vand.u32 2147483647, %v4257
    %vm4268 = vcmp.eq.f32.partialorder %v4267, 8.507059e+37
    %v4269 = vand.u32 %v4257, 2147483648
    %v4270 = vor.u32 1.1754944e-38, %v4269
    %v4271 = vsel %vm4268, %v4270, %v4266
    %v4272 = vmul.f32 %v4247, %v4271
    %v4273 = vmin.f32 %v4272, 1.0
    %v4274 = vmax.f32 %v4273, -1.0
    %v4275 = vmul.f32 %v2697, %v2697
    %v4276 = vmin.f32 16.0, %v4275
    %v4277 = vmul.f32 %v4276, 2.1237322e-06
    %v4278 = vadd.f32 %v4277, 0.00028619796
    %v4279 = vmul.f32 %v4276, %v4278
    %v4280 = vadd.f32 %v4279, 0.0036580483
    %v4281 = vmul.f32 %v4276, %v4280
    %v4282 = vadd.f32 %v4281, 0.05243302
    %v4283 = vmul.f32 %v4276, %v4282
    %v4284 = vadd.f32 %v4283, 0.18741608
    %v4285 = vmul.f32 %v4276, %v4284
    %v4286 = vadd.f32 %v4285, 1.1283791
    %v4287 = vmul.f32 %v2697, %v4286
    %v4288 = vmul.f32 %v4276, 3.8918573e-05
    %v4289 = vadd.f32 %v4288, 0.001143296
    %v4290 = vmul.f32 %v4276, %v4289
    %v4291 = vadd.f32 %v4290, 0.014752088
    %v4292 = vmul.f32 %v4276, %v4291
    %v4293 = vadd.f32 %v4292, 0.112945676
    %v4294 = vmul.f32 %v4276, %v4293
    %v4295 = vadd.f32 %v4294, 0.4994258
    %v4296 = vmul.f32 %v4276, %v4295
    %v4297 = vadd.f32 %v4296, 1.0
    %v4298 = vrcp.pop %v4297
    %v4299 = vmul.f32 %v4297, %v4298
    %v4300 = vsub.f32 1.0, %v4299
    %v4301 = vmul.f32 %v4298, %v4300
    %v4302 = vadd.f32 %v4298, %v4301
    %vm4303 = vweird.f32 %v4297
    %vm4304 = vweird.f32 %v4298
    %vm4305 = vmor %vm4303, %vm4304
    %v4306 = vsel %vm4305, %v4298, %v4302
    %v4307 = vand.u32 2147483647, %v4297
    %vm4308 = vcmp.eq.f32.partialorder %v4307, 8.507059e+37
    %v4309 = vand.u32 %v4297, 2147483648
    %v4310 = vor.u32 1.1754944e-38, %v4309
    %v4311 = vsel %vm4308, %v4310, %v4306
    %v4312 = vmul.f32 %v4287, %v4311
    %v4313 = vmin.f32 %v4312, 1.0
    %v4314 = vmax.f32 %v4313, -1.0
    %v4315 = vmul.f32 %v2701, %v2701
    %v4316 = vmin.f32 16.0, %v4315
    %v4317 = vmul.f32 %v4316, 2.1237322e-06
    %v4318 = vadd.f32 %v4317, 0.00028619796
    %v4319 = vmul.f32 %v4316, %v4318
    %v4320 = vadd.f32 %v4319, 0.0036580483
    %v4321 = vmul.f32 %v4316, %v4320
    %v4322 = vadd.f32 %v4321, 0.05243302
    %v4323 = vmul.f32 %v4316, %v4322
    %v4324 = vadd.f32 %v4323, 0.18741608
    %v4325 = vmul.f32 %v4316, %v4324
    %v4326 = vadd.f32 %v4325, 1.1283791
    %v4327 = vmul.f32 %v2701, %v4326
    %v4328 = vmul.f32 %v4316, 3.8918573e-05
    %v4329 = vadd.f32 %v4328, 0.001143296
    %v4330 = vmul.f32 %v4316, %v4329
    %v4331 = vadd.f32 %v4330, 0.014752088
    %v4332 = vmul.f32 %v4316, %v4331
    %v4333 = vadd.f32 %v4332, 0.112945676
    %v4334 = vmul.f32 %v4316, %v4333
    %v4335 = vadd.f32 %v4334, 0.4994258
    %v4336 = vmul.f32 %v4316, %v4335
    %v4337 = vadd.f32 %v4336, 1.0
    %v4338 = vrcp.pop %v4337
    %v4339 = vmul.f32 %v4337, %v4338
    %v4340 = vsub.f32 1.0, %v4339
    %v4341 = vmul.f32 %v4338, %v4340
    %v4342 = vadd.f32 %v4338, %v4341
    %vm4343 = vweird.f32 %v4337
    %vm4344 = vweird.f32 %v4338
    %vm4345 = vmor %vm4343, %vm4344
    %v4346 = vsel %vm4345, %v4338, %v4342
    %v4347 = vand.u32 2147483647, %v4337
    %vm4348 = vcmp.eq.f32.partialorder %v4347, 8.507059e+37
    %v4349 = vand.u32 %v4337, 2147483648
    %v4350 = vor.u32 1.1754944e-38, %v4349
    %v4351 = vsel %vm4348, %v4350, %v4346
    %v4352 = vmul.f32 %v4327, %v4351
    %v4353 = vmin.f32 %v4352, 1.0
    %v4354 = vmax.f32 %v4353, -1.0
    %v4355 = vmul.f32 %v2705, %v2705
    %v4356 = vmin.f32 16.0, %v4355
    %v4357 = vmul.f32 %v4356, 2.1237322e-06
    %v4358 = vadd.f32 %v4357, 0.00028619796
    %v4359 = vmul.f32 %v4356, %v4358
    %v4360 = vadd.f32 %v4359, 0.0036580483
    %v4361 = vmul.f32 %v4356, %v4360
    %v4362 = vadd.f32 %v4361, 0.05243302
    %v4363 = vmul.f32 %v4356, %v4362
    %v4364 = vadd.f32 %v4363, 0.18741608
    %v4365 = vmul.f32 %v4356, %v4364
    %v4366 = vadd.f32 %v4365, 1.1283791
    %v4367 = vmul.f32 %v2705, %v4366
    %v4368 = vmul.f32 %v4356, 3.8918573e-05
    %v4369 = vadd.f32 %v4368, 0.001143296
    %v4370 = vmul.f32 %v4356, %v4369
    %v4371 = vadd.f32 %v4370, 0.014752088
    %v4372 = vmul.f32 %v4356, %v4371
    %v4373 = vadd.f32 %v4372, 0.112945676
    %v4374 = vmul.f32 %v4356, %v4373
    %v4375 = vadd.f32 %v4374, 0.4994258
    %v4376 = vmul.f32 %v4356, %v4375
    %v4377 = vadd.f32 %v4376, 1.0
    %v4378 = vrcp.pop %v4377
    %v4379 = vmul.f32 %v4377, %v4378
    %v4380 = vsub.f32 1.0, %v4379
    %v4381 = vmul.f32 %v4378, %v4380
    %v4382 = vadd.f32 %v4378, %v4381
    %vm4383 = vweird.f32 %v4377
    %vm4384 = vweird.f32 %v4378
    %vm4385 = vmor %vm4383, %vm4384
    %v4386 = vsel %vm4385, %v4378, %v4382
    %v4387 = vand.u32 2147483647, %v4377
    %vm4388 = vcmp.eq.f32.partialorder %v4387, 8.507059e+37
    %v4389 = vand.u32 %v4377, 2147483648
    %v4390 = vor.u32 1.1754944e-38, %v4389
    %v4391 = vsel %vm4388, %v4390, %v4386
    %v4392 = vmul.f32 %v4367, %v4391
    %v4393 = vmin.f32 %v4392, 1.0
    %v4394 = vmax.f32 %v4393, -1.0
    %v4395 = vmul.f32 %v2709, %v2709
    %v4396 = vmin.f32 16.0, %v4395
    %v4397 = vmul.f32 %v4396, 2.1237322e-06
    %v4398 = vadd.f32 %v4397, 0.00028619796
    %v4399 = vmul.f32 %v4396, %v4398
    %v4400 = vadd.f32 %v4399, 0.0036580483
    %v4401 = vmul.f32 %v4396, %v4400
    %v4402 = vadd.f32 %v4401, 0.05243302
    %v4403 = vmul.f32 %v4396, %v4402
    %v4404 = vadd.f32 %v4403, 0.18741608
    %v4405 = vmul.f32 %v4396, %v4404
    %v4406 = vadd.f32 %v4405, 1.1283791
    %v4407 = vmul.f32 %v2709, %v4406
    %v4408 = vmul.f32 %v4396, 3.8918573e-05
    %v4409 = vadd.f32 %v4408, 0.001143296
    %v4410 = vmul.f32 %v4396, %v4409
    %v4411 = vadd.f32 %v4410, 0.014752088
    %v4412 = vmul.f32 %v4396, %v4411
    %v4413 = vadd.f32 %v4412, 0.112945676
    %v4414 = vmul.f32 %v4396, %v4413
    %v4415 = vadd.f32 %v4414, 0.4994258
    %v4416 = vmul.f32 %v4396, %v4415
    %v4417 = vadd.f32 %v4416, 1.0
    %v4418 = vrcp.pop %v4417
    %v4419 = vmul.f32 %v4417, %v4418
    %v4420 = vsub.f32 1.0, %v4419
    %v4421 = vmul.f32 %v4418, %v4420
    %v4422 = vadd.f32 %v4418, %v4421
    %vm4423 = vweird.f32 %v4417
    %vm4424 = vweird.f32 %v4418
    %vm4425 = vmor %vm4423, %vm4424
    %v4426 = vsel %vm4425, %v4418, %v4422
    %v4427 = vand.u32 2147483647, %v4417
    %vm4428 = vcmp.eq.f32.partialorder %v4427, 8.507059e+37
    %v4429 = vand.u32 %v4417, 2147483648
    %v4430 = vor.u32 1.1754944e-38, %v4429
    %v4431 = vsel %vm4428, %v4430, %v4426
    %v4432 = vmul.f32 %v4407, %v4431
    %v4433 = vmin.f32 %v4432, 1.0
    %v4434 = vmax.f32 %v4433, -1.0
    %v4435 = vmul.f32 %v2713, %v2713
    %v4436 = vmin.f32 16.0, %v4435
    %v4437 = vmul.f32 %v4436, 2.1237322e-06
    %v4438 = vadd.f32 %v4437, 0.00028619796
    %v4439 = vmul.f32 %v4436, %v4438
    %v4440 = vadd.f32 %v4439, 0.0036580483
    %v4441 = vmul.f32 %v4436, %v4440
    %v4442 = vadd.f32 %v4441, 0.05243302
    %v4443 = vmul.f32 %v4436, %v4442
    %v4444 = vadd.f32 %v4443, 0.18741608
    %v4445 = vmul.f32 %v4436, %v4444
    %v4446 = vadd.f32 %v4445, 1.1283791
    %v4447 = vmul.f32 %v2713, %v4446
    %v4448 = vmul.f32 %v4436, 3.8918573e-05
    %v4449 = vadd.f32 %v4448, 0.001143296
    %v4450 = vmul.f32 %v4436, %v4449
    %v4451 = vadd.f32 %v4450, 0.014752088
    %v4452 = vmul.f32 %v4436, %v4451
    %v4453 = vadd.f32 %v4452, 0.112945676
    %v4454 = vmul.f32 %v4436, %v4453
    %v4455 = vadd.f32 %v4454, 0.4994258
    %v4456 = vmul.f32 %v4436, %v4455
    %v4457 = vadd.f32 %v4456, 1.0
    %v4458 = vrcp.pop %v4457
    %v4459 = vmul.f32 %v4457, %v4458
    %v4460 = vsub.f32 1.0, %v4459
    %v4461 = vmul.f32 %v4458, %v4460
    %v4462 = vadd.f32 %v4458, %v4461
    %vm4463 = vweird.f32 %v4457
    %vm4464 = vweird.f32 %v4458
    %vm4465 = vmor %vm4463, %vm4464
    %v4466 = vsel %vm4465, %v4458, %v4462
    %v4467 = vand.u32 2147483647, %v4457
    %vm4468 = vcmp.eq.f32.partialorder %v4467, 8.507059e+37
    %v4469 = vand.u32 %v4457, 2147483648
    %v4470 = vor.u32 1.1754944e-38, %v4469
    %v4471 = vsel %vm4468, %v4470, %v4466
    %v4472 = vmul.f32 %v4447, %v4471
    %v4473 = vmin.f32 %v4472, 1.0
    %v4474 = vmax.f32 %v4473, -1.0
    %v4475 = vmul.f32 %v2717, %v2717
    %v4476 = vmin.f32 16.0, %v4475
    %v4477 = vmul.f32 %v4476, 2.1237322e-06
    %v4478 = vadd.f32 %v4477, 0.00028619796
    %v4479 = vmul.f32 %v4476, %v4478
    %v4480 = vadd.f32 %v4479, 0.0036580483
    %v4481 = vmul.f32 %v4476, %v4480
    %v4482 = vadd.f32 %v4481, 0.05243302
    %v4483 = vmul.f32 %v4476, %v4482
    %v4484 = vadd.f32 %v4483, 0.18741608
    %v4485 = vmul.f32 %v4476, %v4484
    %v4486 = vadd.f32 %v4485, 1.1283791
    %v4487 = vmul.f32 %v2717, %v4486
    %v4488 = vmul.f32 %v4476, 3.8918573e-05
    %v4489 = vadd.f32 %v4488, 0.001143296
    %v4490 = vmul.f32 %v4476, %v4489
    %v4491 = vadd.f32 %v4490, 0.014752088
    %v4492 = vmul.f32 %v4476, %v4491
    %v4493 = vadd.f32 %v4492, 0.112945676
    %v4494 = vmul.f32 %v4476, %v4493
    %v4495 = vadd.f32 %v4494, 0.4994258
    %v4496 = vmul.f32 %v4476, %v4495
    %v4497 = vadd.f32 %v4496, 1.0
    %v4498 = vrcp.pop %v4497
    %v4499 = vmul.f32 %v4497, %v4498
    %v4500 = vsub.f32 1.0, %v4499
    %v4501 = vmul.f32 %v4498, %v4500
    %v4502 = vadd.f32 %v4498, %v4501
    %vm4503 = vweird.f32 %v4497
    %vm4504 = vweird.f32 %v4498
    %vm4505 = vmor %vm4503, %vm4504
    %v4506 = vsel %vm4505, %v4498, %v4502
    %v4507 = vand.u32 2147483647, %v4497
    %vm4508 = vcmp.eq.f32.partialorder %v4507, 8.507059e+37
    %v4509 = vand.u32 %v4497, 2147483648
    %v4510 = vor.u32 1.1754944e-38, %v4509
    %v4511 = vsel %vm4508, %v4510, %v4506
    %v4512 = vmul.f32 %v4487, %v4511
    %v4513 = vmin.f32 %v4512, 1.0
    %v4514 = vmax.f32 %v4513, -1.0
    %v4515 = vmul.f32 %v2721, %v2721
    %v4516 = vmin.f32 16.0, %v4515
    %v4517 = vmul.f32 %v4516, 2.1237322e-06
    %v4518 = vadd.f32 %v4517, 0.00028619796
    %v4519 = vmul.f32 %v4516, %v4518
    %v4520 = vadd.f32 %v4519, 0.0036580483
    %v4521 = vmul.f32 %v4516, %v4520
    %v4522 = vadd.f32 %v4521, 0.05243302
    %v4523 = vmul.f32 %v4516, %v4522
    %v4524 = vadd.f32 %v4523, 0.18741608
    %v4525 = vmul.f32 %v4516, %v4524
    %v4526 = vadd.f32 %v4525, 1.1283791
    %v4527 = vmul.f32 %v2721, %v4526
    %v4528 = vmul.f32 %v4516, 3.8918573e-05
    %v4529 = vadd.f32 %v4528, 0.001143296
    %v4530 = vmul.f32 %v4516, %v4529
    %v4531 = vadd.f32 %v4530, 0.014752088
    %v4532 = vmul.f32 %v4516, %v4531
    %v4533 = vadd.f32 %v4532, 0.112945676
    %v4534 = vmul.f32 %v4516, %v4533
    %v4535 = vadd.f32 %v4534, 0.4994258
    %v4536 = vmul.f32 %v4516, %v4535
    %v4537 = vadd.f32 %v4536, 1.0
    %v4538 = vrcp.pop %v4537
    %v4539 = vmul.f32 %v4537, %v4538
    %v4540 = vsub.f32 1.0, %v4539
    %v4541 = vmul.f32 %v4538, %v4540
    %v4542 = vadd.f32 %v4538, %v4541
    %vm4543 = vweird.f32 %v4537
    %vm4544 = vweird.f32 %v4538
    %vm4545 = vmor %vm4543, %vm4544
    %v4546 = vsel %vm4545, %v4538, %v4542
    %v4547 = vand.u32 2147483647, %v4537
    %vm4548 = vcmp.eq.f32.partialorder %v4547, 8.507059e+37
    %v4549 = vand.u32 %v4537, 2147483648
    %v4550 = vor.u32 1.1754944e-38, %v4549
    %v4551 = vsel %vm4548, %v4550, %v4546
    %v4552 = vmul.f32 %v4527, %v4551
    %v4553 = vmin.f32 %v4552, 1.0
    %v4554 = vmax.f32 %v4553, -1.0
    %v4555 = vmul.f32 %v2725, %v2725
    %v4556 = vmin.f32 16.0, %v4555
    %v4557 = vmul.f32 %v4556, 2.1237322e-06
    %v4558 = vadd.f32 %v4557, 0.00028619796
    %v4559 = vmul.f32 %v4556, %v4558
    %v4560 = vadd.f32 %v4559, 0.0036580483
    %v4561 = vmul.f32 %v4556, %v4560
    %v4562 = vadd.f32 %v4561, 0.05243302
    %v4563 = vmul.f32 %v4556, %v4562
    %v4564 = vadd.f32 %v4563, 0.18741608
    %v4565 = vmul.f32 %v4556, %v4564
    %v4566 = vadd.f32 %v4565, 1.1283791
    %v4567 = vmul.f32 %v2725, %v4566
    %v4568 = vmul.f32 %v4556, 3.8918573e-05
    %v4569 = vadd.f32 %v4568, 0.001143296
    %v4570 = vmul.f32 %v4556, %v4569
    %v4571 = vadd.f32 %v4570, 0.014752088
    %v4572 = vmul.f32 %v4556, %v4571
    %v4573 = vadd.f32 %v4572, 0.112945676
    %v4574 = vmul.f32 %v4556, %v4573
    %v4575 = vadd.f32 %v4574, 0.4994258
    %v4576 = vmul.f32 %v4556, %v4575
    %v4577 = vadd.f32 %v4576, 1.0
    %v4578 = vrcp.pop %v4577
    %v4579 = vmul.f32 %v4577, %v4578
    %v4580 = vsub.f32 1.0, %v4579
    %v4581 = vmul.f32 %v4578, %v4580
    %v4582 = vadd.f32 %v4578, %v4581
    %vm4583 = vweird.f32 %v4577
    %vm4584 = vweird.f32 %v4578
    %vm4585 = vmor %vm4583, %vm4584
    %v4586 = vsel %vm4585, %v4578, %v4582
    %v4587 = vand.u32 2147483647, %v4577
    %vm4588 = vcmp.eq.f32.partialorder %v4587, 8.507059e+37
    %v4589 = vand.u32 %v4577, 2147483648
    %v4590 = vor.u32 1.1754944e-38, %v4589
    %v4591 = vsel %vm4588, %v4590, %v4586
    %v4592 = vmul.f32 %v4567, %v4591
    %v4593 = vmin.f32 %v4592, 1.0
    %v4594 = vmax.f32 %v4593, -1.0
    %v4595 = vmul.f32 %v2729, %v2729
    %v4596 = vmin.f32 16.0, %v4595
    %v4597 = vmul.f32 %v4596, 2.1237322e-06
    %v4598 = vadd.f32 %v4597, 0.00028619796
    %v4599 = vmul.f32 %v4596, %v4598
    %v4600 = vadd.f32 %v4599, 0.0036580483
    %v4601 = vmul.f32 %v4596, %v4600
    %v4602 = vadd.f32 %v4601, 0.05243302
    %v4603 = vmul.f32 %v4596, %v4602
    %v4604 = vadd.f32 %v4603, 0.18741608
    %v4605 = vmul.f32 %v4596, %v4604
    %v4606 = vadd.f32 %v4605, 1.1283791
    %v4607 = vmul.f32 %v2729, %v4606
    %v4608 = vmul.f32 %v4596, 3.8918573e-05
    %v4609 = vadd.f32 %v4608, 0.001143296
    %v4610 = vmul.f32 %v4596, %v4609
    %v4611 = vadd.f32 %v4610, 0.014752088
    %v4612 = vmul.f32 %v4596, %v4611
    %v4613 = vadd.f32 %v4612, 0.112945676
    %v4614 = vmul.f32 %v4596, %v4613
    %v4615 = vadd.f32 %v4614, 0.4994258
    %v4616 = vmul.f32 %v4596, %v4615
    %v4617 = vadd.f32 %v4616, 1.0
    %v4618 = vrcp.pop %v4617
    %v4619 = vmul.f32 %v4617, %v4618
    %v4620 = vsub.f32 1.0, %v4619
    %v4621 = vmul.f32 %v4618, %v4620
    %v4622 = vadd.f32 %v4618, %v4621
    %vm4623 = vweird.f32 %v4617
    %vm4624 = vweird.f32 %v4618
    %vm4625 = vmor %vm4623, %vm4624
    %v4626 = vsel %vm4625, %v4618, %v4622
    %v4627 = vand.u32 2147483647, %v4617
    %vm4628 = vcmp.eq.f32.partialorder %v4627, 8.507059e+37
    %v4629 = vand.u32 %v4617, 2147483648
    %v4630 = vor.u32 1.1754944e-38, %v4629
    %v4631 = vsel %vm4628, %v4630, %v4626
    %v4632 = vmul.f32 %v4607, %v4631
    %v4633 = vmin.f32 %v4632, 1.0
    %v4634 = vmax.f32 %v4633, -1.0
    %v4635 = vmul.f32 %v2733, %v2733
    %v4636 = vmin.f32 16.0, %v4635
    %v4637 = vmul.f32 %v4636, 2.1237322e-06
    %v4638 = vadd.f32 %v4637, 0.00028619796
    %v4639 = vmul.f32 %v4636, %v4638
    %v4640 = vadd.f32 %v4639, 0.0036580483
    %v4641 = vmul.f32 %v4636, %v4640
    %v4642 = vadd.f32 %v4641, 0.05243302
    %v4643 = vmul.f32 %v4636, %v4642
    %v4644 = vadd.f32 %v4643, 0.18741608
    %v4645 = vmul.f32 %v4636, %v4644
    %v4646 = vadd.f32 %v4645, 1.1283791
    %v4647 = vmul.f32 %v2733, %v4646
    %v4648 = vmul.f32 %v4636, 3.8918573e-05
    %v4649 = vadd.f32 %v4648, 0.001143296
    %v4650 = vmul.f32 %v4636, %v4649
    %v4651 = vadd.f32 %v4650, 0.014752088
    %v4652 = vmul.f32 %v4636, %v4651
    %v4653 = vadd.f32 %v4652, 0.112945676
    %v4654 = vmul.f32 %v4636, %v4653
    %v4655 = vadd.f32 %v4654, 0.4994258
    %v4656 = vmul.f32 %v4636, %v4655
    %v4657 = vadd.f32 %v4656, 1.0
    %v4658 = vrcp.pop %v4657
    %v4659 = vmul.f32 %v4657, %v4658
    %v4660 = vsub.f32 1.0, %v4659
    %v4661 = vmul.f32 %v4658, %v4660
    %v4662 = vadd.f32 %v4658, %v4661
    %vm4663 = vweird.f32 %v4657
    %vm4664 = vweird.f32 %v4658
    %vm4665 = vmor %vm4663, %vm4664
    %v4666 = vsel %vm4665, %v4658, %v4662
    %v4667 = vand.u32 2147483647, %v4657
    %vm4668 = vcmp.eq.f32.partialorder %v4667, 8.507059e+37
    %v4669 = vand.u32 %v4657, 2147483648
    %v4670 = vor.u32 1.1754944e-38, %v4669
    %v4671 = vsel %vm4668, %v4670, %v4666
    %v4672 = vmul.f32 %v4647, %v4671
    %v4673 = vmin.f32 %v4672, 1.0
    %v4674 = vmax.f32 %v4673, -1.0
    %v4675 = vmul.f32 %v2737, %v2737
    %v4676 = vmin.f32 16.0, %v4675
    %v4677 = vmul.f32 %v4676, 2.1237322e-06
    %v4678 = vadd.f32 %v4677, 0.00028619796
    %v4679 = vmul.f32 %v4676, %v4678
    %v4680 = vadd.f32 %v4679, 0.0036580483
    %v4681 = vmul.f32 %v4676, %v4680
    %v4682 = vadd.f32 %v4681, 0.05243302
    %v4683 = vmul.f32 %v4676, %v4682
    %v4684 = vadd.f32 %v4683, 0.18741608
    %v4685 = vmul.f32 %v4676, %v4684
    %v4686 = vadd.f32 %v4685, 1.1283791
    %v4687 = vmul.f32 %v2737, %v4686
    %v4688 = vmul.f32 %v4676, 3.8918573e-05
    %v4689 = vadd.f32 %v4688, 0.001143296
    %v4690 = vmul.f32 %v4676, %v4689
    %v4691 = vadd.f32 %v4690, 0.014752088
    %v4692 = vmul.f32 %v4676, %v4691
    %v4693 = vadd.f32 %v4692, 0.112945676
    %v4694 = vmul.f32 %v4676, %v4693
    %v4695 = vadd.f32 %v4694, 0.4994258
    %v4696 = vmul.f32 %v4676, %v4695
    %v4697 = vadd.f32 %v4696, 1.0
    %v4698 = vrcp.pop %v4697
    %v4699 = vmul.f32 %v4697, %v4698
    %v4700 = vsub.f32 1.0, %v4699
    %v4701 = vmul.f32 %v4698, %v4700
    %v4702 = vadd.f32 %v4698, %v4701
    %vm4703 = vweird.f32 %v4697
    %vm4704 = vweird.f32 %v4698
    %vm4705 = vmor %vm4703, %vm4704
    %v4706 = vsel %vm4705, %v4698, %v4702
    %v4707 = vand.u32 2147483647, %v4697
    %vm4708 = vcmp.eq.f32.partialorder %v4707, 8.507059e+37
    %v4709 = vand.u32 %v4697, 2147483648
    %v4710 = vor.u32 1.1754944e-38, %v4709
    %v4711 = vsel %vm4708, %v4710, %v4706
    %v4712 = vmul.f32 %v4687, %v4711
    %v4713 = vmin.f32 %v4712, 1.0
    %v4714 = vmax.f32 %v4713, -1.0
    %v4715 = vmul.f32 %v2741, %v2741
    %v4716 = vmin.f32 16.0, %v4715
    %v4717 = vmul.f32 %v4716, 2.1237322e-06
    %v4718 = vadd.f32 %v4717, 0.00028619796
    %v4719 = vmul.f32 %v4716, %v4718
    %v4720 = vadd.f32 %v4719, 0.0036580483
    %v4721 = vmul.f32 %v4716, %v4720
    %v4722 = vadd.f32 %v4721, 0.05243302
    %v4723 = vmul.f32 %v4716, %v4722
    %v4724 = vadd.f32 %v4723, 0.18741608
    %v4725 = vmul.f32 %v4716, %v4724
    %v4726 = vadd.f32 %v4725, 1.1283791
    %v4727 = vmul.f32 %v2741, %v4726
    %v4728 = vmul.f32 %v4716, 3.8918573e-05
    %v4729 = vadd.f32 %v4728, 0.001143296
    %v4730 = vmul.f32 %v4716, %v4729
    %v4731 = vadd.f32 %v4730, 0.014752088
    %v4732 = vmul.f32 %v4716, %v4731
    %v4733 = vadd.f32 %v4732, 0.112945676
    %v4734 = vmul.f32 %v4716, %v4733
    %v4735 = vadd.f32 %v4734, 0.4994258
    %v4736 = vmul.f32 %v4716, %v4735
    %v4737 = vadd.f32 %v4736, 1.0
    %v4738 = vrcp.pop %v4737
    %v4739 = vmul.f32 %v4737, %v4738
    %v4740 = vsub.f32 1.0, %v4739
    %v4741 = vmul.f32 %v4738, %v4740
    %v4742 = vadd.f32 %v4738, %v4741
    %vm4743 = vweird.f32 %v4737
    %vm4744 = vweird.f32 %v4738
    %vm4745 = vmor %vm4743, %vm4744
    %v4746 = vsel %vm4745, %v4738, %v4742
    %v4747 = vand.u32 2147483647, %v4737
    %vm4748 = vcmp.eq.f32.partialorder %v4747, 8.507059e+37
    %v4749 = vand.u32 %v4737, 2147483648
    %v4750 = vor.u32 1.1754944e-38, %v4749
    %v4751 = vsel %vm4748, %v4750, %v4746
    %v4752 = vmul.f32 %v4727, %v4751
    %v4753 = vmin.f32 %v4752, 1.0
    %v4754 = vmax.f32 %v4753, -1.0
    %v4755 = vmul.f32 %v2745, %v2745
    %v4756 = vmin.f32 16.0, %v4755
    %v4757 = vmul.f32 %v4756, 2.1237322e-06
    %v4758 = vadd.f32 %v4757, 0.00028619796
    %v4759 = vmul.f32 %v4756, %v4758
    %v4760 = vadd.f32 %v4759, 0.0036580483
    %v4761 = vmul.f32 %v4756, %v4760
    %v4762 = vadd.f32 %v4761, 0.05243302
    %v4763 = vmul.f32 %v4756, %v4762
    %v4764 = vadd.f32 %v4763, 0.18741608
    %v4765 = vmul.f32 %v4756, %v4764
    %v4766 = vadd.f32 %v4765, 1.1283791
    %v4767 = vmul.f32 %v2745, %v4766
    %v4768 = vmul.f32 %v4756, 3.8918573e-05
    %v4769 = vadd.f32 %v4768, 0.001143296
    %v4770 = vmul.f32 %v4756, %v4769
    %v4771 = vadd.f32 %v4770, 0.014752088
    %v4772 = vmul.f32 %v4756, %v4771
    %v4773 = vadd.f32 %v4772, 0.112945676
    %v4774 = vmul.f32 %v4756, %v4773
    %v4775 = vadd.f32 %v4774, 0.4994258
    %v4776 = vmul.f32 %v4756, %v4775
    %v4777 = vadd.f32 %v4776, 1.0
    %v4778 = vrcp.pop %v4777
    %v4779 = vmul.f32 %v4777, %v4778
    %v4780 = vsub.f32 1.0, %v4779
    %v4781 = vmul.f32 %v4778, %v4780
    %v4782 = vadd.f32 %v4778, %v4781
    %vm4783 = vweird.f32 %v4777
    %vm4784 = vweird.f32 %v4778
    %vm4785 = vmor %vm4783, %vm4784
    %v4786 = vsel %vm4785, %v4778, %v4782
    %v4787 = vand.u32 2147483647, %v4777
    %vm4788 = vcmp.eq.f32.partialorder %v4787, 8.507059e+37
    %v4789 = vand.u32 %v4777, 2147483648
    %v4790 = vor.u32 1.1754944e-38, %v4789
    %v4791 = vsel %vm4788, %v4790, %v4786
    %v4792 = vmul.f32 %v4767, %v4791
    %v4793 = vmin.f32 %v4792, 1.0
    %v4794 = vmax.f32 %v4793, -1.0
    %v4795 = vmul.f32 %v2749, %v2749
    %v4796 = vmin.f32 16.0, %v4795
    %v4797 = vmul.f32 %v4796, 2.1237322e-06
    %v4798 = vadd.f32 %v4797, 0.00028619796
    %v4799 = vmul.f32 %v4796, %v4798
    %v4800 = vadd.f32 %v4799, 0.0036580483
    %v4801 = vmul.f32 %v4796, %v4800
    %v4802 = vadd.f32 %v4801, 0.05243302
    %v4803 = vmul.f32 %v4796, %v4802
    %v4804 = vadd.f32 %v4803, 0.18741608
    %v4805 = vmul.f32 %v4796, %v4804
    %v4806 = vadd.f32 %v4805, 1.1283791
    %v4807 = vmul.f32 %v2749, %v4806
    %v4808 = vmul.f32 %v4796, 3.8918573e-05
    %v4809 = vadd.f32 %v4808, 0.001143296
    %v4810 = vmul.f32 %v4796, %v4809
    %v4811 = vadd.f32 %v4810, 0.014752088
    %v4812 = vmul.f32 %v4796, %v4811
    %v4813 = vadd.f32 %v4812, 0.112945676
    %v4814 = vmul.f32 %v4796, %v4813
    %v4815 = vadd.f32 %v4814, 0.4994258
    %v4816 = vmul.f32 %v4796, %v4815
    %v4817 = vadd.f32 %v4816, 1.0
    %v4818 = vrcp.pop %v4817
    %v4819 = vmul.f32 %v4817, %v4818
    %v4820 = vsub.f32 1.0, %v4819
    %v4821 = vmul.f32 %v4818, %v4820
    %v4822 = vadd.f32 %v4818, %v4821
    %vm4823 = vweird.f32 %v4817
    %vm4824 = vweird.f32 %v4818
    %vm4825 = vmor %vm4823, %vm4824
    %v4826 = vsel %vm4825, %v4818, %v4822
    %v4827 = vand.u32 2147483647, %v4817
    %vm4828 = vcmp.eq.f32.partialorder %v4827, 8.507059e+37
    %v4829 = vand.u32 %v4817, 2147483648
    %v4830 = vor.u32 1.1754944e-38, %v4829
    %v4831 = vsel %vm4828, %v4830, %v4826
    %v4832 = vmul.f32 %v4807, %v4831
    %v4833 = vmin.f32 %v4832, 1.0
    %v4834 = vmax.f32 %v4833, -1.0
    %v4835 = vmul.f32 %v2753, %v2753
    %v4836 = vmin.f32 16.0, %v4835
    %v4837 = vmul.f32 %v4836, 2.1237322e-06
    %v4838 = vadd.f32 %v4837, 0.00028619796
    %v4839 = vmul.f32 %v4836, %v4838
    %v4840 = vadd.f32 %v4839, 0.0036580483
    %v4841 = vmul.f32 %v4836, %v4840
    %v4842 = vadd.f32 %v4841, 0.05243302
    %v4843 = vmul.f32 %v4836, %v4842
    %v4844 = vadd.f32 %v4843, 0.18741608
    %v4845 = vmul.f32 %v4836, %v4844
    %v4846 = vadd.f32 %v4845, 1.1283791
    %v4847 = vmul.f32 %v2753, %v4846
    %v4848 = vmul.f32 %v4836, 3.8918573e-05
    %v4849 = vadd.f32 %v4848, 0.001143296
    %v4850 = vmul.f32 %v4836, %v4849
    %v4851 = vadd.f32 %v4850, 0.014752088
    %v4852 = vmul.f32 %v4836, %v4851
    %v4853 = vadd.f32 %v4852, 0.112945676
    %v4854 = vmul.f32 %v4836, %v4853
    %v4855 = vadd.f32 %v4854, 0.4994258
    %v4856 = vmul.f32 %v4836, %v4855
    %v4857 = vadd.f32 %v4856, 1.0
    %v4858 = vrcp.pop %v4857
    %v4859 = vmul.f32 %v4857, %v4858
    %v4860 = vsub.f32 1.0, %v4859
    %v4861 = vmul.f32 %v4858, %v4860
    %v4862 = vadd.f32 %v4858, %v4861
    %vm4863 = vweird.f32 %v4857
    %vm4864 = vweird.f32 %v4858
    %vm4865 = vmor %vm4863, %vm4864
    %v4866 = vsel %vm4865, %v4858, %v4862
    %v4867 = vand.u32 2147483647, %v4857
    %vm4868 = vcmp.eq.f32.partialorder %v4867, 8.507059e+37
    %v4869 = vand.u32 %v4857, 2147483648
    %v4870 = vor.u32 1.1754944e-38, %v4869
    %v4871 = vsel %vm4868, %v4870, %v4866
    %v4872 = vmul.f32 %v4847, %v4871
    %v4873 = vmin.f32 %v4872, 1.0
    %v4874 = vmax.f32 %v4873, -1.0
    %v4875 = vmul.f32 %v2757, %v2757
    %v4876 = vmin.f32 16.0, %v4875
    %v4877 = vmul.f32 %v4876, 2.1237322e-06
    %v4878 = vadd.f32 %v4877, 0.00028619796
    %v4879 = vmul.f32 %v4876, %v4878
    %v4880 = vadd.f32 %v4879, 0.0036580483
    %v4881 = vmul.f32 %v4876, %v4880
    %v4882 = vadd.f32 %v4881, 0.05243302
    %v4883 = vmul.f32 %v4876, %v4882
    %v4884 = vadd.f32 %v4883, 0.18741608
    %v4885 = vmul.f32 %v4876, %v4884
    %v4886 = vadd.f32 %v4885, 1.1283791
    %v4887 = vmul.f32 %v2757, %v4886
    %v4888 = vmul.f32 %v4876, 3.8918573e-05
    %v4889 = vadd.f32 %v4888, 0.001143296
    %v4890 = vmul.f32 %v4876, %v4889
    %v4891 = vadd.f32 %v4890, 0.014752088
    %v4892 = vmul.f32 %v4876, %v4891
    %v4893 = vadd.f32 %v4892, 0.112945676
    %v4894 = vmul.f32 %v4876, %v4893
    %v4895 = vadd.f32 %v4894, 0.4994258
    %v4896 = vmul.f32 %v4876, %v4895
    %v4897 = vadd.f32 %v4896, 1.0
    %v4898 = vrcp.pop %v4897
    %v4899 = vmul.f32 %v4897, %v4898
    %v4900 = vsub.f32 1.0, %v4899
    %v4901 = vmul.f32 %v4898, %v4900
    %v4902 = vadd.f32 %v4898, %v4901
    %vm4903 = vweird.f32 %v4897
    %vm4904 = vweird.f32 %v4898
    %vm4905 = vmor %vm4903, %vm4904
    %v4906 = vsel %vm4905, %v4898, %v4902
    %v4907 = vand.u32 2147483647, %v4897
    %vm4908 = vcmp.eq.f32.partialorder %v4907, 8.507059e+37
    %v4909 = vand.u32 %v4897, 2147483648
    %v4910 = vor.u32 1.1754944e-38, %v4909
    %v4911 = vsel %vm4908, %v4910, %v4906
    %v4912 = vmul.f32 %v4887, %v4911
    %v4913 = vmin.f32 %v4912, 1.0
    %v4914 = vmax.f32 %v4913, -1.0
    %v4915 = vmul.f32 %v2761, %v2761
    %v4916 = vmin.f32 16.0, %v4915
    %v4917 = vmul.f32 %v4916, 2.1237322e-06
    %v4918 = vadd.f32 %v4917, 0.00028619796
    %v4919 = vmul.f32 %v4916, %v4918
    %v4920 = vadd.f32 %v4919, 0.0036580483
    %v4921 = vmul.f32 %v4916, %v4920
    %v4922 = vadd.f32 %v4921, 0.05243302
    %v4923 = vmul.f32 %v4916, %v4922
    %v4924 = vadd.f32 %v4923, 0.18741608
    %v4925 = vmul.f32 %v4916, %v4924
    %v4926 = vadd.f32 %v4925, 1.1283791
    %v4927 = vmul.f32 %v2761, %v4926
    %v4928 = vmul.f32 %v4916, 3.8918573e-05
    %v4929 = vadd.f32 %v4928, 0.001143296
    %v4930 = vmul.f32 %v4916, %v4929
    %v4931 = vadd.f32 %v4930, 0.014752088
    %v4932 = vmul.f32 %v4916, %v4931
    %v4933 = vadd.f32 %v4932, 0.112945676
    %v4934 = vmul.f32 %v4916, %v4933
    %v4935 = vadd.f32 %v4934, 0.4994258
    %v4936 = vmul.f32 %v4916, %v4935
    %v4937 = vadd.f32 %v4936, 1.0
    %v4938 = vrcp.pop %v4937
    %v4939 = vmul.f32 %v4937, %v4938
    %v4940 = vsub.f32 1.0, %v4939
    %v4941 = vmul.f32 %v4938, %v4940
    %v4942 = vadd.f32 %v4938, %v4941
    %vm4943 = vweird.f32 %v4937
    %vm4944 = vweird.f32 %v4938
    %vm4945 = vmor %vm4943, %vm4944
    %v4946 = vsel %vm4945, %v4938, %v4942
    %v4947 = vand.u32 2147483647, %v4937
    %vm4948 = vcmp.eq.f32.partialorder %v4947, 8.507059e+37
    %v4949 = vand.u32 %v4937, 2147483648
    %v4950 = vor.u32 1.1754944e-38, %v4949
    %v4951 = vsel %vm4948, %v4950, %v4946
    %v4952 = vmul.f32 %v4927, %v4951
    %v4953 = vmin.f32 %v4952, 1.0
    %v4954 = vmax.f32 %v4953, -1.0
    %v4955 = vmul.f32 %v2765, %v2765
    %v4956 = vmin.f32 16.0, %v4955
    %v4957 = vmul.f32 %v4956, 2.1237322e-06
    %v4958 = vadd.f32 %v4957, 0.00028619796
    %v4959 = vmul.f32 %v4956, %v4958
    %v4960 = vadd.f32 %v4959, 0.0036580483
    %v4961 = vmul.f32 %v4956, %v4960
    %v4962 = vadd.f32 %v4961, 0.05243302
    %v4963 = vmul.f32 %v4956, %v4962
    %v4964 = vadd.f32 %v4963, 0.18741608
    %v4965 = vmul.f32 %v4956, %v4964
    %v4966 = vadd.f32 %v4965, 1.1283791
    %v4967 = vmul.f32 %v2765, %v4966
    %v4968 = vmul.f32 %v4956, 3.8918573e-05
    %v4969 = vadd.f32 %v4968, 0.001143296
    %v4970 = vmul.f32 %v4956, %v4969
    %v4971 = vadd.f32 %v4970, 0.014752088
    %v4972 = vmul.f32 %v4956, %v4971
    %v4973 = vadd.f32 %v4972, 0.112945676
    %v4974 = vmul.f32 %v4956, %v4973
    %v4975 = vadd.f32 %v4974, 0.4994258
    %v4976 = vmul.f32 %v4956, %v4975
    %v4977 = vadd.f32 %v4976, 1.0
    %v4978 = vrcp.pop %v4977
    %v4979 = vmul.f32 %v4977, %v4978
    %v4980 = vsub.f32 1.0, %v4979
    %v4981 = vmul.f32 %v4978, %v4980
    %v4982 = vadd.f32 %v4978, %v4981
    %vm4983 = vweird.f32 %v4977
    %vm4984 = vweird.f32 %v4978
    %vm4985 = vmor %vm4983, %vm4984
    %v4986 = vsel %vm4985, %v4978, %v4982
    %v4987 = vand.u32 2147483647, %v4977
    %vm4988 = vcmp.eq.f32.partialorder %v4987, 8.507059e+37
    %v4989 = vand.u32 %v4977, 2147483648
    %v4990 = vor.u32 1.1754944e-38, %v4989
    %v4991 = vsel %vm4988, %v4990, %v4986
    %v4992 = vmul.f32 %v4967, %v4991
    %v4993 = vmin.f32 %v4992, 1.0
    %v4994 = vmax.f32 %v4993, -1.0
    %v4995 = vmul.f32 %v2769, %v2769
    %v4996 = vmin.f32 16.0, %v4995
    %v4997 = vmul.f32 %v4996, 2.1237322e-06
    %v4998 = vadd.f32 %v4997, 0.00028619796
    %v4999 = vmul.f32 %v4996, %v4998
    %v5000 = vadd.f32 %v4999, 0.0036580483
    %v5001 = vmul.f32 %v4996, %v5000
    %v5002 = vadd.f32 %v5001, 0.05243302
    %v5003 = vmul.f32 %v4996, %v5002
    %v5004 = vadd.f32 %v5003, 0.18741608
    %v5005 = vmul.f32 %v4996, %v5004
    %v5006 = vadd.f32 %v5005, 1.1283791
    %v5007 = vmul.f32 %v2769, %v5006
    %v5008 = vmul.f32 %v4996, 3.8918573e-05
    %v5009 = vadd.f32 %v5008, 0.001143296
    %v5010 = vmul.f32 %v4996, %v5009
    %v5011 = vadd.f32 %v5010, 0.014752088
    %v5012 = vmul.f32 %v4996, %v5011
    %v5013 = vadd.f32 %v5012, 0.112945676
    %v5014 = vmul.f32 %v4996, %v5013
    %v5015 = vadd.f32 %v5014, 0.4994258
    %v5016 = vmul.f32 %v4996, %v5015
    %v5017 = vadd.f32 %v5016, 1.0
    %v5018 = vrcp.pop %v5017
    %v5019 = vmul.f32 %v5017, %v5018
    %v5020 = vsub.f32 1.0, %v5019
    %v5021 = vmul.f32 %v5018, %v5020
    %v5022 = vadd.f32 %v5018, %v5021
    %vm5023 = vweird.f32 %v5017
    %vm5024 = vweird.f32 %v5018
    %vm5025 = vmor %vm5023, %vm5024
    %v5026 = vsel %vm5025, %v5018, %v5022
    %v5027 = vand.u32 2147483647, %v5017
    %vm5028 = vcmp.eq.f32.partialorder %v5027, 8.507059e+37
    %v5029 = vand.u32 %v5017, 2147483648
    %v5030 = vor.u32 1.1754944e-38, %v5029
    %v5031 = vsel %vm5028, %v5030, %v5026
    %v5032 = vmul.f32 %v5007, %v5031
    %v5033 = vmin.f32 %v5032, 1.0
    %v5034 = vmax.f32 %v5033, -1.0
    %v5035 = vmul.f32 %v2773, %v2773
    %v5036 = vmin.f32 16.0, %v5035
    %v5037 = vmul.f32 %v5036, 2.1237322e-06
    %v5038 = vadd.f32 %v5037, 0.00028619796
    %v5039 = vmul.f32 %v5036, %v5038
    %v5040 = vadd.f32 %v5039, 0.0036580483
    %v5041 = vmul.f32 %v5036, %v5040
    %v5042 = vadd.f32 %v5041, 0.05243302
    %v5043 = vmul.f32 %v5036, %v5042
    %v5044 = vadd.f32 %v5043, 0.18741608
    %v5045 = vmul.f32 %v5036, %v5044
    %v5046 = vadd.f32 %v5045, 1.1283791
    %v5047 = vmul.f32 %v2773, %v5046
    %v5048 = vmul.f32 %v5036, 3.8918573e-05
    %v5049 = vadd.f32 %v5048, 0.001143296
    %v5050 = vmul.f32 %v5036, %v5049
    %v5051 = vadd.f32 %v5050, 0.014752088
    %v5052 = vmul.f32 %v5036, %v5051
    %v5053 = vadd.f32 %v5052, 0.112945676
    %v5054 = vmul.f32 %v5036, %v5053
    %v5055 = vadd.f32 %v5054, 0.4994258
    %v5056 = vmul.f32 %v5036, %v5055
    %v5057 = vadd.f32 %v5056, 1.0
    %v5058 = vrcp.pop %v5057
    %v5059 = vmul.f32 %v5057, %v5058
    %v5060 = vsub.f32 1.0, %v5059
    %v5061 = vmul.f32 %v5058, %v5060
    %v5062 = vadd.f32 %v5058, %v5061
    %vm5063 = vweird.f32 %v5057
    %vm5064 = vweird.f32 %v5058
    %vm5065 = vmor %vm5063, %vm5064
    %v5066 = vsel %vm5065, %v5058, %v5062
    %v5067 = vand.u32 2147483647, %v5057
    %vm5068 = vcmp.eq.f32.partialorder %v5067, 8.507059e+37
    %v5069 = vand.u32 %v5057, 2147483648
    %v5070 = vor.u32 1.1754944e-38, %v5069
    %v5071 = vsel %vm5068, %v5070, %v5066
    %v5072 = vmul.f32 %v5047, %v5071
    %v5073 = vmin.f32 %v5072, 1.0
    %v5074 = vmax.f32 %v5073, -1.0
    %v5075 = vmul.f32 %v2777, %v2777
    %v5076 = vmin.f32 16.0, %v5075
    %v5077 = vmul.f32 %v5076, 2.1237322e-06
    %v5078 = vadd.f32 %v5077, 0.00028619796
    %v5079 = vmul.f32 %v5076, %v5078
    %v5080 = vadd.f32 %v5079, 0.0036580483
    %v5081 = vmul.f32 %v5076, %v5080
    %v5082 = vadd.f32 %v5081, 0.05243302
    %v5083 = vmul.f32 %v5076, %v5082
    %v5084 = vadd.f32 %v5083, 0.18741608
    %v5085 = vmul.f32 %v5076, %v5084
    %v5086 = vadd.f32 %v5085, 1.1283791
    %v5087 = vmul.f32 %v2777, %v5086
    %v5088 = vmul.f32 %v5076, 3.8918573e-05
    %v5089 = vadd.f32 %v5088, 0.001143296
    %v5090 = vmul.f32 %v5076, %v5089
    %v5091 = vadd.f32 %v5090, 0.014752088
    %v5092 = vmul.f32 %v5076, %v5091
    %v5093 = vadd.f32 %v5092, 0.112945676
    %v5094 = vmul.f32 %v5076, %v5093
    %v5095 = vadd.f32 %v5094, 0.4994258
    %v5096 = vmul.f32 %v5076, %v5095
    %v5097 = vadd.f32 %v5096, 1.0
    %v5098 = vrcp.pop %v5097
    %v5099 = vmul.f32 %v5097, %v5098
    %v5100 = vsub.f32 1.0, %v5099
    %v5101 = vmul.f32 %v5098, %v5100
    %v5102 = vadd.f32 %v5098, %v5101
    %vm5103 = vweird.f32 %v5097
    %vm5104 = vweird.f32 %v5098
    %vm5105 = vmor %vm5103, %vm5104
    %v5106 = vsel %vm5105, %v5098, %v5102
    %v5107 = vand.u32 2147483647, %v5097
    %vm5108 = vcmp.eq.f32.partialorder %v5107, 8.507059e+37
    %v5109 = vand.u32 %v5097, 2147483648
    %v5110 = vor.u32 1.1754944e-38, %v5109
    %v5111 = vsel %vm5108, %v5110, %v5106
    %v5112 = vmul.f32 %v5087, %v5111
    %v5113 = vmin.f32 %v5112, 1.0
    %v5114 = vmax.f32 %v5113, -1.0
    %v5115 = vmul.f32 %v2781, %v2781
    %v5116 = vmin.f32 16.0, %v5115
    %v5117 = vmul.f32 %v5116, 2.1237322e-06
    %v5118 = vadd.f32 %v5117, 0.00028619796
    %v5119 = vmul.f32 %v5116, %v5118
    %v5120 = vadd.f32 %v5119, 0.0036580483
    %v5121 = vmul.f32 %v5116, %v5120
    %v5122 = vadd.f32 %v5121, 0.05243302
    %v5123 = vmul.f32 %v5116, %v5122
    %v5124 = vadd.f32 %v5123, 0.18741608
    %v5125 = vmul.f32 %v5116, %v5124
    %v5126 = vadd.f32 %v5125, 1.1283791
    %v5127 = vmul.f32 %v2781, %v5126
    %v5128 = vmul.f32 %v5116, 3.8918573e-05
    %v5129 = vadd.f32 %v5128, 0.001143296
    %v5130 = vmul.f32 %v5116, %v5129
    %v5131 = vadd.f32 %v5130, 0.014752088
    %v5132 = vmul.f32 %v5116, %v5131
    %v5133 = vadd.f32 %v5132, 0.112945676
    %v5134 = vmul.f32 %v5116, %v5133
    %v5135 = vadd.f32 %v5134, 0.4994258
    %v5136 = vmul.f32 %v5116, %v5135
    %v5137 = vadd.f32 %v5136, 1.0
    %v5138 = vrcp.pop %v5137
    %v5139 = vmul.f32 %v5137, %v5138
    %v5140 = vsub.f32 1.0, %v5139
    %v5141 = vmul.f32 %v5138, %v5140
    %v5142 = vadd.f32 %v5138, %v5141
    %vm5143 = vweird.f32 %v5137
    %vm5144 = vweird.f32 %v5138
    %vm5145 = vmor %vm5143, %vm5144
    %v5146 = vsel %vm5145, %v5138, %v5142
    %v5147 = vand.u32 2147483647, %v5137
    %vm5148 = vcmp.eq.f32.partialorder %v5147, 8.507059e+37
    %v5149 = vand.u32 %v5137, 2147483648
    %v5150 = vor.u32 1.1754944e-38, %v5149
    %v5151 = vsel %vm5148, %v5150, %v5146
    %v5152 = vmul.f32 %v5127, %v5151
    %v5153 = vmin.f32 %v5152, 1.0
    %v5154 = vmax.f32 %v5153, -1.0
    %v5155 = vmul.f32 %v2785, %v2785
    %v5156 = vmin.f32 16.0, %v5155
    %v5157 = vmul.f32 %v5156, 2.1237322e-06
    %v5158 = vadd.f32 %v5157, 0.00028619796
    %v5159 = vmul.f32 %v5156, %v5158
    %v5160 = vadd.f32 %v5159, 0.0036580483
    %v5161 = vmul.f32 %v5156, %v5160
    %v5162 = vadd.f32 %v5161, 0.05243302
    %v5163 = vmul.f32 %v5156, %v5162
    %v5164 = vadd.f32 %v5163, 0.18741608
    %v5165 = vmul.f32 %v5156, %v5164
    %v5166 = vadd.f32 %v5165, 1.1283791
    %v5167 = vmul.f32 %v2785, %v5166
    %v5168 = vmul.f32 %v5156, 3.8918573e-05
    %v5169 = vadd.f32 %v5168, 0.001143296
    %v5170 = vmul.f32 %v5156, %v5169
    %v5171 = vadd.f32 %v5170, 0.014752088
    %v5172 = vmul.f32 %v5156, %v5171
    %v5173 = vadd.f32 %v5172, 0.112945676
    %v5174 = vmul.f32 %v5156, %v5173
    %v5175 = vadd.f32 %v5174, 0.4994258
    %v5176 = vmul.f32 %v5156, %v5175
    %v5177 = vadd.f32 %v5176, 1.0
    %v5178 = vrcp.pop %v5177
    %v5179 = vmul.f32 %v5177, %v5178
    %v5180 = vsub.f32 1.0, %v5179
    %v5181 = vmul.f32 %v5178, %v5180
    %v5182 = vadd.f32 %v5178, %v5181
    %vm5183 = vweird.f32 %v5177
    %vm5184 = vweird.f32 %v5178
    %vm5185 = vmor %vm5183, %vm5184
    %v5186 = vsel %vm5185, %v5178, %v5182
    %v5187 = vand.u32 2147483647, %v5177
    %vm5188 = vcmp.eq.f32.partialorder %v5187, 8.507059e+37
    %v5189 = vand.u32 %v5177, 2147483648
    %v5190 = vor.u32 1.1754944e-38, %v5189
    %v5191 = vsel %vm5188, %v5190, %v5186
    %v5192 = vmul.f32 %v5167, %v5191
    %v5193 = vmin.f32 %v5192, 1.0
    %v5194 = vmax.f32 %v5193, -1.0
    %v5195 = vmul.f32 %v2789, %v2789
    %v5196 = vmin.f32 16.0, %v5195
    %v5197 = vmul.f32 %v5196, 2.1237322e-06
    %v5198 = vadd.f32 %v5197, 0.00028619796
    %v5199 = vmul.f32 %v5196, %v5198
    %v5200 = vadd.f32 %v5199, 0.0036580483
    %v5201 = vmul.f32 %v5196, %v5200
    %v5202 = vadd.f32 %v5201, 0.05243302
    %v5203 = vmul.f32 %v5196, %v5202
    %v5204 = vadd.f32 %v5203, 0.18741608
    %v5205 = vmul.f32 %v5196, %v5204
    %v5206 = vadd.f32 %v5205, 1.1283791
    %v5207 = vmul.f32 %v2789, %v5206
    %v5208 = vmul.f32 %v5196, 3.8918573e-05
    %v5209 = vadd.f32 %v5208, 0.001143296
    %v5210 = vmul.f32 %v5196, %v5209
    %v5211 = vadd.f32 %v5210, 0.014752088
    %v5212 = vmul.f32 %v5196, %v5211
    %v5213 = vadd.f32 %v5212, 0.112945676
    %v5214 = vmul.f32 %v5196, %v5213
    %v5215 = vadd.f32 %v5214, 0.4994258
    %v5216 = vmul.f32 %v5196, %v5215
    %v5217 = vadd.f32 %v5216, 1.0
    %v5218 = vrcp.pop %v5217
    %v5219 = vmul.f32 %v5217, %v5218
    %v5220 = vsub.f32 1.0, %v5219
    %v5221 = vmul.f32 %v5218, %v5220
    %v5222 = vadd.f32 %v5218, %v5221
    %vm5223 = vweird.f32 %v5217
    %vm5224 = vweird.f32 %v5218
    %vm5225 = vmor %vm5223, %vm5224
    %v5226 = vsel %vm5225, %v5218, %v5222
    %v5227 = vand.u32 2147483647, %v5217
    %vm5228 = vcmp.eq.f32.partialorder %v5227, 8.507059e+37
    %v5229 = vand.u32 %v5217, 2147483648
    %v5230 = vor.u32 1.1754944e-38, %v5229
    %v5231 = vsel %vm5228, %v5230, %v5226
    %v5232 = vmul.f32 %v5207, %v5231
    %v5233 = vmin.f32 %v5232, 1.0
    %v5234 = vmax.f32 %v5233, -1.0
    %v5235 = vmul.f32 %v2793, %v2793
    %v5236 = vmin.f32 16.0, %v5235
    %v5237 = vmul.f32 %v5236, 2.1237322e-06
    %v5238 = vadd.f32 %v5237, 0.00028619796
    %v5239 = vmul.f32 %v5236, %v5238
    %v5240 = vadd.f32 %v5239, 0.0036580483
    %v5241 = vmul.f32 %v5236, %v5240
    %v5242 = vadd.f32 %v5241, 0.05243302
    %v5243 = vmul.f32 %v5236, %v5242
    %v5244 = vadd.f32 %v5243, 0.18741608
    %v5245 = vmul.f32 %v5236, %v5244
    %v5246 = vadd.f32 %v5245, 1.1283791
    %v5247 = vmul.f32 %v2793, %v5246
    %v5248 = vmul.f32 %v5236, 3.8918573e-05
    %v5249 = vadd.f32 %v5248, 0.001143296
    %v5250 = vmul.f32 %v5236, %v5249
    %v5251 = vadd.f32 %v5250, 0.014752088
    %v5252 = vmul.f32 %v5236, %v5251
    %v5253 = vadd.f32 %v5252, 0.112945676
    %v5254 = vmul.f32 %v5236, %v5253
    %v5255 = vadd.f32 %v5254, 0.4994258
    %v5256 = vmul.f32 %v5236, %v5255
    %v5257 = vadd.f32 %v5256, 1.0
    %v5258 = vrcp.pop %v5257
    %v5259 = vmul.f32 %v5257, %v5258
    %v5260 = vsub.f32 1.0, %v5259
    %v5261 = vmul.f32 %v5258, %v5260
    %v5262 = vadd.f32 %v5258, %v5261
    %vm5263 = vweird.f32 %v5257
    %vm5264 = vweird.f32 %v5258
    %vm5265 = vmor %vm5263, %vm5264
    %v5266 = vsel %vm5265, %v5258, %v5262
    %v5267 = vand.u32 2147483647, %v5257
    %vm5268 = vcmp.eq.f32.partialorder %v5267, 8.507059e+37
    %v5269 = vand.u32 %v5257, 2147483648
    %v5270 = vor.u32 1.1754944e-38, %v5269
    %v5271 = vsel %vm5268, %v5270, %v5266
    %v5272 = vmul.f32 %v5247, %v5271
    %v5273 = vmin.f32 %v5272, 1.0
    %v5274 = vmax.f32 %v5273, -1.0
    %v5275 = vmul.f32 %v2797, %v2797
    %v5276 = vmin.f32 16.0, %v5275
    %v5277 = vmul.f32 %v5276, 2.1237322e-06
    %v5278 = vadd.f32 %v5277, 0.00028619796
    %v5279 = vmul.f32 %v5276, %v5278
    %v5280 = vadd.f32 %v5279, 0.0036580483
    %v5281 = vmul.f32 %v5276, %v5280
    %v5282 = vadd.f32 %v5281, 0.05243302
    %v5283 = vmul.f32 %v5276, %v5282
    %v5284 = vadd.f32 %v5283, 0.18741608
    %v5285 = vmul.f32 %v5276, %v5284
    %v5286 = vadd.f32 %v5285, 1.1283791
    %v5287 = vmul.f32 %v2797, %v5286
    %v5288 = vmul.f32 %v5276, 3.8918573e-05
    %v5289 = vadd.f32 %v5288, 0.001143296
    %v5290 = vmul.f32 %v5276, %v5289
    %v5291 = vadd.f32 %v5290, 0.014752088
    %v5292 = vmul.f32 %v5276, %v5291
    %v5293 = vadd.f32 %v5292, 0.112945676
    %v5294 = vmul.f32 %v5276, %v5293
    %v5295 = vadd.f32 %v5294, 0.4994258
    %v5296 = vmul.f32 %v5276, %v5295
    %v5297 = vadd.f32 %v5296, 1.0
    %v5298 = vrcp.pop %v5297
    %v5299 = vmul.f32 %v5297, %v5298
    %v5300 = vsub.f32 1.0, %v5299
    %v5301 = vmul.f32 %v5298, %v5300
    %v5302 = vadd.f32 %v5298, %v5301
    %vm5303 = vweird.f32 %v5297
    %vm5304 = vweird.f32 %v5298
    %vm5305 = vmor %vm5303, %vm5304
    %v5306 = vsel %vm5305, %v5298, %v5302
    %v5307 = vand.u32 2147483647, %v5297
    %vm5308 = vcmp.eq.f32.partialorder %v5307, 8.507059e+37
    %v5309 = vand.u32 %v5297, 2147483648
    %v5310 = vor.u32 1.1754944e-38, %v5309
    %v5311 = vsel %vm5308, %v5310, %v5306
    %v5312 = vmul.f32 %v5287, %v5311
    %v5313 = vmin.f32 %v5312, 1.0
    %v5314 = vmax.f32 %v5313, -1.0
    %v5315 = vmul.f32 %v2801, %v2801
    %v5316 = vmin.f32 16.0, %v5315
    %v5317 = vmul.f32 %v5316, 2.1237322e-06
    %v5318 = vadd.f32 %v5317, 0.00028619796
    %v5319 = vmul.f32 %v5316, %v5318
    %v5320 = vadd.f32 %v5319, 0.0036580483
    %v5321 = vmul.f32 %v5316, %v5320
    %v5322 = vadd.f32 %v5321, 0.05243302
    %v5323 = vmul.f32 %v5316, %v5322
    %v5324 = vadd.f32 %v5323, 0.18741608
    %v5325 = vmul.f32 %v5316, %v5324
    %v5326 = vadd.f32 %v5325, 1.1283791
    %v5327 = vmul.f32 %v2801, %v5326
    %v5328 = vmul.f32 %v5316, 3.8918573e-05
    %v5329 = vadd.f32 %v5328, 0.001143296
    %v5330 = vmul.f32 %v5316, %v5329
    %v5331 = vadd.f32 %v5330, 0.014752088
    %v5332 = vmul.f32 %v5316, %v5331
    %v5333 = vadd.f32 %v5332, 0.112945676
    %v5334 = vmul.f32 %v5316, %v5333
    %v5335 = vadd.f32 %v5334, 0.4994258
    %v5336 = vmul.f32 %v5316, %v5335
    %v5337 = vadd.f32 %v5336, 1.0
    %v5338 = vrcp.pop %v5337
    %v5339 = vmul.f32 %v5337, %v5338
    %v5340 = vsub.f32 1.0, %v5339
    %v5341 = vmul.f32 %v5338, %v5340
    %v5342 = vadd.f32 %v5338, %v5341
    %vm5343 = vweird.f32 %v5337
    %vm5344 = vweird.f32 %v5338
    %vm5345 = vmor %vm5343, %vm5344
    %v5346 = vsel %vm5345, %v5338, %v5342
    %v5347 = vand.u32 2147483647, %v5337
    %vm5348 = vcmp.eq.f32.partialorder %v5347, 8.507059e+37
    %v5349 = vand.u32 %v5337, 2147483648
    %v5350 = vor.u32 1.1754944e-38, %v5349
    %v5351 = vsel %vm5348, %v5350, %v5346
    %v5352 = vmul.f32 %v5327, %v5351
    %v5353 = vmin.f32 %v5352, 1.0
    %v5354 = vmax.f32 %v5353, -1.0
    %v5355 = vmul.f32 %v2805, %v2805
    %v5356 = vmin.f32 16.0, %v5355
    %v5357 = vmul.f32 %v5356, 2.1237322e-06
    %v5358 = vadd.f32 %v5357, 0.00028619796
    %v5359 = vmul.f32 %v5356, %v5358
    %v5360 = vadd.f32 %v5359, 0.0036580483
    %v5361 = vmul.f32 %v5356, %v5360
    %v5362 = vadd.f32 %v5361, 0.05243302
    %v5363 = vmul.f32 %v5356, %v5362
    %v5364 = vadd.f32 %v5363, 0.18741608
    %v5365 = vmul.f32 %v5356, %v5364
    %v5366 = vadd.f32 %v5365, 1.1283791
    %v5367 = vmul.f32 %v2805, %v5366
    %v5368 = vmul.f32 %v5356, 3.8918573e-05
    %v5369 = vadd.f32 %v5368, 0.001143296
    %v5370 = vmul.f32 %v5356, %v5369
    %v5371 = vadd.f32 %v5370, 0.014752088
    %v5372 = vmul.f32 %v5356, %v5371
    %v5373 = vadd.f32 %v5372, 0.112945676
    %v5374 = vmul.f32 %v5356, %v5373
    %v5375 = vadd.f32 %v5374, 0.4994258
    %v5376 = vmul.f32 %v5356, %v5375
    %v5377 = vadd.f32 %v5376, 1.0
    %v5378 = vrcp.pop %v5377
    %v5379 = vmul.f32 %v5377, %v5378
    %v5380 = vsub.f32 1.0, %v5379
    %v5381 = vmul.f32 %v5378, %v5380
    %v5382 = vadd.f32 %v5378, %v5381
    %vm5383 = vweird.f32 %v5377
    %vm5384 = vweird.f32 %v5378
    %vm5385 = vmor %vm5383, %vm5384
    %v5386 = vsel %vm5385, %v5378, %v5382
    %v5387 = vand.u32 2147483647, %v5377
    %vm5388 = vcmp.eq.f32.partialorder %v5387, 8.507059e+37
    %v5389 = vand.u32 %v5377, 2147483648
    %v5390 = vor.u32 1.1754944e-38, %v5389
    %v5391 = vsel %vm5388, %v5390, %v5386
    %v5392 = vmul.f32 %v5367, %v5391
    %v5393 = vmin.f32 %v5392, 1.0
    %v5394 = vmax.f32 %v5393, -1.0
    %v5395 = vmul.f32 %v2809, %v2809
    %v5396 = vmin.f32 16.0, %v5395
    %v5397 = vmul.f32 %v5396, 2.1237322e-06
    %v5398 = vadd.f32 %v5397, 0.00028619796
    %v5399 = vmul.f32 %v5396, %v5398
    %v5400 = vadd.f32 %v5399, 0.0036580483
    %v5401 = vmul.f32 %v5396, %v5400
    %v5402 = vadd.f32 %v5401, 0.05243302
    %v5403 = vmul.f32 %v5396, %v5402
    %v5404 = vadd.f32 %v5403, 0.18741608
    %v5405 = vmul.f32 %v5396, %v5404
    %v5406 = vadd.f32 %v5405, 1.1283791
    %v5407 = vmul.f32 %v2809, %v5406
    %v5408 = vmul.f32 %v5396, 3.8918573e-05
    %v5409 = vadd.f32 %v5408, 0.001143296
    %v5410 = vmul.f32 %v5396, %v5409
    %v5411 = vadd.f32 %v5410, 0.014752088
    %v5412 = vmul.f32 %v5396, %v5411
    %v5413 = vadd.f32 %v5412, 0.112945676
    %v5414 = vmul.f32 %v5396, %v5413
    %v5415 = vadd.f32 %v5414, 0.4994258
    %v5416 = vmul.f32 %v5396, %v5415
    %v5417 = vadd.f32 %v5416, 1.0
    %v5418 = vrcp.pop %v5417
    %v5419 = vmul.f32 %v5417, %v5418
    %v5420 = vsub.f32 1.0, %v5419
    %v5421 = vmul.f32 %v5418, %v5420
    %v5422 = vadd.f32 %v5418, %v5421
    %vm5423 = vweird.f32 %v5417
    %vm5424 = vweird.f32 %v5418
    %vm5425 = vmor %vm5423, %vm5424
    %v5426 = vsel %vm5425, %v5418, %v5422
    %v5427 = vand.u32 2147483647, %v5417
    %vm5428 = vcmp.eq.f32.partialorder %v5427, 8.507059e+37
    %v5429 = vand.u32 %v5417, 2147483648
    %v5430 = vor.u32 1.1754944e-38, %v5429
    %v5431 = vsel %vm5428, %v5430, %v5426
    %v5432 = vmul.f32 %v5407, %v5431
    %v5433 = vmin.f32 %v5432, 1.0
    %v5434 = vmax.f32 %v5433, -1.0
    %v5435 = vadd.f32 %v2914, 1.0
    %v5436 = vadd.f32 %v2954, 1.0
    %v5437 = vadd.f32 %v2994, 1.0
    %v5438 = vadd.f32 %v3034, 1.0
    %v5439 = vadd.f32 %v3074, 1.0
    %v5440 = vadd.f32 %v3114, 1.0
    %v5441 = vadd.f32 %v3154, 1.0
    %v5442 = vadd.f32 %v3194, 1.0
    %v5443 = vadd.f32 %v3234, 1.0
    %v5444 = vadd.f32 %v3274, 1.0
    %v5445 = vadd.f32 %v3314, 1.0
    %v5446 = vadd.f32 %v3354, 1.0
    %v5447 = vadd.f32 %v3394, 1.0
    %v5448 = vadd.f32 %v3434, 1.0
    %v5449 = vadd.f32 %v3474, 1.0
    %v5450 = vadd.f32 %v3514, 1.0
    %v5451 = vadd.f32 %v3554, 1.0
    %v5452 = vadd.f32 %v3594, 1.0
    %v5453 = vadd.f32 %v3634, 1.0
    %v5454 = vadd.f32 %v3674, 1.0
    %v5455 = vadd.f32 %v3714, 1.0
    %v5456 = vadd.f32 %v3754, 1.0
    %v5457 = vadd.f32 %v3794, 1.0
    %v5458 = vadd.f32 %v3834, 1.0
    %v5459 = vadd.f32 %v3874, 1.0
    %v5460 = vadd.f32 %v3914, 1.0
    %v5461 = vadd.f32 %v3954, 1.0
    %v5462 = vadd.f32 %v3994, 1.0
    %v5463 = vadd.f32 %v4034, 1.0
    %v5464 = vadd.f32 %v4074, 1.0
    %v5465 = vadd.f32 %v4114, 1.0
    %v5466 = vadd.f32 %v4154, 1.0
    %v5467 = vadd.f32 %v4194, 1.0
    %v5468 = vadd.f32 %v4234, 1.0
    %v5469 = vadd.f32 %v4274, 1.0
    %v5470 = vadd.f32 %v4314, 1.0
    %v5471 = vadd.f32 %v4354, 1.0
    %v5472 = vadd.f32 %v4394, 1.0
    %v5473 = vadd.f32 %v4434, 1.0
    %v5474 = vadd.f32 %v4474, 1.0
    %v5475 = vadd.f32 %v4514, 1.0
    %v5476 = vadd.f32 %v4554, 1.0
    %v5477 = vadd.f32 %v4594, 1.0
    %v5478 = vadd.f32 %v4634, 1.0
    %v5479 = vadd.f32 %v4674, 1.0
    %v5480 = vadd.f32 %v4714, 1.0
    %v5481 = vadd.f32 %v4754, 1.0
    %v5482 = vadd.f32 %v4794, 1.0
    %v5483 = vadd.f32 %v4834, 1.0
    %v5484 = vadd.f32 %v4874, 1.0
    %v5485 = vadd.f32 %v4914, 1.0
    %v5486 = vadd.f32 %v4954, 1.0
    %v5487 = vadd.f32 %v4994, 1.0
    %v5488 = vadd.f32 %v5034, 1.0
    %v5489 = vadd.f32 %v5074, 1.0
    %v5490 = vadd.f32 %v5114, 1.0
    %v5491 = vadd.f32 %v5154, 1.0
    %v5492 = vadd.f32 %v5194, 1.0
    %v5493 = vadd.f32 %v5234, 1.0
    %v5494 = vadd.f32 %v5274, 1.0
    %v5495 = vadd.f32 %v5314, 1.0
    %v5496 = vadd.f32 %v5354, 1.0
    %v5497 = vadd.f32 %v5394, 1.0
    %v5498 = vadd.f32 %v5434, 1.0
    %v5499 = vmul.f32 %v2811, %v5435
    %v5500 = vmul.f32 %v2812, %v5436
    %v5501 = vmul.f32 %v2813, %v5437
    %v5502 = vmul.f32 %v2814, %v5438
    %v5503 = vmul.f32 %v2815, %v5439
    %v5504 = vmul.f32 %v2816, %v5440
    %v5505 = vmul.f32 %v2817, %v5441
    %v5506 = vmul.f32 %v2818, %v5442
    %v5507 = vmul.f32 %v2819, %v5443
    %v5508 = vmul.f32 %v2820, %v5444
    %v5509 = vmul.f32 %v2821, %v5445
    %v5510 = vmul.f32 %v2822, %v5446
    %v5511 = vmul.f32 %v2823, %v5447
    %v5512 = vmul.f32 %v2824, %v5448
    %v5513 = vmul.f32 %v2825, %v5449
    %v5514 = vmul.f32 %v2826, %v5450
    %v5515 = vmul.f32 %v2827, %v5451
    %v5516 = vmul.f32 %v2828, %v5452
    %v5517 = vmul.f32 %v2829, %v5453
    %v5518 = vmul.f32 %v2830, %v5454
    %v5519 = vmul.f32 %v2831, %v5455
    %v5520 = vmul.f32 %v2832, %v5456
    %v5521 = vmul.f32 %v2833, %v5457
    %v5522 = vmul.f32 %v2834, %v5458
    %v5523 = vmul.f32 %v2835, %v5459
    %v5524 = vmul.f32 %v2836, %v5460
    %v5525 = vmul.f32 %v2837, %v5461
    %v5526 = vmul.f32 %v2838, %v5462
    %v5527 = vmul.f32 %v2839, %v5463
    %v5528 = vmul.f32 %v2840, %v5464
    %v5529 = vmul.f32 %v2841, %v5465
    %v5530 = vmul.f32 %v2842, %v5466
    %v5531 = vmul.f32 %v2843, %v5467
    %v5532 = vmul.f32 %v2844, %v5468
    %v5533 = vmul.f32 %v2845, %v5469
    %v5534 = vmul.f32 %v2846, %v5470
    %v5535 = vmul.f32 %v2847, %v5471
    %v5536 = vmul.f32 %v2848, %v5472
    %v5537 = vmul.f32 %v2849, %v5473
    %v5538 = vmul.f32 %v2850, %v5474
    %v5539 = vmul.f32 %v2851, %v5475
    %v5540 = vmul.f32 %v2852, %v5476
    %v5541 = vmul.f32 %v2853, %v5477
    %v5542 = vmul.f32 %v2854, %v5478
    %v5543 = vmul.f32 %v2855, %v5479
    %v5544 = vmul.f32 %v2856, %v5480
    %v5545 = vmul.f32 %v2857, %v5481
    %v5546 = vmul.f32 %v2858, %v5482
    %v5547 = vmul.f32 %v2859, %v5483
    %v5548 = vmul.f32 %v2860, %v5484
    %v5549 = vmul.f32 %v2861, %v5485
    %v5550 = vmul.f32 %v2862, %v5486
    %v5551 = vmul.f32 %v2863, %v5487
    %v5552 = vmul.f32 %v2864, %v5488
    %v5553 = vmul.f32 %v2865, %v5489
    %v5554 = vmul.f32 %v2866, %v5490
    %v5555 = vmul.f32 %v2867, %v5491
    %v5556 = vmul.f32 %v2868, %v5492
    %v5557 = vmul.f32 %v2869, %v5493
    %v5558 = vmul.f32 %v2870, %v5494
    %v5559 = vmul.f32 %v2871, %v5495
    %v5560 = vmul.f32 %v2872, %v5496
    %v5561 = vmul.f32 %v2873, %v5497
    %v5562 = vmul.f32 %v2874, %v5498
    %v5563 = vld [vmem:[%s3] sm:$0xff]
    %v5564 = vld [vmem:[%s3 + $0x8] sm:$0xff]
    %v5565 = vld [vmem:[%s3 + $0x10] sm:$0xff]
    %v5566 = vld [vmem:[%s3 + $0x18] sm:$0xff]
    %v5567 = vld [vmem:[%s3 + $0x20] sm:$0xff]
    %v5568 = vld [vmem:[%s3 + $0x28] sm:$0xff]
    %v5569 = vld [vmem:[%s3 + $0x30] sm:$0xff]
    %v5570 = vld [vmem:[%s3 + $0x38] sm:$0xff]
    %v5571 = vld [vmem:[%s3 + $0x40] sm:$0xff]
    %v5572 = vld [vmem:[%s3 + $0x48] sm:$0xff]
    %v5573 = vld [vmem:[%s3 + $0x50] sm:$0xff]
    %v5574 = vld [vmem:[%s3 + $0x58] sm:$0xff]
    %v5575 = vld [vmem:[%s3 + $0x60] sm:$0xff]
    %v5576 = vld [vmem:[%s3 + $0x68] sm:$0xff]
    %v5577 = vld [vmem:[%s3 + $0x70] sm:$0xff]
    %v5578 = vld [vmem:[%s3 + $0x78] sm:$0xff]
    %v5579 = vld [vmem:[%s3 + $0x80] sm:$0xff]
    %v5580 = vld [vmem:[%s3 + $0x88] sm:$0xff]
    %v5581 = vld [vmem:[%s3 + $0x90] sm:$0xff]
    %v5582 = vld [vmem:[%s3 + $0x98] sm:$0xff]
    %v5583 = vld [vmem:[%s3 + $0xa0] sm:$0xff]
    %v5584 = vld [vmem:[%s3 + $0xa8] sm:$0xff]
    %v5585 = vld [vmem:[%s3 + $0xb0] sm:$0xff]
    %v5586 = vld [vmem:[%s3 + $0xb8] sm:$0xff]
    %v5587 = vld [vmem:[%s3 + $0xc0] sm:$0xff]
    %v5588 = vld [vmem:[%s3 + $0xc8] sm:$0xff]
    %v5589 = vld [vmem:[%s3 + $0xd0] sm:$0xff]
    %v5590 = vld [vmem:[%s3 + $0xd8] sm:$0xff]
    %v5591 = vld [vmem:[%s3 + $0xe0] sm:$0xff]
    %v5592 = vld [vmem:[%s3 + $0xe8] sm:$0xff]
    %v5593 = vld [vmem:[%s3 + $0xf0] sm:$0xff]
    %v5594 = vld [vmem:[%s3 + $0xf8] sm:$0xff]
    %v5595 = vld [vmem:[%s4] sm:$0xff]
    %v5596 = vld [vmem:[%s4 + $0x8] sm:$0xff]
    %v5597 = vld [vmem:[%s4 + $0x10] sm:$0xff]
    %v5598 = vld [vmem:[%s4 + $0x18] sm:$0xff]
    %v5599 = vld [vmem:[%s4 + $0x20] sm:$0xff]
    %v5600 = vld [vmem:[%s4 + $0x28] sm:$0xff]
    %v5601 = vld [vmem:[%s4 + $0x30] sm:$0xff]
    %v5602 = vld [vmem:[%s4 + $0x38] sm:$0xff]
    %5604 = vset.pattern.permute.xlu0 0
    %5605 = vperm.xlu0 %5604, %v5595
    %v5606 = vpop.permute.xlu0 %5605
    %5609 = vset.pattern.permute.xlu0 0
    %5610 = vperm.xlu0 %5609, %v5596
    %v5611 = vpop.permute.xlu0 %5610
    %5614 = vset.pattern.permute.xlu0 0
    %5615 = vperm.xlu0 %5614, %v5597
    %v5616 = vpop.permute.xlu0 %5615
    %5619 = vset.pattern.permute.xlu0 0
    %5620 = vperm.xlu0 %5619, %v5598
    %v5621 = vpop.permute.xlu0 %5620
    %5624 = vset.pattern.permute.xlu0 0
    %5625 = vperm.xlu0 %5624, %v5599
    %v5626 = vpop.permute.xlu0 %5625
    %5629 = vset.pattern.permute.xlu0 0
    %5630 = vperm.xlu0 %5629, %v5600
    %v5631 = vpop.permute.xlu0 %5630
    %5634 = vset.pattern.permute.xlu0 0
    %5635 = vperm.xlu0 %5634, %v5601
    %v5636 = vpop.permute.xlu0 %5635
    %5639 = vset.pattern.permute.xlu0 0
    %5640 = vperm.xlu0 %5639, %v5602
    %v5641 = vpop.permute.xlu0 %5640
    %v5643 = vand.u32 %v5514, 4294901760
    %5644 = vmatpush.msra.mxu0 %v5643
    %v5645 = vand.u32 %v5513, 4294901760
    %5646 = vmatpush.msra.mxu0 %v5645
    %v5647 = vand.u32 %v5512, 4294901760
    %5648 = vmatpush.msra.mxu0 %v5647
    %v5649 = vand.u32 %v5511, 4294901760
    %5650 = vmatpush.msra.mxu0 %v5649
    %v5651 = vand.u32 %v5510, 4294901760
    %5652 = vmatpush.msra.mxu0 %v5651
    %v5653 = vand.u32 %v5509, 4294901760
    %5654 = vmatpush.msra.mxu0 %v5653
    %v5655 = vand.u32 %v5508, 4294901760
    %5656 = vmatpush.msra.mxu0 %v5655
    %v5657 = vand.u32 %v5507, 4294901760
    %5658 = vmatpush.msra.mxu0 %v5657
    %v5659 = vand.u32 %v5506, 4294901760
    %5660 = vmatpush.msra.mxu0 %v5659
    %v5661 = vand.u32 %v5505, 4294901760
    %5662 = vmatpush.msra.mxu0 %v5661
    %v5663 = vand.u32 %v5504, 4294901760
    %5664 = vmatpush.msra.mxu0 %v5663
    %v5665 = vand.u32 %v5503, 4294901760
    %5666 = vmatpush.msra.mxu0 %v5665
    %v5667 = vand.u32 %v5502, 4294901760
    %5668 = vmatpush.msra.mxu0 %v5667
    %v5669 = vand.u32 %v5501, 4294901760
    %5670 = vmatpush.msra.mxu0 %v5669
    %v5671 = vand.u32 %v5500, 4294901760
    %5672 = vmatpush.msra.mxu0 %v5671
    %v5673 = vand.u32 %v5499, 4294901760
    %5674 = vmatpush.msra.mxu0 %v5673
    %v5675 = vand.u32 %v5563, 4294901760
    %v5676 = vsub.f32 %v5563, %v5675
    %v5677 = vand.u32 %v5676, 4294901760
    %v5678 = vsub.f32 %v5676, %v5677
    %v5679 = vand.u32 %v5678, 4294901760
    %5680 = vmatmul.f32.gmra.mxu0 %v5679
    %v5681 = vpop.f32.mrf.mxu0
    %v5682 = vadd.f32 %v5606, %v5681
    %v5683 = vand.u32 %v5567, 4294901760
    %v5684 = vsub.f32 %v5567, %v5683
    %v5685 = vand.u32 %v5684, 4294901760
    %v5686 = vsub.f32 %v5684, %v5685
    %v5687 = vand.u32 %v5686, 4294901760
    %5688 = vmatmul.f32.gmra.mxu0 %v5687
    %v5689 = vpop.f32.mrf.mxu0
    %v5690 = vadd.f32 %v5611, %v5689
    %v5691 = vand.u32 %v5571, 4294901760
    %v5692 = vsub.f32 %v5571, %v5691
    %v5693 = vand.u32 %v5692, 4294901760
    %v5694 = vsub.f32 %v5692, %v5693
    %v5695 = vand.u32 %v5694, 4294901760
    %5696 = vmatmul.f32.gmra.mxu0 %v5695
    %v5697 = vpop.f32.mrf.mxu0
    %v5698 = vadd.f32 %v5616, %v5697
    %v5699 = vand.u32 %v5575, 4294901760
    %v5700 = vsub.f32 %v5575, %v5699
    %v5701 = vand.u32 %v5700, 4294901760
    %v5702 = vsub.f32 %v5700, %v5701
    %v5703 = vand.u32 %v5702, 4294901760
    %5704 = vmatmul.f32.gmra.mxu0 %v5703
    %v5705 = vpop.f32.mrf.mxu0
    %v5706 = vadd.f32 %v5621, %v5705
    %v5707 = vand.u32 %v5579, 4294901760
    %v5708 = vsub.f32 %v5579, %v5707
    %v5709 = vand.u32 %v5708, 4294901760
    %v5710 = vsub.f32 %v5708, %v5709
    %v5711 = vand.u32 %v5710, 4294901760
    %5712 = vmatmul.f32.gmra.mxu0 %v5711
    %v5713 = vpop.f32.mrf.mxu0
    %v5714 = vadd.f32 %v5626, %v5713
    %v5715 = vand.u32 %v5583, 4294901760
    %v5716 = vsub.f32 %v5583, %v5715
    %v5717 = vand.u32 %v5716, 4294901760
    %v5718 = vsub.f32 %v5716, %v5717
    %v5719 = vand.u32 %v5718, 4294901760
    %5720 = vmatmul.f32.gmra.mxu0 %v5719
    %v5721 = vpop.f32.mrf.mxu0
    %v5722 = vadd.f32 %v5631, %v5721
    %v5723 = vand.u32 %v5587, 4294901760
    %v5724 = vsub.f32 %v5587, %v5723
    %v5725 = vand.u32 %v5724, 4294901760
    %v5726 = vsub.f32 %v5724, %v5725
    %v5727 = vand.u32 %v5726, 4294901760
    %5728 = vmatmul.f32.gmra.mxu0 %v5727
    %v5729 = vpop.f32.mrf.mxu0
    %v5730 = vadd.f32 %v5636, %v5729
    %v5731 = vand.u32 %v5591, 4294901760
    %v5732 = vsub.f32 %v5591, %v5731
    %v5733 = vand.u32 %v5732, 4294901760
    %v5734 = vsub.f32 %v5732, %v5733
    %v5735 = vand.u32 %v5734, 4294901760
    %5736 = vmatmul.f32.gmra.mxu0 %v5735
    %v5737 = vpop.f32.mrf.mxu0
    %v5738 = vadd.f32 %v5641, %v5737
    %5739 = vdwg.mxu0
    %v5740 = vand.u32 %v5514, 4294901760
    %v5741 = vsub.f32 %v5514, %v5740
    %v5742 = vand.u32 %v5741, 4294901760
    %v5743 = vsub.f32 %v5741, %v5742
    %v5744 = vand.u32 %v5743, 4294901760
    %5745 = vmatpush.msra.mxu0 %v5744
    %v5746 = vand.u32 %v5513, 4294901760
    %v5747 = vsub.f32 %v5513, %v5746
    %v5748 = vand.u32 %v5747, 4294901760
    %v5749 = vsub.f32 %v5747, %v5748
    %v5750 = vand.u32 %v5749, 4294901760
    %5751 = vmatpush.msra.mxu0 %v5750
    %v5752 = vand.u32 %v5512, 4294901760
    %v5753 = vsub.f32 %v5512, %v5752
    %v5754 = vand.u32 %v5753, 4294901760
    %v5755 = vsub.f32 %v5753, %v5754
    %v5756 = vand.u32 %v5755, 4294901760
    %5757 = vmatpush.msra.mxu0 %v5756
    %v5758 = vand.u32 %v5511, 4294901760
    %v5759 = vsub.f32 %v5511, %v5758
    %v5760 = vand.u32 %v5759, 4294901760
    %v5761 = vsub.f32 %v5759, %v5760
    %v5762 = vand.u32 %v5761, 4294901760
    %5763 = vmatpush.msra.mxu0 %v5762
    %v5764 = vand.u32 %v5510, 4294901760
    %v5765 = vsub.f32 %v5510, %v5764
    %v5766 = vand.u32 %v5765, 4294901760
    %v5767 = vsub.f32 %v5765, %v5766
    %v5768 = vand.u32 %v5767, 4294901760
    %5769 = vmatpush.msra.mxu0 %v5768
    %v5770 = vand.u32 %v5509, 4294901760
    %v5771 = vsub.f32 %v5509, %v5770
    %v5772 = vand.u32 %v5771, 4294901760
    %v5773 = vsub.f32 %v5771, %v5772
    %v5774 = vand.u32 %v5773, 4294901760
    %5775 = vmatpush.msra.mxu0 %v5774
    %v5776 = vand.u32 %v5508, 4294901760
    %v5777 = vsub.f32 %v5508, %v5776
    %v5778 = vand.u32 %v5777, 4294901760
    %v5779 = vsub.f32 %v5777, %v5778
    %v5780 = vand.u32 %v5779, 4294901760
    %5781 = vmatpush.msra.mxu0 %v5780
    %v5782 = vand.u32 %v5507, 4294901760
    %v5783 = vsub.f32 %v5507, %v5782
    %v5784 = vand.u32 %v5783, 4294901760
    %v5785 = vsub.f32 %v5783, %v5784
    %v5786 = vand.u32 %v5785, 4294901760
    %5787 = vmatpush.msra.mxu0 %v5786
    %v5788 = vand.u32 %v5506, 4294901760
    %v5789 = vsub.f32 %v5506, %v5788
    %v5790 = vand.u32 %v5789, 4294901760
    %v5791 = vsub.f32 %v5789, %v5790
    %v5792 = vand.u32 %v5791, 4294901760
    %5793 = vmatpush.msra.mxu0 %v5792
    %v5794 = vand.u32 %v5505, 4294901760
    %v5795 = vsub.f32 %v5505, %v5794
    %v5796 = vand.u32 %v5795, 4294901760
    %v5797 = vsub.f32 %v5795, %v5796
    %v5798 = vand.u32 %v5797, 4294901760
    %5799 = vmatpush.msra.mxu0 %v5798
    %v5800 = vand.u32 %v5504, 4294901760
    %v5801 = vsub.f32 %v5504, %v5800
    %v5802 = vand.u32 %v5801, 4294901760
    %v5803 = vsub.f32 %v5801, %v5802
    %v5804 = vand.u32 %v5803, 4294901760
    %5805 = vmatpush.msra.mxu0 %v5804
    %v5806 = vand.u32 %v5503, 4294901760
    %v5807 = vsub.f32 %v5503, %v5806
    %v5808 = vand.u32 %v5807, 4294901760
    %v5809 = vsub.f32 %v5807, %v5808
    %v5810 = vand.u32 %v5809, 4294901760
    %5811 = vmatpush.msra.mxu0 %v5810
    %v5812 = vand.u32 %v5502, 4294901760
    %v5813 = vsub.f32 %v5502, %v5812
    %v5814 = vand.u32 %v5813, 4294901760
    %v5815 = vsub.f32 %v5813, %v5814
    %v5816 = vand.u32 %v5815, 4294901760
    %5817 = vmatpush.msra.mxu0 %v5816
    %v5818 = vand.u32 %v5501, 4294901760
    %v5819 = vsub.f32 %v5501, %v5818
    %v5820 = vand.u32 %v5819, 4294901760
    %v5821 = vsub.f32 %v5819, %v5820
    %v5822 = vand.u32 %v5821, 4294901760
    %5823 = vmatpush.msra.mxu0 %v5822
    %v5824 = vand.u32 %v5500, 4294901760
    %v5825 = vsub.f32 %v5500, %v5824
    %v5826 = vand.u32 %v5825, 4294901760
    %v5827 = vsub.f32 %v5825, %v5826
    %v5828 = vand.u32 %v5827, 4294901760
    %5829 = vmatpush.msra.mxu0 %v5828
    %v5830 = vand.u32 %v5499, 4294901760
    %v5831 = vsub.f32 %v5499, %v5830
    %v5832 = vand.u32 %v5831, 4294901760
    %v5833 = vsub.f32 %v5831, %v5832
    %v5834 = vand.u32 %v5833, 4294901760
    %5835 = vmatpush.msra.mxu0 %v5834
    %v5836 = vand.u32 %v5563, 4294901760
    %5837 = vmatmul.f32.gmra.mxu0 %v5836
    %v5838 = vpop.f32.mrf.mxu0
    %v5839 = vadd.f32 %v5682, %v5838
    %v5840 = vand.u32 %v5567, 4294901760
    %5841 = vmatmul.f32.gmra.mxu0 %v5840
    %v5842 = vpop.f32.mrf.mxu0
    %v5843 = vadd.f32 %v5690, %v5842
    %v5844 = vand.u32 %v5571, 4294901760
    %5845 = vmatmul.f32.gmra.mxu0 %v5844
    %v5846 = vpop.f32.mrf.mxu0
    %v5847 = vadd.f32 %v5698, %v5846
    %v5848 = vand.u32 %v5575, 4294901760
    %5849 = vmatmul.f32.gmra.mxu0 %v5848
    %v5850 = vpop.f32.mrf.mxu0
    %v5851 = vadd.f32 %v5706, %v5850
    %v5852 = vand.u32 %v5579, 4294901760
    %5853 = vmatmul.f32.gmra.mxu0 %v5852
    %v5854 = vpop.f32.mrf.mxu0
    %v5855 = vadd.f32 %v5714, %v5854
    %v5856 = vand.u32 %v5583, 4294901760
    %5857 = vmatmul.f32.gmra.mxu0 %v5856
    %v5858 = vpop.f32.mrf.mxu0
    %v5859 = vadd.f32 %v5722, %v5858
    %v5860 = vand.u32 %v5587, 4294901760
    %5861 = vmatmul.f32.gmra.mxu0 %v5860
    %v5862 = vpop.f32.mrf.mxu0
    %v5863 = vadd.f32 %v5730, %v5862
    %v5864 = vand.u32 %v5591, 4294901760
    %5865 = vmatmul.f32.gmra.mxu0 %v5864
    %v5866 = vpop.f32.mrf.mxu0
    %v5867 = vadd.f32 %v5738, %v5866
    %5868 = vdwg.mxu0
    %v5869 = vand.u32 %v5514, 4294901760
    %v5870 = vsub.f32 %v5514, %v5869
    %5871 = vmatpush.msra.mxu0 %v5870
    %v5872 = vand.u32 %v5513, 4294901760
    %v5873 = vsub.f32 %v5513, %v5872
    %5874 = vmatpush.msra.mxu0 %v5873
    %v5875 = vand.u32 %v5512, 4294901760
    %v5876 = vsub.f32 %v5512, %v5875
    %5877 = vmatpush.msra.mxu0 %v5876
    %v5878 = vand.u32 %v5511, 4294901760
    %v5879 = vsub.f32 %v5511, %v5878
    %5880 = vmatpush.msra.mxu0 %v5879
    %v5881 = vand.u32 %v5510, 4294901760
    %v5882 = vsub.f32 %v5510, %v5881
    %5883 = vmatpush.msra.mxu0 %v5882
    %v5884 = vand.u32 %v5509, 4294901760
    %v5885 = vsub.f32 %v5509, %v5884
    %5886 = vmatpush.msra.mxu0 %v5885
    %v5887 = vand.u32 %v5508, 4294901760
    %v5888 = vsub.f32 %v5508, %v5887
    %5889 = vmatpush.msra.mxu0 %v5888
    %v5890 = vand.u32 %v5507, 4294901760
    %v5891 = vsub.f32 %v5507, %v5890
    %5892 = vmatpush.msra.mxu0 %v5891
    %v5893 = vand.u32 %v5506, 4294901760
    %v5894 = vsub.f32 %v5506, %v5893
    %5895 = vmatpush.msra.mxu0 %v5894
    %v5896 = vand.u32 %v5505, 4294901760
    %v5897 = vsub.f32 %v5505, %v5896
    %5898 = vmatpush.msra.mxu0 %v5897
    %v5899 = vand.u32 %v5504, 4294901760
    %v5900 = vsub.f32 %v5504, %v5899
    %5901 = vmatpush.msra.mxu0 %v5900
    %v5902 = vand.u32 %v5503, 4294901760
    %v5903 = vsub.f32 %v5503, %v5902
    %5904 = vmatpush.msra.mxu0 %v5903
    %v5905 = vand.u32 %v5502, 4294901760
    %v5906 = vsub.f32 %v5502, %v5905
    %5907 = vmatpush.msra.mxu0 %v5906
    %v5908 = vand.u32 %v5501, 4294901760
    %v5909 = vsub.f32 %v5501, %v5908
    %5910 = vmatpush.msra.mxu0 %v5909
    %v5911 = vand.u32 %v5500, 4294901760
    %v5912 = vsub.f32 %v5500, %v5911
    %5913 = vmatpush.msra.mxu0 %v5912
    %v5914 = vand.u32 %v5499, 4294901760
    %v5915 = vsub.f32 %v5499, %v5914
    %5916 = vmatpush.msra.mxu0 %v5915
    %v5917 = vand.u32 %v5563, 4294901760
    %v5918 = vsub.f32 %v5563, %v5917
    %5919 = vmatmul.f32.gmra.mxu0 %v5918
    %v5920 = vpop.f32.mrf.mxu0
    %v5921 = vadd.f32 %v5839, %v5920
    %v5922 = vand.u32 %v5567, 4294901760
    %v5923 = vsub.f32 %v5567, %v5922
    %5924 = vmatmul.f32.gmra.mxu0 %v5923
    %v5925 = vpop.f32.mrf.mxu0
    %v5926 = vadd.f32 %v5843, %v5925
    %v5927 = vand.u32 %v5571, 4294901760
    %v5928 = vsub.f32 %v5571, %v5927
    %5929 = vmatmul.f32.gmra.mxu0 %v5928
    %v5930 = vpop.f32.mrf.mxu0
    %v5931 = vadd.f32 %v5847, %v5930
    %v5932 = vand.u32 %v5575, 4294901760
    %v5933 = vsub.f32 %v5575, %v5932
    %5934 = vmatmul.f32.gmra.mxu0 %v5933
    %v5935 = vpop.f32.mrf.mxu0
    %v5936 = vadd.f32 %v5851, %v5935
    %v5937 = vand.u32 %v5579, 4294901760
    %v5938 = vsub.f32 %v5579, %v5937
    %5939 = vmatmul.f32.gmra.mxu0 %v5938
    %v5940 = vpop.f32.mrf.mxu0
    %v5941 = vadd.f32 %v5855, %v5940
    %v5942 = vand.u32 %v5583, 4294901760
    %v5943 = vsub.f32 %v5583, %v5942
    %5944 = vmatmul.f32.gmra.mxu0 %v5943
    %v5945 = vpop.f32.mrf.mxu0
    %v5946 = vadd.f32 %v5859, %v5945
    %v5947 = vand.u32 %v5587, 4294901760
    %v5948 = vsub.f32 %v5587, %v5947
    %5949 = vmatmul.f32.gmra.mxu0 %v5948
    %v5950 = vpop.f32.mrf.mxu0
    %v5951 = vadd.f32 %v5863, %v5950
    %v5952 = vand.u32 %v5591, 4294901760
    %v5953 = vsub.f32 %v5591, %v5952
    %5954 = vmatmul.f32.gmra.mxu0 %v5953
    %v5955 = vpop.f32.mrf.mxu0
    %v5956 = vadd.f32 %v5867, %v5955
    %5957 = vdwg.mxu0
    %v5958 = vand.u32 %v5514, 4294901760
    %5959 = vmatpush.msra.mxu0 %v5958
    %v5960 = vand.u32 %v5513, 4294901760
    %5961 = vmatpush.msra.mxu0 %v5960
    %v5962 = vand.u32 %v5512, 4294901760
    %5963 = vmatpush.msra.mxu0 %v5962
    %v5964 = vand.u32 %v5511, 4294901760
    %5965 = vmatpush.msra.mxu0 %v5964
    %v5966 = vand.u32 %v5510, 4294901760
    %5967 = vmatpush.msra.mxu0 %v5966
    %v5968 = vand.u32 %v5509, 4294901760
    %5969 = vmatpush.msra.mxu0 %v5968
    %v5970 = vand.u32 %v5508, 4294901760
    %5971 = vmatpush.msra.mxu0 %v5970
    %v5972 = vand.u32 %v5507, 4294901760
    %5973 = vmatpush.msra.mxu0 %v5972
    %v5974 = vand.u32 %v5506, 4294901760
    %5975 = vmatpush.msra.mxu0 %v5974
    %v5976 = vand.u32 %v5505, 4294901760
    %5977 = vmatpush.msra.mxu0 %v5976
    %v5978 = vand.u32 %v5504, 4294901760
    %5979 = vmatpush.msra.mxu0 %v5978
    %v5980 = vand.u32 %v5503, 4294901760
    %5981 = vmatpush.msra.mxu0 %v5980
    %v5982 = vand.u32 %v5502, 4294901760
    %5983 = vmatpush.msra.mxu0 %v5982
    %v5984 = vand.u32 %v5501, 4294901760
    %5985 = vmatpush.msra.mxu0 %v5984
    %v5986 = vand.u32 %v5500, 4294901760
    %5987 = vmatpush.msra.mxu0 %v5986
    %v5988 = vand.u32 %v5499, 4294901760
    %5989 = vmatpush.msra.mxu0 %v5988
    %v5990 = vand.u32 %v5563, 4294901760
    %v5991 = vsub.f32 %v5563, %v5990
    %v5992 = vand.u32 %v5991, 4294901760
    %5993 = vmatmul.f32.gmra.mxu0 %v5992
    %v5994 = vpop.f32.mrf.mxu0
    %v5995 = vadd.f32 %v5921, %v5994
    %v5996 = vand.u32 %v5567, 4294901760
    %v5997 = vsub.f32 %v5567, %v5996
    %v5998 = vand.u32 %v5997, 4294901760
    %5999 = vmatmul.f32.gmra.mxu0 %v5998
    %v6000 = vpop.f32.mrf.mxu0
    %v6001 = vadd.f32 %v5926, %v6000
    %v6002 = vand.u32 %v5571, 4294901760
    %v6003 = vsub.f32 %v5571, %v6002
    %v6004 = vand.u32 %v6003, 4294901760
    %6005 = vmatmul.f32.gmra.mxu0 %v6004
    %v6006 = vpop.f32.mrf.mxu0
    %v6007 = vadd.f32 %v5931, %v6006
    %v6008 = vand.u32 %v5575, 4294901760
    %v6009 = vsub.f32 %v5575, %v6008
    %v6010 = vand.u32 %v6009, 4294901760
    %6011 = vmatmul.f32.gmra.mxu0 %v6010
    %v6012 = vpop.f32.mrf.mxu0
    %v6013 = vadd.f32 %v5936, %v6012
    %v6014 = vand.u32 %v5579, 4294901760
    %v6015 = vsub.f32 %v5579, %v6014
    %v6016 = vand.u32 %v6015, 4294901760
    %6017 = vmatmul.f32.gmra.mxu0 %v6016
    %v6018 = vpop.f32.mrf.mxu0
    %v6019 = vadd.f32 %v5941, %v6018
    %v6020 = vand.u32 %v5583, 4294901760
    %v6021 = vsub.f32 %v5583, %v6020
    %v6022 = vand.u32 %v6021, 4294901760
    %6023 = vmatmul.f32.gmra.mxu0 %v6022
    %v6024 = vpop.f32.mrf.mxu0
    %v6025 = vadd.f32 %v5946, %v6024
    %v6026 = vand.u32 %v5587, 4294901760
    %v6027 = vsub.f32 %v5587, %v6026
    %v6028 = vand.u32 %v6027, 4294901760
    %6029 = vmatmul.f32.gmra.mxu0 %v6028
    %v6030 = vpop.f32.mrf.mxu0
    %v6031 = vadd.f32 %v5951, %v6030
    %v6032 = vand.u32 %v5591, 4294901760
    %v6033 = vsub.f32 %v5591, %v6032
    %v6034 = vand.u32 %v6033, 4294901760
    %6035 = vmatmul.f32.gmra.mxu0 %v6034
    %v6036 = vpop.f32.mrf.mxu0
    %v6037 = vadd.f32 %v5956, %v6036
    %6038 = vdwg.mxu0
    %v6039 = vand.u32 %v5514, 4294901760
    %v6040 = vsub.f32 %v5514, %v6039
    %v6041 = vand.u32 %v6040, 4294901760
    %6042 = vmatpush.msra.mxu0 %v6041
    %v6043 = vand.u32 %v5513, 4294901760
    %v6044 = vsub.f32 %v5513, %v6043
    %v6045 = vand.u32 %v6044, 4294901760
    %6046 = vmatpush.msra.mxu0 %v6045
    %v6047 = vand.u32 %v5512, 4294901760
    %v6048 = vsub.f32 %v5512, %v6047
    %v6049 = vand.u32 %v6048, 4294901760
    %6050 = vmatpush.msra.mxu0 %v6049
    %v6051 = vand.u32 %v5511, 4294901760
    %v6052 = vsub.f32 %v5511, %v6051
    %v6053 = vand.u32 %v6052, 4294901760
    %6054 = vmatpush.msra.mxu0 %v6053
    %v6055 = vand.u32 %v5510, 4294901760
    %v6056 = vsub.f32 %v5510, %v6055
    %v6057 = vand.u32 %v6056, 4294901760
    %6058 = vmatpush.msra.mxu0 %v6057
    %v6059 = vand.u32 %v5509, 4294901760
    %v6060 = vsub.f32 %v5509, %v6059
    %v6061 = vand.u32 %v6060, 4294901760
    %6062 = vmatpush.msra.mxu0 %v6061
    %v6063 = vand.u32 %v5508, 4294901760
    %v6064 = vsub.f32 %v5508, %v6063
    %v6065 = vand.u32 %v6064, 4294901760
    %6066 = vmatpush.msra.mxu0 %v6065
    %v6067 = vand.u32 %v5507, 4294901760
    %v6068 = vsub.f32 %v5507, %v6067
    %v6069 = vand.u32 %v6068, 4294901760
    %6070 = vmatpush.msra.mxu0 %v6069
    %v6071 = vand.u32 %v5506, 4294901760
    %v6072 = vsub.f32 %v5506, %v6071
    %v6073 = vand.u32 %v6072, 4294901760
    %6074 = vmatpush.msra.mxu0 %v6073
    %v6075 = vand.u32 %v5505, 4294901760
    %v6076 = vsub.f32 %v5505, %v6075
    %v6077 = vand.u32 %v6076, 4294901760
    %6078 = vmatpush.msra.mxu0 %v6077
    %v6079 = vand.u32 %v5504, 4294901760
    %v6080 = vsub.f32 %v5504, %v6079
    %v6081 = vand.u32 %v6080, 4294901760
    %6082 = vmatpush.msra.mxu0 %v6081
    %v6083 = vand.u32 %v5503, 4294901760
    %v6084 = vsub.f32 %v5503, %v6083
    %v6085 = vand.u32 %v6084, 4294901760
    %6086 = vmatpush.msra.mxu0 %v6085
    %v6087 = vand.u32 %v5502, 4294901760
    %v6088 = vsub.f32 %v5502, %v6087
    %v6089 = vand.u32 %v6088, 4294901760
    %6090 = vmatpush.msra.mxu0 %v6089
    %v6091 = vand.u32 %v5501, 4294901760
    %v6092 = vsub.f32 %v5501, %v6091
    %v6093 = vand.u32 %v6092, 4294901760
    %6094 = vmatpush.msra.mxu0 %v6093
    %v6095 = vand.u32 %v5500, 4294901760
    %v6096 = vsub.f32 %v5500, %v6095
    %v6097 = vand.u32 %v6096, 4294901760
    %6098 = vmatpush.msra.mxu0 %v6097
    %v6099 = vand.u32 %v5499, 4294901760
    %v6100 = vsub.f32 %v5499, %v6099
    %v6101 = vand.u32 %v6100, 4294901760
    %6102 = vmatpush.msra.mxu0 %v6101
    %v6103 = vand.u32 %v5563, 4294901760
    %6104 = vmatmul.f32.gmra.mxu0 %v6103
    %v6105 = vpop.f32.mrf.mxu0
    %v6106 = vadd.f32 %v5995, %v6105
    %v6107 = vand.u32 %v5567, 4294901760
    %6108 = vmatmul.f32.gmra.mxu0 %v6107
    %v6109 = vpop.f32.mrf.mxu0
    %v6110 = vadd.f32 %v6001, %v6109
    %v6111 = vand.u32 %v5571, 4294901760
    %6112 = vmatmul.f32.gmra.mxu0 %v6111
    %v6113 = vpop.f32.mrf.mxu0
    %v6114 = vadd.f32 %v6007, %v6113
    %v6115 = vand.u32 %v5575, 4294901760
    %6116 = vmatmul.f32.gmra.mxu0 %v6115
    %v6117 = vpop.f32.mrf.mxu0
    %v6118 = vadd.f32 %v6013, %v6117
    %v6119 = vand.u32 %v5579, 4294901760
    %6120 = vmatmul.f32.gmra.mxu0 %v6119
    %v6121 = vpop.f32.mrf.mxu0
    %v6122 = vadd.f32 %v6019, %v6121
    %v6123 = vand.u32 %v5583, 4294901760
    %6124 = vmatmul.f32.gmra.mxu0 %v6123
    %v6125 = vpop.f32.mrf.mxu0
    %v6126 = vadd.f32 %v6025, %v6125
    %v6127 = vand.u32 %v5587, 4294901760
    %6128 = vmatmul.f32.gmra.mxu0 %v6127
    %v6129 = vpop.f32.mrf.mxu0
    %v6130 = vadd.f32 %v6031, %v6129
    %v6131 = vand.u32 %v5591, 4294901760
    %6132 = vmatmul.f32.gmra.mxu0 %v6131
    %v6133 = vpop.f32.mrf.mxu0
    %v6134 = vadd.f32 %v6037, %v6133
    %6135 = vdwg.mxu0
    %v6136 = vand.u32 %v5514, 4294901760
    %6137 = vmatpush.msra.mxu0 %v6136
    %v6138 = vand.u32 %v5513, 4294901760
    %6139 = vmatpush.msra.mxu0 %v6138
    %v6140 = vand.u32 %v5512, 4294901760
    %6141 = vmatpush.msra.mxu0 %v6140
    %v6142 = vand.u32 %v5511, 4294901760
    %6143 = vmatpush.msra.mxu0 %v6142
    %v6144 = vand.u32 %v5510, 4294901760
    %6145 = vmatpush.msra.mxu0 %v6144
    %v6146 = vand.u32 %v5509, 4294901760
    %6147 = vmatpush.msra.mxu0 %v6146
    %v6148 = vand.u32 %v5508, 4294901760
    %6149 = vmatpush.msra.mxu0 %v6148
    %v6150 = vand.u32 %v5507, 4294901760
    %6151 = vmatpush.msra.mxu0 %v6150
    %v6152 = vand.u32 %v5506, 4294901760
    %6153 = vmatpush.msra.mxu0 %v6152
    %v6154 = vand.u32 %v5505, 4294901760
    %6155 = vmatpush.msra.mxu0 %v6154
    %v6156 = vand.u32 %v5504, 4294901760
    %6157 = vmatpush.msra.mxu0 %v6156
    %v6158 = vand.u32 %v5503, 4294901760
    %6159 = vmatpush.msra.mxu0 %v6158
    %v6160 = vand.u32 %v5502, 4294901760
    %6161 = vmatpush.msra.mxu0 %v6160
    %v6162 = vand.u32 %v5501, 4294901760
    %6163 = vmatpush.msra.mxu0 %v6162
    %v6164 = vand.u32 %v5500, 4294901760
    %6165 = vmatpush.msra.mxu0 %v6164
    %v6166 = vand.u32 %v5499, 4294901760
    %6167 = vmatpush.msra.mxu0 %v6166
    %v6168 = vand.u32 %v5563, 4294901760
    %6169 = vmatmul.f32.gmra.mxu0 %v6168
    %v6170 = vpop.f32.mrf.mxu0
    %v6171 = vadd.f32 %v6106, %v6170
    %v6172 = vand.u32 %v5567, 4294901760
    %6173 = vmatmul.f32.gmra.mxu0 %v6172
    %v6174 = vpop.f32.mrf.mxu0
    %v6175 = vadd.f32 %v6110, %v6174
    %v6176 = vand.u32 %v5571, 4294901760
    %6177 = vmatmul.f32.gmra.mxu0 %v6176
    %v6178 = vpop.f32.mrf.mxu0
    %v6179 = vadd.f32 %v6114, %v6178
    %v6180 = vand.u32 %v5575, 4294901760
    %6181 = vmatmul.f32.gmra.mxu0 %v6180
    %v6182 = vpop.f32.mrf.mxu0
    %v6183 = vadd.f32 %v6118, %v6182
    %v6184 = vand.u32 %v5579, 4294901760
    %6185 = vmatmul.f32.gmra.mxu0 %v6184
    %v6186 = vpop.f32.mrf.mxu0
    %v6187 = vadd.f32 %v6122, %v6186
    %v6188 = vand.u32 %v5583, 4294901760
    %6189 = vmatmul.f32.gmra.mxu0 %v6188
    %v6190 = vpop.f32.mrf.mxu0
    %v6191 = vadd.f32 %v6126, %v6190
    %v6192 = vand.u32 %v5587, 4294901760
    %6193 = vmatmul.f32.gmra.mxu0 %v6192
    %v6194 = vpop.f32.mrf.mxu0
    %v6195 = vadd.f32 %v6130, %v6194
    %v6196 = vand.u32 %v5591, 4294901760
    %6197 = vmatmul.f32.gmra.mxu0 %v6196
    %v6198 = vpop.f32.mrf.mxu0
    %v6199 = vadd.f32 %v6134, %v6198
    %6200 = vdwg.mxu0
    %v6201 = vand.u32 %v5530, 4294901760
    %6202 = vmatpush.msra.mxu0 %v6201
    %v6203 = vand.u32 %v5529, 4294901760
    %6204 = vmatpush.msra.mxu0 %v6203
    %v6205 = vand.u32 %v5528, 4294901760
    %6206 = vmatpush.msra.mxu0 %v6205
    %v6207 = vand.u32 %v5527, 4294901760
    %6208 = vmatpush.msra.mxu0 %v6207
    %v6209 = vand.u32 %v5526, 4294901760
    %6210 = vmatpush.msra.mxu0 %v6209
    %v6211 = vand.u32 %v5525, 4294901760
    %6212 = vmatpush.msra.mxu0 %v6211
    %v6213 = vand.u32 %v5524, 4294901760
    %6214 = vmatpush.msra.mxu0 %v6213
    %v6215 = vand.u32 %v5523, 4294901760
    %6216 = vmatpush.msra.mxu0 %v6215
    %v6217 = vand.u32 %v5522, 4294901760
    %6218 = vmatpush.msra.mxu0 %v6217
    %v6219 = vand.u32 %v5521, 4294901760
    %6220 = vmatpush.msra.mxu0 %v6219
    %v6221 = vand.u32 %v5520, 4294901760
    %6222 = vmatpush.msra.mxu0 %v6221
    %v6223 = vand.u32 %v5519, 4294901760
    %6224 = vmatpush.msra.mxu0 %v6223
    %v6225 = vand.u32 %v5518, 4294901760
    %6226 = vmatpush.msra.mxu0 %v6225
    %v6227 = vand.u32 %v5517, 4294901760
    %6228 = vmatpush.msra.mxu0 %v6227
    %v6229 = vand.u32 %v5516, 4294901760
    %6230 = vmatpush.msra.mxu0 %v6229
    %v6231 = vand.u32 %v5515, 4294901760
    %6232 = vmatpush.msra.mxu0 %v6231
    %v6233 = vand.u32 %v5564, 4294901760
    %v6234 = vsub.f32 %v5564, %v6233
    %v6235 = vand.u32 %v6234, 4294901760
    %v6236 = vsub.f32 %v6234, %v6235
    %v6237 = vand.u32 %v6236, 4294901760
    %6238 = vmatmul.f32.gmra.mxu0 %v6237
    %v6239 = vpop.f32.mrf.mxu0
    %v6240 = vadd.f32 %v6171, %v6239
    %v6241 = vand.u32 %v5568, 4294901760
    %v6242 = vsub.f32 %v5568, %v6241
    %v6243 = vand.u32 %v6242, 4294901760
    %v6244 = vsub.f32 %v6242, %v6243
    %v6245 = vand.u32 %v6244, 4294901760
    %6246 = vmatmul.f32.gmra.mxu0 %v6245
    %v6247 = vpop.f32.mrf.mxu0
    %v6248 = vadd.f32 %v6175, %v6247
    %v6249 = vand.u32 %v5572, 4294901760
    %v6250 = vsub.f32 %v5572, %v6249
    %v6251 = vand.u32 %v6250, 4294901760
    %v6252 = vsub.f32 %v6250, %v6251
    %v6253 = vand.u32 %v6252, 4294901760
    %6254 = vmatmul.f32.gmra.mxu0 %v6253
    %v6255 = vpop.f32.mrf.mxu0
    %v6256 = vadd.f32 %v6179, %v6255
    %v6257 = vand.u32 %v5576, 4294901760
    %v6258 = vsub.f32 %v5576, %v6257
    %v6259 = vand.u32 %v6258, 4294901760
    %v6260 = vsub.f32 %v6258, %v6259
    %v6261 = vand.u32 %v6260, 4294901760
    %6262 = vmatmul.f32.gmra.mxu0 %v6261
    %v6263 = vpop.f32.mrf.mxu0
    %v6264 = vadd.f32 %v6183, %v6263
    %v6265 = vand.u32 %v5580, 4294901760
    %v6266 = vsub.f32 %v5580, %v6265
    %v6267 = vand.u32 %v6266, 4294901760
    %v6268 = vsub.f32 %v6266, %v6267
    %v6269 = vand.u32 %v6268, 4294901760
    %6270 = vmatmul.f32.gmra.mxu0 %v6269
    %v6271 = vpop.f32.mrf.mxu0
    %v6272 = vadd.f32 %v6187, %v6271
    %v6273 = vand.u32 %v5584, 4294901760
    %v6274 = vsub.f32 %v5584, %v6273
    %v6275 = vand.u32 %v6274, 4294901760
    %v6276 = vsub.f32 %v6274, %v6275
    %v6277 = vand.u32 %v6276, 4294901760
    %6278 = vmatmul.f32.gmra.mxu0 %v6277
    %v6279 = vpop.f32.mrf.mxu0
    %v6280 = vadd.f32 %v6191, %v6279
    %v6281 = vand.u32 %v5588, 4294901760
    %v6282 = vsub.f32 %v5588, %v6281
    %v6283 = vand.u32 %v6282, 4294901760
    %v6284 = vsub.f32 %v6282, %v6283
    %v6285 = vand.u32 %v6284, 4294901760
    %6286 = vmatmul.f32.gmra.mxu0 %v6285
    %v6287 = vpop.f32.mrf.mxu0
    %v6288 = vadd.f32 %v6195, %v6287
    %v6289 = vand.u32 %v5592, 4294901760
    %v6290 = vsub.f32 %v5592, %v6289
    %v6291 = vand.u32 %v6290, 4294901760
    %v6292 = vsub.f32 %v6290, %v6291
    %v6293 = vand.u32 %v6292, 4294901760
    %6294 = vmatmul.f32.gmra.mxu0 %v6293
    %v6295 = vpop.f32.mrf.mxu0
    %v6296 = vadd.f32 %v6199, %v6295
    %6297 = vdwg.mxu0
    %v6298 = vand.u32 %v5530, 4294901760
    %v6299 = vsub.f32 %v5530, %v6298
    %v6300 = vand.u32 %v6299, 4294901760
    %v6301 = vsub.f32 %v6299, %v6300
    %v6302 = vand.u32 %v6301, 4294901760
    %6303 = vmatpush.msra.mxu0 %v6302
    %v6304 = vand.u32 %v5529, 4294901760
    %v6305 = vsub.f32 %v5529, %v6304
    %v6306 = vand.u32 %v6305, 4294901760
    %v6307 = vsub.f32 %v6305, %v6306
    %v6308 = vand.u32 %v6307, 4294901760
    %6309 = vmatpush.msra.mxu0 %v6308
    %v6310 = vand.u32 %v5528, 4294901760
    %v6311 = vsub.f32 %v5528, %v6310
    %v6312 = vand.u32 %v6311, 4294901760
    %v6313 = vsub.f32 %v6311, %v6312
    %v6314 = vand.u32 %v6313, 4294901760
    %6315 = vmatpush.msra.mxu0 %v6314
    %v6316 = vand.u32 %v5527, 4294901760
    %v6317 = vsub.f32 %v5527, %v6316
    %v6318 = vand.u32 %v6317, 4294901760
    %v6319 = vsub.f32 %v6317, %v6318
    %v6320 = vand.u32 %v6319, 4294901760
    %6321 = vmatpush.msra.mxu0 %v6320
    %v6322 = vand.u32 %v5526, 4294901760
    %v6323 = vsub.f32 %v5526, %v6322
    %v6324 = vand.u32 %v6323, 4294901760
    %v6325 = vsub.f32 %v6323, %v6324
    %v6326 = vand.u32 %v6325, 4294901760
    %6327 = vmatpush.msra.mxu0 %v6326
    %v6328 = vand.u32 %v5525, 4294901760
    %v6329 = vsub.f32 %v5525, %v6328
    %v6330 = vand.u32 %v6329, 4294901760
    %v6331 = vsub.f32 %v6329, %v6330
    %v6332 = vand.u32 %v6331, 4294901760
    %6333 = vmatpush.msra.mxu0 %v6332
    %v6334 = vand.u32 %v5524, 4294901760
    %v6335 = vsub.f32 %v5524, %v6334
    %v6336 = vand.u32 %v6335, 4294901760
    %v6337 = vsub.f32 %v6335, %v6336
    %v6338 = vand.u32 %v6337, 4294901760
    %6339 = vmatpush.msra.mxu0 %v6338
    %v6340 = vand.u32 %v5523, 4294901760
    %v6341 = vsub.f32 %v5523, %v6340
    %v6342 = vand.u32 %v6341, 4294901760
    %v6343 = vsub.f32 %v6341, %v6342
    %v6344 = vand.u32 %v6343, 4294901760
    %6345 = vmatpush.msra.mxu0 %v6344
    %v6346 = vand.u32 %v5522, 4294901760
    %v6347 = vsub.f32 %v5522, %v6346
    %v6348 = vand.u32 %v6347, 4294901760
    %v6349 = vsub.f32 %v6347, %v6348
    %v6350 = vand.u32 %v6349, 4294901760
    %6351 = vmatpush.msra.mxu0 %v6350
    %v6352 = vand.u32 %v5521, 4294901760
    %v6353 = vsub.f32 %v5521, %v6352
    %v6354 = vand.u32 %v6353, 4294901760
    %v6355 = vsub.f32 %v6353, %v6354
    %v6356 = vand.u32 %v6355, 4294901760
    %6357 = vmatpush.msra.mxu0 %v6356
    %v6358 = vand.u32 %v5520, 4294901760
    %v6359 = vsub.f32 %v5520, %v6358
    %v6360 = vand.u32 %v6359, 4294901760
    %v6361 = vsub.f32 %v6359, %v6360
    %v6362 = vand.u32 %v6361, 4294901760
    %6363 = vmatpush.msra.mxu0 %v6362
    %v6364 = vand.u32 %v5519, 4294901760
    %v6365 = vsub.f32 %v5519, %v6364
    %v6366 = vand.u32 %v6365, 4294901760
    %v6367 = vsub.f32 %v6365, %v6366
    %v6368 = vand.u32 %v6367, 4294901760
    %6369 = vmatpush.msra.mxu0 %v6368
    %v6370 = vand.u32 %v5518, 4294901760
    %v6371 = vsub.f32 %v5518, %v6370
    %v6372 = vand.u32 %v6371, 4294901760
    %v6373 = vsub.f32 %v6371, %v6372
    %v6374 = vand.u32 %v6373, 4294901760
    %6375 = vmatpush.msra.mxu0 %v6374
    %v6376 = vand.u32 %v5517, 4294901760
    %v6377 = vsub.f32 %v5517, %v6376
    %v6378 = vand.u32 %v6377, 4294901760
    %v6379 = vsub.f32 %v6377, %v6378
    %v6380 = vand.u32 %v6379, 4294901760
    %6381 = vmatpush.msra.mxu0 %v6380
    %v6382 = vand.u32 %v5516, 4294901760
    %v6383 = vsub.f32 %v5516, %v6382
    %v6384 = vand.u32 %v6383, 4294901760
    %v6385 = vsub.f32 %v6383, %v6384
    %v6386 = vand.u32 %v6385, 4294901760
    %6387 = vmatpush.msra.mxu0 %v6386
    %v6388 = vand.u32 %v5515, 4294901760
    %v6389 = vsub.f32 %v5515, %v6388
    %v6390 = vand.u32 %v6389, 4294901760
    %v6391 = vsub.f32 %v6389, %v6390
    %v6392 = vand.u32 %v6391, 4294901760
    %6393 = vmatpush.msra.mxu0 %v6392
    %v6394 = vand.u32 %v5564, 4294901760
    %6395 = vmatmul.f32.gmra.mxu0 %v6394
    %v6396 = vpop.f32.mrf.mxu0
    %v6397 = vadd.f32 %v6240, %v6396
    %v6398 = vand.u32 %v5568, 4294901760
    %6399 = vmatmul.f32.gmra.mxu0 %v6398
    %v6400 = vpop.f32.mrf.mxu0
    %v6401 = vadd.f32 %v6248, %v6400
    %v6402 = vand.u32 %v5572, 4294901760
    %6403 = vmatmul.f32.gmra.mxu0 %v6402
    %v6404 = vpop.f32.mrf.mxu0
    %v6405 = vadd.f32 %v6256, %v6404
    %v6406 = vand.u32 %v5576, 4294901760
    %6407 = vmatmul.f32.gmra.mxu0 %v6406
    %v6408 = vpop.f32.mrf.mxu0
    %v6409 = vadd.f32 %v6264, %v6408
    %v6410 = vand.u32 %v5580, 4294901760
    %6411 = vmatmul.f32.gmra.mxu0 %v6410
    %v6412 = vpop.f32.mrf.mxu0
    %v6413 = vadd.f32 %v6272, %v6412
    %v6414 = vand.u32 %v5584, 4294901760
    %6415 = vmatmul.f32.gmra.mxu0 %v6414
    %v6416 = vpop.f32.mrf.mxu0
    %v6417 = vadd.f32 %v6280, %v6416
    %v6418 = vand.u32 %v5588, 4294901760
    %6419 = vmatmul.f32.gmra.mxu0 %v6418
    %v6420 = vpop.f32.mrf.mxu0
    %v6421 = vadd.f32 %v6288, %v6420
    %v6422 = vand.u32 %v5592, 4294901760
    %6423 = vmatmul.f32.gmra.mxu0 %v6422
    %v6424 = vpop.f32.mrf.mxu0
    %v6425 = vadd.f32 %v6296, %v6424
    %6426 = vdwg.mxu0
    %v6427 = vand.u32 %v5530, 4294901760
    %v6428 = vsub.f32 %v5530, %v6427
    %6429 = vmatpush.msra.mxu0 %v6428
    %v6430 = vand.u32 %v5529, 4294901760
    %v6431 = vsub.f32 %v5529, %v6430
    %6432 = vmatpush.msra.mxu0 %v6431
    %v6433 = vand.u32 %v5528, 4294901760
    %v6434 = vsub.f32 %v5528, %v6433
    %6435 = vmatpush.msra.mxu0 %v6434
    %v6436 = vand.u32 %v5527, 4294901760
    %v6437 = vsub.f32 %v5527, %v6436
    %6438 = vmatpush.msra.mxu0 %v6437
    %v6439 = vand.u32 %v5526, 4294901760
    %v6440 = vsub.f32 %v5526, %v6439
    %6441 = vmatpush.msra.mxu0 %v6440
    %v6442 = vand.u32 %v5525, 4294901760
    %v6443 = vsub.f32 %v5525, %v6442
    %6444 = vmatpush.msra.mxu0 %v6443
    %v6445 = vand.u32 %v5524, 4294901760
    %v6446 = vsub.f32 %v5524, %v6445
    %6447 = vmatpush.msra.mxu0 %v6446
    %v6448 = vand.u32 %v5523, 4294901760
    %v6449 = vsub.f32 %v5523, %v6448
    %6450 = vmatpush.msra.mxu0 %v6449
    %v6451 = vand.u32 %v5522, 4294901760
    %v6452 = vsub.f32 %v5522, %v6451
    %6453 = vmatpush.msra.mxu0 %v6452
    %v6454 = vand.u32 %v5521, 4294901760
    %v6455 = vsub.f32 %v5521, %v6454
    %6456 = vmatpush.msra.mxu0 %v6455
    %v6457 = vand.u32 %v5520, 4294901760
    %v6458 = vsub.f32 %v5520, %v6457
    %6459 = vmatpush.msra.mxu0 %v6458
    %v6460 = vand.u32 %v5519, 4294901760
    %v6461 = vsub.f32 %v5519, %v6460
    %6462 = vmatpush.msra.mxu0 %v6461
    %v6463 = vand.u32 %v5518, 4294901760
    %v6464 = vsub.f32 %v5518, %v6463
    %6465 = vmatpush.msra.mxu0 %v6464
    %v6466 = vand.u32 %v5517, 4294901760
    %v6467 = vsub.f32 %v5517, %v6466
    %6468 = vmatpush.msra.mxu0 %v6467
    %v6469 = vand.u32 %v5516, 4294901760
    %v6470 = vsub.f32 %v5516, %v6469
    %6471 = vmatpush.msra.mxu0 %v6470
    %v6472 = vand.u32 %v5515, 4294901760
    %v6473 = vsub.f32 %v5515, %v6472
    %6474 = vmatpush.msra.mxu0 %v6473
    %v6475 = vand.u32 %v5564, 4294901760
    %v6476 = vsub.f32 %v5564, %v6475
    %6477 = vmatmul.f32.gmra.mxu0 %v6476
    %v6478 = vpop.f32.mrf.mxu0
    %v6479 = vadd.f32 %v6397, %v6478
    %v6480 = vand.u32 %v5568, 4294901760
    %v6481 = vsub.f32 %v5568, %v6480
    %6482 = vmatmul.f32.gmra.mxu0 %v6481
    %v6483 = vpop.f32.mrf.mxu0
    %v6484 = vadd.f32 %v6401, %v6483
    %v6485 = vand.u32 %v5572, 4294901760
    %v6486 = vsub.f32 %v5572, %v6485
    %6487 = vmatmul.f32.gmra.mxu0 %v6486
    %v6488 = vpop.f32.mrf.mxu0
    %v6489 = vadd.f32 %v6405, %v6488
    %v6490 = vand.u32 %v5576, 4294901760
    %v6491 = vsub.f32 %v5576, %v6490
    %6492 = vmatmul.f32.gmra.mxu0 %v6491
    %v6493 = vpop.f32.mrf.mxu0
    %v6494 = vadd.f32 %v6409, %v6493
    %v6495 = vand.u32 %v5580, 4294901760
    %v6496 = vsub.f32 %v5580, %v6495
    %6497 = vmatmul.f32.gmra.mxu0 %v6496
    %v6498 = vpop.f32.mrf.mxu0
    %v6499 = vadd.f32 %v6413, %v6498
    %v6500 = vand.u32 %v5584, 4294901760
    %v6501 = vsub.f32 %v5584, %v6500
    %6502 = vmatmul.f32.gmra.mxu0 %v6501
    %v6503 = vpop.f32.mrf.mxu0
    %v6504 = vadd.f32 %v6417, %v6503
    %v6505 = vand.u32 %v5588, 4294901760
    %v6506 = vsub.f32 %v5588, %v6505
    %6507 = vmatmul.f32.gmra.mxu0 %v6506
    %v6508 = vpop.f32.mrf.mxu0
    %v6509 = vadd.f32 %v6421, %v6508
    %v6510 = vand.u32 %v5592, 4294901760
    %v6511 = vsub.f32 %v5592, %v6510
    %6512 = vmatmul.f32.gmra.mxu0 %v6511
    %v6513 = vpop.f32.mrf.mxu0
    %v6514 = vadd.f32 %v6425, %v6513
    %6515 = vdwg.mxu0
    %v6516 = vand.u32 %v5530, 4294901760
    %6517 = vmatpush.msra.mxu0 %v6516
    %v6518 = vand.u32 %v5529, 4294901760
    %6519 = vmatpush.msra.mxu0 %v6518
    %v6520 = vand.u32 %v5528, 4294901760
    %6521 = vmatpush.msra.mxu0 %v6520
    %v6522 = vand.u32 %v5527, 4294901760
    %6523 = vmatpush.msra.mxu0 %v6522
    %v6524 = vand.u32 %v5526, 4294901760
    %6525 = vmatpush.msra.mxu0 %v6524
    %v6526 = vand.u32 %v5525, 4294901760
    %6527 = vmatpush.msra.mxu0 %v6526
    %v6528 = vand.u32 %v5524, 4294901760
    %6529 = vmatpush.msra.mxu0 %v6528
    %v6530 = vand.u32 %v5523, 4294901760
    %6531 = vmatpush.msra.mxu0 %v6530
    %v6532 = vand.u32 %v5522, 4294901760
    %6533 = vmatpush.msra.mxu0 %v6532
    %v6534 = vand.u32 %v5521, 4294901760
    %6535 = vmatpush.msra.mxu0 %v6534
    %v6536 = vand.u32 %v5520, 4294901760
    %6537 = vmatpush.msra.mxu0 %v6536
    %v6538 = vand.u32 %v5519, 4294901760
    %6539 = vmatpush.msra.mxu0 %v6538
    %v6540 = vand.u32 %v5518, 4294901760
    %6541 = vmatpush.msra.mxu0 %v6540
    %v6542 = vand.u32 %v5517, 4294901760
    %6543 = vmatpush.msra.mxu0 %v6542
    %v6544 = vand.u32 %v5516, 4294901760
    %6545 = vmatpush.msra.mxu0 %v6544
    %v6546 = vand.u32 %v5515, 4294901760
    %6547 = vmatpush.msra.mxu0 %v6546
    %v6548 = vand.u32 %v5564, 4294901760
    %v6549 = vsub.f32 %v5564, %v6548
    %v6550 = vand.u32 %v6549, 4294901760
    %6551 = vmatmul.f32.gmra.mxu0 %v6550
    %v6552 = vpop.f32.mrf.mxu0
    %v6553 = vadd.f32 %v6479, %v6552
    %v6554 = vand.u32 %v5568, 4294901760
    %v6555 = vsub.f32 %v5568, %v6554
    %v6556 = vand.u32 %v6555, 4294901760
    %6557 = vmatmul.f32.gmra.mxu0 %v6556
    %v6558 = vpop.f32.mrf.mxu0
    %v6559 = vadd.f32 %v6484, %v6558
    %v6560 = vand.u32 %v5572, 4294901760
    %v6561 = vsub.f32 %v5572, %v6560
    %v6562 = vand.u32 %v6561, 4294901760
    %6563 = vmatmul.f32.gmra.mxu0 %v6562
    %v6564 = vpop.f32.mrf.mxu0
    %v6565 = vadd.f32 %v6489, %v6564
    %v6566 = vand.u32 %v5576, 4294901760
    %v6567 = vsub.f32 %v5576, %v6566
    %v6568 = vand.u32 %v6567, 4294901760
    %6569 = vmatmul.f32.gmra.mxu0 %v6568
    %v6570 = vpop.f32.mrf.mxu0
    %v6571 = vadd.f32 %v6494, %v6570
    %v6572 = vand.u32 %v5580, 4294901760
    %v6573 = vsub.f32 %v5580, %v6572
    %v6574 = vand.u32 %v6573, 4294901760
    %6575 = vmatmul.f32.gmra.mxu0 %v6574
    %v6576 = vpop.f32.mrf.mxu0
    %v6577 = vadd.f32 %v6499, %v6576
    %v6578 = vand.u32 %v5584, 4294901760
    %v6579 = vsub.f32 %v5584, %v6578
    %v6580 = vand.u32 %v6579, 4294901760
    %6581 = vmatmul.f32.gmra.mxu0 %v6580
    %v6582 = vpop.f32.mrf.mxu0
    %v6583 = vadd.f32 %v6504, %v6582
    %v6584 = vand.u32 %v5588, 4294901760
    %v6585 = vsub.f32 %v5588, %v6584
    %v6586 = vand.u32 %v6585, 4294901760
    %6587 = vmatmul.f32.gmra.mxu0 %v6586
    %v6588 = vpop.f32.mrf.mxu0
    %v6589 = vadd.f32 %v6509, %v6588
    %v6590 = vand.u32 %v5592, 4294901760
    %v6591 = vsub.f32 %v5592, %v6590
    %v6592 = vand.u32 %v6591, 4294901760
    %6593 = vmatmul.f32.gmra.mxu0 %v6592
    %v6594 = vpop.f32.mrf.mxu0
    %v6595 = vadd.f32 %v6514, %v6594
    %6596 = vdwg.mxu0
    %v6597 = vand.u32 %v5530, 4294901760
    %v6598 = vsub.f32 %v5530, %v6597
    %v6599 = vand.u32 %v6598, 4294901760
    %6600 = vmatpush.msra.mxu0 %v6599
    %v6601 = vand.u32 %v5529, 4294901760
    %v6602 = vsub.f32 %v5529, %v6601
    %v6603 = vand.u32 %v6602, 4294901760
    %6604 = vmatpush.msra.mxu0 %v6603
    %v6605 = vand.u32 %v5528, 4294901760
    %v6606 = vsub.f32 %v5528, %v6605
    %v6607 = vand.u32 %v6606, 4294901760
    %6608 = vmatpush.msra.mxu0 %v6607
    %v6609 = vand.u32 %v5527, 4294901760
    %v6610 = vsub.f32 %v5527, %v6609
    %v6611 = vand.u32 %v6610, 4294901760
    %6612 = vmatpush.msra.mxu0 %v6611
    %v6613 = vand.u32 %v5526, 4294901760
    %v6614 = vsub.f32 %v5526, %v6613
    %v6615 = vand.u32 %v6614, 4294901760
    %6616 = vmatpush.msra.mxu0 %v6615
    %v6617 = vand.u32 %v5525, 4294901760
    %v6618 = vsub.f32 %v5525, %v6617
    %v6619 = vand.u32 %v6618, 4294901760
    %6620 = vmatpush.msra.mxu0 %v6619
    %v6621 = vand.u32 %v5524, 4294901760
    %v6622 = vsub.f32 %v5524, %v6621
    %v6623 = vand.u32 %v6622, 4294901760
    %6624 = vmatpush.msra.mxu0 %v6623
    %v6625 = vand.u32 %v5523, 4294901760
    %v6626 = vsub.f32 %v5523, %v6625
    %v6627 = vand.u32 %v6626, 4294901760
    %6628 = vmatpush.msra.mxu0 %v6627
    %v6629 = vand.u32 %v5522, 4294901760
    %v6630 = vsub.f32 %v5522, %v6629
    %v6631 = vand.u32 %v6630, 4294901760
    %6632 = vmatpush.msra.mxu0 %v6631
    %v6633 = vand.u32 %v5521, 4294901760
    %v6634 = vsub.f32 %v5521, %v6633
    %v6635 = vand.u32 %v6634, 4294901760
    %6636 = vmatpush.msra.mxu0 %v6635
    %v6637 = vand.u32 %v5520, 4294901760
    %v6638 = vsub.f32 %v5520, %v6637
    %v6639 = vand.u32 %v6638, 4294901760
    %6640 = vmatpush.msra.mxu0 %v6639
    %v6641 = vand.u32 %v5519, 4294901760
    %v6642 = vsub.f32 %v5519, %v6641
    %v6643 = vand.u32 %v6642, 4294901760
    %6644 = vmatpush.msra.mxu0 %v6643
    %v6645 = vand.u32 %v5518, 4294901760
    %v6646 = vsub.f32 %v5518, %v6645
    %v6647 = vand.u32 %v6646, 4294901760
    %6648 = vmatpush.msra.mxu0 %v6647
    %v6649 = vand.u32 %v5517, 4294901760
    %v6650 = vsub.f32 %v5517, %v6649
    %v6651 = vand.u32 %v6650, 4294901760
    %6652 = vmatpush.msra.mxu0 %v6651
    %v6653 = vand.u32 %v5516, 4294901760
    %v6654 = vsub.f32 %v5516, %v6653
    %v6655 = vand.u32 %v6654, 4294901760
    %6656 = vmatpush.msra.mxu0 %v6655
    %v6657 = vand.u32 %v5515, 4294901760
    %v6658 = vsub.f32 %v5515, %v6657
    %v6659 = vand.u32 %v6658, 4294901760
    %6660 = vmatpush.msra.mxu0 %v6659
    %v6661 = vand.u32 %v5564, 4294901760
    %6662 = vmatmul.f32.gmra.mxu0 %v6661
    %v6663 = vpop.f32.mrf.mxu0
    %v6664 = vadd.f32 %v6553, %v6663
    %v6665 = vand.u32 %v5568, 4294901760
    %6666 = vmatmul.f32.gmra.mxu0 %v6665
    %v6667 = vpop.f32.mrf.mxu0
    %v6668 = vadd.f32 %v6559, %v6667
    %v6669 = vand.u32 %v5572, 4294901760
    %6670 = vmatmul.f32.gmra.mxu0 %v6669
    %v6671 = vpop.f32.mrf.mxu0
    %v6672 = vadd.f32 %v6565, %v6671
    %v6673 = vand.u32 %v5576, 4294901760
    %6674 = vmatmul.f32.gmra.mxu0 %v6673
    %v6675 = vpop.f32.mrf.mxu0
    %v6676 = vadd.f32 %v6571, %v6675
    %v6677 = vand.u32 %v5580, 4294901760
    %6678 = vmatmul.f32.gmra.mxu0 %v6677
    %v6679 = vpop.f32.mrf.mxu0
    %v6680 = vadd.f32 %v6577, %v6679
    %v6681 = vand.u32 %v5584, 4294901760
    %6682 = vmatmul.f32.gmra.mxu0 %v6681
    %v6683 = vpop.f32.mrf.mxu0
    %v6684 = vadd.f32 %v6583, %v6683
    %v6685 = vand.u32 %v5588, 4294901760
    %6686 = vmatmul.f32.gmra.mxu0 %v6685
    %v6687 = vpop.f32.mrf.mxu0
    %v6688 = vadd.f32 %v6589, %v6687
    %v6689 = vand.u32 %v5592, 4294901760
    %6690 = vmatmul.f32.gmra.mxu0 %v6689
    %v6691 = vpop.f32.mrf.mxu0
    %v6692 = vadd.f32 %v6595, %v6691
    %6693 = vdwg.mxu0
    %v6694 = vand.u32 %v5530, 4294901760
    %6695 = vmatpush.msra.mxu0 %v6694
    %v6696 = vand.u32 %v5529, 4294901760
    %6697 = vmatpush.msra.mxu0 %v6696
    %v6698 = vand.u32 %v5528, 4294901760
    %6699 = vmatpush.msra.mxu0 %v6698
    %v6700 = vand.u32 %v5527, 4294901760
    %6701 = vmatpush.msra.mxu0 %v6700
    %v6702 = vand.u32 %v5526, 4294901760
    %6703 = vmatpush.msra.mxu0 %v6702
    %v6704 = vand.u32 %v5525, 4294901760
    %6705 = vmatpush.msra.mxu0 %v6704
    %v6706 = vand.u32 %v5524, 4294901760
    %6707 = vmatpush.msra.mxu0 %v6706
    %v6708 = vand.u32 %v5523, 4294901760
    %6709 = vmatpush.msra.mxu0 %v6708
    %v6710 = vand.u32 %v5522, 4294901760
    %6711 = vmatpush.msra.mxu0 %v6710
    %v6712 = vand.u32 %v5521, 4294901760
    %6713 = vmatpush.msra.mxu0 %v6712
    %v6714 = vand.u32 %v5520, 4294901760
    %6715 = vmatpush.msra.mxu0 %v6714
    %v6716 = vand.u32 %v5519, 4294901760
    %6717 = vmatpush.msra.mxu0 %v6716
    %v6718 = vand.u32 %v5518, 4294901760
    %6719 = vmatpush.msra.mxu0 %v6718
    %v6720 = vand.u32 %v5517, 4294901760
    %6721 = vmatpush.msra.mxu0 %v6720
    %v6722 = vand.u32 %v5516, 4294901760
    %6723 = vmatpush.msra.mxu0 %v6722
    %v6724 = vand.u32 %v5515, 4294901760
    %6725 = vmatpush.msra.mxu0 %v6724
    %v6726 = vand.u32 %v5564, 4294901760
    %6727 = vmatmul.f32.gmra.mxu0 %v6726
    %v6728 = vpop.f32.mrf.mxu0
    %v6729 = vadd.f32 %v6664, %v6728
    %v6730 = vand.u32 %v5568, 4294901760
    %6731 = vmatmul.f32.gmra.mxu0 %v6730
    %v6732 = vpop.f32.mrf.mxu0
    %v6733 = vadd.f32 %v6668, %v6732
    %v6734 = vand.u32 %v5572, 4294901760
    %6735 = vmatmul.f32.gmra.mxu0 %v6734
    %v6736 = vpop.f32.mrf.mxu0
    %v6737 = vadd.f32 %v6672, %v6736
    %v6738 = vand.u32 %v5576, 4294901760
    %6739 = vmatmul.f32.gmra.mxu0 %v6738
    %v6740 = vpop.f32.mrf.mxu0
    %v6741 = vadd.f32 %v6676, %v6740
    %v6742 = vand.u32 %v5580, 4294901760
    %6743 = vmatmul.f32.gmra.mxu0 %v6742
    %v6744 = vpop.f32.mrf.mxu0
    %v6745 = vadd.f32 %v6680, %v6744
    %v6746 = vand.u32 %v5584, 4294901760
    %6747 = vmatmul.f32.gmra.mxu0 %v6746
    %v6748 = vpop.f32.mrf.mxu0
    %v6749 = vadd.f32 %v6684, %v6748
    %v6750 = vand.u32 %v5588, 4294901760
    %6751 = vmatmul.f32.gmra.mxu0 %v6750
    %v6752 = vpop.f32.mrf.mxu0
    %v6753 = vadd.f32 %v6688, %v6752
    %v6754 = vand.u32 %v5592, 4294901760
    %6755 = vmatmul.f32.gmra.mxu0 %v6754
    %v6756 = vpop.f32.mrf.mxu0
    %v6757 = vadd.f32 %v6692, %v6756
    %6758 = vdwg.mxu0
    %v6759 = vand.u32 %v5546, 4294901760
    %6760 = vmatpush.msra.mxu0 %v6759
    %v6761 = vand.u32 %v5545, 4294901760
    %6762 = vmatpush.msra.mxu0 %v6761
    %v6763 = vand.u32 %v5544, 4294901760
    %6764 = vmatpush.msra.mxu0 %v6763
    %v6765 = vand.u32 %v5543, 4294901760
    %6766 = vmatpush.msra.mxu0 %v6765
    %v6767 = vand.u32 %v5542, 4294901760
    %6768 = vmatpush.msra.mxu0 %v6767
    %v6769 = vand.u32 %v5541, 4294901760
    %6770 = vmatpush.msra.mxu0 %v6769
    %v6771 = vand.u32 %v5540, 4294901760
    %6772 = vmatpush.msra.mxu0 %v6771
    %v6773 = vand.u32 %v5539, 4294901760
    %6774 = vmatpush.msra.mxu0 %v6773
    %v6775 = vand.u32 %v5538, 4294901760
    %6776 = vmatpush.msra.mxu0 %v6775
    %v6777 = vand.u32 %v5537, 4294901760
    %6778 = vmatpush.msra.mxu0 %v6777
    %v6779 = vand.u32 %v5536, 4294901760
    %6780 = vmatpush.msra.mxu0 %v6779
    %v6781 = vand.u32 %v5535, 4294901760
    %6782 = vmatpush.msra.mxu0 %v6781
    %v6783 = vand.u32 %v5534, 4294901760
    %6784 = vmatpush.msra.mxu0 %v6783
    %v6785 = vand.u32 %v5533, 4294901760
    %6786 = vmatpush.msra.mxu0 %v6785
    %v6787 = vand.u32 %v5532, 4294901760
    %6788 = vmatpush.msra.mxu0 %v6787
    %v6789 = vand.u32 %v5531, 4294901760
    %6790 = vmatpush.msra.mxu0 %v6789
    %v6791 = vand.u32 %v5565, 4294901760
    %v6792 = vsub.f32 %v5565, %v6791
    %v6793 = vand.u32 %v6792, 4294901760
    %v6794 = vsub.f32 %v6792, %v6793
    %v6795 = vand.u32 %v6794, 4294901760
    %6796 = vmatmul.f32.gmra.mxu0 %v6795
    %v6797 = vpop.f32.mrf.mxu0
    %v6798 = vadd.f32 %v6729, %v6797
    %v6799 = vand.u32 %v5569, 4294901760
    %v6800 = vsub.f32 %v5569, %v6799
    %v6801 = vand.u32 %v6800, 4294901760
    %v6802 = vsub.f32 %v6800, %v6801
    %v6803 = vand.u32 %v6802, 4294901760
    %6804 = vmatmul.f32.gmra.mxu0 %v6803
    %v6805 = vpop.f32.mrf.mxu0
    %v6806 = vadd.f32 %v6733, %v6805
    %v6807 = vand.u32 %v5573, 4294901760
    %v6808 = vsub.f32 %v5573, %v6807
    %v6809 = vand.u32 %v6808, 4294901760
    %v6810 = vsub.f32 %v6808, %v6809
    %v6811 = vand.u32 %v6810, 4294901760
    %6812 = vmatmul.f32.gmra.mxu0 %v6811
    %v6813 = vpop.f32.mrf.mxu0
    %v6814 = vadd.f32 %v6737, %v6813
    %v6815 = vand.u32 %v5577, 4294901760
    %v6816 = vsub.f32 %v5577, %v6815
    %v6817 = vand.u32 %v6816, 4294901760
    %v6818 = vsub.f32 %v6816, %v6817
    %v6819 = vand.u32 %v6818, 4294901760
    %6820 = vmatmul.f32.gmra.mxu0 %v6819
    %v6821 = vpop.f32.mrf.mxu0
    %v6822 = vadd.f32 %v6741, %v6821
    %v6823 = vand.u32 %v5581, 4294901760
    %v6824 = vsub.f32 %v5581, %v6823
    %v6825 = vand.u32 %v6824, 4294901760
    %v6826 = vsub.f32 %v6824, %v6825
    %v6827 = vand.u32 %v6826, 4294901760
    %6828 = vmatmul.f32.gmra.mxu0 %v6827
    %v6829 = vpop.f32.mrf.mxu0
    %v6830 = vadd.f32 %v6745, %v6829
    %v6831 = vand.u32 %v5585, 4294901760
    %v6832 = vsub.f32 %v5585, %v6831
    %v6833 = vand.u32 %v6832, 4294901760
    %v6834 = vsub.f32 %v6832, %v6833
    %v6835 = vand.u32 %v6834, 4294901760
    %6836 = vmatmul.f32.gmra.mxu0 %v6835
    %v6837 = vpop.f32.mrf.mxu0
    %v6838 = vadd.f32 %v6749, %v6837
    %v6839 = vand.u32 %v5589, 4294901760
    %v6840 = vsub.f32 %v5589, %v6839
    %v6841 = vand.u32 %v6840, 4294901760
    %v6842 = vsub.f32 %v6840, %v6841
    %v6843 = vand.u32 %v6842, 4294901760
    %6844 = vmatmul.f32.gmra.mxu0 %v6843
    %v6845 = vpop.f32.mrf.mxu0
    %v6846 = vadd.f32 %v6753, %v6845
    %v6847 = vand.u32 %v5593, 4294901760
    %v6848 = vsub.f32 %v5593, %v6847
    %v6849 = vand.u32 %v6848, 4294901760
    %v6850 = vsub.f32 %v6848, %v6849
    %v6851 = vand.u32 %v6850, 4294901760
    %6852 = vmatmul.f32.gmra.mxu0 %v6851
    %v6853 = vpop.f32.mrf.mxu0
    %v6854 = vadd.f32 %v6757, %v6853
    %6855 = vdwg.mxu0
    %v6856 = vand.u32 %v5546, 4294901760
    %v6857 = vsub.f32 %v5546, %v6856
    %v6858 = vand.u32 %v6857, 4294901760
    %v6859 = vsub.f32 %v6857, %v6858
    %v6860 = vand.u32 %v6859, 4294901760
    %6861 = vmatpush.msra.mxu0 %v6860
    %v6862 = vand.u32 %v5545, 4294901760
    %v6863 = vsub.f32 %v5545, %v6862
    %v6864 = vand.u32 %v6863, 4294901760
    %v6865 = vsub.f32 %v6863, %v6864
    %v6866 = vand.u32 %v6865, 4294901760
    %6867 = vmatpush.msra.mxu0 %v6866
    %v6868 = vand.u32 %v5544, 4294901760
    %v6869 = vsub.f32 %v5544, %v6868
    %v6870 = vand.u32 %v6869, 4294901760
    %v6871 = vsub.f32 %v6869, %v6870
    %v6872 = vand.u32 %v6871, 4294901760
    %6873 = vmatpush.msra.mxu0 %v6872
    %v6874 = vand.u32 %v5543, 4294901760
    %v6875 = vsub.f32 %v5543, %v6874
    %v6876 = vand.u32 %v6875, 4294901760
    %v6877 = vsub.f32 %v6875, %v6876
    %v6878 = vand.u32 %v6877, 4294901760
    %6879 = vmatpush.msra.mxu0 %v6878
    %v6880 = vand.u32 %v5542, 4294901760
    %v6881 = vsub.f32 %v5542, %v6880
    %v6882 = vand.u32 %v6881, 4294901760
    %v6883 = vsub.f32 %v6881, %v6882
    %v6884 = vand.u32 %v6883, 4294901760
    %6885 = vmatpush.msra.mxu0 %v6884
    %v6886 = vand.u32 %v5541, 4294901760
    %v6887 = vsub.f32 %v5541, %v6886
    %v6888 = vand.u32 %v6887, 4294901760
    %v6889 = vsub.f32 %v6887, %v6888
    %v6890 = vand.u32 %v6889, 4294901760
    %6891 = vmatpush.msra.mxu0 %v6890
    %v6892 = vand.u32 %v5540, 4294901760
    %v6893 = vsub.f32 %v5540, %v6892
    %v6894 = vand.u32 %v6893, 4294901760
    %v6895 = vsub.f32 %v6893, %v6894
    %v6896 = vand.u32 %v6895, 4294901760
    %6897 = vmatpush.msra.mxu0 %v6896
    %v6898 = vand.u32 %v5539, 4294901760
    %v6899 = vsub.f32 %v5539, %v6898
    %v6900 = vand.u32 %v6899, 4294901760
    %v6901 = vsub.f32 %v6899, %v6900
    %v6902 = vand.u32 %v6901, 4294901760
    %6903 = vmatpush.msra.mxu0 %v6902
    %v6904 = vand.u32 %v5538, 4294901760
    %v6905 = vsub.f32 %v5538, %v6904
    %v6906 = vand.u32 %v6905, 4294901760
    %v6907 = vsub.f32 %v6905, %v6906
    %v6908 = vand.u32 %v6907, 4294901760
    %6909 = vmatpush.msra.mxu0 %v6908
    %v6910 = vand.u32 %v5537, 4294901760
    %v6911 = vsub.f32 %v5537, %v6910
    %v6912 = vand.u32 %v6911, 4294901760
    %v6913 = vsub.f32 %v6911, %v6912
    %v6914 = vand.u32 %v6913, 4294901760
    %6915 = vmatpush.msra.mxu0 %v6914
    %v6916 = vand.u32 %v5536, 4294901760
    %v6917 = vsub.f32 %v5536, %v6916
    %v6918 = vand.u32 %v6917, 4294901760
    %v6919 = vsub.f32 %v6917, %v6918
    %v6920 = vand.u32 %v6919, 4294901760
    %6921 = vmatpush.msra.mxu0 %v6920
    %v6922 = vand.u32 %v5535, 4294901760
    %v6923 = vsub.f32 %v5535, %v6922
    %v6924 = vand.u32 %v6923, 4294901760
    %v6925 = vsub.f32 %v6923, %v6924
    %v6926 = vand.u32 %v6925, 4294901760
    %6927 = vmatpush.msra.mxu0 %v6926
    %v6928 = vand.u32 %v5534, 4294901760
    %v6929 = vsub.f32 %v5534, %v6928
    %v6930 = vand.u32 %v6929, 4294901760
    %v6931 = vsub.f32 %v6929, %v6930
    %v6932 = vand.u32 %v6931, 4294901760
    %6933 = vmatpush.msra.mxu0 %v6932
    %v6934 = vand.u32 %v5533, 4294901760
    %v6935 = vsub.f32 %v5533, %v6934
    %v6936 = vand.u32 %v6935, 4294901760
    %v6937 = vsub.f32 %v6935, %v6936
    %v6938 = vand.u32 %v6937, 4294901760
    %6939 = vmatpush.msra.mxu0 %v6938
    %v6940 = vand.u32 %v5532, 4294901760
    %v6941 = vsub.f32 %v5532, %v6940
    %v6942 = vand.u32 %v6941, 4294901760
    %v6943 = vsub.f32 %v6941, %v6942
    %v6944 = vand.u32 %v6943, 4294901760
    %6945 = vmatpush.msra.mxu0 %v6944
    %v6946 = vand.u32 %v5531, 4294901760
    %v6947 = vsub.f32 %v5531, %v6946
    %v6948 = vand.u32 %v6947, 4294901760
    %v6949 = vsub.f32 %v6947, %v6948
    %v6950 = vand.u32 %v6949, 4294901760
    %6951 = vmatpush.msra.mxu0 %v6950
    %v6952 = vand.u32 %v5565, 4294901760
    %6953 = vmatmul.f32.gmra.mxu0 %v6952
    %v6954 = vpop.f32.mrf.mxu0
    %v6955 = vadd.f32 %v6798, %v6954
    %v6956 = vand.u32 %v5569, 4294901760
    %6957 = vmatmul.f32.gmra.mxu0 %v6956
    %v6958 = vpop.f32.mrf.mxu0
    %v6959 = vadd.f32 %v6806, %v6958
    %v6960 = vand.u32 %v5573, 4294901760
    %6961 = vmatmul.f32.gmra.mxu0 %v6960
    %v6962 = vpop.f32.mrf.mxu0
    %v6963 = vadd.f32 %v6814, %v6962
    %v6964 = vand.u32 %v5577, 4294901760
    %6965 = vmatmul.f32.gmra.mxu0 %v6964
    %v6966 = vpop.f32.mrf.mxu0
    %v6967 = vadd.f32 %v6822, %v6966
    %v6968 = vand.u32 %v5581, 4294901760
    %6969 = vmatmul.f32.gmra.mxu0 %v6968
    %v6970 = vpop.f32.mrf.mxu0
    %v6971 = vadd.f32 %v6830, %v6970
    %v6972 = vand.u32 %v5585, 4294901760
    %6973 = vmatmul.f32.gmra.mxu0 %v6972
    %v6974 = vpop.f32.mrf.mxu0
    %v6975 = vadd.f32 %v6838, %v6974
    %v6976 = vand.u32 %v5589, 4294901760
    %6977 = vmatmul.f32.gmra.mxu0 %v6976
    %v6978 = vpop.f32.mrf.mxu0
    %v6979 = vadd.f32 %v6846, %v6978
    %v6980 = vand.u32 %v5593, 4294901760
    %6981 = vmatmul.f32.gmra.mxu0 %v6980
    %v6982 = vpop.f32.mrf.mxu0
    %v6983 = vadd.f32 %v6854, %v6982
    %6984 = vdwg.mxu0
    %v6985 = vand.u32 %v5546, 4294901760
    %v6986 = vsub.f32 %v5546, %v6985
    %6987 = vmatpush.msra.mxu0 %v6986
    %v6988 = vand.u32 %v5545, 4294901760
    %v6989 = vsub.f32 %v5545, %v6988
    %6990 = vmatpush.msra.mxu0 %v6989
    %v6991 = vand.u32 %v5544, 4294901760
    %v6992 = vsub.f32 %v5544, %v6991
    %6993 = vmatpush.msra.mxu0 %v6992
    %v6994 = vand.u32 %v5543, 4294901760
    %v6995 = vsub.f32 %v5543, %v6994
    %6996 = vmatpush.msra.mxu0 %v6995
    %v6997 = vand.u32 %v5542, 4294901760
    %v6998 = vsub.f32 %v5542, %v6997
    %6999 = vmatpush.msra.mxu0 %v6998
    %v7000 = vand.u32 %v5541, 4294901760
    %v7001 = vsub.f32 %v5541, %v7000
    %7002 = vmatpush.msra.mxu0 %v7001
    %v7003 = vand.u32 %v5540, 4294901760
    %v7004 = vsub.f32 %v5540, %v7003
    %7005 = vmatpush.msra.mxu0 %v7004
    %v7006 = vand.u32 %v5539, 4294901760
    %v7007 = vsub.f32 %v5539, %v7006
    %7008 = vmatpush.msra.mxu0 %v7007
    %v7009 = vand.u32 %v5538, 4294901760
    %v7010 = vsub.f32 %v5538, %v7009
    %7011 = vmatpush.msra.mxu0 %v7010
    %v7012 = vand.u32 %v5537, 4294901760
    %v7013 = vsub.f32 %v5537, %v7012
    %7014 = vmatpush.msra.mxu0 %v7013
    %v7015 = vand.u32 %v5536, 4294901760
    %v7016 = vsub.f32 %v5536, %v7015
    %7017 = vmatpush.msra.mxu0 %v7016
    %v7018 = vand.u32 %v5535, 4294901760
    %v7019 = vsub.f32 %v5535, %v7018
    %7020 = vmatpush.msra.mxu0 %v7019
    %v7021 = vand.u32 %v5534, 4294901760
    %v7022 = vsub.f32 %v5534, %v7021
    %7023 = vmatpush.msra.mxu0 %v7022
    %v7024 = vand.u32 %v5533, 4294901760
    %v7025 = vsub.f32 %v5533, %v7024
    %7026 = vmatpush.msra.mxu0 %v7025
    %v7027 = vand.u32 %v5532, 4294901760
    %v7028 = vsub.f32 %v5532, %v7027
    %7029 = vmatpush.msra.mxu0 %v7028
    %v7030 = vand.u32 %v5531, 4294901760
    %v7031 = vsub.f32 %v5531, %v7030
    %7032 = vmatpush.msra.mxu0 %v7031
    %v7033 = vand.u32 %v5565, 4294901760
    %v7034 = vsub.f32 %v5565, %v7033
    %7035 = vmatmul.f32.gmra.mxu0 %v7034
    %v7036 = vpop.f32.mrf.mxu0
    %v7037 = vadd.f32 %v6955, %v7036
    %v7038 = vand.u32 %v5569, 4294901760
    %v7039 = vsub.f32 %v5569, %v7038
    %7040 = vmatmul.f32.gmra.mxu0 %v7039
    %v7041 = vpop.f32.mrf.mxu0
    %v7042 = vadd.f32 %v6959, %v7041
    %v7043 = vand.u32 %v5573, 4294901760
    %v7044 = vsub.f32 %v5573, %v7043
    %7045 = vmatmul.f32.gmra.mxu0 %v7044
    %v7046 = vpop.f32.mrf.mxu0
    %v7047 = vadd.f32 %v6963, %v7046
    %v7048 = vand.u32 %v5577, 4294901760
    %v7049 = vsub.f32 %v5577, %v7048
    %7050 = vmatmul.f32.gmra.mxu0 %v7049
    %v7051 = vpop.f32.mrf.mxu0
    %v7052 = vadd.f32 %v6967, %v7051
    %v7053 = vand.u32 %v5581, 4294901760
    %v7054 = vsub.f32 %v5581, %v7053
    %7055 = vmatmul.f32.gmra.mxu0 %v7054
    %v7056 = vpop.f32.mrf.mxu0
    %v7057 = vadd.f32 %v6971, %v7056
    %v7058 = vand.u32 %v5585, 4294901760
    %v7059 = vsub.f32 %v5585, %v7058
    %7060 = vmatmul.f32.gmra.mxu0 %v7059
    %v7061 = vpop.f32.mrf.mxu0
    %v7062 = vadd.f32 %v6975, %v7061
    %v7063 = vand.u32 %v5589, 4294901760
    %v7064 = vsub.f32 %v5589, %v7063
    %7065 = vmatmul.f32.gmra.mxu0 %v7064
    %v7066 = vpop.f32.mrf.mxu0
    %v7067 = vadd.f32 %v6979, %v7066
    %v7068 = vand.u32 %v5593, 4294901760
    %v7069 = vsub.f32 %v5593, %v7068
    %7070 = vmatmul.f32.gmra.mxu0 %v7069
    %v7071 = vpop.f32.mrf.mxu0
    %v7072 = vadd.f32 %v6983, %v7071
    %7073 = vdwg.mxu0
    %v7074 = vand.u32 %v5546, 4294901760
    %7075 = vmatpush.msra.mxu0 %v7074
    %v7076 = vand.u32 %v5545, 4294901760
    %7077 = vmatpush.msra.mxu0 %v7076
    %v7078 = vand.u32 %v5544, 4294901760
    %7079 = vmatpush.msra.mxu0 %v7078
    %v7080 = vand.u32 %v5543, 4294901760
    %7081 = vmatpush.msra.mxu0 %v7080
    %v7082 = vand.u32 %v5542, 4294901760
    %7083 = vmatpush.msra.mxu0 %v7082
    %v7084 = vand.u32 %v5541, 4294901760
    %7085 = vmatpush.msra.mxu0 %v7084
    %v7086 = vand.u32 %v5540, 4294901760
    %7087 = vmatpush.msra.mxu0 %v7086
    %v7088 = vand.u32 %v5539, 4294901760
    %7089 = vmatpush.msra.mxu0 %v7088
    %v7090 = vand.u32 %v5538, 4294901760
    %7091 = vmatpush.msra.mxu0 %v7090
    %v7092 = vand.u32 %v5537, 4294901760
    %7093 = vmatpush.msra.mxu0 %v7092
    %v7094 = vand.u32 %v5536, 4294901760
    %7095 = vmatpush.msra.mxu0 %v7094
    %v7096 = vand.u32 %v5535, 4294901760
    %7097 = vmatpush.msra.mxu0 %v7096
    %v7098 = vand.u32 %v5534, 4294901760
    %7099 = vmatpush.msra.mxu0 %v7098
    %v7100 = vand.u32 %v5533, 4294901760
    %7101 = vmatpush.msra.mxu0 %v7100
    %v7102 = vand.u32 %v5532, 4294901760
    %7103 = vmatpush.msra.mxu0 %v7102
    %v7104 = vand.u32 %v5531, 4294901760
    %7105 = vmatpush.msra.mxu0 %v7104
    %v7106 = vand.u32 %v5565, 4294901760
    %v7107 = vsub.f32 %v5565, %v7106
    %v7108 = vand.u32 %v7107, 4294901760
    %7109 = vmatmul.f32.gmra.mxu0 %v7108
    %v7110 = vpop.f32.mrf.mxu0
    %v7111 = vadd.f32 %v7037, %v7110
    %v7112 = vand.u32 %v5569, 4294901760
    %v7113 = vsub.f32 %v5569, %v7112
    %v7114 = vand.u32 %v7113, 4294901760
    %7115 = vmatmul.f32.gmra.mxu0 %v7114
    %v7116 = vpop.f32.mrf.mxu0
    %v7117 = vadd.f32 %v7042, %v7116
    %v7118 = vand.u32 %v5573, 4294901760
    %v7119 = vsub.f32 %v5573, %v7118
    %v7120 = vand.u32 %v7119, 4294901760
    %7121 = vmatmul.f32.gmra.mxu0 %v7120
    %v7122 = vpop.f32.mrf.mxu0
    %v7123 = vadd.f32 %v7047, %v7122
    %v7124 = vand.u32 %v5577, 4294901760
    %v7125 = vsub.f32 %v5577, %v7124
    %v7126 = vand.u32 %v7125, 4294901760
    %7127 = vmatmul.f32.gmra.mxu0 %v7126
    %v7128 = vpop.f32.mrf.mxu0
    %v7129 = vadd.f32 %v7052, %v7128
    %v7130 = vand.u32 %v5581, 4294901760
    %v7131 = vsub.f32 %v5581, %v7130
    %v7132 = vand.u32 %v7131, 4294901760
    %7133 = vmatmul.f32.gmra.mxu0 %v7132
    %v7134 = vpop.f32.mrf.mxu0
    %v7135 = vadd.f32 %v7057, %v7134
    %v7136 = vand.u32 %v5585, 4294901760
    %v7137 = vsub.f32 %v5585, %v7136
    %v7138 = vand.u32 %v7137, 4294901760
    %7139 = vmatmul.f32.gmra.mxu0 %v7138
    %v7140 = vpop.f32.mrf.mxu0
    %v7141 = vadd.f32 %v7062, %v7140
    %v7142 = vand.u32 %v5589, 4294901760
    %v7143 = vsub.f32 %v5589, %v7142
    %v7144 = vand.u32 %v7143, 4294901760
    %7145 = vmatmul.f32.gmra.mxu0 %v7144
    %v7146 = vpop.f32.mrf.mxu0
    %v7147 = vadd.f32 %v7067, %v7146
    %v7148 = vand.u32 %v5593, 4294901760
    %v7149 = vsub.f32 %v5593, %v7148
    %v7150 = vand.u32 %v7149, 4294901760
    %7151 = vmatmul.f32.gmra.mxu0 %v7150
    %v7152 = vpop.f32.mrf.mxu0
    %v7153 = vadd.f32 %v7072, %v7152
    %7154 = vdwg.mxu0
    %v7155 = vand.u32 %v5546, 4294901760
    %v7156 = vsub.f32 %v5546, %v7155
    %v7157 = vand.u32 %v7156, 4294901760
    %7158 = vmatpush.msra.mxu0 %v7157
    %v7159 = vand.u32 %v5545, 4294901760
    %v7160 = vsub.f32 %v5545, %v7159
    %v7161 = vand.u32 %v7160, 4294901760
    %7162 = vmatpush.msra.mxu0 %v7161
    %v7163 = vand.u32 %v5544, 4294901760
    %v7164 = vsub.f32 %v5544, %v7163
    %v7165 = vand.u32 %v7164, 4294901760
    %7166 = vmatpush.msra.mxu0 %v7165
    %v7167 = vand.u32 %v5543, 4294901760
    %v7168 = vsub.f32 %v5543, %v7167
    %v7169 = vand.u32 %v7168, 4294901760
    %7170 = vmatpush.msra.mxu0 %v7169
    %v7171 = vand.u32 %v5542, 4294901760
    %v7172 = vsub.f32 %v5542, %v7171
    %v7173 = vand.u32 %v7172, 4294901760
    %7174 = vmatpush.msra.mxu0 %v7173
    %v7175 = vand.u32 %v5541, 4294901760
    %v7176 = vsub.f32 %v5541, %v7175
    %v7177 = vand.u32 %v7176, 4294901760
    %7178 = vmatpush.msra.mxu0 %v7177
    %v7179 = vand.u32 %v5540, 4294901760
    %v7180 = vsub.f32 %v5540, %v7179
    %v7181 = vand.u32 %v7180, 4294901760
    %7182 = vmatpush.msra.mxu0 %v7181
    %v7183 = vand.u32 %v5539, 4294901760
    %v7184 = vsub.f32 %v5539, %v7183
    %v7185 = vand.u32 %v7184, 4294901760
    %7186 = vmatpush.msra.mxu0 %v7185
    %v7187 = vand.u32 %v5538, 4294901760
    %v7188 = vsub.f32 %v5538, %v7187
    %v7189 = vand.u32 %v7188, 4294901760
    %7190 = vmatpush.msra.mxu0 %v7189
    %v7191 = vand.u32 %v5537, 4294901760
    %v7192 = vsub.f32 %v5537, %v7191
    %v7193 = vand.u32 %v7192, 4294901760
    %7194 = vmatpush.msra.mxu0 %v7193
    %v7195 = vand.u32 %v5536, 4294901760
    %v7196 = vsub.f32 %v5536, %v7195
    %v7197 = vand.u32 %v7196, 4294901760
    %7198 = vmatpush.msra.mxu0 %v7197
    %v7199 = vand.u32 %v5535, 4294901760
    %v7200 = vsub.f32 %v5535, %v7199
    %v7201 = vand.u32 %v7200, 4294901760
    %7202 = vmatpush.msra.mxu0 %v7201
    %v7203 = vand.u32 %v5534, 4294901760
    %v7204 = vsub.f32 %v5534, %v7203
    %v7205 = vand.u32 %v7204, 4294901760
    %7206 = vmatpush.msra.mxu0 %v7205
    %v7207 = vand.u32 %v5533, 4294901760
    %v7208 = vsub.f32 %v5533, %v7207
    %v7209 = vand.u32 %v7208, 4294901760
    %7210 = vmatpush.msra.mxu0 %v7209
    %v7211 = vand.u32 %v5532, 4294901760
    %v7212 = vsub.f32 %v5532, %v7211
    %v7213 = vand.u32 %v7212, 4294901760
    %7214 = vmatpush.msra.mxu0 %v7213
    %v7215 = vand.u32 %v5531, 4294901760
    %v7216 = vsub.f32 %v5531, %v7215
    %v7217 = vand.u32 %v7216, 4294901760
    %7218 = vmatpush.msra.mxu0 %v7217
    %v7219 = vand.u32 %v5565, 4294901760
    %7220 = vmatmul.f32.gmra.mxu0 %v7219
    %v7221 = vpop.f32.mrf.mxu0
    %v7222 = vadd.f32 %v7111, %v7221
    %v7223 = vand.u32 %v5569, 4294901760
    %7224 = vmatmul.f32.gmra.mxu0 %v7223
    %v7225 = vpop.f32.mrf.mxu0
    %v7226 = vadd.f32 %v7117, %v7225
    %v7227 = vand.u32 %v5573, 4294901760
    %7228 = vmatmul.f32.gmra.mxu0 %v7227
    %v7229 = vpop.f32.mrf.mxu0
    %v7230 = vadd.f32 %v7123, %v7229
    %v7231 = vand.u32 %v5577, 4294901760
    %7232 = vmatmul.f32.gmra.mxu0 %v7231
    %v7233 = vpop.f32.mrf.mxu0
    %v7234 = vadd.f32 %v7129, %v7233
    %v7235 = vand.u32 %v5581, 4294901760
    %7236 = vmatmul.f32.gmra.mxu0 %v7235
    %v7237 = vpop.f32.mrf.mxu0
    %v7238 = vadd.f32 %v7135, %v7237
    %v7239 = vand.u32 %v5585, 4294901760
    %7240 = vmatmul.f32.gmra.mxu0 %v7239
    %v7241 = vpop.f32.mrf.mxu0
    %v7242 = vadd.f32 %v7141, %v7241
    %v7243 = vand.u32 %v5589, 4294901760
    %7244 = vmatmul.f32.gmra.mxu0 %v7243
    %v7245 = vpop.f32.mrf.mxu0
    %v7246 = vadd.f32 %v7147, %v7245
    %v7247 = vand.u32 %v5593, 4294901760
    %7248 = vmatmul.f32.gmra.mxu0 %v7247
    %v7249 = vpop.f32.mrf.mxu0
    %v7250 = vadd.f32 %v7153, %v7249
    %7251 = vdwg.mxu0
    %v7252 = vand.u32 %v5546, 4294901760
    %7253 = vmatpush.msra.mxu0 %v7252
    %v7254 = vand.u32 %v5545, 4294901760
    %7255 = vmatpush.msra.mxu0 %v7254
    %v7256 = vand.u32 %v5544, 4294901760
    %7257 = vmatpush.msra.mxu0 %v7256
    %v7258 = vand.u32 %v5543, 4294901760
    %7259 = vmatpush.msra.mxu0 %v7258
    %v7260 = vand.u32 %v5542, 4294901760
    %7261 = vmatpush.msra.mxu0 %v7260
    %v7262 = vand.u32 %v5541, 4294901760
    %7263 = vmatpush.msra.mxu0 %v7262
    %v7264 = vand.u32 %v5540, 4294901760
    %7265 = vmatpush.msra.mxu0 %v7264
    %v7266 = vand.u32 %v5539, 4294901760
    %7267 = vmatpush.msra.mxu0 %v7266
    %v7268 = vand.u32 %v5538, 4294901760
    %7269 = vmatpush.msra.mxu0 %v7268
    %v7270 = vand.u32 %v5537, 4294901760
    %7271 = vmatpush.msra.mxu0 %v7270
    %v7272 = vand.u32 %v5536, 4294901760
    %7273 = vmatpush.msra.mxu0 %v7272
    %v7274 = vand.u32 %v5535, 4294901760
    %7275 = vmatpush.msra.mxu0 %v7274
    %v7276 = vand.u32 %v5534, 4294901760
    %7277 = vmatpush.msra.mxu0 %v7276
    %v7278 = vand.u32 %v5533, 4294901760
    %7279 = vmatpush.msra.mxu0 %v7278
    %v7280 = vand.u32 %v5532, 4294901760
    %7281 = vmatpush.msra.mxu0 %v7280
    %v7282 = vand.u32 %v5531, 4294901760
    %7283 = vmatpush.msra.mxu0 %v7282
    %v7284 = vand.u32 %v5565, 4294901760
    %7285 = vmatmul.f32.gmra.mxu0 %v7284
    %v7286 = vpop.f32.mrf.mxu0
    %v7287 = vadd.f32 %v7222, %v7286
    %v7288 = vand.u32 %v5569, 4294901760
    %7289 = vmatmul.f32.gmra.mxu0 %v7288
    %v7290 = vpop.f32.mrf.mxu0
    %v7291 = vadd.f32 %v7226, %v7290
    %v7292 = vand.u32 %v5573, 4294901760
    %7293 = vmatmul.f32.gmra.mxu0 %v7292
    %v7294 = vpop.f32.mrf.mxu0
    %v7295 = vadd.f32 %v7230, %v7294
    %v7296 = vand.u32 %v5577, 4294901760
    %7297 = vmatmul.f32.gmra.mxu0 %v7296
    %v7298 = vpop.f32.mrf.mxu0
    %v7299 = vadd.f32 %v7234, %v7298
    %v7300 = vand.u32 %v5581, 4294901760
    %7301 = vmatmul.f32.gmra.mxu0 %v7300
    %v7302 = vpop.f32.mrf.mxu0
    %v7303 = vadd.f32 %v7238, %v7302
    %v7304 = vand.u32 %v5585, 4294901760
    %7305 = vmatmul.f32.gmra.mxu0 %v7304
    %v7306 = vpop.f32.mrf.mxu0
    %v7307 = vadd.f32 %v7242, %v7306
    %v7308 = vand.u32 %v5589, 4294901760
    %7309 = vmatmul.f32.gmra.mxu0 %v7308
    %v7310 = vpop.f32.mrf.mxu0
    %v7311 = vadd.f32 %v7246, %v7310
    %v7312 = vand.u32 %v5593, 4294901760
    %7313 = vmatmul.f32.gmra.mxu0 %v7312
    %v7314 = vpop.f32.mrf.mxu0
    %v7315 = vadd.f32 %v7250, %v7314
    %7316 = vdwg.mxu0
    %v7317 = vand.u32 %v5562, 4294901760
    %7318 = vmatpush.msra.mxu0 %v7317
    %v7319 = vand.u32 %v5561, 4294901760
    %7320 = vmatpush.msra.mxu0 %v7319
    %v7321 = vand.u32 %v5560, 4294901760
    %7322 = vmatpush.msra.mxu0 %v7321
    %v7323 = vand.u32 %v5559, 4294901760
    %7324 = vmatpush.msra.mxu0 %v7323
    %v7325 = vand.u32 %v5558, 4294901760
    %7326 = vmatpush.msra.mxu0 %v7325
    %v7327 = vand.u32 %v5557, 4294901760
    %7328 = vmatpush.msra.mxu0 %v7327
    %v7329 = vand.u32 %v5556, 4294901760
    %7330 = vmatpush.msra.mxu0 %v7329
    %v7331 = vand.u32 %v5555, 4294901760
    %7332 = vmatpush.msra.mxu0 %v7331
    %v7333 = vand.u32 %v5554, 4294901760
    %7334 = vmatpush.msra.mxu0 %v7333
    %v7335 = vand.u32 %v5553, 4294901760
    %7336 = vmatpush.msra.mxu0 %v7335
    %v7337 = vand.u32 %v5552, 4294901760
    %7338 = vmatpush.msra.mxu0 %v7337
    %v7339 = vand.u32 %v5551, 4294901760
    %7340 = vmatpush.msra.mxu0 %v7339
    %v7341 = vand.u32 %v5550, 4294901760
    %7342 = vmatpush.msra.mxu0 %v7341
    %v7343 = vand.u32 %v5549, 4294901760
    %7344 = vmatpush.msra.mxu0 %v7343
    %v7345 = vand.u32 %v5548, 4294901760
    %7346 = vmatpush.msra.mxu0 %v7345
    %v7347 = vand.u32 %v5547, 4294901760
    %7348 = vmatpush.msra.mxu0 %v7347
    %v7349 = vand.u32 %v5566, 4294901760
    %v7350 = vsub.f32 %v5566, %v7349
    %v7351 = vand.u32 %v7350, 4294901760
    %v7352 = vsub.f32 %v7350, %v7351
    %v7353 = vand.u32 %v7352, 4294901760
    %7354 = vmatmul.f32.gmra.mxu0 %v7353
    %v7355 = vpop.f32.mrf.mxu0
    %v7356 = vadd.f32 %v7287, %v7355
    %v7357 = vand.u32 %v5570, 4294901760
    %v7358 = vsub.f32 %v5570, %v7357
    %v7359 = vand.u32 %v7358, 4294901760
    %v7360 = vsub.f32 %v7358, %v7359
    %v7361 = vand.u32 %v7360, 4294901760
    %7362 = vmatmul.f32.gmra.mxu0 %v7361
    %v7363 = vpop.f32.mrf.mxu0
    %v7364 = vadd.f32 %v7291, %v7363
    %v7365 = vand.u32 %v5574, 4294901760
    %v7366 = vsub.f32 %v5574, %v7365
    %v7367 = vand.u32 %v7366, 4294901760
    %v7368 = vsub.f32 %v7366, %v7367
    %v7369 = vand.u32 %v7368, 4294901760
    %7370 = vmatmul.f32.gmra.mxu0 %v7369
    %v7371 = vpop.f32.mrf.mxu0
    %v7372 = vadd.f32 %v7295, %v7371
    %v7373 = vand.u32 %v5578, 4294901760
    %v7374 = vsub.f32 %v5578, %v7373
    %v7375 = vand.u32 %v7374, 4294901760
    %v7376 = vsub.f32 %v7374, %v7375
    %v7377 = vand.u32 %v7376, 4294901760
    %7378 = vmatmul.f32.gmra.mxu0 %v7377
    %v7379 = vpop.f32.mrf.mxu0
    %v7380 = vadd.f32 %v7299, %v7379
    %v7381 = vand.u32 %v5582, 4294901760
    %v7382 = vsub.f32 %v5582, %v7381
    %v7383 = vand.u32 %v7382, 4294901760
    %v7384 = vsub.f32 %v7382, %v7383
    %v7385 = vand.u32 %v7384, 4294901760
    %7386 = vmatmul.f32.gmra.mxu0 %v7385
    %v7387 = vpop.f32.mrf.mxu0
    %v7388 = vadd.f32 %v7303, %v7387
    %v7389 = vand.u32 %v5586, 4294901760
    %v7390 = vsub.f32 %v5586, %v7389
    %v7391 = vand.u32 %v7390, 4294901760
    %v7392 = vsub.f32 %v7390, %v7391
    %v7393 = vand.u32 %v7392, 4294901760
    %7394 = vmatmul.f32.gmra.mxu0 %v7393
    %v7395 = vpop.f32.mrf.mxu0
    %v7396 = vadd.f32 %v7307, %v7395
    %v7397 = vand.u32 %v5590, 4294901760
    %v7398 = vsub.f32 %v5590, %v7397
    %v7399 = vand.u32 %v7398, 4294901760
    %v7400 = vsub.f32 %v7398, %v7399
    %v7401 = vand.u32 %v7400, 4294901760
    %7402 = vmatmul.f32.gmra.mxu0 %v7401
    %v7403 = vpop.f32.mrf.mxu0
    %v7404 = vadd.f32 %v7311, %v7403
    %v7405 = vand.u32 %v5594, 4294901760
    %v7406 = vsub.f32 %v5594, %v7405
    %v7407 = vand.u32 %v7406, 4294901760
    %v7408 = vsub.f32 %v7406, %v7407
    %v7409 = vand.u32 %v7408, 4294901760
    %7410 = vmatmul.f32.gmra.mxu0 %v7409
    %v7411 = vpop.f32.mrf.mxu0
    %v7412 = vadd.f32 %v7315, %v7411
    %7413 = vdwg.mxu0
    %v7414 = vand.u32 %v5562, 4294901760
    %v7415 = vsub.f32 %v5562, %v7414
    %v7416 = vand.u32 %v7415, 4294901760
    %v7417 = vsub.f32 %v7415, %v7416
    %v7418 = vand.u32 %v7417, 4294901760
    %7419 = vmatpush.msra.mxu0 %v7418
    %v7420 = vand.u32 %v5561, 4294901760
    %v7421 = vsub.f32 %v5561, %v7420
    %v7422 = vand.u32 %v7421, 4294901760
    %v7423 = vsub.f32 %v7421, %v7422
    %v7424 = vand.u32 %v7423, 4294901760
    %7425 = vmatpush.msra.mxu0 %v7424
    %v7426 = vand.u32 %v5560, 4294901760
    %v7427 = vsub.f32 %v5560, %v7426
    %v7428 = vand.u32 %v7427, 4294901760
    %v7429 = vsub.f32 %v7427, %v7428
    %v7430 = vand.u32 %v7429, 4294901760
    %7431 = vmatpush.msra.mxu0 %v7430
    %v7432 = vand.u32 %v5559, 4294901760
    %v7433 = vsub.f32 %v5559, %v7432
    %v7434 = vand.u32 %v7433, 4294901760
    %v7435 = vsub.f32 %v7433, %v7434
    %v7436 = vand.u32 %v7435, 4294901760
    %7437 = vmatpush.msra.mxu0 %v7436
    %v7438 = vand.u32 %v5558, 4294901760
    %v7439 = vsub.f32 %v5558, %v7438
    %v7440 = vand.u32 %v7439, 4294901760
    %v7441 = vsub.f32 %v7439, %v7440
    %v7442 = vand.u32 %v7441, 4294901760
    %7443 = vmatpush.msra.mxu0 %v7442
    %v7444 = vand.u32 %v5557, 4294901760
    %v7445 = vsub.f32 %v5557, %v7444
    %v7446 = vand.u32 %v7445, 4294901760
    %v7447 = vsub.f32 %v7445, %v7446
    %v7448 = vand.u32 %v7447, 4294901760
    %7449 = vmatpush.msra.mxu0 %v7448
    %v7450 = vand.u32 %v5556, 4294901760
    %v7451 = vsub.f32 %v5556, %v7450
    %v7452 = vand.u32 %v7451, 4294901760
    %v7453 = vsub.f32 %v7451, %v7452
    %v7454 = vand.u32 %v7453, 4294901760
    %7455 = vmatpush.msra.mxu0 %v7454
    %v7456 = vand.u32 %v5555, 4294901760
    %v7457 = vsub.f32 %v5555, %v7456
    %v7458 = vand.u32 %v7457, 4294901760
    %v7459 = vsub.f32 %v7457, %v7458
    %v7460 = vand.u32 %v7459, 4294901760
    %7461 = vmatpush.msra.mxu0 %v7460
    %v7462 = vand.u32 %v5554, 4294901760
    %v7463 = vsub.f32 %v5554, %v7462
    %v7464 = vand.u32 %v7463, 4294901760
    %v7465 = vsub.f32 %v7463, %v7464
    %v7466 = vand.u32 %v7465, 4294901760
    %7467 = vmatpush.msra.mxu0 %v7466
    %v7468 = vand.u32 %v5553, 4294901760
    %v7469 = vsub.f32 %v5553, %v7468
    %v7470 = vand.u32 %v7469, 4294901760
    %v7471 = vsub.f32 %v7469, %v7470
    %v7472 = vand.u32 %v7471, 4294901760
    %7473 = vmatpush.msra.mxu0 %v7472
    %v7474 = vand.u32 %v5552, 4294901760
    %v7475 = vsub.f32 %v5552, %v7474
    %v7476 = vand.u32 %v7475, 4294901760
    %v7477 = vsub.f32 %v7475, %v7476
    %v7478 = vand.u32 %v7477, 4294901760
    %7479 = vmatpush.msra.mxu0 %v7478
    %v7480 = vand.u32 %v5551, 4294901760
    %v7481 = vsub.f32 %v5551, %v7480
    %v7482 = vand.u32 %v7481, 4294901760
    %v7483 = vsub.f32 %v7481, %v7482
    %v7484 = vand.u32 %v7483, 4294901760
    %7485 = vmatpush.msra.mxu0 %v7484
    %v7486 = vand.u32 %v5550, 4294901760
    %v7487 = vsub.f32 %v5550, %v7486
    %v7488 = vand.u32 %v7487, 4294901760
    %v7489 = vsub.f32 %v7487, %v7488
    %v7490 = vand.u32 %v7489, 4294901760
    %7491 = vmatpush.msra.mxu0 %v7490
    %v7492 = vand.u32 %v5549, 4294901760
    %v7493 = vsub.f32 %v5549, %v7492
    %v7494 = vand.u32 %v7493, 4294901760
    %v7495 = vsub.f32 %v7493, %v7494
    %v7496 = vand.u32 %v7495, 4294901760
    %7497 = vmatpush.msra.mxu0 %v7496
    %v7498 = vand.u32 %v5548, 4294901760
    %v7499 = vsub.f32 %v5548, %v7498
    %v7500 = vand.u32 %v7499, 4294901760
    %v7501 = vsub.f32 %v7499, %v7500
    %v7502 = vand.u32 %v7501, 4294901760
    %7503 = vmatpush.msra.mxu0 %v7502
    %v7504 = vand.u32 %v5547, 4294901760
    %v7505 = vsub.f32 %v5547, %v7504
    %v7506 = vand.u32 %v7505, 4294901760
    %v7507 = vsub.f32 %v7505, %v7506
    %v7508 = vand.u32 %v7507, 4294901760
    %7509 = vmatpush.msra.mxu0 %v7508
    %v7510 = vand.u32 %v5566, 4294901760
    %7511 = vmatmul.f32.gmra.mxu0 %v7510
    %v7512 = vpop.f32.mrf.mxu0
    %v7513 = vadd.f32 %v7356, %v7512
    %v7514 = vand.u32 %v5570, 4294901760
    %7515 = vmatmul.f32.gmra.mxu0 %v7514
    %v7516 = vpop.f32.mrf.mxu0
    %v7517 = vadd.f32 %v7364, %v7516
    %v7518 = vand.u32 %v5574, 4294901760
    %7519 = vmatmul.f32.gmra.mxu0 %v7518
    %v7520 = vpop.f32.mrf.mxu0
    %v7521 = vadd.f32 %v7372, %v7520
    %v7522 = vand.u32 %v5578, 4294901760
    %7523 = vmatmul.f32.gmra.mxu0 %v7522
    %v7524 = vpop.f32.mrf.mxu0
    %v7525 = vadd.f32 %v7380, %v7524
    %v7526 = vand.u32 %v5582, 4294901760
    %7527 = vmatmul.f32.gmra.mxu0 %v7526
    %v7528 = vpop.f32.mrf.mxu0
    %v7529 = vadd.f32 %v7388, %v7528
    %v7530 = vand.u32 %v5586, 4294901760
    %7531 = vmatmul.f32.gmra.mxu0 %v7530
    %v7532 = vpop.f32.mrf.mxu0
    %v7533 = vadd.f32 %v7396, %v7532
    %v7534 = vand.u32 %v5590, 4294901760
    %7535 = vmatmul.f32.gmra.mxu0 %v7534
    %v7536 = vpop.f32.mrf.mxu0
    %v7537 = vadd.f32 %v7404, %v7536
    %v7538 = vand.u32 %v5594, 4294901760
    %7539 = vmatmul.f32.gmra.mxu0 %v7538
    %v7540 = vpop.f32.mrf.mxu0
    %v7541 = vadd.f32 %v7412, %v7540
    %7542 = vdwg.mxu0
    %v7543 = vand.u32 %v5562, 4294901760
    %v7544 = vsub.f32 %v5562, %v7543
    %7545 = vmatpush.msra.mxu0 %v7544
    %v7546 = vand.u32 %v5561, 4294901760
    %v7547 = vsub.f32 %v5561, %v7546
    %7548 = vmatpush.msra.mxu0 %v7547
    %v7549 = vand.u32 %v5560, 4294901760
    %v7550 = vsub.f32 %v5560, %v7549
    %7551 = vmatpush.msra.mxu0 %v7550
    %v7552 = vand.u32 %v5559, 4294901760
    %v7553 = vsub.f32 %v5559, %v7552
    %7554 = vmatpush.msra.mxu0 %v7553
    %v7555 = vand.u32 %v5558, 4294901760
    %v7556 = vsub.f32 %v5558, %v7555
    %7557 = vmatpush.msra.mxu0 %v7556
    %v7558 = vand.u32 %v5557, 4294901760
    %v7559 = vsub.f32 %v5557, %v7558
    %7560 = vmatpush.msra.mxu0 %v7559
    %v7561 = vand.u32 %v5556, 4294901760
    %v7562 = vsub.f32 %v5556, %v7561
    %7563 = vmatpush.msra.mxu0 %v7562
    %v7564 = vand.u32 %v5555, 4294901760
    %v7565 = vsub.f32 %v5555, %v7564
    %7566 = vmatpush.msra.mxu0 %v7565
    %v7567 = vand.u32 %v5554, 4294901760
    %v7568 = vsub.f32 %v5554, %v7567
    %7569 = vmatpush.msra.mxu0 %v7568
    %v7570 = vand.u32 %v5553, 4294901760
    %v7571 = vsub.f32 %v5553, %v7570
    %7572 = vmatpush.msra.mxu0 %v7571
    %v7573 = vand.u32 %v5552, 4294901760
    %v7574 = vsub.f32 %v5552, %v7573
    %7575 = vmatpush.msra.mxu0 %v7574
    %v7576 = vand.u32 %v5551, 4294901760
    %v7577 = vsub.f32 %v5551, %v7576
    %7578 = vmatpush.msra.mxu0 %v7577
    %v7579 = vand.u32 %v5550, 4294901760
    %v7580 = vsub.f32 %v5550, %v7579
    %7581 = vmatpush.msra.mxu0 %v7580
    %v7582 = vand.u32 %v5549, 4294901760
    %v7583 = vsub.f32 %v5549, %v7582
    %7584 = vmatpush.msra.mxu0 %v7583
    %v7585 = vand.u32 %v5548, 4294901760
    %v7586 = vsub.f32 %v5548, %v7585
    %7587 = vmatpush.msra.mxu0 %v7586
    %v7588 = vand.u32 %v5547, 4294901760
    %v7589 = vsub.f32 %v5547, %v7588
    %7590 = vmatpush.msra.mxu0 %v7589
    %v7591 = vand.u32 %v5566, 4294901760
    %v7592 = vsub.f32 %v5566, %v7591
    %7593 = vmatmul.f32.gmra.mxu0 %v7592
    %v7594 = vpop.f32.mrf.mxu0
    %v7595 = vadd.f32 %v7513, %v7594
    %v7596 = vand.u32 %v5570, 4294901760
    %v7597 = vsub.f32 %v5570, %v7596
    %7598 = vmatmul.f32.gmra.mxu0 %v7597
    %v7599 = vpop.f32.mrf.mxu0
    %v7600 = vadd.f32 %v7517, %v7599
    %v7601 = vand.u32 %v5574, 4294901760
    %v7602 = vsub.f32 %v5574, %v7601
    %7603 = vmatmul.f32.gmra.mxu0 %v7602
    %v7604 = vpop.f32.mrf.mxu0
    %v7605 = vadd.f32 %v7521, %v7604
    %v7606 = vand.u32 %v5578, 4294901760
    %v7607 = vsub.f32 %v5578, %v7606
    %7608 = vmatmul.f32.gmra.mxu0 %v7607
    %v7609 = vpop.f32.mrf.mxu0
    %v7610 = vadd.f32 %v7525, %v7609
    %v7611 = vand.u32 %v5582, 4294901760
    %v7612 = vsub.f32 %v5582, %v7611
    %7613 = vmatmul.f32.gmra.mxu0 %v7612
    %v7614 = vpop.f32.mrf.mxu0
    %v7615 = vadd.f32 %v7529, %v7614
    %v7616 = vand.u32 %v5586, 4294901760
    %v7617 = vsub.f32 %v5586, %v7616
    %7618 = vmatmul.f32.gmra.mxu0 %v7617
    %v7619 = vpop.f32.mrf.mxu0
    %v7620 = vadd.f32 %v7533, %v7619
    %v7621 = vand.u32 %v5590, 4294901760
    %v7622 = vsub.f32 %v5590, %v7621
    %7623 = vmatmul.f32.gmra.mxu0 %v7622
    %v7624 = vpop.f32.mrf.mxu0
    %v7625 = vadd.f32 %v7537, %v7624
    %v7626 = vand.u32 %v5594, 4294901760
    %v7627 = vsub.f32 %v5594, %v7626
    %7628 = vmatmul.f32.gmra.mxu0 %v7627
    %v7629 = vpop.f32.mrf.mxu0
    %v7630 = vadd.f32 %v7541, %v7629
    %7631 = vdwg.mxu0
    %v7632 = vand.u32 %v5562, 4294901760
    %7633 = vmatpush.msra.mxu0 %v7632
    %v7634 = vand.u32 %v5561, 4294901760
    %7635 = vmatpush.msra.mxu0 %v7634
    %v7636 = vand.u32 %v5560, 4294901760
    %7637 = vmatpush.msra.mxu0 %v7636
    %v7638 = vand.u32 %v5559, 4294901760
    %7639 = vmatpush.msra.mxu0 %v7638
    %v7640 = vand.u32 %v5558, 4294901760
    %7641 = vmatpush.msra.mxu0 %v7640
    %v7642 = vand.u32 %v5557, 4294901760
    %7643 = vmatpush.msra.mxu0 %v7642
    %v7644 = vand.u32 %v5556, 4294901760
    %7645 = vmatpush.msra.mxu0 %v7644
    %v7646 = vand.u32 %v5555, 4294901760
    %7647 = vmatpush.msra.mxu0 %v7646
    %v7648 = vand.u32 %v5554, 4294901760
    %7649 = vmatpush.msra.mxu0 %v7648
    %v7650 = vand.u32 %v5553, 4294901760
    %7651 = vmatpush.msra.mxu0 %v7650
    %v7652 = vand.u32 %v5552, 4294901760
    %7653 = vmatpush.msra.mxu0 %v7652
    %v7654 = vand.u32 %v5551, 4294901760
    %7655 = vmatpush.msra.mxu0 %v7654
    %v7656 = vand.u32 %v5550, 4294901760
    %7657 = vmatpush.msra.mxu0 %v7656
    %v7658 = vand.u32 %v5549, 4294901760
    %7659 = vmatpush.msra.mxu0 %v7658
    %v7660 = vand.u32 %v5548, 4294901760
    %7661 = vmatpush.msra.mxu0 %v7660
    %v7662 = vand.u32 %v5547, 4294901760
    %7663 = vmatpush.msra.mxu0 %v7662
    %v7664 = vand.u32 %v5566, 4294901760
    %v7665 = vsub.f32 %v5566, %v7664
    %v7666 = vand.u32 %v7665, 4294901760
    %7667 = vmatmul.f32.gmra.mxu0 %v7666
    %v7668 = vpop.f32.mrf.mxu0
    %v7669 = vadd.f32 %v7595, %v7668
    %v7670 = vand.u32 %v5570, 4294901760
    %v7671 = vsub.f32 %v5570, %v7670
    %v7672 = vand.u32 %v7671, 4294901760
    %7673 = vmatmul.f32.gmra.mxu0 %v7672
    %v7674 = vpop.f32.mrf.mxu0
    %v7675 = vadd.f32 %v7600, %v7674
    %v7676 = vand.u32 %v5574, 4294901760
    %v7677 = vsub.f32 %v5574, %v7676
    %v7678 = vand.u32 %v7677, 4294901760
    %7679 = vmatmul.f32.gmra.mxu0 %v7678
    %v7680 = vpop.f32.mrf.mxu0
    %v7681 = vadd.f32 %v7605, %v7680
    %v7682 = vand.u32 %v5578, 4294901760
    %v7683 = vsub.f32 %v5578, %v7682
    %v7684 = vand.u32 %v7683, 4294901760
    %7685 = vmatmul.f32.gmra.mxu0 %v7684
    %v7686 = vpop.f32.mrf.mxu0
    %v7687 = vadd.f32 %v7610, %v7686
    %v7688 = vand.u32 %v5582, 4294901760
    %v7689 = vsub.f32 %v5582, %v7688
    %v7690 = vand.u32 %v7689, 4294901760
    %7691 = vmatmul.f32.gmra.mxu0 %v7690
    %v7692 = vpop.f32.mrf.mxu0
    %v7693 = vadd.f32 %v7615, %v7692
    %v7694 = vand.u32 %v5586, 4294901760
    %v7695 = vsub.f32 %v5586, %v7694
    %v7696 = vand.u32 %v7695, 4294901760
    %7697 = vmatmul.f32.gmra.mxu0 %v7696
    %v7698 = vpop.f32.mrf.mxu0
    %v7699 = vadd.f32 %v7620, %v7698
    %v7700 = vand.u32 %v5590, 4294901760
    %v7701 = vsub.f32 %v5590, %v7700
    %v7702 = vand.u32 %v7701, 4294901760
    %7703 = vmatmul.f32.gmra.mxu0 %v7702
    %v7704 = vpop.f32.mrf.mxu0
    %v7705 = vadd.f32 %v7625, %v7704
    %v7706 = vand.u32 %v5594, 4294901760
    %v7707 = vsub.f32 %v5594, %v7706
    %v7708 = vand.u32 %v7707, 4294901760
    %7709 = vmatmul.f32.gmra.mxu0 %v7708
    %v7710 = vpop.f32.mrf.mxu0
    %v7711 = vadd.f32 %v7630, %v7710
    %7712 = vdwg.mxu0
    %v7713 = vand.u32 %v5562, 4294901760
    %v7714 = vsub.f32 %v5562, %v7713
    %v7715 = vand.u32 %v7714, 4294901760
    %7716 = vmatpush.msra.mxu0 %v7715
    %v7717 = vand.u32 %v5561, 4294901760
    %v7718 = vsub.f32 %v5561, %v7717
    %v7719 = vand.u32 %v7718, 4294901760
    %7720 = vmatpush.msra.mxu0 %v7719
    %v7721 = vand.u32 %v5560, 4294901760
    %v7722 = vsub.f32 %v5560, %v7721
    %v7723 = vand.u32 %v7722, 4294901760
    %7724 = vmatpush.msra.mxu0 %v7723
    %v7725 = vand.u32 %v5559, 4294901760
    %v7726 = vsub.f32 %v5559, %v7725
    %v7727 = vand.u32 %v7726, 4294901760
    %7728 = vmatpush.msra.mxu0 %v7727
    %v7729 = vand.u32 %v5558, 4294901760
    %v7730 = vsub.f32 %v5558, %v7729
    %v7731 = vand.u32 %v7730, 4294901760
    %7732 = vmatpush.msra.mxu0 %v7731
    %v7733 = vand.u32 %v5557, 4294901760
    %v7734 = vsub.f32 %v5557, %v7733
    %v7735 = vand.u32 %v7734, 4294901760
    %7736 = vmatpush.msra.mxu0 %v7735
    %v7737 = vand.u32 %v5556, 4294901760
    %v7738 = vsub.f32 %v5556, %v7737
    %v7739 = vand.u32 %v7738, 4294901760
    %7740 = vmatpush.msra.mxu0 %v7739
    %v7741 = vand.u32 %v5555, 4294901760
    %v7742 = vsub.f32 %v5555, %v7741
    %v7743 = vand.u32 %v7742, 4294901760
    %7744 = vmatpush.msra.mxu0 %v7743
    %v7745 = vand.u32 %v5554, 4294901760
    %v7746 = vsub.f32 %v5554, %v7745
    %v7747 = vand.u32 %v7746, 4294901760
    %7748 = vmatpush.msra.mxu0 %v7747
    %v7749 = vand.u32 %v5553, 4294901760
    %v7750 = vsub.f32 %v5553, %v7749
    %v7751 = vand.u32 %v7750, 4294901760
    %7752 = vmatpush.msra.mxu0 %v7751
    %v7753 = vand.u32 %v5552, 4294901760
    %v7754 = vsub.f32 %v5552, %v7753
    %v7755 = vand.u32 %v7754, 4294901760
    %7756 = vmatpush.msra.mxu0 %v7755
    %v7757 = vand.u32 %v5551, 4294901760
    %v7758 = vsub.f32 %v5551, %v7757
    %v7759 = vand.u32 %v7758, 4294901760
    %7760 = vmatpush.msra.mxu0 %v7759
    %v7761 = vand.u32 %v5550, 4294901760
    %v7762 = vsub.f32 %v5550, %v7761
    %v7763 = vand.u32 %v7762, 4294901760
    %7764 = vmatpush.msra.mxu0 %v7763
    %v7765 = vand.u32 %v5549, 4294901760
    %v7766 = vsub.f32 %v5549, %v7765
    %v7767 = vand.u32 %v7766, 4294901760
    %7768 = vmatpush.msra.mxu0 %v7767
    %v7769 = vand.u32 %v5548, 4294901760
    %v7770 = vsub.f32 %v5548, %v7769
    %v7771 = vand.u32 %v7770, 4294901760
    %7772 = vmatpush.msra.mxu0 %v7771
    %v7773 = vand.u32 %v5547, 4294901760
    %v7774 = vsub.f32 %v5547, %v7773
    %v7775 = vand.u32 %v7774, 4294901760
    %7776 = vmatpush.msra.mxu0 %v7775
    %v7777 = vand.u32 %v5566, 4294901760
    %7778 = vmatmul.f32.gmra.mxu0 %v7777
    %v7779 = vpop.f32.mrf.mxu0
    %v7780 = vadd.f32 %v7669, %v7779
    %v7781 = vand.u32 %v5570, 4294901760
    %7782 = vmatmul.f32.gmra.mxu0 %v7781
    %v7783 = vpop.f32.mrf.mxu0
    %v7784 = vadd.f32 %v7675, %v7783
    %v7785 = vand.u32 %v5574, 4294901760
    %7786 = vmatmul.f32.gmra.mxu0 %v7785
    %v7787 = vpop.f32.mrf.mxu0
    %v7788 = vadd.f32 %v7681, %v7787
    %v7789 = vand.u32 %v5578, 4294901760
    %7790 = vmatmul.f32.gmra.mxu0 %v7789
    %v7791 = vpop.f32.mrf.mxu0
    %v7792 = vadd.f32 %v7687, %v7791
    %v7793 = vand.u32 %v5582, 4294901760
    %7794 = vmatmul.f32.gmra.mxu0 %v7793
    %v7795 = vpop.f32.mrf.mxu0
    %v7796 = vadd.f32 %v7693, %v7795
    %v7797 = vand.u32 %v5586, 4294901760
    %7798 = vmatmul.f32.gmra.mxu0 %v7797
    %v7799 = vpop.f32.mrf.mxu0
    %v7800 = vadd.f32 %v7699, %v7799
    %v7801 = vand.u32 %v5590, 4294901760
    %7802 = vmatmul.f32.gmra.mxu0 %v7801
    %v7803 = vpop.f32.mrf.mxu0
    %v7804 = vadd.f32 %v7705, %v7803
    %v7805 = vand.u32 %v5594, 4294901760
    %7806 = vmatmul.f32.gmra.mxu0 %v7805
    %v7807 = vpop.f32.mrf.mxu0
    %v7808 = vadd.f32 %v7711, %v7807
    %7809 = vdwg.mxu0
    %v7810 = vand.u32 %v5562, 4294901760
    %7811 = vmatpush.msra.mxu0 %v7810
    %v7812 = vand.u32 %v5561, 4294901760
    %7813 = vmatpush.msra.mxu0 %v7812
    %v7814 = vand.u32 %v5560, 4294901760
    %7815 = vmatpush.msra.mxu0 %v7814
    %v7816 = vand.u32 %v5559, 4294901760
    %7817 = vmatpush.msra.mxu0 %v7816
    %v7818 = vand.u32 %v5558, 4294901760
    %7819 = vmatpush.msra.mxu0 %v7818
    %v7820 = vand.u32 %v5557, 4294901760
    %7821 = vmatpush.msra.mxu0 %v7820
    %v7822 = vand.u32 %v5556, 4294901760
    %7823 = vmatpush.msra.mxu0 %v7822
    %v7824 = vand.u32 %v5555, 4294901760
    %7825 = vmatpush.msra.mxu0 %v7824
    %v7826 = vand.u32 %v5554, 4294901760
    %7827 = vmatpush.msra.mxu0 %v7826
    %v7828 = vand.u32 %v5553, 4294901760
    %7829 = vmatpush.msra.mxu0 %v7828
    %v7830 = vand.u32 %v5552, 4294901760
    %7831 = vmatpush.msra.mxu0 %v7830
    %v7832 = vand.u32 %v5551, 4294901760
    %7833 = vmatpush.msra.mxu0 %v7832
    %v7834 = vand.u32 %v5550, 4294901760
    %7835 = vmatpush.msra.mxu0 %v7834
    %v7836 = vand.u32 %v5549, 4294901760
    %7837 = vmatpush.msra.mxu0 %v7836
    %v7838 = vand.u32 %v5548, 4294901760
    %7839 = vmatpush.msra.mxu0 %v7838
    %v7840 = vand.u32 %v5547, 4294901760
    %7841 = vmatpush.msra.mxu0 %v7840
    %v7842 = vand.u32 %v5566, 4294901760
    %7843 = vmatmul.f32.gmra.mxu0 %v7842
    %v7844 = vpop.f32.mrf.mxu0
    %v7845 = vadd.f32 %v7780, %v7844
    %v7846 = vand.u32 %v5570, 4294901760
    %7847 = vmatmul.f32.gmra.mxu0 %v7846
    %v7848 = vpop.f32.mrf.mxu0
    %v7849 = vadd.f32 %v7784, %v7848
    %v7850 = vand.u32 %v5574, 4294901760
    %7851 = vmatmul.f32.gmra.mxu0 %v7850
    %v7852 = vpop.f32.mrf.mxu0
    %v7853 = vadd.f32 %v7788, %v7852
    %v7854 = vand.u32 %v5578, 4294901760
    %7855 = vmatmul.f32.gmra.mxu0 %v7854
    %v7856 = vpop.f32.mrf.mxu0
    %v7857 = vadd.f32 %v7792, %v7856
    %v7858 = vand.u32 %v5582, 4294901760
    %7859 = vmatmul.f32.gmra.mxu0 %v7858
    %v7860 = vpop.f32.mrf.mxu0
    %v7861 = vadd.f32 %v7796, %v7860
    %v7862 = vand.u32 %v5586, 4294901760
    %7863 = vmatmul.f32.gmra.mxu0 %v7862
    %v7864 = vpop.f32.mrf.mxu0
    %v7865 = vadd.f32 %v7800, %v7864
    %v7866 = vand.u32 %v5590, 4294901760
    %7867 = vmatmul.f32.gmra.mxu0 %v7866
    %v7868 = vpop.f32.mrf.mxu0
    %v7869 = vadd.f32 %v7804, %v7868
    %v7870 = vand.u32 %v5594, 4294901760
    %7871 = vmatmul.f32.gmra.mxu0 %v7870
    %v7872 = vpop.f32.mrf.mxu0
    %v7873 = vadd.f32 %v7808, %v7872
    %7874 = vdwg.mxu0
    %v7875 = vmul.f32 %v7845, 0.70710677
    %v7876 = vmul.f32 %v7849, 0.70710677
    %v7877 = vmul.f32 %v7853, 0.70710677
    %v7878 = vmul.f32 %v7857, 0.70710677
    %v7879 = vmul.f32 %v7861, 0.70710677
    %v7880 = vmul.f32 %v7865, 0.70710677
    %v7881 = vmul.f32 %v7869, 0.70710677
    %v7882 = vmul.f32 %v7873, 0.70710677
    %v7883 = vmul.f32 %v7845, %v7845
    %v7884 = vmin.f32 16.0, %v7883
    %v7885 = vmul.f32 %v7884, 2.1237322e-06
    %v7886 = vadd.f32 %v7885, 0.00028619796
    %v7887 = vmul.f32 %v7884, %v7886
    %v7888 = vadd.f32 %v7887, 0.0036580483
    %v7889 = vmul.f32 %v7884, %v7888
    %v7890 = vadd.f32 %v7889, 0.05243302
    %v7891 = vmul.f32 %v7884, %v7890
    %v7892 = vadd.f32 %v7891, 0.18741608
    %v7893 = vmul.f32 %v7884, %v7892
    %v7894 = vadd.f32 %v7893, 1.1283791
    %v7895 = vmul.f32 %v7845, %v7894
    %v7896 = vmul.f32 %v7884, 3.8918573e-05
    %v7897 = vadd.f32 %v7896, 0.001143296
    %v7898 = vmul.f32 %v7884, %v7897
    %v7899 = vadd.f32 %v7898, 0.014752088
    %v7900 = vmul.f32 %v7884, %v7899
    %v7901 = vadd.f32 %v7900, 0.112945676
    %v7902 = vmul.f32 %v7884, %v7901
    %v7903 = vadd.f32 %v7902, 0.4994258
    %v7904 = vmul.f32 %v7884, %v7903
    %v7905 = vadd.f32 %v7904, 1.0
    %v7906 = vrcp.pop %v7905
    %v7907 = vmul.f32 %v7905, %v7906
    %v7908 = vsub.f32 1.0, %v7907
    %v7909 = vmul.f32 %v7906, %v7908
    %v7910 = vadd.f32 %v7906, %v7909
    %vm7911 = vweird.f32 %v7905
    %vm7912 = vweird.f32 %v7906
    %vm7913 = vmor %vm7911, %vm7912
    %v7914 = vsel %vm7913, %v7906, %v7910
    %v7915 = vand.u32 2147483647, %v7905
    %vm7916 = vcmp.eq.f32.partialorder %v7915, 8.507059e+37
    %v7917 = vand.u32 %v7905, 2147483648
    %v7918 = vor.u32 1.1754944e-38, %v7917
    %v7919 = vsel %vm7916, %v7918, %v7914
    %v7920 = vmul.f32 %v7895, %v7919
    %v7921 = vmin.f32 %v7920, 1.0
    %v7922 = vmax.f32 %v7921, -1.0
    %v7923 = vmul.f32 %v7849, %v7849
    %v7924 = vmin.f32 16.0, %v7923
    %v7925 = vmul.f32 %v7924, 2.1237322e-06
    %v7926 = vadd.f32 %v7925, 0.00028619796
    %v7927 = vmul.f32 %v7924, %v7926
    %v7928 = vadd.f32 %v7927, 0.0036580483
    %v7929 = vmul.f32 %v7924, %v7928
    %v7930 = vadd.f32 %v7929, 0.05243302
    %v7931 = vmul.f32 %v7924, %v7930
    %v7932 = vadd.f32 %v7931, 0.18741608
    %v7933 = vmul.f32 %v7924, %v7932
    %v7934 = vadd.f32 %v7933, 1.1283791
    %v7935 = vmul.f32 %v7849, %v7934
    %v7936 = vmul.f32 %v7924, 3.8918573e-05
    %v7937 = vadd.f32 %v7936, 0.001143296
    %v7938 = vmul.f32 %v7924, %v7937
    %v7939 = vadd.f32 %v7938, 0.014752088
    %v7940 = vmul.f32 %v7924, %v7939
    %v7941 = vadd.f32 %v7940, 0.112945676
    %v7942 = vmul.f32 %v7924, %v7941
    %v7943 = vadd.f32 %v7942, 0.4994258
    %v7944 = vmul.f32 %v7924, %v7943
    %v7945 = vadd.f32 %v7944, 1.0
    %v7946 = vrcp.pop %v7945
    %v7947 = vmul.f32 %v7945, %v7946
    %v7948 = vsub.f32 1.0, %v7947
    %v7949 = vmul.f32 %v7946, %v7948
    %v7950 = vadd.f32 %v7946, %v7949
    %vm7951 = vweird.f32 %v7945
    %vm7952 = vweird.f32 %v7946
    %vm7953 = vmor %vm7951, %vm7952
    %v7954 = vsel %vm7953, %v7946, %v7950
    %v7955 = vand.u32 2147483647, %v7945
    %vm7956 = vcmp.eq.f32.partialorder %v7955, 8.507059e+37
    %v7957 = vand.u32 %v7945, 2147483648
    %v7958 = vor.u32 1.1754944e-38, %v7957
    %v7959 = vsel %vm7956, %v7958, %v7954
    %v7960 = vmul.f32 %v7935, %v7959
    %v7961 = vmin.f32 %v7960, 1.0
    %v7962 = vmax.f32 %v7961, -1.0
    %v7963 = vmul.f32 %v7853, %v7853
    %v7964 = vmin.f32 16.0, %v7963
    %v7965 = vmul.f32 %v7964, 2.1237322e-06
    %v7966 = vadd.f32 %v7965, 0.00028619796
    %v7967 = vmul.f32 %v7964, %v7966
    %v7968 = vadd.f32 %v7967, 0.0036580483
    %v7969 = vmul.f32 %v7964, %v7968
    %v7970 = vadd.f32 %v7969, 0.05243302
    %v7971 = vmul.f32 %v7964, %v7970
    %v7972 = vadd.f32 %v7971, 0.18741608
    %v7973 = vmul.f32 %v7964, %v7972
    %v7974 = vadd.f32 %v7973, 1.1283791
    %v7975 = vmul.f32 %v7853, %v7974
    %v7976 = vmul.f32 %v7964, 3.8918573e-05
    %v7977 = vadd.f32 %v7976, 0.001143296
    %v7978 = vmul.f32 %v7964, %v7977
    %v7979 = vadd.f32 %v7978, 0.014752088
    %v7980 = vmul.f32 %v7964, %v7979
    %v7981 = vadd.f32 %v7980, 0.112945676
    %v7982 = vmul.f32 %v7964, %v7981
    %v7983 = vadd.f32 %v7982, 0.4994258
    %v7984 = vmul.f32 %v7964, %v7983
    %v7985 = vadd.f32 %v7984, 1.0
    %v7986 = vrcp.pop %v7985
    %v7987 = vmul.f32 %v7985, %v7986
    %v7988 = vsub.f32 1.0, %v7987
    %v7989 = vmul.f32 %v7986, %v7988
    %v7990 = vadd.f32 %v7986, %v7989
    %vm7991 = vweird.f32 %v7985
    %vm7992 = vweird.f32 %v7986
    %vm7993 = vmor %vm7991, %vm7992
    %v7994 = vsel %vm7993, %v7986, %v7990
    %v7995 = vand.u32 2147483647, %v7985
    %vm7996 = vcmp.eq.f32.partialorder %v7995, 8.507059e+37
    %v7997 = vand.u32 %v7985, 2147483648
    %v7998 = vor.u32 1.1754944e-38, %v7997
    %v7999 = vsel %vm7996, %v7998, %v7994
    %v8000 = vmul.f32 %v7975, %v7999
    %v8001 = vmin.f32 %v8000, 1.0
    %v8002 = vmax.f32 %v8001, -1.0
    %v8003 = vmul.f32 %v7857, %v7857
    %v8004 = vmin.f32 16.0, %v8003
    %v8005 = vmul.f32 %v8004, 2.1237322e-06
    %v8006 = vadd.f32 %v8005, 0.00028619796
    %v8007 = vmul.f32 %v8004, %v8006
    %v8008 = vadd.f32 %v8007, 0.0036580483
    %v8009 = vmul.f32 %v8004, %v8008
    %v8010 = vadd.f32 %v8009, 0.05243302
    %v8011 = vmul.f32 %v8004, %v8010
    %v8012 = vadd.f32 %v8011, 0.18741608
    %v8013 = vmul.f32 %v8004, %v8012
    %v8014 = vadd.f32 %v8013, 1.1283791
    %v8015 = vmul.f32 %v7857, %v8014
    %v8016 = vmul.f32 %v8004, 3.8918573e-05
    %v8017 = vadd.f32 %v8016, 0.001143296
    %v8018 = vmul.f32 %v8004, %v8017
    %v8019 = vadd.f32 %v8018, 0.014752088
    %v8020 = vmul.f32 %v8004, %v8019
    %v8021 = vadd.f32 %v8020, 0.112945676
    %v8022 = vmul.f32 %v8004, %v8021
    %v8023 = vadd.f32 %v8022, 0.4994258
    %v8024 = vmul.f32 %v8004, %v8023
    %v8025 = vadd.f32 %v8024, 1.0
    %v8026 = vrcp.pop %v8025
    %v8027 = vmul.f32 %v8025, %v8026
    %v8028 = vsub.f32 1.0, %v8027
    %v8029 = vmul.f32 %v8026, %v8028
    %v8030 = vadd.f32 %v8026, %v8029
    %vm8031 = vweird.f32 %v8025
    %vm8032 = vweird.f32 %v8026
    %vm8033 = vmor %vm8031, %vm8032
    %v8034 = vsel %vm8033, %v8026, %v8030
    %v8035 = vand.u32 2147483647, %v8025
    %vm8036 = vcmp.eq.f32.partialorder %v8035, 8.507059e+37
    %v8037 = vand.u32 %v8025, 2147483648
    %v8038 = vor.u32 1.1754944e-38, %v8037
    %v8039 = vsel %vm8036, %v8038, %v8034
    %v8040 = vmul.f32 %v8015, %v8039
    %v8041 = vmin.f32 %v8040, 1.0
    %v8042 = vmax.f32 %v8041, -1.0
    %v8043 = vmul.f32 %v7861, %v7861
    %v8044 = vmin.f32 16.0, %v8043
    %v8045 = vmul.f32 %v8044, 2.1237322e-06
    %v8046 = vadd.f32 %v8045, 0.00028619796
    %v8047 = vmul.f32 %v8044, %v8046
    %v8048 = vadd.f32 %v8047, 0.0036580483
    %v8049 = vmul.f32 %v8044, %v8048
    %v8050 = vadd.f32 %v8049, 0.05243302
    %v8051 = vmul.f32 %v8044, %v8050
    %v8052 = vadd.f32 %v8051, 0.18741608
    %v8053 = vmul.f32 %v8044, %v8052
    %v8054 = vadd.f32 %v8053, 1.1283791
    %v8055 = vmul.f32 %v7861, %v8054
    %v8056 = vmul.f32 %v8044, 3.8918573e-05
    %v8057 = vadd.f32 %v8056, 0.001143296
    %v8058 = vmul.f32 %v8044, %v8057
    %v8059 = vadd.f32 %v8058, 0.014752088
    %v8060 = vmul.f32 %v8044, %v8059
    %v8061 = vadd.f32 %v8060, 0.112945676
    %v8062 = vmul.f32 %v8044, %v8061
    %v8063 = vadd.f32 %v8062, 0.4994258
    %v8064 = vmul.f32 %v8044, %v8063
    %v8065 = vadd.f32 %v8064, 1.0
    %v8066 = vrcp.pop %v8065
    %v8067 = vmul.f32 %v8065, %v8066
    %v8068 = vsub.f32 1.0, %v8067
    %v8069 = vmul.f32 %v8066, %v8068
    %v8070 = vadd.f32 %v8066, %v8069
    %vm8071 = vweird.f32 %v8065
    %vm8072 = vweird.f32 %v8066
    %vm8073 = vmor %vm8071, %vm8072
    %v8074 = vsel %vm8073, %v8066, %v8070
    %v8075 = vand.u32 2147483647, %v8065
    %vm8076 = vcmp.eq.f32.partialorder %v8075, 8.507059e+37
    %v8077 = vand.u32 %v8065, 2147483648
    %v8078 = vor.u32 1.1754944e-38, %v8077
    %v8079 = vsel %vm8076, %v8078, %v8074
    %v8080 = vmul.f32 %v8055, %v8079
    %v8081 = vmin.f32 %v8080, 1.0
    %v8082 = vmax.f32 %v8081, -1.0
    %v8083 = vmul.f32 %v7865, %v7865
    %v8084 = vmin.f32 16.0, %v8083
    %v8085 = vmul.f32 %v8084, 2.1237322e-06
    %v8086 = vadd.f32 %v8085, 0.00028619796
    %v8087 = vmul.f32 %v8084, %v8086
    %v8088 = vadd.f32 %v8087, 0.0036580483
    %v8089 = vmul.f32 %v8084, %v8088
    %v8090 = vadd.f32 %v8089, 0.05243302
    %v8091 = vmul.f32 %v8084, %v8090
    %v8092 = vadd.f32 %v8091, 0.18741608
    %v8093 = vmul.f32 %v8084, %v8092
    %v8094 = vadd.f32 %v8093, 1.1283791
    %v8095 = vmul.f32 %v7865, %v8094
    %v8096 = vmul.f32 %v8084, 3.8918573e-05
    %v8097 = vadd.f32 %v8096, 0.001143296
    %v8098 = vmul.f32 %v8084, %v8097
    %v8099 = vadd.f32 %v8098, 0.014752088
    %v8100 = vmul.f32 %v8084, %v8099
    %v8101 = vadd.f32 %v8100, 0.112945676
    %v8102 = vmul.f32 %v8084, %v8101
    %v8103 = vadd.f32 %v8102, 0.4994258
    %v8104 = vmul.f32 %v8084, %v8103
    %v8105 = vadd.f32 %v8104, 1.0
    %v8106 = vrcp.pop %v8105
    %v8107 = vmul.f32 %v8105, %v8106
    %v8108 = vsub.f32 1.0, %v8107
    %v8109 = vmul.f32 %v8106, %v8108
    %v8110 = vadd.f32 %v8106, %v8109
    %vm8111 = vweird.f32 %v8105
    %vm8112 = vweird.f32 %v8106
    %vm8113 = vmor %vm8111, %vm8112
    %v8114 = vsel %vm8113, %v8106, %v8110
    %v8115 = vand.u32 2147483647, %v8105
    %vm8116 = vcmp.eq.f32.partialorder %v8115, 8.507059e+37
    %v8117 = vand.u32 %v8105, 2147483648
    %v8118 = vor.u32 1.1754944e-38, %v8117
    %v8119 = vsel %vm8116, %v8118, %v8114
    %v8120 = vmul.f32 %v8095, %v8119
    %v8121 = vmin.f32 %v8120, 1.0
    %v8122 = vmax.f32 %v8121, -1.0
    %v8123 = vmul.f32 %v7869, %v7869
    %v8124 = vmin.f32 16.0, %v8123
    %v8125 = vmul.f32 %v8124, 2.1237322e-06
    %v8126 = vadd.f32 %v8125, 0.00028619796
    %v8127 = vmul.f32 %v8124, %v8126
    %v8128 = vadd.f32 %v8127, 0.0036580483
    %v8129 = vmul.f32 %v8124, %v8128
    %v8130 = vadd.f32 %v8129, 0.05243302
    %v8131 = vmul.f32 %v8124, %v8130
    %v8132 = vadd.f32 %v8131, 0.18741608
    %v8133 = vmul.f32 %v8124, %v8132
    %v8134 = vadd.f32 %v8133, 1.1283791
    %v8135 = vmul.f32 %v7869, %v8134
    %v8136 = vmul.f32 %v8124, 3.8918573e-05
    %v8137 = vadd.f32 %v8136, 0.001143296
    %v8138 = vmul.f32 %v8124, %v8137
    %v8139 = vadd.f32 %v8138, 0.014752088
    %v8140 = vmul.f32 %v8124, %v8139
    %v8141 = vadd.f32 %v8140, 0.112945676
    %v8142 = vmul.f32 %v8124, %v8141
    %v8143 = vadd.f32 %v8142, 0.4994258
    %v8144 = vmul.f32 %v8124, %v8143
    %v8145 = vadd.f32 %v8144, 1.0
    %v8146 = vrcp.pop %v8145
    %v8147 = vmul.f32 %v8145, %v8146
    %v8148 = vsub.f32 1.0, %v8147
    %v8149 = vmul.f32 %v8146, %v8148
    %v8150 = vadd.f32 %v8146, %v8149
    %vm8151 = vweird.f32 %v8145
    %vm8152 = vweird.f32 %v8146
    %vm8153 = vmor %vm8151, %vm8152
    %v8154 = vsel %vm8153, %v8146, %v8150
    %v8155 = vand.u32 2147483647, %v8145
    %vm8156 = vcmp.eq.f32.partialorder %v8155, 8.507059e+37
    %v8157 = vand.u32 %v8145, 2147483648
    %v8158 = vor.u32 1.1754944e-38, %v8157
    %v8159 = vsel %vm8156, %v8158, %v8154
    %v8160 = vmul.f32 %v8135, %v8159
    %v8161 = vmin.f32 %v8160, 1.0
    %v8162 = vmax.f32 %v8161, -1.0
    %v8163 = vmul.f32 %v7873, %v7873
    %v8164 = vmin.f32 16.0, %v8163
    %v8165 = vmul.f32 %v8164, 2.1237322e-06
    %v8166 = vadd.f32 %v8165, 0.00028619796
    %v8167 = vmul.f32 %v8164, %v8166
    %v8168 = vadd.f32 %v8167, 0.0036580483
    %v8169 = vmul.f32 %v8164, %v8168
    %v8170 = vadd.f32 %v8169, 0.05243302
    %v8171 = vmul.f32 %v8164, %v8170
    %v8172 = vadd.f32 %v8171, 0.18741608
    %v8173 = vmul.f32 %v8164, %v8172
    %v8174 = vadd.f32 %v8173, 1.1283791
    %v8175 = vmul.f32 %v7873, %v8174
    %v8176 = vmul.f32 %v8164, 3.8918573e-05
    %v8177 = vadd.f32 %v8176, 0.001143296
    %v8178 = vmul.f32 %v8164, %v8177
    %v8179 = vadd.f32 %v8178, 0.014752088
    %v8180 = vmul.f32 %v8164, %v8179
    %v8181 = vadd.f32 %v8180, 0.112945676
    %v8182 = vmul.f32 %v8164, %v8181
    %v8183 = vadd.f32 %v8182, 0.4994258
    %v8184 = vmul.f32 %v8164, %v8183
    %v8185 = vadd.f32 %v8184, 1.0
    %v8186 = vrcp.pop %v8185
    %v8187 = vmul.f32 %v8185, %v8186
    %v8188 = vsub.f32 1.0, %v8187
    %v8189 = vmul.f32 %v8186, %v8188
    %v8190 = vadd.f32 %v8186, %v8189
    %vm8191 = vweird.f32 %v8185
    %vm8192 = vweird.f32 %v8186
    %vm8193 = vmor %vm8191, %vm8192
    %v8194 = vsel %vm8193, %v8186, %v8190
    %v8195 = vand.u32 2147483647, %v8185
    %vm8196 = vcmp.eq.f32.partialorder %v8195, 8.507059e+37
    %v8197 = vand.u32 %v8185, 2147483648
    %v8198 = vor.u32 1.1754944e-38, %v8197
    %v8199 = vsel %vm8196, %v8198, %v8194
    %v8200 = vmul.f32 %v8175, %v8199
    %v8201 = vmin.f32 %v8200, 1.0
    %v8202 = vmax.f32 %v8201, -1.0
    %v8203 = vadd.f32 %v7922, 1.0
    %v8204 = vadd.f32 %v7962, 1.0
    %v8205 = vadd.f32 %v8002, 1.0
    %v8206 = vadd.f32 %v8042, 1.0
    %v8207 = vadd.f32 %v8082, 1.0
    %v8208 = vadd.f32 %v8122, 1.0
    %v8209 = vadd.f32 %v8162, 1.0
    %v8210 = vadd.f32 %v8202, 1.0
    %v8211 = vmul.f32 %v7875, %v8203
    %v8212 = vmul.f32 %v7876, %v8204
    %v8213 = vmul.f32 %v7877, %v8205
    %v8214 = vmul.f32 %v7878, %v8206
    %v8215 = vmul.f32 %v7879, %v8207
    %v8216 = vmul.f32 %v7880, %v8208
    %v8217 = vmul.f32 %v7881, %v8209
    %v8218 = vmul.f32 %v7882, %v8210
    %v8219 = vld [vmem:[%s5] sm:$0x1]
    %s8220 = sld [smem:[#allocation2]]
    %v8221 = vstv %s8220
    %vm8222 = vcmask 523264
    %v8224 = vsel %vm8222, %v8219, 0
    %8226 = vmatpush.msra.mxu0 0.0
    %8227 = vmatpush.msra.mxu0 0.0
    %8228 = vmatpush.msra.mxu0 0.0
    %8229 = vmatpush.msra.mxu0 0.0
    %8230 = vmatpush.msra.mxu0 0.0
    %8231 = vmatpush.msra.mxu0 0.0
    %8232 = vmatpush.msra.mxu0 0.0
    %8233 = vmatpush.msra.mxu0 0.0
    %v8234 = vand.u32 %v8218, 4294901760
    %8235 = vmatpush.msra.mxu0 %v8234
    %v8236 = vand.u32 %v8217, 4294901760
    %8237 = vmatpush.msra.mxu0 %v8236
    %v8238 = vand.u32 %v8216, 4294901760
    %8239 = vmatpush.msra.mxu0 %v8238
    %v8240 = vand.u32 %v8215, 4294901760
    %8241 = vmatpush.msra.mxu0 %v8240
    %v8242 = vand.u32 %v8214, 4294901760
    %8243 = vmatpush.msra.mxu0 %v8242
    %v8244 = vand.u32 %v8213, 4294901760
    %8245 = vmatpush.msra.mxu0 %v8244
    %v8246 = vand.u32 %v8212, 4294901760
    %8247 = vmatpush.msra.mxu0 %v8246
    %v8248 = vand.u32 %v8211, 4294901760
    %8249 = vmatpush.msra.mxu0 %v8248
    %v8250 = vand.u32 %v8224, 4294901760
    %v8251 = vsub.f32 %v8224, %v8250
    %v8252 = vand.u32 %v8251, 4294901760
    %v8253 = vsub.f32 %v8251, %v8252
    %v8254 = vand.u32 %v8253, 4294901760
    %8255 = vmatmul.f32.gmra.mxu0 %v8254
    %v8256 = vpop.f32.mrf.mxu0
    %v8257 = vadd.f32 %v8221, %v8256
    %8258 = vdwg.mxu0
    %8259 = vmatpush.msra.mxu0 0.0
    %8260 = vmatpush.msra.mxu0 0.0
    %8261 = vmatpush.msra.mxu0 0.0
    %8262 = vmatpush.msra.mxu0 0.0
    %8263 = vmatpush.msra.mxu0 0.0
    %8264 = vmatpush.msra.mxu0 0.0
    %8265 = vmatpush.msra.mxu0 0.0
    %8266 = vmatpush.msra.mxu0 0.0
    %v8267 = vand.u32 %v8218, 4294901760
    %v8268 = vsub.f32 %v8218, %v8267
    %v8269 = vand.u32 %v8268, 4294901760
    %v8270 = vsub.f32 %v8268, %v8269
    %v8271 = vand.u32 %v8270, 4294901760
    %8272 = vmatpush.msra.mxu0 %v8271
    %v8273 = vand.u32 %v8217, 4294901760
    %v8274 = vsub.f32 %v8217, %v8273
    %v8275 = vand.u32 %v8274, 4294901760
    %v8276 = vsub.f32 %v8274, %v8275
    %v8277 = vand.u32 %v8276, 4294901760
    %8278 = vmatpush.msra.mxu0 %v8277
    %v8279 = vand.u32 %v8216, 4294901760
    %v8280 = vsub.f32 %v8216, %v8279
    %v8281 = vand.u32 %v8280, 4294901760
    %v8282 = vsub.f32 %v8280, %v8281
    %v8283 = vand.u32 %v8282, 4294901760
    %8284 = vmatpush.msra.mxu0 %v8283
    %v8285 = vand.u32 %v8215, 4294901760
    %v8286 = vsub.f32 %v8215, %v8285
    %v8287 = vand.u32 %v8286, 4294901760
    %v8288 = vsub.f32 %v8286, %v8287
    %v8289 = vand.u32 %v8288, 4294901760
    %8290 = vmatpush.msra.mxu0 %v8289
    %v8291 = vand.u32 %v8214, 4294901760
    %v8292 = vsub.f32 %v8214, %v8291
    %v8293 = vand.u32 %v8292, 4294901760
    %v8294 = vsub.f32 %v8292, %v8293
    %v8295 = vand.u32 %v8294, 4294901760
    %8296 = vmatpush.msra.mxu0 %v8295
    %v8297 = vand.u32 %v8213, 4294901760
    %v8298 = vsub.f32 %v8213, %v8297
    %v8299 = vand.u32 %v8298, 4294901760
    %v8300 = vsub.f32 %v8298, %v8299
    %v8301 = vand.u32 %v8300, 4294901760
    %8302 = vmatpush.msra.mxu0 %v8301
    %v8303 = vand.u32 %v8212, 4294901760
    %v8304 = vsub.f32 %v8212, %v8303
    %v8305 = vand.u32 %v8304, 4294901760
    %v8306 = vsub.f32 %v8304, %v8305
    %v8307 = vand.u32 %v8306, 4294901760
    %8308 = vmatpush.msra.mxu0 %v8307
    %v8309 = vand.u32 %v8211, 4294901760
    %v8310 = vsub.f32 %v8211, %v8309
    %v8311 = vand.u32 %v8310, 4294901760
    %v8312 = vsub.f32 %v8310, %v8311
    %v8313 = vand.u32 %v8312, 4294901760
    %8314 = vmatpush.msra.mxu0 %v8313
    %v8315 = vand.u32 %v8224, 4294901760
    %8316 = vmatmul.f32.gmra.mxu0 %v8315
    %v8317 = vpop.f32.mrf.mxu0
    %v8318 = vadd.f32 %v8257, %v8317
    %8319 = vdwg.mxu0
    %8320 = vmatpush.msra.mxu0 0.0
    %8321 = vmatpush.msra.mxu0 0.0
    %8322 = vmatpush.msra.mxu0 0.0
    %8323 = vmatpush.msra.mxu0 0.0
    %8324 = vmatpush.msra.mxu0 0.0
    %8325 = vmatpush.msra.mxu0 0.0
    %8326 = vmatpush.msra.mxu0 0.0
    %8327 = vmatpush.msra.mxu0 0.0
    %v8328 = vand.u32 %v8218, 4294901760
    %v8329 = vsub.f32 %v8218, %v8328
    %8330 = vmatpush.msra.mxu0 %v8329
    %v8331 = vand.u32 %v8217, 4294901760
    %v8332 = vsub.f32 %v8217, %v8331
    %8333 = vmatpush.msra.mxu0 %v8332
    %v8334 = vand.u32 %v8216, 4294901760
    %v8335 = vsub.f32 %v8216, %v8334
    %8336 = vmatpush.msra.mxu0 %v8335
    %v8337 = vand.u32 %v8215, 4294901760
    %v8338 = vsub.f32 %v8215, %v8337
    %8339 = vmatpush.msra.mxu0 %v8338
    %v8340 = vand.u32 %v8214, 4294901760
    %v8341 = vsub.f32 %v8214, %v8340
    %8342 = vmatpush.msra.mxu0 %v8341
    %v8343 = vand.u32 %v8213, 4294901760
    %v8344 = vsub.f32 %v8213, %v8343
    %8345 = vmatpush.msra.mxu0 %v8344
    %v8346 = vand.u32 %v8212, 4294901760
    %v8347 = vsub.f32 %v8212, %v8346
    %8348 = vmatpush.msra.mxu0 %v8347
    %v8349 = vand.u32 %v8211, 4294901760
    %v8350 = vsub.f32 %v8211, %v8349
    %8351 = vmatpush.msra.mxu0 %v8350
    %v8352 = vand.u32 %v8224, 4294901760
    %v8353 = vsub.f32 %v8224, %v8352
    %8354 = vmatmul.f32.gmra.mxu0 %v8353
    %v8355 = vpop.f32.mrf.mxu0
    %v8356 = vadd.f32 %v8318, %v8355
    %8357 = vdwg.mxu0
    %8358 = vmatpush.msra.mxu0 0.0
    %8359 = vmatpush.msra.mxu0 0.0
    %8360 = vmatpush.msra.mxu0 0.0
    %8361 = vmatpush.msra.mxu0 0.0
    %8362 = vmatpush.msra.mxu0 0.0
    %8363 = vmatpush.msra.mxu0 0.0
    %8364 = vmatpush.msra.mxu0 0.0
    %8365 = vmatpush.msra.mxu0 0.0
    %v8366 = vand.u32 %v8218, 4294901760
    %8367 = vmatpush.msra.mxu0 %v8366
    %v8368 = vand.u32 %v8217, 4294901760
    %8369 = vmatpush.msra.mxu0 %v8368
    %v8370 = vand.u32 %v8216, 4294901760
    %8371 = vmatpush.msra.mxu0 %v8370
    %v8372 = vand.u32 %v8215, 4294901760
    %8373 = vmatpush.msra.mxu0 %v8372
    %v8374 = vand.u32 %v8214, 4294901760
    %8375 = vmatpush.msra.mxu0 %v8374
    %v8376 = vand.u32 %v8213, 4294901760
    %8377 = vmatpush.msra.mxu0 %v8376
    %v8378 = vand.u32 %v8212, 4294901760
    %8379 = vmatpush.msra.mxu0 %v8378
    %v8380 = vand.u32 %v8211, 4294901760
    %8381 = vmatpush.msra.mxu0 %v8380
    %v8382 = vand.u32 %v8224, 4294901760
    %v8383 = vsub.f32 %v8224, %v8382
    %v8384 = vand.u32 %v8383, 4294901760
    %8385 = vmatmul.f32.gmra.mxu0 %v8384
    %v8386 = vpop.f32.mrf.mxu0
    %v8387 = vadd.f32 %v8356, %v8386
    %8388 = vdwg.mxu0
    %8389 = vmatpush.msra.mxu0 0.0
    %8390 = vmatpush.msra.mxu0 0.0
    %8391 = vmatpush.msra.mxu0 0.0
    %8392 = vmatpush.msra.mxu0 0.0
    %8393 = vmatpush.msra.mxu0 0.0
    %8394 = vmatpush.msra.mxu0 0.0
    %8395 = vmatpush.msra.mxu0 0.0
    %8396 = vmatpush.msra.mxu0 0.0
    %v8397 = vand.u32 %v8218, 4294901760
    %v8398 = vsub.f32 %v8218, %v8397
    %v8399 = vand.u32 %v8398, 4294901760
    %8400 = vmatpush.msra.mxu0 %v8399
    %v8401 = vand.u32 %v8217, 4294901760
    %v8402 = vsub.f32 %v8217, %v8401
    %v8403 = vand.u32 %v8402, 4294901760
    %8404 = vmatpush.msra.mxu0 %v8403
    %v8405 = vand.u32 %v8216, 4294901760
    %v8406 = vsub.f32 %v8216, %v8405
    %v8407 = vand.u32 %v8406, 4294901760
    %8408 = vmatpush.msra.mxu0 %v8407
    %v8409 = vand.u32 %v8215, 4294901760
    %v8410 = vsub.f32 %v8215, %v8409
    %v8411 = vand.u32 %v8410, 4294901760
    %8412 = vmatpush.msra.mxu0 %v8411
    %v8413 = vand.u32 %v8214, 4294901760
    %v8414 = vsub.f32 %v8214, %v8413
    %v8415 = vand.u32 %v8414, 4294901760
    %8416 = vmatpush.msra.mxu0 %v8415
    %v8417 = vand.u32 %v8213, 4294901760
    %v8418 = vsub.f32 %v8213, %v8417
    %v8419 = vand.u32 %v8418, 4294901760
    %8420 = vmatpush.msra.mxu0 %v8419
    %v8421 = vand.u32 %v8212, 4294901760
    %v8422 = vsub.f32 %v8212, %v8421
    %v8423 = vand.u32 %v8422, 4294901760
    %8424 = vmatpush.msra.mxu0 %v8423
    %v8425 = vand.u32 %v8211, 4294901760
    %v8426 = vsub.f32 %v8211, %v8425
    %v8427 = vand.u32 %v8426, 4294901760
    %8428 = vmatpush.msra.mxu0 %v8427
    %v8429 = vand.u32 %v8224, 4294901760
    %8430 = vmatmul.f32.gmra.mxu0 %v8429
    %v8431 = vpop.f32.mrf.mxu0
    %v8432 = vadd.f32 %v8387, %v8431
    %8433 = vdwg.mxu0
    %8434 = vmatpush.msra.mxu0 0.0
    %8435 = vmatpush.msra.mxu0 0.0
    %8436 = vmatpush.msra.mxu0 0.0
    %8437 = vmatpush.msra.mxu0 0.0
    %8438 = vmatpush.msra.mxu0 0.0
    %8439 = vmatpush.msra.mxu0 0.0
    %8440 = vmatpush.msra.mxu0 0.0
    %8441 = vmatpush.msra.mxu0 0.0
    %v8442 = vand.u32 %v8218, 4294901760
    %8443 = vmatpush.msra.mxu0 %v8442
    %v8444 = vand.u32 %v8217, 4294901760
    %8445 = vmatpush.msra.mxu0 %v8444
    %v8446 = vand.u32 %v8216, 4294901760
    %8447 = vmatpush.msra.mxu0 %v8446
    %v8448 = vand.u32 %v8215, 4294901760
    %8449 = vmatpush.msra.mxu0 %v8448
    %v8450 = vand.u32 %v8214, 4294901760
    %8451 = vmatpush.msra.mxu0 %v8450
    %v8452 = vand.u32 %v8213, 4294901760
    %8453 = vmatpush.msra.mxu0 %v8452
    %v8454 = vand.u32 %v8212, 4294901760
    %8455 = vmatpush.msra.mxu0 %v8454
    %v8456 = vand.u32 %v8211, 4294901760
    %8457 = vmatpush.msra.mxu0 %v8456
    %v8458 = vand.u32 %v8224, 4294901760
    %8459 = vmatmul.f32.gmra.mxu0 %v8458
    %v8460 = vpop.f32.mrf.mxu0
    %v8461 = vadd.f32 %v8432, %v8460
    %8462 = vdwg.mxu0
    %8463 = vst [vmem:[#allocation3] sm:$0x1] %v8461
    // Predicated region
    $region30: #{tpu_custom_call.1} parent=1 // pred_check
      _
    $region31: #{tpu_custom_call.1} parent=1 // pred_check_branch
      %8465 = sbr.rel (0) target = $region33
    $region32: #{tpu_custom_call.1} parent=1 // pred_region
      %8467 = vsyncadd [#allocation4], 0
      %s8469 = sshll.u32 [#allocation3], 4
      %s8470 = int_to_ptr.vmem [resolvable:$true] %s8469
      %s8471 = sshll.u32 %s7, 4
      %s8472 = int_to_ptr.hbm [resolvable:$true] %s8471
      %8474 = dma.vmem_to_hbm [thread:$0]  %s8470, 16, %s8472, [#allocation4]
    $region33: #{tpu_custom_call.1} parent=1 // pred_fallthru
      _
    // Predicated region
    $region34: #{tpu_custom_call.1} parent=1 // pred_check
      _
    $region35: #{tpu_custom_call.1} parent=1 // pred_check_branch
      %8476 = sbr.rel (0) target = $region37
    $region36: #{tpu_custom_call.1} parent=1 // pred_region
      %8478 = dma.done [#allocation4], 16
    $region37: #{tpu_custom_call.1} parent=1 // pred_fallthru
      _
    %8479 = vsyncpa [#allocation4], 1

</llo_original>
